<compile_context>
chip_gen: v6e
topology: v6e:2x2x1
jax: 0.10.0
libtpu: 0.0.40
codegen_flags: <defaults>
</compile_context>

<pallas_src>
import functools

import jax
import jax.numpy as jnp
from jax import lax
from jax.experimental import pallas as pl
from jax.experimental.pallas import tpu as pltpu


# --------------------------------------------------------------------------
# Fused kernel (whole forward pass, everything VMEM resident).
# --------------------------------------------------------------------------

def _weather_kernel(*refs, cfg):
    H, W = cfg["H"], cfg["W"]
    HW = H * W
    B_loc = cfg["B_loc"]                 # batch images handled by this program
    Nb = B_loc * HW                      # lane width of this program's block
    T, D, L = cfg["T"], cfg["D"], cfg["L"]
    Ch, A = cfg["Ch"], cfg["A"]
    Wout, sel, out_ch = cfg["Wout"], cfg["sel"], cfg["out_ch"]
    bf16_eup = cfg["bf16_eup"]

    it = iter(refs)
    x_ref, h0_ref, c0_ref, mask_ref = next(it), next(it), next(it), next(it)
    w_attn, ab_ref = next(it), next(it)
    enc = [(next(it), next(it)) for _ in range(L)]
    dec = [(next(it), next(it)) for _ in range(L)]
    oc1, oc2 = next(it), next(it)
    out_ref = next(it)
    x_scr, h_scr, c_scr, sh_scr, sc_scr, y_scr = (next(it) for _ in range(6))

    inv_ahw = 1.0 / float(A * HW)

    # bf16 transcendentals on v6e/v7x (EUP relief); f32 elsewhere and on v5e.
    if bf16_eup:
        _sig = lambda v: jax.nn.sigmoid(v.astype(jnp.bfloat16)).astype(jnp.float32)
        _tnh = lambda v: jnp.tanh(v.astype(jnp.bfloat16)).astype(jnp.float32)
    else:
        _sig = jax.nn.sigmoid
        _tnh = jnp.tanh

    def taps(x):
        """x: (C, Nb) f32 -> 9 bf16 (C, Nb) rolled+masked tap pieces, tap-major.
        |tap offset| <= W+1 < HW, so any lane-roll wrap across an image /
        batch / block boundary lands on a position whose edge mask is 0.
        (Only valid for 3x3 kernels -- asserted in the wrapper.)"""
        out = []
        idx = 0
        for di in (-1, 0, 1):
            for dj in (-1, 0, 1):
                off = di * W + dj
                if off == 0:
                    out.append(x.astype(jnp.bfloat16))
                else:
                    m = mask_ref[pl.ds(idx, 1), :]                      # (1, Nb)
                    out.append((pltpu.roll(x, (-off) % Nb, axis=1) * m)
                               .astype(jnp.bfloat16))
                idx += 1
        return out

    def cell(gates, c_prev):
        """Standard ConvLSTM update from fused gate pre-activations (4Ch, Nb)."""
        i = _sig(gates[0 * Ch:1 * Ch])
        f = _sig(gates[1 * Ch:2 * Ch])
        o = _sig(gates[2 * Ch:3 * Ch])
        g = _tnh(gates[3 * Ch:4 * Ch])
        c_next = f * c_prev + i * g
        return o * _tnh(c_next), c_next

    def leaky(v):
        return jnp.where(v > 0, v, 0.01 * v)     # PyTorch LeakyReLU default

    # ---- init VMEM-resident state -------------------------------------------
    x_scr[...] = x_ref[...]
    h_scr[...] = h0_ref[...]
    c_scr[...] = c0_ref[...]
    sh_scr[...] = jnp.zeros_like(sh_scr)
    sc_scr[...] = jnp.zeros_like(sc_scr)

    # ------------------------------- encoder ---------------------------------
    @pl.loop(0, T)
    def _enc_step(t):
        taps_h0 = taps(h_scr[0])         # reused: attention AND layer-0 gates
        taps_c0 = taps(c_scr[0])

        # -- input attention: ONE block-diagonal matmul for all D variables --
        # K = 9*(D*T + 2*Ch); x-taps are block-diagonal, h/c taps shared.
        pieces = []
        for k in range(D):
            pieces += taps(x_scr[k])                       # (T, Nb) slab per var
        pieces += taps_h0
        pieces += taps_c0
        att_in = jnp.concatenate(pieces, axis=0)           # (K, Nb) bf16
        amap = jnp.tanh(jnp.dot(w_attn[...], att_in,
                                preferred_element_type=jnp.float32)
                        + ab_ref[...])                     # (D*A, Nb) f32
        rsum = jnp.concatenate(
            [jnp.sum(amap[k * A:(k + 1) * A], axis=0, keepdims=True)
             for k in range(D)], axis=0)                   # (D, Nb)

        # softmax over the D variables per batch image, scale x[:, t] in place
        xt = jnp.concatenate(
            [x_scr[pl.ds(k, 1), pl.ds(t, 1), :].reshape(1, Nb) for k in range(D)],
            axis=0)                                        # (D, Nb) unscaled
        if B_loc == 1:
            s = jnp.sum(rsum, axis=1, keepdims=True) * inv_ahw          # (D, 1)
            e = jnp.exp(s - jnp.max(s, axis=0, keepdims=True))
            xt = xt * (e / jnp.sum(e, axis=0, keepdims=True))
        else:
            q = lax.broadcasted_iota(jnp.int32, (1, Nb), 1)
            alpha_map = jnp.zeros((D, Nb), jnp.float32)
            for b in range(B_loc):
                s = jnp.sum(rsum[:, b * HW:(b + 1) * HW], axis=1,
                            keepdims=True) * inv_ahw                    # (D, 1)
                e = jnp.exp(s - jnp.max(s, axis=0, keepdims=True))
                a_b = e / jnp.sum(e, axis=0, keepdims=True)
                bmask = ((q >= b * HW) & (q < (b + 1) * HW)).astype(jnp.float32)
                alpha_map = alpha_map + a_b * bmask
            xt = xt * alpha_map
        for k in range(D):                                  # x[:, t] *= alpha
            x_scr[pl.ds(k, 1), pl.ds(t, 1), :] = xt[k:k + 1].reshape(1, 1, Nb)

        # -- ConvLSTM stack: x-taps + h-taps fused into one matmul per layer --
        inp_pieces = taps(xt)
        h_pieces = taps_h0                                  # reuse (no re-roll)
        inp = None
        for l in range(L):
            if l > 0:
                inp_pieces = taps(inp)
                h_pieces = taps(h_scr[l])
            w_ref, b_ref = enc[l]
            gin = jnp.concatenate(inp_pieces + h_pieces, axis=0)
            gates = jnp.dot(w_ref[...], gin,
                            preferred_element_type=jnp.float32) + b_ref[...]
            h_new, c_new = cell(gates, c_scr[l])
            h_scr[l] = h_new
            c_scr[l] = c_new
            sh_scr[l] = sh_scr[l] + h_new
            sc_scr[l] = sc_scr[l] + c_new
            inp = h_new

    # ------------------------- decoder + output head --------------------------
    # Decoder initial state: time-summed encoder states, layer order reversed.
    for l in range(L):
        h_scr[l] = sh_scr[L - 1 - l]
        c_scr[l] = sc_scr[L - 1 - l]
    # Decoder seed = ORIGINAL x[:, -1, selected_dim]: the reference encodes
    # x.clone(), so the in-place attention scaling never reaches this read.
    y_scr[...] = x_ref[pl.ds(sel, 1), pl.ds(T - 1, 1), :].reshape(out_ch, Nb)

    @pl.loop(0, Wout)
    def _dec_step(step):
        inp = y_scr[...]
        for l in range(L):
            w_ref, b_ref = dec[l]
            gin = jnp.concatenate(taps(inp) + taps(h_scr[l]), axis=0)
            gates = jnp.dot(w_ref[...], gin,
                            preferred_element_type=jnp.float32) + b_ref[...]
            h_new, c_new = cell(gates, c_scr[l])
            h_scr[l] = h_new
            c_scr[l] = c_new
            inp = h_new
        y1 = leaky(jnp.dot(oc1[...], jnp.concatenate(taps(inp), axis=0),
                           preferred_element_type=jnp.float32))   # out_conv1
        y2 = leaky(jnp.dot(oc2[...], jnp.concatenate(taps(y1), axis=0),
                           preferred_element_type=jnp.float32))   # out_conv2
        out_ref[step] = y2
        y_scr[...] = y2


# --------------------------------------------------------------------------
# Wrapper: trace-time layout plumbing only (transposes / weight re-packing).
# --------------------------------------------------------------------------

def _pack3x3(w):
    """(Cout, Cin, 3, 3) -> (Cout, 9*Cin); column order (tap, cin), tap=ki*3+kj."""
    cout, cin, kh, kw = w.shape
    assert kh == 3 and kw == 3, "fused kernel only supports 3x3 convs"
    return jnp.transpose(w, (0, 2, 3, 1)).reshape(cout, 9 * cin)


def _pack_gate(w, cin):
    """ConvLSTM gate conv weight -> (4*Ch, 9*(cin+Ch)) bf16 ([x-taps | h-taps])."""
    return jnp.concatenate([_pack3x3(w[:, :cin]), _pack3x3(w[:, cin:])],
                           axis=1).astype(jnp.bfloat16)


def weather_model_forward(params, x, hidden, cfg, *, num_blocks=None, bf16_eup=None):
    """x: (B, T, D, H, W); hidden: list of (h, c), each (B, Ch, H, W).
    Returns (B, window_out, out_channel, H, W)."""
    B, T, D, H, W = x.shape
    L = cfg["num_layers"]
    enc_hd = cfg["encoder_params"]["hidden_dims"]
    dec_hd = cfg["decoder_params"]["hidden_dims"]
    assert len(set(enc_hd)) == 1 and list(enc_hd) == list(dec_hd), \
        "fused kernel assumes equal hidden dims across layers/blocks"
    Ch = enc_hd[0]
    ap = cfg["input_attn_params"]
    op = cfg["output_conv_params"]
    assert ap["input_dim"] == T and ap["hidden_dim"] == Ch and ap["kernel_size"] == 3
    assert all(k == 3 for k in cfg["encoder_params"]["kernel_size"])
    assert all(k == 3 for k in cfg["decoder_params"]["kernel_size"])
    assert op["in_kernel"] == 3 and op["out_kernel"] == 3
    assert cfg["encoder_params"]["input_dim"] == D
    assert cfg["decoder_params"]["input_dim"] == 1 and op["out_channel"] == 1
    assert not cfg["encoder_params"]["peephole_con"]
    assert not cfg["decoder_params"]["peephole_con"]
    assert cfg["selected_dim"] < D
    A = ap["attn_channel"]
    Wout = cfg["window_out"]
    out_ch = op["out_channel"]
    HW = H * W
    N = B * HW

    # chip-dependent knobs (auto-detected, overridable)
    if num_blocks is None or bf16_eup is None:
        try:
            kind = jax.devices()[0].device_kind.lower()
        except Exception:
            kind = ""
        if bf16_eup is None:
            bf16_eup = ("v6" in kind) or ("v7" in kind)    # no bf16 VPU/EUP on v5e
        if num_blocks is None:
            # v7x: 2 TensorCores -> split the batch-folded lane axis across them
            num_blocks = 2 if ("v7" in kind and B % 2 == 0) else 1
    assert num_blocks >= 1 and B % num_blocks == 0
    B_loc = B // num_blocks
    Nb = B_loc * HW

    # ---- layout plumbing: fold batch onto the lane axis (b-major) ----
    x_flat = jnp.transpose(x, (2, 1, 0, 3, 4)).reshape(D, T, N)
    h_init = jnp.stack([jnp.transpose(h, (1, 0, 2, 3)).reshape(Ch, N) for h, _ in hidden])
    c_init = jnp.stack([jnp.transpose(c, (1, 0, 2, 3)).reshape(Ch, N) for _, c in hidden])

    # 9 packed edge masks (tap-major) over the lane axis (periodic in HW)
    p = jnp.arange(N, dtype=jnp.int32) % HW
    ii, jj = p // W, p % W
    mrows = []
    for di in (-1, 0, 1):
        for dj in (-1, 0, 1):
            ok = (ii + di >= 0) & (ii + di < H) & (jj + dj >= 0) & (jj + dj < W)
            mrows.append(ok.astype(jnp.float32))
    masks = jnp.stack(mrows, axis=0)                                   # (9, N)

    # attention weights: block-diagonal x-taps (shared across variables) plus
    # shared h/c tap columns -> one (D*A, 9*(D*T + 2*Ch)) matmul per timestep
    aw = params["input_attn"]["w"]                         # (A, T + 2*Ch, 3, 3)
    w_ax = _pack3x3(aw[:, :T])
    w_ah = _pack3x3(aw[:, T:T + Ch])
    w_ac = _pack3x3(aw[:, T + Ch:])
    blocks = []
    for k in range(D):
        cols = [jnp.zeros((A, 9 * T), jnp.float32) for _ in range(D)]
        cols[k] = w_ax
        blocks.append(jnp.concatenate(cols + [w_ah, w_ac], axis=1))
    w_attn = jnp.concatenate(blocks, axis=0).astype(jnp.bfloat16)      # (D*A, Ka)
    ab = jnp.tile(params["input_attn"]["b"].reshape(A, 1), (D, 1))     # (D*A, 1)

    def _full2d(a):
        return pl.BlockSpec(a.shape, lambda g: (0, 0))

    operands = [x_flat, h_init, c_init, masks, w_attn, ab]
    in_specs = [
        pl.BlockSpec((D, T, Nb), lambda g: (0, 0, g)),
        pl.BlockSpec((L, Ch, Nb), lambda g: (0, 0, g)),
        pl.BlockSpec((L, Ch, Nb), lambda g: (0, 0, g)),
        pl.BlockSpec((9, Nb), lambda g: (0, g)),
        _full2d(w_attn),
        _full2d(ab),
    ]
    for blk, bp in (("encoder", cfg["encoder_params"]),
                    ("decoder", cfg["decoder_params"])):
        for l in range(L):
            cin = bp["input_dim"] if l == 0 else bp["hidden_dims"][l - 1]
            wl = _pack_gate(params[blk][l]["w"], cin)
            bl = params[blk][l]["b"].reshape(4 * Ch, 1).astype(jnp.float32)
            operands += [wl, bl]
            in_specs += [_full2d(wl), _full2d(bl)]
    w1 = _pack3x3(params["out_conv1"]["w"]).astype(jnp.bfloat16)
    w2 = _pack3x3(params["out_conv2"]["w"]).astype(jnp.bfloat16)
    operands += [w1, w2]
    in_specs += [_full2d(w1), _full2d(w2)]

    kcfg = dict(H=H, W=W, B_loc=B_loc, T=T, D=D, L=L, Ch=Ch, A=A,
                Wout=Wout, sel=cfg["selected_dim"], out_ch=out_ch,
                bf16_eup=bool(bf16_eup))

    out = pl.pallas_call(
        functools.partial(_weather_kernel, cfg=kcfg),
        out_shape=jax.ShapeDtypeStruct((Wout, out_ch, N), jnp.float32),
        grid=(num_blocks,),
        in_specs=in_specs,
        out_specs=pl.BlockSpec((Wout, out_ch, Nb), lambda g: (0, 0, g)),
        scratch_shapes=[
            pltpu.VMEM((D, T, Nb), jnp.float32),      # attention-scaled x
            pltpu.VMEM((L, Ch, Nb), jnp.float32),     # h
            pltpu.VMEM((L, Ch, Nb), jnp.float32),     # c
            pltpu.VMEM((L, Ch, Nb), jnp.float32),     # sum_t h
            pltpu.VMEM((L, Ch, Nb), jnp.float32),     # sum_t c
            pltpu.VMEM((out_ch, Nb), jnp.float32),    # decoder feedback y
        ],
        compiler_params=pltpu.CompilerParams(
            dimension_semantics=("parallel",)),
    )(*operands)

    out = out.reshape(Wout, out_ch, B, H, W)
    return jnp.transpose(out, (2, 0, 1, 3, 4))


# ----------------------------- parameter init -----------------------------

def init_params(key, cfg):
    keys = iter(jax.random.split(key, 64))

    def conv_w(cout, cin, k):
        return 0.1 * jax.random.normal(next(keys), (cout, cin, k, k), jnp.float32)

    def conv_b(cout):
        return 0.1 * jax.random.normal(next(keys), (cout,), jnp.float32)

    ap = cfg["input_attn_params"]
    params = {
        "input_attn": {
            "w": conv_w(ap["attn_channel"], ap["input_dim"] + 2 * ap["hidden_dim"],
                        ap["kernel_size"]),
            "b": conv_b(ap["attn_channel"]),
        }
    }

    def block(bp):
        cells = []
        for i in range(cfg["num_layers"]):
            cin = bp["input_dim"] if i == 0 else bp["hidden_dims"][i - 1]
            ch = bp["hidden_dims"][i]
            k = bp["kernel_size"][i]
            cells.append({
                "w": conv_w(4 * ch, cin + ch, k),
                "b": conv_b(4 * ch) if bp["bias"] else jnp.zeros((4 * ch,), jnp.float32),
            })
        return cells

    params["encoder"] = block(cfg["encoder_params"])
    params["decoder"] = block(cfg["decoder_params"])
    op = cfg["output_conv_params"]
    params["out_conv1"] = {"w": conv_w(op["mid_channel"],
                                       cfg["decoder_params"]["hidden_dims"][-1],
                                       op["in_kernel"])}
    params["out_conv2"] = {"w": conv_w(op["out_channel"], op["mid_channel"],
                                       op["out_kernel"])}
    return params


# ----------------------------- main -----------------------------

if __name__ == "__main__":
    H = W = 16
    cfg = dict(
        input_size=(H, W),
        window_in=4,
        window_out=2,
        num_layers=2,
        selected_dim=0,
        encoder_params=dict(input_dim=3, hidden_dims=[8, 8], kernel_size=[3, 3],
                            bias=True, peephole_con=False),
        decoder_params=dict(input_dim=1, hidden_dims=[8, 8], kernel_size=[3, 3],
                            bias=True, peephole_con=False),
        input_attn_params=dict(input_dim=4, hidden_dim=8, attn_channel=4, kernel_size=3),
        output_conv_params=dict(mid_channel=8, out_channel=1, in_kernel=3, out_kernel=3),
    )
    B = 2
    T = cfg["window_in"]
    D = cfg["encoder_params"]["input_dim"]

    key = jax.random.PRNGKey(0)
    k_param, k_x = jax.random.split(key)
    params = init_params(k_param, cfg)
    x = jax.random.normal(k_x, (B, T, D, H, W), jnp.float32)
    hidden = [
        (jnp.zeros((B, ch, H, W), jnp.float32), jnp.zeros((B, ch, H, W), jnp.float32))
        for ch in cfg["encoder_params"]["hidden_dims"]
    ]

    fwd = jax.jit(functools.partial(weather_model_forward, cfg=cfg))
    out = fwd(params, x, hidden)
    jax.block_until_ready(out)
    assert out.shape == (B, cfg["window_out"],
                         cfg["output_conv_params"]["out_channel"], H, W), out.shape
    print("KERNEL_OK")
</pallas_src>

<mosaic_0001>
module attributes {stable_mosaic.version = 11 : i64} {
  func.func @_weather_kernel(%arg0: i32, %arg1: memref<3x4x512xf32, #tpu.memory_space<vmem>>, %arg2: memref<2x8x512xf32, #tpu.memory_space<vmem>>, %arg3: memref<2x8x512xf32, #tpu.memory_space<vmem>>, %arg4: memref<9x512xf32, #tpu.memory_space<vmem>>, %arg5: memref<12x252xbf16, #tpu.memory_space<vmem>>, %arg6: memref<12x1xf32, #tpu.memory_space<vmem>>, %arg7: memref<32x99xbf16, #tpu.memory_space<vmem>>, %arg8: memref<32x1xf32, #tpu.memory_space<vmem>>, %arg9: memref<32x144xbf16, #tpu.memory_space<vmem>>, %arg10: memref<32x1xf32, #tpu.memory_space<vmem>>, %arg11: memref<32x81xbf16, #tpu.memory_space<vmem>>, %arg12: memref<32x1xf32, #tpu.memory_space<vmem>>, %arg13: memref<32x144xbf16, #tpu.memory_space<vmem>>, %arg14: memref<32x1xf32, #tpu.memory_space<vmem>>, %arg15: memref<8x72xbf16, #tpu.memory_space<vmem>>, %arg16: memref<1x72xbf16, #tpu.memory_space<vmem>>, %arg17: memref<2x1x512xf32, #tpu.memory_space<vmem>>, %arg18: memref<3x4x512xf32, #tpu.memory_space<vmem>>, %arg19: memref<2x8x512xf32, #tpu.memory_space<vmem>>, %arg20: memref<2x8x512xf32, #tpu.memory_space<vmem>>, %arg21: memref<2x8x512xf32, #tpu.memory_space<vmem>>, %arg22: memref<2x8x512xf32, #tpu.memory_space<vmem>>, %arg23: memref<1x512xf32, #tpu.memory_space<vmem>>) attributes {dimension_semantics = [#tpu.dimension_semantics<parallel>], iteration_bounds = array<i64: 1>, scalar_prefetch = 0 : i64, scratch_operands = 6 : i64, tpu.core_type = #tpu.core_type<tc>, window_params = [{transform_indices = @transform_0, window_bounds = array<i64: 3, 4, 512>}, {transform_indices = @transform_1, window_bounds = array<i64: 2, 8, 512>}, {transform_indices = @transform_2, window_bounds = array<i64: 2, 8, 512>}, {transform_indices = @transform_3, window_bounds = array<i64: 9, 512>}, {pipeline_mode = #tpu.pipeline_mode<synchronous>, transform_indices = @transform_4, window_bounds = array<i64: 12, 252>}, {pipeline_mode = #tpu.pipeline_mode<synchronous>, transform_indices = @transform_5, window_bounds = array<i64: 12, 1>}, {pipeline_mode = #tpu.pipeline_mode<synchronous>, transform_indices = @transform_6, window_bounds = array<i64: 32, 99>}, {pipeline_mode = #tpu.pipeline_mode<synchronous>, transform_indices = @transform_7, window_bounds = array<i64: 32, 1>}, {pipeline_mode = #tpu.pipeline_mode<synchronous>, transform_indices = @transform_8, window_bounds = array<i64: 32, 144>}, {pipeline_mode = #tpu.pipeline_mode<synchronous>, transform_indices = @transform_9, window_bounds = array<i64: 32, 1>}, {pipeline_mode = #tpu.pipeline_mode<synchronous>, transform_indices = @transform_10, window_bounds = array<i64: 32, 81>}, {pipeline_mode = #tpu.pipeline_mode<synchronous>, transform_indices = @transform_11, window_bounds = array<i64: 32, 1>}, {pipeline_mode = #tpu.pipeline_mode<synchronous>, transform_indices = @transform_12, window_bounds = array<i64: 32, 144>}, {pipeline_mode = #tpu.pipeline_mode<synchronous>, transform_indices = @transform_13, window_bounds = array<i64: 32, 1>}, {pipeline_mode = #tpu.pipeline_mode<synchronous>, transform_indices = @transform_14, window_bounds = array<i64: 8, 72>}, {pipeline_mode = #tpu.pipeline_mode<synchronous>, transform_indices = @transform_15, window_bounds = array<i64: 1, 72>}, {transform_indices = @transform_16, window_bounds = array<i64: 2, 1, 512>}]} {
    %c0 = arith.constant 0 : index
    %c0_0 = arith.constant 0 : index
    %c0_1 = arith.constant 0 : index
    %0 = vector.load %arg1[%c0, %c0_0, %c0_1] : memref<3x4x512xf32, #tpu.memory_space<vmem>>, vector<3x4x512xf32>
    %c0_2 = arith.constant 0 : index
    %c0_3 = arith.constant 0 : index
    %c0_4 = arith.constant 0 : index
    %1 = vector.load %arg18[%c0_2, %c0_3, %c0_4] : memref<3x4x512xf32, #tpu.memory_space<vmem>>, vector<3x4x512xf32>
    tpu.vector_store %arg18[%c0_2, %c0_3, %c0_4], %0 {strides = array<i32>} : memref<3x4x512xf32, #tpu.memory_space<vmem>>, vector<3x4x512xf32>,
    %c0_5 = arith.constant 0 : index
    %c0_6 = arith.constant 0 : index
    %c0_7 = arith.constant 0 : index
    %2 = vector.load %arg2[%c0_5, %c0_6, %c0_7] : memref<2x8x512xf32, #tpu.memory_space<vmem>>, vector<2x8x512xf32>
    %c0_8 = arith.constant 0 : index
    %c0_9 = arith.constant 0 : index
    %c0_10 = arith.constant 0 : index
    %3 = vector.load %arg19[%c0_8, %c0_9, %c0_10] : memref<2x8x512xf32, #tpu.memory_space<vmem>>, vector<2x8x512xf32>
    tpu.vector_store %arg19[%c0_8, %c0_9, %c0_10], %2 {strides = array<i32>} : memref<2x8x512xf32, #tpu.memory_space<vmem>>, vector<2x8x512xf32>,
    %c0_11 = arith.constant 0 : index
    %c0_12 = arith.constant 0 : index
    %c0_13 = arith.constant 0 : index
    %4 = vector.load %arg3[%c0_11, %c0_12, %c0_13] : memref<2x8x512xf32, #tpu.memory_space<vmem>>, vector<2x8x512xf32>
    %c0_14 = arith.constant 0 : index
    %c0_15 = arith.constant 0 : index
    %c0_16 = arith.constant 0 : index
    %5 = vector.load %arg20[%c0_14, %c0_15, %c0_16] : memref<2x8x512xf32, #tpu.memory_space<vmem>>, vector<2x8x512xf32>
    tpu.vector_store %arg20[%c0_14, %c0_15, %c0_16], %4 {strides = array<i32>} : memref<2x8x512xf32, #tpu.memory_space<vmem>>, vector<2x8x512xf32>,
    %cst = arith.constant 0.000000e+00 : f32
    %6 = vector.broadcast %cst : f32 to vector<2x8x512xf32>
    %c0_17 = arith.constant 0 : index
    %c0_18 = arith.constant 0 : index
    %c0_19 = arith.constant 0 : index
    %7 = vector.load %arg21[%c0_17, %c0_18, %c0_19] : memref<2x8x512xf32, #tpu.memory_space<vmem>>, vector<2x8x512xf32>
    tpu.vector_store %arg21[%c0_17, %c0_18, %c0_19], %6 {strides = array<i32>} : memref<2x8x512xf32, #tpu.memory_space<vmem>>, vector<2x8x512xf32>,
    %cst_20 = arith.constant 0.000000e+00 : f32
    %8 = vector.broadcast %cst_20 : f32 to vector<2x8x512xf32>
    %c0_21 = arith.constant 0 : index
    %c0_22 = arith.constant 0 : index
    %c0_23 = arith.constant 0 : index
    %9 = vector.load %arg22[%c0_21, %c0_22, %c0_23] : memref<2x8x512xf32, #tpu.memory_space<vmem>>, vector<2x8x512xf32>
    tpu.vector_store %arg22[%c0_21, %c0_22, %c0_23], %8 {strides = array<i32>} : memref<2x8x512xf32, #tpu.memory_space<vmem>>, vector<2x8x512xf32>,
    %c0_i32 = arith.constant 0 : i32
    %c4_i32 = arith.constant 4 : i32
    %10 = arith.addi %c0_i32, %c4_i32 : i32
    %c1_i32 = arith.constant 1 : i32
    scf.for %arg24 = %c0_i32 to %10 step %c1_i32  : i32 {
      %c1_i32_55 = arith.constant 1 : i32
      %35 = arith.muli %arg24, %c1_i32_55 : i32
      %c0_i32_56 = arith.constant 0 : i32
      %36 = arith.addi %c0_i32_56, %35 : i32
      %c0_57 = arith.constant 0 : index
      %c0_58 = arith.constant 0 : index
      %c0_59 = arith.constant 0 : index
      %37 = vector.load %arg19[%c0_57, %c0_58, %c0_59] : memref<2x8x512xf32, #tpu.memory_space<vmem>>, vector<1x8x512xf32>
      %38 = vector.shape_cast %37 : vector<1x8x512xf32> to vector<8x512xf32>
      %c0_60 = arith.constant 0 : index
      %c0_61 = arith.constant 0 : index
      %39 = vector.load %arg4[%c0_60, %c0_61] : memref<9x512xf32, #tpu.memory_space<vmem>>, vector<1x512xf32>
      %c17_i32 = arith.constant 17 : i32
      %40 = tpu.dynamic_rotate %38 by %c17_i32 dim 1 : vector<8x512xf32>, i32 -> vector<8x512xf32>
      %41 = vector.broadcast %39 : vector<1x512xf32> to vector<8x512xf32>
      %42 = arith.mulf %40, %41 : vector<8x512xf32>
      %43 = arith.truncf %42 : vector<8x512xf32> to vector<8x512xbf16>
      %c1_62 = arith.constant 1 : index
      %c0_63 = arith.constant 0 : index
      %44 = vector.load %arg4[%c1_62, %c0_63] : memref<9x512xf32, #tpu.memory_space<vmem>>, vector<1x512xf32>
      %c16_i32 = arith.constant 16 : i32
      %45 = tpu.dynamic_rotate %38 by %c16_i32 dim 1 : vector<8x512xf32>, i32 -> vector<8x512xf32>
      %46 = vector.broadcast %44 : vector<1x512xf32> to vector<8x512xf32>
      %47 = arith.mulf %45, %46 : vector<8x512xf32>
      %48 = arith.truncf %47 : vector<8x512xf32> to vector<8x512xbf16>
      %c2 = arith.constant 2 : index
      %c0_64 = arith.constant 0 : index
      %49 = vector.load %arg4[%c2, %c0_64] : memref<9x512xf32, #tpu.memory_space<vmem>>, vector<1x512xf32>
      %c15_i32 = arith.constant 15 : i32
      %50 = tpu.dynamic_rotate %38 by %c15_i32 dim 1 : vector<8x512xf32>, i32 -> vector<8x512xf32>
      %51 = vector.broadcast %49 : vector<1x512xf32> to vector<8x512xf32>
      %52 = arith.mulf %50, %51 : vector<8x512xf32>
      %53 = arith.truncf %52 : vector<8x512xf32> to vector<8x512xbf16>
      %c3_65 = arith.constant 3 : index
      %c0_66 = arith.constant 0 : index
      %54 = vector.load %arg4[%c3_65, %c0_66] : memref<9x512xf32, #tpu.memory_space<vmem>>, vector<1x512xf32>
      %c1_i32_67 = arith.constant 1 : i32
      %55 = tpu.dynamic_rotate %38 by %c1_i32_67 dim 1 : vector<8x512xf32>, i32 -> vector<8x512xf32>
      %56 = vector.broadcast %54 : vector<1x512xf32> to vector<8x512xf32>
      %57 = arith.mulf %55, %56 : vector<8x512xf32>
      %58 = arith.truncf %57 : vector<8x512xf32> to vector<8x512xbf16>
      %59 = arith.truncf %38 : vector<8x512xf32> to vector<8x512xbf16>
      %c5 = arith.constant 5 : index
      %c0_68 = arith.constant 0 : index
      %60 = vector.load %arg4[%c5, %c0_68] : memref<9x512xf32, #tpu.memory_space<vmem>>, vector<1x512xf32>
      %c511_i32 = arith.constant 511 : i32
      %61 = tpu.dynamic_rotate %38 by %c511_i32 dim 1 : vector<8x512xf32>, i32 -> vector<8x512xf32>
      %62 = vector.broadcast %60 : vector<1x512xf32> to vector<8x512xf32>
      %63 = arith.mulf %61, %62 : vector<8x512xf32>
      %64 = arith.truncf %63 : vector<8x512xf32> to vector<8x512xbf16>
      %c6 = arith.constant 6 : index
      %c0_69 = arith.constant 0 : index
      %65 = vector.load %arg4[%c6, %c0_69] : memref<9x512xf32, #tpu.memory_space<vmem>>, vector<1x512xf32>
      %c497_i32 = arith.constant 497 : i32
      %66 = tpu.dynamic_rotate %38 by %c497_i32 dim 1 : vector<8x512xf32>, i32 -> vector<8x512xf32>
      %67 = vector.broadcast %65 : vector<1x512xf32> to vector<8x512xf32>
      %68 = arith.mulf %66, %67 : vector<8x512xf32>
      %69 = arith.truncf %68 : vector<8x512xf32> to vector<8x512xbf16>
      %c7 = arith.constant 7 : index
      %c0_70 = arith.constant 0 : index
      %70 = vector.load %arg4[%c7, %c0_70] : memref<9x512xf32, #tpu.memory_space<vmem>>, vector<1x512xf32>
      %c496_i32 = arith.constant 496 : i32
      %71 = tpu.dynamic_rotate %38 by %c496_i32 dim 1 : vector<8x512xf32>, i32 -> vector<8x512xf32>
      %72 = vector.broadcast %70 : vector<1x512xf32> to vector<8x512xf32>
      %73 = arith.mulf %71, %72 : vector<8x512xf32>
      %74 = arith.truncf %73 : vector<8x512xf32> to vector<8x512xbf16>
      %c8 = arith.constant 8 : index
      %c0_71 = arith.constant 0 : index
      %75 = vector.load %arg4[%c8, %c0_71] : memref<9x512xf32, #tpu.memory_space<vmem>>, vector<1x512xf32>
      %c495_i32 = arith.constant 495 : i32
      %76 = tpu.dynamic_rotate %38 by %c495_i32 dim 1 : vector<8x512xf32>, i32 -> vector<8x512xf32>
      %77 = vector.broadcast %75 : vector<1x512xf32> to vector<8x512xf32>
      %78 = arith.mulf %76, %77 : vector<8x512xf32>
      %79 = arith.truncf %78 : vector<8x512xf32> to vector<8x512xbf16>
      %c0_72 = arith.constant 0 : index
      %c0_73 = arith.constant 0 : index
      %c0_74 = arith.constant 0 : index
      %80 = vector.load %arg20[%c0_72, %c0_73, %c0_74] : memref<2x8x512xf32, #tpu.memory_space<vmem>>, vector<1x8x512xf32>
      %81 = vector.shape_cast %80 : vector<1x8x512xf32> to vector<8x512xf32>
      %c0_75 = arith.constant 0 : index
      %c0_76 = arith.constant 0 : index
      %82 = vector.load %arg4[%c0_75, %c0_76] : memref<9x512xf32, #tpu.memory_space<vmem>>, vector<1x512xf32>
      %c17_i32_77 = arith.constant 17 : i32
      %83 = tpu.dynamic_rotate %81 by %c17_i32_77 dim 1 : vector<8x512xf32>, i32 -> vector<8x512xf32>
      %84 = vector.broadcast %82 : vector<1x512xf32> to vector<8x512xf32>
      %85 = arith.mulf %83, %84 : vector<8x512xf32>
      %86 = arith.truncf %85 : vector<8x512xf32> to vector<8x512xbf16>
      %c1_78 = arith.constant 1 : index
      %c0_79 = arith.constant 0 : index
      %87 = vector.load %arg4[%c1_78, %c0_79] : memref<9x512xf32, #tpu.memory_space<vmem>>, vector<1x512xf32>
      %c16_i32_80 = arith.constant 16 : i32
      %88 = tpu.dynamic_rotate %81 by %c16_i32_80 dim 1 : vector<8x512xf32>, i32 -> vector<8x512xf32>
      %89 = vector.broadcast %87 : vector<1x512xf32> to vector<8x512xf32>
      %90 = arith.mulf %88, %89 : vector<8x512xf32>
      %91 = arith.truncf %90 : vector<8x512xf32> to vector<8x512xbf16>
      %c2_81 = arith.constant 2 : index
      %c0_82 = arith.constant 0 : index
      %92 = vector.load %arg4[%c2_81, %c0_82] : memref<9x512xf32, #tpu.memory_space<vmem>>, vector<1x512xf32>
      %c15_i32_83 = arith.constant 15 : i32
      %93 = tpu.dynamic_rotate %81 by %c15_i32_83 dim 1 : vector<8x512xf32>, i32 -> vector<8x512xf32>
      %94 = vector.broadcast %92 : vector<1x512xf32> to vector<8x512xf32>
      %95 = arith.mulf %93, %94 : vector<8x512xf32>
      %96 = arith.truncf %95 : vector<8x512xf32> to vector<8x512xbf16>
      %c3_84 = arith.constant 3 : index
      %c0_85 = arith.constant 0 : index
      %97 = vector.load %arg4[%c3_84, %c0_85] : memref<9x512xf32, #tpu.memory_space<vmem>>, vector<1x512xf32>
      %c1_i32_86 = arith.constant 1 : i32
      %98 = tpu.dynamic_rotate %81 by %c1_i32_86 dim 1 : vector<8x512xf32>, i32 -> vector<8x512xf32>
      %99 = vector.broadcast %97 : vector<1x512xf32> to vector<8x512xf32>
      %100 = arith.mulf %98, %99 : vector<8x512xf32>
      %101 = arith.truncf %100 : vector<8x512xf32> to vector<8x512xbf16>
      %102 = arith.truncf %81 : vector<8x512xf32> to vector<8x512xbf16>
      %c5_87 = arith.constant 5 : index
      %c0_88 = arith.constant 0 : index
      %103 = vector.load %arg4[%c5_87, %c0_88] : memref<9x512xf32, #tpu.memory_space<vmem>>, vector<1x512xf32>
      %c511_i32_89 = arith.constant 511 : i32
      %104 = tpu.dynamic_rotate %81 by %c511_i32_89 dim 1 : vector<8x512xf32>, i32 -> vector<8x512xf32>
      %105 = vector.broadcast %103 : vector<1x512xf32> to vector<8x512xf32>
      %106 = arith.mulf %104, %105 : vector<8x512xf32>
      %107 = arith.truncf %106 : vector<8x512xf32> to vector<8x512xbf16>
      %c6_90 = arith.constant 6 : index
      %c0_91 = arith.constant 0 : index
      %108 = vector.load %arg4[%c6_90, %c0_91] : memref<9x512xf32, #tpu.memory_space<vmem>>, vector<1x512xf32>
      %c497_i32_92 = arith.constant 497 : i32
      %109 = tpu.dynamic_rotate %81 by %c497_i32_92 dim 1 : vector<8x512xf32>, i32 -> vector<8x512xf32>
      %110 = vector.broadcast %108 : vector<1x512xf32> to vector<8x512xf32>
      %111 = arith.mulf %109, %110 : vector<8x512xf32>
      %112 = arith.truncf %111 : vector<8x512xf32> to vector<8x512xbf16>
      %c7_93 = arith.constant 7 : index
      %c0_94 = arith.constant 0 : index
      %113 = vector.load %arg4[%c7_93, %c0_94] : memref<9x512xf32, #tpu.memory_space<vmem>>, vector<1x512xf32>
      %c496_i32_95 = arith.constant 496 : i32
      %114 = tpu.dynamic_rotate %81 by %c496_i32_95 dim 1 : vector<8x512xf32>, i32 -> vector<8x512xf32>
      %115 = vector.broadcast %113 : vector<1x512xf32> to vector<8x512xf32>
      %116 = arith.mulf %114, %115 : vector<8x512xf32>
      %117 = arith.truncf %116 : vector<8x512xf32> to vector<8x512xbf16>
      %c8_96 = arith.constant 8 : index
      %c0_97 = arith.constant 0 : index
      %118 = vector.load %arg4[%c8_96, %c0_97] : memref<9x512xf32, #tpu.memory_space<vmem>>, vector<1x512xf32>
      %c495_i32_98 = arith.constant 495 : i32
      %119 = tpu.dynamic_rotate %81 by %c495_i32_98 dim 1 : vector<8x512xf32>, i32 -> vector<8x512xf32>
      %120 = vector.broadcast %118 : vector<1x512xf32> to vector<8x512xf32>
      %121 = arith.mulf %119, %120 : vector<8x512xf32>
      %122 = arith.truncf %121 : vector<8x512xf32> to vector<8x512xbf16>
      %c0_99 = arith.constant 0 : index
      %c0_100 = arith.constant 0 : index
      %c0_101 = arith.constant 0 : index
      %123 = vector.load %arg18[%c0_99, %c0_100, %c0_101] : memref<3x4x512xf32, #tpu.memory_space<vmem>>, vector<1x4x512xf32>
      %124 = vector.shape_cast %123 : vector<1x4x512xf32> to vector<4x512xf32>
      %c0_102 = arith.constant 0 : index
      %c0_103 = arith.constant 0 : index
      %125 = vector.load %arg4[%c0_102, %c0_103] : memref<9x512xf32, #tpu.memory_space<vmem>>, vector<1x512xf32>
      %c17_i32_104 = arith.constant 17 : i32
      %126 = tpu.dynamic_rotate %124 by %c17_i32_104 dim 1 : vector<4x512xf32>, i32 -> vector<4x512xf32>
      %127 = vector.broadcast %125 : vector<1x512xf32> to vector<4x512xf32>
      %128 = arith.mulf %126, %127 : vector<4x512xf32>
      %129 = arith.truncf %128 : vector<4x512xf32> to vector<4x512xbf16>
      %c1_105 = arith.constant 1 : index
      %c0_106 = arith.constant 0 : index
      %130 = vector.load %arg4[%c1_105, %c0_106] : memref<9x512xf32, #tpu.memory_space<vmem>>, vector<1x512xf32>
      %c16_i32_107 = arith.constant 16 : i32
      %131 = tpu.dynamic_rotate %124 by %c16_i32_107 dim 1 : vector<4x512xf32>, i32 -> vector<4x512xf32>
      %132 = vector.broadcast %130 : vector<1x512xf32> to vector<4x512xf32>
      %133 = arith.mulf %131, %132 : vector<4x512xf32>
      %134 = arith.truncf %133 : vector<4x512xf32> to vector<4x512xbf16>
      %c2_108 = arith.constant 2 : index
      %c0_109 = arith.constant 0 : index
      %135 = vector.load %arg4[%c2_108, %c0_109] : memref<9x512xf32, #tpu.memory_space<vmem>>, vector<1x512xf32>
      %c15_i32_110 = arith.constant 15 : i32
      %136 = tpu.dynamic_rotate %124 by %c15_i32_110 dim 1 : vector<4x512xf32>, i32 -> vector<4x512xf32>
      %137 = vector.broadcast %135 : vector<1x512xf32> to vector<4x512xf32>
      %138 = arith.mulf %136, %137 : vector<4x512xf32>
      %139 = arith.truncf %138 : vector<4x512xf32> to vector<4x512xbf16>
      %c3_111 = arith.constant 3 : index
      %c0_112 = arith.constant 0 : index
      %140 = vector.load %arg4[%c3_111, %c0_112] : memref<9x512xf32, #tpu.memory_space<vmem>>, vector<1x512xf32>
      %c1_i32_113 = arith.constant 1 : i32
      %141 = tpu.dynamic_rotate %124 by %c1_i32_113 dim 1 : vector<4x512xf32>, i32 -> vector<4x512xf32>
      %142 = vector.broadcast %140 : vector<1x512xf32> to vector<4x512xf32>
      %143 = arith.mulf %141, %142 : vector<4x512xf32>
      %144 = arith.truncf %143 : vector<4x512xf32> to vector<4x512xbf16>
      %145 = arith.truncf %124 : vector<4x512xf32> to vector<4x512xbf16>
      %c5_114 = arith.constant 5 : index
      %c0_115 = arith.constant 0 : index
      %146 = vector.load %arg4[%c5_114, %c0_115] : memref<9x512xf32, #tpu.memory_space<vmem>>, vector<1x512xf32>
      %c511_i32_116 = arith.constant 511 : i32
      %147 = tpu.dynamic_rotate %124 by %c511_i32_116 dim 1 : vector<4x512xf32>, i32 -> vector<4x512xf32>
      %148 = vector.broadcast %146 : vector<1x512xf32> to vector<4x512xf32>
      %149 = arith.mulf %147, %148 : vector<4x512xf32>
      %150 = arith.truncf %149 : vector<4x512xf32> to vector<4x512xbf16>
      %c6_117 = arith.constant 6 : index
      %c0_118 = arith.constant 0 : index
      %151 = vector.load %arg4[%c6_117, %c0_118] : memref<9x512xf32, #tpu.memory_space<vmem>>, vector<1x512xf32>
      %c497_i32_119 = arith.constant 497 : i32
      %152 = tpu.dynamic_rotate %124 by %c497_i32_119 dim 1 : vector<4x512xf32>, i32 -> vector<4x512xf32>
      %153 = vector.broadcast %151 : vector<1x512xf32> to vector<4x512xf32>
      %154 = arith.mulf %152, %153 : vector<4x512xf32>
      %155 = arith.truncf %154 : vector<4x512xf32> to vector<4x512xbf16>
      %c7_120 = arith.constant 7 : index
      %c0_121 = arith.constant 0 : index
      %156 = vector.load %arg4[%c7_120, %c0_121] : memref<9x512xf32, #tpu.memory_space<vmem>>, vector<1x512xf32>
      %c496_i32_122 = arith.constant 496 : i32
      %157 = tpu.dynamic_rotate %124 by %c496_i32_122 dim 1 : vector<4x512xf32>, i32 -> vector<4x512xf32>
      %158 = vector.broadcast %156 : vector<1x512xf32> to vector<4x512xf32>
      %159 = arith.mulf %157, %158 : vector<4x512xf32>
      %160 = arith.truncf %159 : vector<4x512xf32> to vector<4x512xbf16>
      %c8_123 = arith.constant 8 : index
      %c0_124 = arith.constant 0 : index
      %161 = vector.load %arg4[%c8_123, %c0_124] : memref<9x512xf32, #tpu.memory_space<vmem>>, vector<1x512xf32>
      %c495_i32_125 = arith.constant 495 : i32
      %162 = tpu.dynamic_rotate %124 by %c495_i32_125 dim 1 : vector<4x512xf32>, i32 -> vector<4x512xf32>
      %163 = vector.broadcast %161 : vector<1x512xf32> to vector<4x512xf32>
      %164 = arith.mulf %162, %163 : vector<4x512xf32>
      %165 = arith.truncf %164 : vector<4x512xf32> to vector<4x512xbf16>
      %c1_126 = arith.constant 1 : index
      %c0_127 = arith.constant 0 : index
      %c0_128 = arith.constant 0 : index
      %166 = vector.load %arg18[%c1_126, %c0_127, %c0_128] : memref<3x4x512xf32, #tpu.memory_space<vmem>>, vector<1x4x512xf32>
      %167 = vector.shape_cast %166 : vector<1x4x512xf32> to vector<4x512xf32>
      %c0_129 = arith.constant 0 : index
      %c0_130 = arith.constant 0 : index
      %168 = vector.load %arg4[%c0_129, %c0_130] : memref<9x512xf32, #tpu.memory_space<vmem>>, vector<1x512xf32>
      %c17_i32_131 = arith.constant 17 : i32
      %169 = tpu.dynamic_rotate %167 by %c17_i32_131 dim 1 : vector<4x512xf32>, i32 -> vector<4x512xf32>
      %170 = vector.broadcast %168 : vector<1x512xf32> to vector<4x512xf32>
      %171 = arith.mulf %169, %170 : vector<4x512xf32>
      %172 = arith.truncf %171 : vector<4x512xf32> to vector<4x512xbf16>
      %c1_132 = arith.constant 1 : index
      %c0_133 = arith.constant 0 : index
      %173 = vector.load %arg4[%c1_132, %c0_133] : memref<9x512xf32, #tpu.memory_space<vmem>>, vector<1x512xf32>
      %c16_i32_134 = arith.constant 16 : i32
      %174 = tpu.dynamic_rotate %167 by %c16_i32_134 dim 1 : vector<4x512xf32>, i32 -> vector<4x512xf32>
      %175 = vector.broadcast %173 : vector<1x512xf32> to vector<4x512xf32>
      %176 = arith.mulf %174, %175 : vector<4x512xf32>
      %177 = arith.truncf %176 : vector<4x512xf32> to vector<4x512xbf16>
      %c2_135 = arith.constant 2 : index
      %c0_136 = arith.constant 0 : index
      %178 = vector.load %arg4[%c2_135, %c0_136] : memref<9x512xf32, #tpu.memory_space<vmem>>, vector<1x512xf32>
      %c15_i32_137 = arith.constant 15 : i32
      %179 = tpu.dynamic_rotate %167 by %c15_i32_137 dim 1 : vector<4x512xf32>, i32 -> vector<4x512xf32>
      %180 = vector.broadcast %178 : vector<1x512xf32> to vector<4x512xf32>
      %181 = arith.mulf %179, %180 : vector<4x512xf32>
      %182 = arith.truncf %181 : vector<4x512xf32> to vector<4x512xbf16>
      %c3_138 = arith.constant 3 : index
      %c0_139 = arith.constant 0 : index
      %183 = vector.load %arg4[%c3_138, %c0_139] : memref<9x512xf32, #tpu.memory_space<vmem>>, vector<1x512xf32>
      %c1_i32_140 = arith.constant 1 : i32
      %184 = tpu.dynamic_rotate %167 by %c1_i32_140 dim 1 : vector<4x512xf32>, i32 -> vector<4x512xf32>
      %185 = vector.broadcast %183 : vector<1x512xf32> to vector<4x512xf32>
      %186 = arith.mulf %184, %185 : vector<4x512xf32>
      %187 = arith.truncf %186 : vector<4x512xf32> to vector<4x512xbf16>
      %188 = arith.truncf %167 : vector<4x512xf32> to vector<4x512xbf16>
      %c5_141 = arith.constant 5 : index
      %c0_142 = arith.constant 0 : index
      %189 = vector.load %arg4[%c5_141, %c0_142] : memref<9x512xf32, #tpu.memory_space<vmem>>, vector<1x512xf32>
      %c511_i32_143 = arith.constant 511 : i32
      %190 = tpu.dynamic_rotate %167 by %c511_i32_143 dim 1 : vector<4x512xf32>, i32 -> vector<4x512xf32>
      %191 = vector.broadcast %189 : vector<1x512xf32> to vector<4x512xf32>
      %192 = arith.mulf %190, %191 : vector<4x512xf32>
      %193 = arith.truncf %192 : vector<4x512xf32> to vector<4x512xbf16>
      %c6_144 = arith.constant 6 : index
      %c0_145 = arith.constant 0 : index
      %194 = vector.load %arg4[%c6_144, %c0_145] : memref<9x512xf32, #tpu.memory_space<vmem>>, vector<1x512xf32>
      %c497_i32_146 = arith.constant 497 : i32
      %195 = tpu.dynamic_rotate %167 by %c497_i32_146 dim 1 : vector<4x512xf32>, i32 -> vector<4x512xf32>
      %196 = vector.broadcast %194 : vector<1x512xf32> to vector<4x512xf32>
      %197 = arith.mulf %195, %196 : vector<4x512xf32>
      %198 = arith.truncf %197 : vector<4x512xf32> to vector<4x512xbf16>
      %c7_147 = arith.constant 7 : index
      %c0_148 = arith.constant 0 : index
      %199 = vector.load %arg4[%c7_147, %c0_148] : memref<9x512xf32, #tpu.memory_space<vmem>>, vector<1x512xf32>
      %c496_i32_149 = arith.constant 496 : i32
      %200 = tpu.dynamic_rotate %167 by %c496_i32_149 dim 1 : vector<4x512xf32>, i32 -> vector<4x512xf32>
      %201 = vector.broadcast %199 : vector<1x512xf32> to vector<4x512xf32>
      %202 = arith.mulf %200, %201 : vector<4x512xf32>
      %203 = arith.truncf %202 : vector<4x512xf32> to vector<4x512xbf16>
      %c8_150 = arith.constant 8 : index
      %c0_151 = arith.constant 0 : index
      %204 = vector.load %arg4[%c8_150, %c0_151] : memref<9x512xf32, #tpu.memory_space<vmem>>, vector<1x512xf32>
      %c495_i32_152 = arith.constant 495 : i32
      %205 = tpu.dynamic_rotate %167 by %c495_i32_152 dim 1 : vector<4x512xf32>, i32 -> vector<4x512xf32>
      %206 = vector.broadcast %204 : vector<1x512xf32> to vector<4x512xf32>
      %207 = arith.mulf %205, %206 : vector<4x512xf32>
      %208 = arith.truncf %207 : vector<4x512xf32> to vector<4x512xbf16>
      %c2_153 = arith.constant 2 : index
      %c0_154 = arith.constant 0 : index
      %c0_155 = arith.constant 0 : index
      %209 = vector.load %arg18[%c2_153, %c0_154, %c0_155] : memref<3x4x512xf32, #tpu.memory_space<vmem>>, vector<1x4x512xf32>
      %210 = vector.shape_cast %209 : vector<1x4x512xf32> to vector<4x512xf32>
      %c0_156 = arith.constant 0 : index
      %c0_157 = arith.constant 0 : index
      %211 = vector.load %arg4[%c0_156, %c0_157] : memref<9x512xf32, #tpu.memory_space<vmem>>, vector<1x512xf32>
      %c17_i32_158 = arith.constant 17 : i32
      %212 = tpu.dynamic_rotate %210 by %c17_i32_158 dim 1 : vector<4x512xf32>, i32 -> vector<4x512xf32>
      %213 = vector.broadcast %211 : vector<1x512xf32> to vector<4x512xf32>
      %214 = arith.mulf %212, %213 : vector<4x512xf32>
      %215 = arith.truncf %214 : vector<4x512xf32> to vector<4x512xbf16>
      %c1_159 = arith.constant 1 : index
      %c0_160 = arith.constant 0 : index
      %216 = vector.load %arg4[%c1_159, %c0_160] : memref<9x512xf32, #tpu.memory_space<vmem>>, vector<1x512xf32>
      %c16_i32_161 = arith.constant 16 : i32
      %217 = tpu.dynamic_rotate %210 by %c16_i32_161 dim 1 : vector<4x512xf32>, i32 -> vector<4x512xf32>
      %218 = vector.broadcast %216 : vector<1x512xf32> to vector<4x512xf32>
      %219 = arith.mulf %217, %218 : vector<4x512xf32>
      %220 = arith.truncf %219 : vector<4x512xf32> to vector<4x512xbf16>
      %c2_162 = arith.constant 2 : index
      %c0_163 = arith.constant 0 : index
      %221 = vector.load %arg4[%c2_162, %c0_163] : memref<9x512xf32, #tpu.memory_space<vmem>>, vector<1x512xf32>
      %c15_i32_164 = arith.constant 15 : i32
      %222 = tpu.dynamic_rotate %210 by %c15_i32_164 dim 1 : vector<4x512xf32>, i32 -> vector<4x512xf32>
      %223 = vector.broadcast %221 : vector<1x512xf32> to vector<4x512xf32>
      %224 = arith.mulf %222, %223 : vector<4x512xf32>
      %225 = arith.truncf %224 : vector<4x512xf32> to vector<4x512xbf16>
      %c3_165 = arith.constant 3 : index
      %c0_166 = arith.constant 0 : index
      %226 = vector.load %arg4[%c3_165, %c0_166] : memref<9x512xf32, #tpu.memory_space<vmem>>, vector<1x512xf32>
      %c1_i32_167 = arith.constant 1 : i32
      %227 = tpu.dynamic_rotate %210 by %c1_i32_167 dim 1 : vector<4x512xf32>, i32 -> vector<4x512xf32>
      %228 = vector.broadcast %226 : vector<1x512xf32> to vector<4x512xf32>
      %229 = arith.mulf %227, %228 : vector<4x512xf32>
      %230 = arith.truncf %229 : vector<4x512xf32> to vector<4x512xbf16>
      %231 = arith.truncf %210 : vector<4x512xf32> to vector<4x512xbf16>
      %c5_168 = arith.constant 5 : index
      %c0_169 = arith.constant 0 : index
      %232 = vector.load %arg4[%c5_168, %c0_169] : memref<9x512xf32, #tpu.memory_space<vmem>>, vector<1x512xf32>
      %c511_i32_170 = arith.constant 511 : i32
      %233 = tpu.dynamic_rotate %210 by %c511_i32_170 dim 1 : vector<4x512xf32>, i32 -> vector<4x512xf32>
      %234 = vector.broadcast %232 : vector<1x512xf32> to vector<4x512xf32>
      %235 = arith.mulf %233, %234 : vector<4x512xf32>
      %236 = arith.truncf %235 : vector<4x512xf32> to vector<4x512xbf16>
      %c6_171 = arith.constant 6 : index
      %c0_172 = arith.constant 0 : index
      %237 = vector.load %arg4[%c6_171, %c0_172] : memref<9x512xf32, #tpu.memory_space<vmem>>, vector<1x512xf32>
      %c497_i32_173 = arith.constant 497 : i32
      %238 = tpu.dynamic_rotate %210 by %c497_i32_173 dim 1 : vector<4x512xf32>, i32 -> vector<4x512xf32>
      %239 = vector.broadcast %237 : vector<1x512xf32> to vector<4x512xf32>
      %240 = arith.mulf %238, %239 : vector<4x512xf32>
      %241 = arith.truncf %240 : vector<4x512xf32> to vector<4x512xbf16>
      %c7_174 = arith.constant 7 : index
      %c0_175 = arith.constant 0 : index
      %242 = vector.load %arg4[%c7_174, %c0_175] : memref<9x512xf32, #tpu.memory_space<vmem>>, vector<1x512xf32>
      %c496_i32_176 = arith.constant 496 : i32
      %243 = tpu.dynamic_rotate %210 by %c496_i32_176 dim 1 : vector<4x512xf32>, i32 -> vector<4x512xf32>
      %244 = vector.broadcast %242 : vector<1x512xf32> to vector<4x512xf32>
      %245 = arith.mulf %243, %244 : vector<4x512xf32>
      %246 = arith.truncf %245 : vector<4x512xf32> to vector<4x512xbf16>
      %c8_177 = arith.constant 8 : index
      %c0_178 = arith.constant 0 : index
      %247 = vector.load %arg4[%c8_177, %c0_178] : memref<9x512xf32, #tpu.memory_space<vmem>>, vector<1x512xf32>
      %c495_i32_179 = arith.constant 495 : i32
      %248 = tpu.dynamic_rotate %210 by %c495_i32_179 dim 1 : vector<4x512xf32>, i32 -> vector<4x512xf32>
      %249 = vector.broadcast %247 : vector<1x512xf32> to vector<4x512xf32>
      %250 = arith.mulf %248, %249 : vector<4x512xf32>
      %251 = arith.truncf %250 : vector<4x512xf32> to vector<4x512xbf16>
      %252 = tpu.concatenate %129, %134, %139, %144, %145, %150, %155, %160, %165, %172, %177, %182, %187, %188, %193, %198 in 0 : vector<4x512xbf16>, vector<4x512xbf16>, vector<4x512xbf16>, vector<4x512xbf16>, vector<4x512xbf16>, vector<4x512xbf16>, vector<4x512xbf16>, vector<4x512xbf16>, vector<4x512xbf16>, vector<4x512xbf16>, vector<4x512xbf16>, vector<4x512xbf16>, vector<4x512xbf16>, vector<4x512xbf16>, vector<4x512xbf16>, vector<4x512xbf16> -> vector<64x512xbf16>
      %253 = tpu.concatenate %203, %208, %215, %220, %225, %230, %231, %236, %241, %246, %251, %43, %48, %53, %58, %59 in 0 : vector<4x512xbf16>, vector<4x512xbf16>, vector<4x512xbf16>, vector<4x512xbf16>, vector<4x512xbf16>, vector<4x512xbf16>, vector<4x512xbf16>, vector<4x512xbf16>, vector<4x512xbf16>, vector<4x512xbf16>, vector<4x512xbf16>, vector<8x512xbf16>, vector<8x512xbf16>, vector<8x512xbf16>, vector<8x512xbf16>, vector<8x512xbf16> -> vector<84x512xbf16>
      %254 = tpu.concatenate %64, %69, %74, %79, %86, %91, %96, %101, %102, %107, %112, %117, %122 in 0 : vector<8x512xbf16>, vector<8x512xbf16>, vector<8x512xbf16>, vector<8x512xbf16>, vector<8x512xbf16>, vector<8x512xbf16>, vector<8x512xbf16>, vector<8x512xbf16>, vector<8x512xbf16>, vector<8x512xbf16>, vector<8x512xbf16>, vector<8x512xbf16>, vector<8x512xbf16> -> vector<104x512xbf16>
      %255 = tpu.concatenate %252, %253, %254 in 0 : vector<64x512xbf16>, vector<84x512xbf16>, vector<104x512xbf16> -> vector<252x512xbf16>
      %c0_180 = arith.constant 0 : index
      %c0_181 = arith.constant 0 : index
      %256 = vector.load %arg5[%c0_180, %c0_181] : memref<12x252xbf16, #tpu.memory_space<vmem>>, vector<12x252xbf16>
      %cst_182 = arith.constant dense<0.000000e+00> : vector<12x512xf32>
      %257 = tpu.matmul %256, %255, %cst_182 {dimension_numbers = #tpu.dot_dimension_numbers<[1], [0], [0], [1], [0, 0, 1, 1], [], []>} : vector<12x252xbf16>, vector<252x512xbf16>, vector<12x512xf32> -> vector<12x512xf32>
      %c0_183 = arith.constant 0 : index
      %c0_184 = arith.constant 0 : index
      %258 = vector.load %arg6[%c0_183, %c0_184] : memref<12x1xf32, #tpu.memory_space<vmem>>, vector<12x1xf32>
      %259 = vector.broadcast %258 : vector<12x1xf32> to vector<12x512xf32>
      %260 = arith.addf %257, %259 : vector<12x512xf32>
      %261 = math.tanh %260 : vector<12x512xf32>
      %262 = vector.extract_strided_slice %261 {offsets = [0, 0], sizes = [4, 512], strides = [1, 1]} : vector<12x512xf32> to vector<4x512xf32>
      %cst_185 = arith.constant dense<0.000000e+00> : vector<512xf32>
      %263 = vector.multi_reduction <add>, %262, %cst_185 [0] : vector<4x512xf32> to vector<512xf32>
      %264 = vector.shape_cast %263 : vector<512xf32> to vector<1x512xf32>
      %265 = vector.extract_strided_slice %261 {offsets = [4, 0], sizes = [4, 512], strides = [1, 1]} : vector<12x512xf32> to vector<4x512xf32>
      %cst_186 = arith.constant dense<0.000000e+00> : vector<512xf32>
      %266 = vector.multi_reduction <add>, %265, %cst_186 [0] : vector<4x512xf32> to vector<512xf32>
      %267 = vector.shape_cast %266 : vector<512xf32> to vector<1x512xf32>
      %268 = vector.extract_strided_slice %261 {offsets = [8, 0], sizes = [4, 512], strides = [1, 1]} : vector<12x512xf32> to vector<4x512xf32>
      %cst_187 = arith.constant dense<0.000000e+00> : vector<512xf32>
      %269 = vector.multi_reduction <add>, %268, %cst_187 [0] : vector<4x512xf32> to vector<512xf32>
      %270 = vector.shape_cast %269 : vector<512xf32> to vector<1x512xf32>
      %271 = tpu.concatenate %264, %267, %270 in 0 : vector<1x512xf32>, vector<1x512xf32>, vector<1x512xf32> -> vector<3x512xf32>
      %c0_188 = arith.constant 0 : index
      %272 = arith.index_cast %36 : i32 to index
      %c0_189 = arith.constant 0 : index
      %273 = vector.load %arg18[%c0_188, %272, %c0_189] : memref<3x4x512xf32, #tpu.memory_space<vmem>>, vector<1x1x512xf32>
      %274 = vector.shape_cast %273 : vector<1x1x512xf32> to vector<1x512xf32>
      %c1_190 = arith.constant 1 : index
      %275 = arith.index_cast %36 : i32 to index
      %c0_191 = arith.constant 0 : index
      %276 = vector.load %arg18[%c1_190, %275, %c0_191] : memref<3x4x512xf32, #tpu.memory_space<vmem>>, vector<1x1x512xf32>
      %277 = vector.shape_cast %276 : vector<1x1x512xf32> to vector<1x512xf32>
      %c2_192 = arith.constant 2 : index
      %278 = arith.index_cast %36 : i32 to index
      %c0_193 = arith.constant 0 : index
      %279 = vector.load %arg18[%c2_192, %278, %c0_193] : memref<3x4x512xf32, #tpu.memory_space<vmem>>, vector<1x1x512xf32>
      %280 = vector.shape_cast %279 : vector<1x1x512xf32> to vector<1x512xf32>
      %281 = tpu.concatenate %274, %277, %280 in 0 : vector<1x512xf32>, vector<1x512xf32>, vector<1x512xf32> -> vector<3x512xf32>
      %282 = tpu.iota {dimensions = array<i32: 1>} : vector<1x512xi32>
      %cst_194 = arith.constant 0.000000e+00 : f32
      %283 = vector.broadcast %cst_194 : f32 to vector<3x512xf32>
      %284 = vector.extract_strided_slice %271 {offsets = [0, 0], sizes = [3, 256], strides = [1, 1]} : vector<3x512xf32> to vector<3x256xf32>
      %cst_195 = arith.constant dense<0.000000e+00> : vector<3xf32>
      %285 = vector.multi_reduction <add>, %284, %cst_195 [1] : vector<3x256xf32> to vector<3xf32>
      %286 = vector.shape_cast %285 : vector<3xf32> to vector<3x1xf32>
      %cst_196 = arith.constant 9.765625E-4 : f32
      %287 = vector.broadcast %cst_196 : f32 to vector<3x1xf32>
      %288 = arith.mulf %286, %287 : vector<3x1xf32>
      %cst_197 = arith.constant dense<0xFF800000> : vector<1xf32>
      %289 = vector.multi_reduction <maximumf>, %288, %cst_197 [0] : vector<3x1xf32> to vector<1xf32>
      %290 = vector.shape_cast %289 : vector<1xf32> to vector<1x1xf32>
      %291 = vector.broadcast %290 : vector<1x1xf32> to vector<3x1xf32>
      %292 = arith.subf %288, %291 : vector<3x1xf32>
      %293 = math.exp %292 : vector<3x1xf32>
      %cst_198 = arith.constant dense<0.000000e+00> : vector<1xf32>
      %294 = vector.multi_reduction <add>, %293, %cst_198 [0] : vector<3x1xf32> to vector<1xf32>
      %295 = vector.shape_cast %294 : vector<1xf32> to vector<1x1xf32>
      %296 = vector.broadcast %295 : vector<1x1xf32> to vector<3x1xf32>
      %297 = arith.divf %293, %296 : vector<3x1xf32>
      %c0_i32_199 = arith.constant 0 : i32
      %298 = vector.broadcast %c0_i32_199 : i32 to vector<1x512xi32>
      %299 = arith.cmpi sge, %282, %298 : vector<1x512xi32>
      %c256_i32 = arith.constant 256 : i32
      %300 = vector.broadcast %c256_i32 : i32 to vector<1x512xi32>
      %301 = arith.cmpi slt, %282, %300 : vector<1x512xi32>
      %302 = arith.andi %299, %301 : vector<1x512xi1>
      %303 = arith.extui %302 : vector<1x512xi1> to vector<1x512xi32>
      %304 = arith.sitofp %303 : vector<1x512xi32> to vector<1x512xf32>
      %305 = vector.broadcast %297 : vector<3x1xf32> to vector<3x512xf32>
      %306 = vector.broadcast %304 : vector<1x512xf32> to vector<3x512xf32>
      %307 = arith.mulf %305, %306 : vector<3x512xf32>
      %308 = arith.addf %283, %307 : vector<3x512xf32>
      %309 = vector.extract_strided_slice %271 {offsets = [0, 256], sizes = [3, 256], strides = [1, 1]} : vector<3x512xf32> to vector<3x256xf32>
      %cst_200 = arith.constant dense<0.000000e+00> : vector<3xf32>
      %310 = vector.multi_reduction <add>, %309, %cst_200 [1] : vector<3x256xf32> to vector<3xf32>
      %311 = vector.shape_cast %310 : vector<3xf32> to vector<3x1xf32>
      %cst_201 = arith.constant 9.765625E-4 : f32
      %312 = vector.broadcast %cst_201 : f32 to vector<3x1xf32>
      %313 = arith.mulf %311, %312 : vector<3x1xf32>
      %cst_202 = arith.constant dense<0xFF800000> : vector<1xf32>
      %314 = vector.multi_reduction <maximumf>, %313, %cst_202 [0] : vector<3x1xf32> to vector<1xf32>
      %315 = vector.shape_cast %314 : vector<1xf32> to vector<1x1xf32>
      %316 = vector.broadcast %315 : vector<1x1xf32> to vector<3x1xf32>
      %317 = arith.subf %313, %316 : vector<3x1xf32>
      %318 = math.exp %317 : vector<3x1xf32>
      %cst_203 = arith.constant dense<0.000000e+00> : vector<1xf32>
      %319 = vector.multi_reduction <add>, %318, %cst_203 [0] : vector<3x1xf32> to vector<1xf32>
      %320 = vector.shape_cast %319 : vector<1xf32> to vector<1x1xf32>
      %321 = vector.broadcast %320 : vector<1x1xf32> to vector<3x1xf32>
      %322 = arith.divf %318, %321 : vector<3x1xf32>
      %c256_i32_204 = arith.constant 256 : i32
      %323 = vector.broadcast %c256_i32_204 : i32 to vector<1x512xi32>
      %324 = arith.cmpi sge, %282, %323 : vector<1x512xi32>
      %c512_i32 = arith.constant 512 : i32
      %325 = vector.broadcast %c512_i32 : i32 to vector<1x512xi32>
      %326 = arith.cmpi slt, %282, %325 : vector<1x512xi32>
      %327 = arith.andi %324, %326 : vector<1x512xi1>
      %328 = arith.extui %327 : vector<1x512xi1> to vector<1x512xi32>
      %329 = arith.sitofp %328 : vector<1x512xi32> to vector<1x512xf32>
      %330 = vector.broadcast %322 : vector<3x1xf32> to vector<3x512xf32>
      %331 = vector.broadcast %329 : vector<1x512xf32> to vector<3x512xf32>
      %332 = arith.mulf %330, %331 : vector<3x512xf32>
      %333 = arith.addf %308, %332 : vector<3x512xf32>
      %334 = arith.mulf %281, %333 : vector<3x512xf32>
      %335 = vector.extract_strided_slice %334 {offsets = [0, 0], sizes = [1, 512], strides = [1, 1]} : vector<3x512xf32> to vector<1x512xf32>
      %336 = vector.shape_cast %335 : vector<1x512xf32> to vector<1x1x512xf32>
      %c0_205 = arith.constant 0 : index
      %337 = arith.index_cast %36 : i32 to index
      %c0_206 = arith.constant 0 : index
      %338 = vector.load %arg18[%c0_205, %337, %c0_206] : memref<3x4x512xf32, #tpu.memory_space<vmem>>, vector<1x1x512xf32>
      tpu.vector_store %arg18[%c0_205, %337, %c0_206], %336 {strides = array<i32>} : memref<3x4x512xf32, #tpu.memory_space<vmem>>, vector<1x1x512xf32>,
      %339 = vector.extract_strided_slice %334 {offsets = [1, 0], sizes = [1, 512], strides = [1, 1]} : vector<3x512xf32> to vector<1x512xf32>
      %340 = vector.shape_cast %339 : vector<1x512xf32> to vector<1x1x512xf32>
      %c1_207 = arith.constant 1 : index
      %341 = arith.index_cast %36 : i32 to index
      %c0_208 = arith.constant 0 : index
      %342 = vector.load %arg18[%c1_207, %341, %c0_208] : memref<3x4x512xf32, #tpu.memory_space<vmem>>, vector<1x1x512xf32>
      tpu.vector_store %arg18[%c1_207, %341, %c0_208], %340 {strides = array<i32>} : memref<3x4x512xf32, #tpu.memory_space<vmem>>, vector<1x1x512xf32>,
      %343 = vector.extract_strided_slice %334 {offsets = [2, 0], sizes = [1, 512], strides = [1, 1]} : vector<3x512xf32> to vector<1x512xf32>
      %344 = vector.shape_cast %343 : vector<1x512xf32> to vector<1x1x512xf32>
      %c2_209 = arith.constant 2 : index
      %345 = arith.index_cast %36 : i32 to index
      %c0_210 = arith.constant 0 : index
      %346 = vector.load %arg18[%c2_209, %345, %c0_210] : memref<3x4x512xf32, #tpu.memory_space<vmem>>, vector<1x1x512xf32>
      tpu.vector_store %arg18[%c2_209, %345, %c0_210], %344 {strides = array<i32>} : memref<3x4x512xf32, #tpu.memory_space<vmem>>, vector<1x1x512xf32>,
      %c0_211 = arith.constant 0 : index
      %c0_212 = arith.constant 0 : index
      %347 = vector.load %arg4[%c0_211, %c0_212] : memref<9x512xf32, #tpu.memory_space<vmem>>, vector<1x512xf32>
      %c17_i32_213 = arith.constant 17 : i32
      %348 = tpu.dynamic_rotate %334 by %c17_i32_213 dim 1 : vector<3x512xf32>, i32 -> vector<3x512xf32>
      %349 = vector.broadcast %347 : vector<1x512xf32> to vector<3x512xf32>
      %350 = arith.mulf %348, %349 : vector<3x512xf32>
      %351 = arith.truncf %350 : vector<3x512xf32> to vector<3x512xbf16>
      %c1_214 = arith.constant 1 : index
      %c0_215 = arith.constant 0 : index
      %352 = vector.load %arg4[%c1_214, %c0_215] : memref<9x512xf32, #tpu.memory_space<vmem>>, vector<1x512xf32>
      %c16_i32_216 = arith.constant 16 : i32
      %353 = tpu.dynamic_rotate %334 by %c16_i32_216 dim 1 : vector<3x512xf32>, i32 -> vector<3x512xf32>
      %354 = vector.broadcast %352 : vector<1x512xf32> to vector<3x512xf32>
      %355 = arith.mulf %353, %354 : vector<3x512xf32>
      %356 = arith.truncf %355 : vector<3x512xf32> to vector<3x512xbf16>
      %c2_217 = arith.constant 2 : index
      %c0_218 = arith.constant 0 : index
      %357 = vector.load %arg4[%c2_217, %c0_218] : memref<9x512xf32, #tpu.memory_space<vmem>>, vector<1x512xf32>
      %c15_i32_219 = arith.constant 15 : i32
      %358 = tpu.dynamic_rotate %334 by %c15_i32_219 dim 1 : vector<3x512xf32>, i32 -> vector<3x512xf32>
      %359 = vector.broadcast %357 : vector<1x512xf32> to vector<3x512xf32>
      %360 = arith.mulf %358, %359 : vector<3x512xf32>
      %361 = arith.truncf %360 : vector<3x512xf32> to vector<3x512xbf16>
      %c3_220 = arith.constant 3 : index
      %c0_221 = arith.constant 0 : index
      %362 = vector.load %arg4[%c3_220, %c0_221] : memref<9x512xf32, #tpu.memory_space<vmem>>, vector<1x512xf32>
      %c1_i32_222 = arith.constant 1 : i32
      %363 = tpu.dynamic_rotate %334 by %c1_i32_222 dim 1 : vector<3x512xf32>, i32 -> vector<3x512xf32>
      %364 = vector.broadcast %362 : vector<1x512xf32> to vector<3x512xf32>
      %365 = arith.mulf %363, %364 : vector<3x512xf32>
      %366 = arith.truncf %365 : vector<3x512xf32> to vector<3x512xbf16>
      %367 = arith.truncf %334 : vector<3x512xf32> to vector<3x512xbf16>
      %c5_223 = arith.constant 5 : index
      %c0_224 = arith.constant 0 : index
      %368 = vector.load %arg4[%c5_223, %c0_224] : memref<9x512xf32, #tpu.memory_space<vmem>>, vector<1x512xf32>
      %c511_i32_225 = arith.constant 511 : i32
      %369 = tpu.dynamic_rotate %334 by %c511_i32_225 dim 1 : vector<3x512xf32>, i32 -> vector<3x512xf32>
      %370 = vector.broadcast %368 : vector<1x512xf32> to vector<3x512xf32>
      %371 = arith.mulf %369, %370 : vector<3x512xf32>
      %372 = arith.truncf %371 : vector<3x512xf32> to vector<3x512xbf16>
      %c6_226 = arith.constant 6 : index
      %c0_227 = arith.constant 0 : index
      %373 = vector.load %arg4[%c6_226, %c0_227] : memref<9x512xf32, #tpu.memory_space<vmem>>, vector<1x512xf32>
      %c497_i32_228 = arith.constant 497 : i32
      %374 = tpu.dynamic_rotate %334 by %c497_i32_228 dim 1 : vector<3x512xf32>, i32 -> vector<3x512xf32>
      %375 = vector.broadcast %373 : vector<1x512xf32> to vector<3x512xf32>
      %376 = arith.mulf %374, %375 : vector<3x512xf32>
      %377 = arith.truncf %376 : vector<3x512xf32> to vector<3x512xbf16>
      %c7_229 = arith.constant 7 : index
      %c0_230 = arith.constant 0 : index
      %378 = vector.load %arg4[%c7_229, %c0_230] : memref<9x512xf32, #tpu.memory_space<vmem>>, vector<1x512xf32>
      %c496_i32_231 = arith.constant 496 : i32
      %379 = tpu.dynamic_rotate %334 by %c496_i32_231 dim 1 : vector<3x512xf32>, i32 -> vector<3x512xf32>
      %380 = vector.broadcast %378 : vector<1x512xf32> to vector<3x512xf32>
      %381 = arith.mulf %379, %380 : vector<3x512xf32>
      %382 = arith.truncf %381 : vector<3x512xf32> to vector<3x512xbf16>
      %c8_232 = arith.constant 8 : index
      %c0_233 = arith.constant 0 : index
      %383 = vector.load %arg4[%c8_232, %c0_233] : memref<9x512xf32, #tpu.memory_space<vmem>>, vector<1x512xf32>
      %c495_i32_234 = arith.constant 495 : i32
      %384 = tpu.dynamic_rotate %334 by %c495_i32_234 dim 1 : vector<3x512xf32>, i32 -> vector<3x512xf32>
      %385 = vector.broadcast %383 : vector<1x512xf32> to vector<3x512xf32>
      %386 = arith.mulf %384, %385 : vector<3x512xf32>
      %387 = arith.truncf %386 : vector<3x512xf32> to vector<3x512xbf16>
      %388 = tpu.concatenate %351, %356, %361, %366, %367, %372, %377, %382, %387, %43, %48, %53, %58, %59, %64, %69 in 0 : vector<3x512xbf16>, vector<3x512xbf16>, vector<3x512xbf16>, vector<3x512xbf16>, vector<3x512xbf16>, vector<3x512xbf16>, vector<3x512xbf16>, vector<3x512xbf16>, vector<3x512xbf16>, vector<8x512xbf16>, vector<8x512xbf16>, vector<8x512xbf16>, vector<8x512xbf16>, vector<8x512xbf16>, vector<8x512xbf16>, vector<8x512xbf16> -> vector<83x512xbf16>
      %389 = tpu.concatenate %74, %79 in 0 : vector<8x512xbf16>, vector<8x512xbf16> -> vector<16x512xbf16>
      %390 = tpu.concatenate %388, %389 in 0 : vector<83x512xbf16>, vector<16x512xbf16> -> vector<99x512xbf16>
      %c0_235 = arith.constant 0 : index
      %c0_236 = arith.constant 0 : index
      %391 = vector.load %arg7[%c0_235, %c0_236] : memref<32x99xbf16, #tpu.memory_space<vmem>>, vector<32x99xbf16>
      %cst_237 = arith.constant dense<0.000000e+00> : vector<32x512xf32>
      %392 = tpu.matmul %391, %390, %cst_237 {dimension_numbers = #tpu.dot_dimension_numbers<[1], [0], [0], [1], [0, 0, 1, 1], [], []>} : vector<32x99xbf16>, vector<99x512xbf16>, vector<32x512xf32> -> vector<32x512xf32>
      %c0_238 = arith.constant 0 : index
      %c0_239 = arith.constant 0 : index
      %393 = vector.load %arg8[%c0_238, %c0_239] : memref<32x1xf32, #tpu.memory_space<vmem>>, vector<32x1xf32>
      %394 = vector.broadcast %393 : vector<32x1xf32> to vector<32x512xf32>
      %395 = arith.addf %392, %394 : vector<32x512xf32>
      %c0_240 = arith.constant 0 : index
      %c0_241 = arith.constant 0 : index
      %c0_242 = arith.constant 0 : index
      %396 = vector.load %arg20[%c0_240, %c0_241, %c0_242] : memref<2x8x512xf32, #tpu.memory_space<vmem>>, vector<1x8x512xf32>
      %397 = vector.shape_cast %396 : vector<1x8x512xf32> to vector<8x512xf32>
      %398 = vector.extract_strided_slice %395 {offsets = [0, 0], sizes = [8, 512], strides = [1, 1]} : vector<32x512xf32> to vector<8x512xf32>
      %399 = arith.negf %398 : vector<8x512xf32>
      %400 = math.exp %399 : vector<8x512xf32>
      %cst_243 = arith.constant 1.000000e+00 : f32
      %401 = vector.broadcast %cst_243 : f32 to vector<8x512xf32>
      %402 = arith.addf %401, %400 : vector<8x512xf32>
      %403 = arith.divf %401, %402 : vector<8x512xf32>
      %404 = vector.extract_strided_slice %395 {offsets = [8, 0], sizes = [8, 512], strides = [1, 1]} : vector<32x512xf32> to vector<8x512xf32>
      %405 = arith.negf %404 : vector<8x512xf32>
      %406 = math.exp %405 : vector<8x512xf32>
      %cst_244 = arith.constant 1.000000e+00 : f32
      %407 = vector.broadcast %cst_244 : f32 to vector<8x512xf32>
      %408 = arith.addf %407, %406 : vector<8x512xf32>
      %409 = arith.divf %407, %408 : vector<8x512xf32>
      %410 = vector.extract_strided_slice %395 {offsets = [16, 0], sizes = [8, 512], strides = [1, 1]} : vector<32x512xf32> to vector<8x512xf32>
      %411 = arith.negf %410 : vector<8x512xf32>
      %412 = math.exp %411 : vector<8x512xf32>
      %cst_245 = arith.constant 1.000000e+00 : f32
      %413 = vector.broadcast %cst_245 : f32 to vector<8x512xf32>
      %414 = arith.addf %413, %412 : vector<8x512xf32>
      %415 = arith.divf %413, %414 : vector<8x512xf32>
      %416 = vector.extract_strided_slice %395 {offsets = [24, 0], sizes = [8, 512], strides = [1, 1]} : vector<32x512xf32> to vector<8x512xf32>
      %417 = math.tanh %416 : vector<8x512xf32>
      %418 = arith.mulf %409, %397 : vector<8x512xf32>
      %419 = arith.mulf %403, %417 : vector<8x512xf32>
      %420 = arith.addf %418, %419 : vector<8x512xf32>
      %421 = math.tanh %420 : vector<8x512xf32>
      %422 = arith.mulf %415, %421 : vector<8x512xf32>
      %c0_246 = arith.constant 0 : index
      %c0_247 = arith.constant 0 : index
      %c0_248 = arith.constant 0 : index
      %423 = vector.load %arg19[%c0_246, %c0_247, %c0_248] : memref<2x8x512xf32, #tpu.memory_space<vmem>>, vector<1x8x512xf32>
      %424 = vector.shape_cast %423 : vector<1x8x512xf32> to vector<8x512xf32>
      %425 = vector.shape_cast %422 : vector<8x512xf32> to vector<1x8x512xf32>
      tpu.vector_store %arg19[%c0_246, %c0_247, %c0_248], %425 {strides = array<i32>} : memref<2x8x512xf32, #tpu.memory_space<vmem>>, vector<1x8x512xf32>,
      %c0_249 = arith.constant 0 : index
      %c0_250 = arith.constant 0 : index
      %c0_251 = arith.constant 0 : index
      %426 = vector.load %arg20[%c0_249, %c0_250, %c0_251] : memref<2x8x512xf32, #tpu.memory_space<vmem>>, vector<1x8x512xf32>
      %427 = vector.shape_cast %426 : vector<1x8x512xf32> to vector<8x512xf32>
      %428 = vector.shape_cast %420 : vector<8x512xf32> to vector<1x8x512xf32>
      tpu.vector_store %arg20[%c0_249, %c0_250, %c0_251], %428 {strides = array<i32>} : memref<2x8x512xf32, #tpu.memory_space<vmem>>, vector<1x8x512xf32>,
      %c0_252 = arith.constant 0 : index
      %c0_253 = arith.constant 0 : index
      %c0_254 = arith.constant 0 : index
      %429 = vector.load %arg21[%c0_252, %c0_253, %c0_254] : memref<2x8x512xf32, #tpu.memory_space<vmem>>, vector<1x8x512xf32>
      %430 = vector.shape_cast %429 : vector<1x8x512xf32> to vector<8x512xf32>
      %431 = arith.addf %430, %422 : vector<8x512xf32>
      %c0_255 = arith.constant 0 : index
      %c0_256 = arith.constant 0 : index
      %c0_257 = arith.constant 0 : index
      %432 = vector.load %arg21[%c0_255, %c0_256, %c0_257] : memref<2x8x512xf32, #tpu.memory_space<vmem>>, vector<1x8x512xf32>
      %433 = vector.shape_cast %432 : vector<1x8x512xf32> to vector<8x512xf32>
      %434 = vector.shape_cast %431 : vector<8x512xf32> to vector<1x8x512xf32>
      tpu.vector_store %arg21[%c0_255, %c0_256, %c0_257], %434 {strides = array<i32>} : memref<2x8x512xf32, #tpu.memory_space<vmem>>, vector<1x8x512xf32>,
      %c0_258 = arith.constant 0 : index
      %c0_259 = arith.constant 0 : index
      %c0_260 = arith.constant 0 : index
      %435 = vector.load %arg22[%c0_258, %c0_259, %c0_260] : memref<2x8x512xf32, #tpu.memory_space<vmem>>, vector<1x8x512xf32>
      %436 = vector.shape_cast %435 : vector<1x8x512xf32> to vector<8x512xf32>
      %437 = arith.addf %436, %420 : vector<8x512xf32>
      %c0_261 = arith.constant 0 : index
      %c0_262 = arith.constant 0 : index
      %c0_263 = arith.constant 0 : index
      %438 = vector.load %arg22[%c0_261, %c0_262, %c0_263] : memref<2x8x512xf32, #tpu.memory_space<vmem>>, vector<1x8x512xf32>
      %439 = vector.shape_cast %438 : vector<1x8x512xf32> to vector<8x512xf32>
      %440 = vector.shape_cast %437 : vector<8x512xf32> to vector<1x8x512xf32>
      tpu.vector_store %arg22[%c0_261, %c0_262, %c0_263], %440 {strides = array<i32>} : memref<2x8x512xf32, #tpu.memory_space<vmem>>, vector<1x8x512xf32>,
      %c0_264 = arith.constant 0 : index
      %c0_265 = arith.constant 0 : index
      %441 = vector.load %arg4[%c0_264, %c0_265] : memref<9x512xf32, #tpu.memory_space<vmem>>, vector<1x512xf32>
      %c17_i32_266 = arith.constant 17 : i32
      %442 = tpu.dynamic_rotate %422 by %c17_i32_266 dim 1 : vector<8x512xf32>, i32 -> vector<8x512xf32>
      %443 = vector.broadcast %441 : vector<1x512xf32> to vector<8x512xf32>
      %444 = arith.mulf %442, %443 : vector<8x512xf32>
      %445 = arith.truncf %444 : vector<8x512xf32> to vector<8x512xbf16>
      %c1_267 = arith.constant 1 : index
      %c0_268 = arith.constant 0 : index
      %446 = vector.load %arg4[%c1_267, %c0_268] : memref<9x512xf32, #tpu.memory_space<vmem>>, vector<1x512xf32>
      %c16_i32_269 = arith.constant 16 : i32
      %447 = tpu.dynamic_rotate %422 by %c16_i32_269 dim 1 : vector<8x512xf32>, i32 -> vector<8x512xf32>
      %448 = vector.broadcast %446 : vector<1x512xf32> to vector<8x512xf32>
      %449 = arith.mulf %447, %448 : vector<8x512xf32>
      %450 = arith.truncf %449 : vector<8x512xf32> to vector<8x512xbf16>
      %c2_270 = arith.constant 2 : index
      %c0_271 = arith.constant 0 : index
      %451 = vector.load %arg4[%c2_270, %c0_271] : memref<9x512xf32, #tpu.memory_space<vmem>>, vector<1x512xf32>
      %c15_i32_272 = arith.constant 15 : i32
      %452 = tpu.dynamic_rotate %422 by %c15_i32_272 dim 1 : vector<8x512xf32>, i32 -> vector<8x512xf32>
      %453 = vector.broadcast %451 : vector<1x512xf32> to vector<8x512xf32>
      %454 = arith.mulf %452, %453 : vector<8x512xf32>
      %455 = arith.truncf %454 : vector<8x512xf32> to vector<8x512xbf16>
      %c3_273 = arith.constant 3 : index
      %c0_274 = arith.constant 0 : index
      %456 = vector.load %arg4[%c3_273, %c0_274] : memref<9x512xf32, #tpu.memory_space<vmem>>, vector<1x512xf32>
      %c1_i32_275 = arith.constant 1 : i32
      %457 = tpu.dynamic_rotate %422 by %c1_i32_275 dim 1 : vector<8x512xf32>, i32 -> vector<8x512xf32>
      %458 = vector.broadcast %456 : vector<1x512xf32> to vector<8x512xf32>
      %459 = arith.mulf %457, %458 : vector<8x512xf32>
      %460 = arith.truncf %459 : vector<8x512xf32> to vector<8x512xbf16>
      %461 = arith.truncf %422 : vector<8x512xf32> to vector<8x512xbf16>
      %c5_276 = arith.constant 5 : index
      %c0_277 = arith.constant 0 : index
      %462 = vector.load %arg4[%c5_276, %c0_277] : memref<9x512xf32, #tpu.memory_space<vmem>>, vector<1x512xf32>
      %c511_i32_278 = arith.constant 511 : i32
      %463 = tpu.dynamic_rotate %422 by %c511_i32_278 dim 1 : vector<8x512xf32>, i32 -> vector<8x512xf32>
      %464 = vector.broadcast %462 : vector<1x512xf32> to vector<8x512xf32>
      %465 = arith.mulf %463, %464 : vector<8x512xf32>
      %466 = arith.truncf %465 : vector<8x512xf32> to vector<8x512xbf16>
      %c6_279 = arith.constant 6 : index
      %c0_280 = arith.constant 0 : index
      %467 = vector.load %arg4[%c6_279, %c0_280] : memref<9x512xf32, #tpu.memory_space<vmem>>, vector<1x512xf32>
      %c497_i32_281 = arith.constant 497 : i32
      %468 = tpu.dynamic_rotate %422 by %c497_i32_281 dim 1 : vector<8x512xf32>, i32 -> vector<8x512xf32>
      %469 = vector.broadcast %467 : vector<1x512xf32> to vector<8x512xf32>
      %470 = arith.mulf %468, %469 : vector<8x512xf32>
      %471 = arith.truncf %470 : vector<8x512xf32> to vector<8x512xbf16>
      %c7_282 = arith.constant 7 : index
      %c0_283 = arith.constant 0 : index
      %472 = vector.load %arg4[%c7_282, %c0_283] : memref<9x512xf32, #tpu.memory_space<vmem>>, vector<1x512xf32>
      %c496_i32_284 = arith.constant 496 : i32
      %473 = tpu.dynamic_rotate %422 by %c496_i32_284 dim 1 : vector<8x512xf32>, i32 -> vector<8x512xf32>
      %474 = vector.broadcast %472 : vector<1x512xf32> to vector<8x512xf32>
      %475 = arith.mulf %473, %474 : vector<8x512xf32>
      %476 = arith.truncf %475 : vector<8x512xf32> to vector<8x512xbf16>
      %c8_285 = arith.constant 8 : index
      %c0_286 = arith.constant 0 : index
      %477 = vector.load %arg4[%c8_285, %c0_286] : memref<9x512xf32, #tpu.memory_space<vmem>>, vector<1x512xf32>
      %c495_i32_287 = arith.constant 495 : i32
      %478 = tpu.dynamic_rotate %422 by %c495_i32_287 dim 1 : vector<8x512xf32>, i32 -> vector<8x512xf32>
      %479 = vector.broadcast %477 : vector<1x512xf32> to vector<8x512xf32>
      %480 = arith.mulf %478, %479 : vector<8x512xf32>
      %481 = arith.truncf %480 : vector<8x512xf32> to vector<8x512xbf16>
      %c1_288 = arith.constant 1 : index
      %c0_289 = arith.constant 0 : index
      %c0_290 = arith.constant 0 : index
      %482 = vector.load %arg19[%c1_288, %c0_289, %c0_290] : memref<2x8x512xf32, #tpu.memory_space<vmem>>, vector<1x8x512xf32>
      %483 = vector.shape_cast %482 : vector<1x8x512xf32> to vector<8x512xf32>
      %c0_291 = arith.constant 0 : index
      %c0_292 = arith.constant 0 : index
      %484 = vector.load %arg4[%c0_291, %c0_292] : memref<9x512xf32, #tpu.memory_space<vmem>>, vector<1x512xf32>
      %c17_i32_293 = arith.constant 17 : i32
      %485 = tpu.dynamic_rotate %483 by %c17_i32_293 dim 1 : vector<8x512xf32>, i32 -> vector<8x512xf32>
      %486 = vector.broadcast %484 : vector<1x512xf32> to vector<8x512xf32>
      %487 = arith.mulf %485, %486 : vector<8x512xf32>
      %488 = arith.truncf %487 : vector<8x512xf32> to vector<8x512xbf16>
      %c1_294 = arith.constant 1 : index
      %c0_295 = arith.constant 0 : index
      %489 = vector.load %arg4[%c1_294, %c0_295] : memref<9x512xf32, #tpu.memory_space<vmem>>, vector<1x512xf32>
      %c16_i32_296 = arith.constant 16 : i32
      %490 = tpu.dynamic_rotate %483 by %c16_i32_296 dim 1 : vector<8x512xf32>, i32 -> vector<8x512xf32>
      %491 = vector.broadcast %489 : vector<1x512xf32> to vector<8x512xf32>
      %492 = arith.mulf %490, %491 : vector<8x512xf32>
      %493 = arith.truncf %492 : vector<8x512xf32> to vector<8x512xbf16>
      %c2_297 = arith.constant 2 : index
      %c0_298 = arith.constant 0 : index
      %494 = vector.load %arg4[%c2_297, %c0_298] : memref<9x512xf32, #tpu.memory_space<vmem>>, vector<1x512xf32>
      %c15_i32_299 = arith.constant 15 : i32
      %495 = tpu.dynamic_rotate %483 by %c15_i32_299 dim 1 : vector<8x512xf32>, i32 -> vector<8x512xf32>
      %496 = vector.broadcast %494 : vector<1x512xf32> to vector<8x512xf32>
      %497 = arith.mulf %495, %496 : vector<8x512xf32>
      %498 = arith.truncf %497 : vector<8x512xf32> to vector<8x512xbf16>
      %c3_300 = arith.constant 3 : index
      %c0_301 = arith.constant 0 : index
      %499 = vector.load %arg4[%c3_300, %c0_301] : memref<9x512xf32, #tpu.memory_space<vmem>>, vector<1x512xf32>
      %c1_i32_302 = arith.constant 1 : i32
      %500 = tpu.dynamic_rotate %483 by %c1_i32_302 dim 1 : vector<8x512xf32>, i32 -> vector<8x512xf32>
      %501 = vector.broadcast %499 : vector<1x512xf32> to vector<8x512xf32>
      %502 = arith.mulf %500, %501 : vector<8x512xf32>
      %503 = arith.truncf %502 : vector<8x512xf32> to vector<8x512xbf16>
      %504 = arith.truncf %483 : vector<8x512xf32> to vector<8x512xbf16>
      %c5_303 = arith.constant 5 : index
      %c0_304 = arith.constant 0 : index
      %505 = vector.load %arg4[%c5_303, %c0_304] : memref<9x512xf32, #tpu.memory_space<vmem>>, vector<1x512xf32>
      %c511_i32_305 = arith.constant 511 : i32
      %506 = tpu.dynamic_rotate %483 by %c511_i32_305 dim 1 : vector<8x512xf32>, i32 -> vector<8x512xf32>
      %507 = vector.broadcast %505 : vector<1x512xf32> to vector<8x512xf32>
      %508 = arith.mulf %506, %507 : vector<8x512xf32>
      %509 = arith.truncf %508 : vector<8x512xf32> to vector<8x512xbf16>
      %c6_306 = arith.constant 6 : index
      %c0_307 = arith.constant 0 : index
      %510 = vector.load %arg4[%c6_306, %c0_307] : memref<9x512xf32, #tpu.memory_space<vmem>>, vector<1x512xf32>
      %c497_i32_308 = arith.constant 497 : i32
      %511 = tpu.dynamic_rotate %483 by %c497_i32_308 dim 1 : vector<8x512xf32>, i32 -> vector<8x512xf32>
      %512 = vector.broadcast %510 : vector<1x512xf32> to vector<8x512xf32>
      %513 = arith.mulf %511, %512 : vector<8x512xf32>
      %514 = arith.truncf %513 : vector<8x512xf32> to vector<8x512xbf16>
      %c7_309 = arith.constant 7 : index
      %c0_310 = arith.constant 0 : index
      %515 = vector.load %arg4[%c7_309, %c0_310] : memref<9x512xf32, #tpu.memory_space<vmem>>, vector<1x512xf32>
      %c496_i32_311 = arith.constant 496 : i32
      %516 = tpu.dynamic_rotate %483 by %c496_i32_311 dim 1 : vector<8x512xf32>, i32 -> vector<8x512xf32>
      %517 = vector.broadcast %515 : vector<1x512xf32> to vector<8x512xf32>
      %518 = arith.mulf %516, %517 : vector<8x512xf32>
      %519 = arith.truncf %518 : vector<8x512xf32> to vector<8x512xbf16>
      %c8_312 = arith.constant 8 : index
      %c0_313 = arith.constant 0 : index
      %520 = vector.load %arg4[%c8_312, %c0_313] : memref<9x512xf32, #tpu.memory_space<vmem>>, vector<1x512xf32>
      %c495_i32_314 = arith.constant 495 : i32
      %521 = tpu.dynamic_rotate %483 by %c495_i32_314 dim 1 : vector<8x512xf32>, i32 -> vector<8x512xf32>
      %522 = vector.broadcast %520 : vector<1x512xf32> to vector<8x512xf32>
      %523 = arith.mulf %521, %522 : vector<8x512xf32>
      %524 = arith.truncf %523 : vector<8x512xf32> to vector<8x512xbf16>
      %525 = tpu.concatenate %445, %450, %455, %460, %461, %466, %471, %476, %481, %488, %493, %498, %503, %504, %509, %514 in 0 : vector<8x512xbf16>, vector<8x512xbf16>, vector<8x512xbf16>, vector<8x512xbf16>, vector<8x512xbf16>, vector<8x512xbf16>, vector<8x512xbf16>, vector<8x512xbf16>, vector<8x512xbf16>, vector<8x512xbf16>, vector<8x512xbf16>, vector<8x512xbf16>, vector<8x512xbf16>, vector<8x512xbf16>, vector<8x512xbf16>, vector<8x512xbf16> -> vector<128x512xbf16>
      %526 = tpu.concatenate %519, %524 in 0 : vector<8x512xbf16>, vector<8x512xbf16> -> vector<16x512xbf16>
      %527 = tpu.concatenate %525, %526 in 0 : vector<128x512xbf16>, vector<16x512xbf16> -> vector<144x512xbf16>
      %c0_315 = arith.constant 0 : index
      %c0_316 = arith.constant 0 : index
      %528 = vector.load %arg9[%c0_315, %c0_316] : memref<32x144xbf16, #tpu.memory_space<vmem>>, vector<32x144xbf16>
      %cst_317 = arith.constant dense<0.000000e+00> : vector<32x512xf32>
      %529 = tpu.matmul %528, %527, %cst_317 {dimension_numbers = #tpu.dot_dimension_numbers<[1], [0], [0], [1], [0, 0, 1, 1], [], []>} : vector<32x144xbf16>, vector<144x512xbf16>, vector<32x512xf32> -> vector<32x512xf32>
      %c0_318 = arith.constant 0 : index
      %c0_319 = arith.constant 0 : index
      %530 = vector.load %arg10[%c0_318, %c0_319] : memref<32x1xf32, #tpu.memory_space<vmem>>, vector<32x1xf32>
      %531 = vector.broadcast %530 : vector<32x1xf32> to vector<32x512xf32>
      %532 = arith.addf %529, %531 : vector<32x512xf32>
      %c1_320 = arith.constant 1 : index
      %c0_321 = arith.constant 0 : index
      %c0_322 = arith.constant 0 : index
      %533 = vector.load %arg20[%c1_320, %c0_321, %c0_322] : memref<2x8x512xf32, #tpu.memory_space<vmem>>, vector<1x8x512xf32>
      %534 = vector.shape_cast %533 : vector<1x8x512xf32> to vector<8x512xf32>
      %535 = vector.extract_strided_slice %532 {offsets = [0, 0], sizes = [8, 512], strides = [1, 1]} : vector<32x512xf32> to vector<8x512xf32>
      %536 = arith.negf %535 : vector<8x512xf32>
      %537 = math.exp %536 : vector<8x512xf32>
      %cst_323 = arith.constant 1.000000e+00 : f32
      %538 = vector.broadcast %cst_323 : f32 to vector<8x512xf32>
      %539 = arith.addf %538, %537 : vector<8x512xf32>
      %540 = arith.divf %538, %539 : vector<8x512xf32>
      %541 = vector.extract_strided_slice %532 {offsets = [8, 0], sizes = [8, 512], strides = [1, 1]} : vector<32x512xf32> to vector<8x512xf32>
      %542 = arith.negf %541 : vector<8x512xf32>
      %543 = math.exp %542 : vector<8x512xf32>
      %cst_324 = arith.constant 1.000000e+00 : f32
      %544 = vector.broadcast %cst_324 : f32 to vector<8x512xf32>
      %545 = arith.addf %544, %543 : vector<8x512xf32>
      %546 = arith.divf %544, %545 : vector<8x512xf32>
      %547 = vector.extract_strided_slice %532 {offsets = [16, 0], sizes = [8, 512], strides = [1, 1]} : vector<32x512xf32> to vector<8x512xf32>
      %548 = arith.negf %547 : vector<8x512xf32>
      %549 = math.exp %548 : vector<8x512xf32>
      %cst_325 = arith.constant 1.000000e+00 : f32
      %550 = vector.broadcast %cst_325 : f32 to vector<8x512xf32>
      %551 = arith.addf %550, %549 : vector<8x512xf32>
      %552 = arith.divf %550, %551 : vector<8x512xf32>
      %553 = vector.extract_strided_slice %532 {offsets = [24, 0], sizes = [8, 512], strides = [1, 1]} : vector<32x512xf32> to vector<8x512xf32>
      %554 = math.tanh %553 : vector<8x512xf32>
      %555 = arith.mulf %546, %534 : vector<8x512xf32>
      %556 = arith.mulf %540, %554 : vector<8x512xf32>
      %557 = arith.addf %555, %556 : vector<8x512xf32>
      %558 = math.tanh %557 : vector<8x512xf32>
      %559 = arith.mulf %552, %558 : vector<8x512xf32>
      %c1_326 = arith.constant 1 : index
      %c0_327 = arith.constant 0 : index
      %c0_328 = arith.constant 0 : index
      %560 = vector.load %arg19[%c1_326, %c0_327, %c0_328] : memref<2x8x512xf32, #tpu.memory_space<vmem>>, vector<1x8x512xf32>
      %561 = vector.shape_cast %560 : vector<1x8x512xf32> to vector<8x512xf32>
      %562 = vector.shape_cast %559 : vector<8x512xf32> to vector<1x8x512xf32>
      tpu.vector_store %arg19[%c1_326, %c0_327, %c0_328], %562 {strides = array<i32>} : memref<2x8x512xf32, #tpu.memory_space<vmem>>, vector<1x8x512xf32>,
      %c1_329 = arith.constant 1 : index
      %c0_330 = arith.constant 0 : index
      %c0_331 = arith.constant 0 : index
      %563 = vector.load %arg20[%c1_329, %c0_330, %c0_331] : memref<2x8x512xf32, #tpu.memory_space<vmem>>, vector<1x8x512xf32>
      %564 = vector.shape_cast %563 : vector<1x8x512xf32> to vector<8x512xf32>
      %565 = vector.shape_cast %557 : vector<8x512xf32> to vector<1x8x512xf32>
      tpu.vector_store %arg20[%c1_329, %c0_330, %c0_331], %565 {strides = array<i32>} : memref<2x8x512xf32, #tpu.memory_space<vmem>>, vector<1x8x512xf32>,
      %c1_332 = arith.constant 1 : index
      %c0_333 = arith.constant 0 : index
      %c0_334 = arith.constant 0 : index
      %566 = vector.load %arg21[%c1_332, %c0_333, %c0_334] : memref<2x8x512xf32, #tpu.memory_space<vmem>>, vector<1x8x512xf32>
      %567 = vector.shape_cast %566 : vector<1x8x512xf32> to vector<8x512xf32>
      %568 = arith.addf %567, %559 : vector<8x512xf32>
      %c1_335 = arith.constant 1 : index
      %c0_336 = arith.constant 0 : index
      %c0_337 = arith.constant 0 : index
      %569 = vector.load %arg21[%c1_335, %c0_336, %c0_337] : memref<2x8x512xf32, #tpu.memory_space<vmem>>, vector<1x8x512xf32>
      %570 = vector.shape_cast %569 : vector<1x8x512xf32> to vector<8x512xf32>
      %571 = vector.shape_cast %568 : vector<8x512xf32> to vector<1x8x512xf32>
      tpu.vector_store %arg21[%c1_335, %c0_336, %c0_337], %571 {strides = array<i32>} : memref<2x8x512xf32, #tpu.memory_space<vmem>>, vector<1x8x512xf32>,
      %c1_338 = arith.constant 1 : index
      %c0_339 = arith.constant 0 : index
      %c0_340 = arith.constant 0 : index
      %572 = vector.load %arg22[%c1_338, %c0_339, %c0_340] : memref<2x8x512xf32, #tpu.memory_space<vmem>>, vector<1x8x512xf32>
      %573 = vector.shape_cast %572 : vector<1x8x512xf32> to vector<8x512xf32>
      %574 = arith.addf %573, %557 : vector<8x512xf32>
      %c1_341 = arith.constant 1 : index
      %c0_342 = arith.constant 0 : index
      %c0_343 = arith.constant 0 : index
      %575 = vector.load %arg22[%c1_341, %c0_342, %c0_343] : memref<2x8x512xf32, #tpu.memory_space<vmem>>, vector<1x8x512xf32>
      %576 = vector.shape_cast %575 : vector<1x8x512xf32> to vector<8x512xf32>
      %577 = vector.shape_cast %574 : vector<8x512xf32> to vector<1x8x512xf32>
      tpu.vector_store %arg22[%c1_341, %c0_342, %c0_343], %577 {strides = array<i32>} : memref<2x8x512xf32, #tpu.memory_space<vmem>>, vector<1x8x512xf32>,
    }
    %c4_i32_24 = arith.constant 4 : i32
    %c1 = arith.constant 1 : index
    %c0_25 = arith.constant 0 : index
    %c0_26 = arith.constant 0 : index
    %11 = vector.load %arg21[%c1, %c0_25, %c0_26] : memref<2x8x512xf32, #tpu.memory_space<vmem>>, vector<1x8x512xf32>
    %12 = vector.shape_cast %11 : vector<1x8x512xf32> to vector<8x512xf32>
    %c0_27 = arith.constant 0 : index
    %c0_28 = arith.constant 0 : index
    %c0_29 = arith.constant 0 : index
    %13 = vector.load %arg19[%c0_27, %c0_28, %c0_29] : memref<2x8x512xf32, #tpu.memory_space<vmem>>, vector<1x8x512xf32>
    %14 = vector.shape_cast %13 : vector<1x8x512xf32> to vector<8x512xf32>
    %15 = vector.shape_cast %12 : vector<8x512xf32> to vector<1x8x512xf32>
    tpu.vector_store %arg19[%c0_27, %c0_28, %c0_29], %15 {strides = array<i32>} : memref<2x8x512xf32, #tpu.memory_space<vmem>>, vector<1x8x512xf32>,
    %c1_30 = arith.constant 1 : index
    %c0_31 = arith.constant 0 : index
    %c0_32 = arith.constant 0 : index
    %16 = vector.load %arg22[%c1_30, %c0_31, %c0_32] : memref<2x8x512xf32, #tpu.memory_space<vmem>>, vector<1x8x512xf32>
    %17 = vector.shape_cast %16 : vector<1x8x512xf32> to vector<8x512xf32>
    %c0_33 = arith.constant 0 : index
    %c0_34 = arith.constant 0 : index
    %c0_35 = arith.constant 0 : index
    %18 = vector.load %arg20[%c0_33, %c0_34, %c0_35] : memref<2x8x512xf32, #tpu.memory_space<vmem>>, vector<1x8x512xf32>
    %19 = vector.shape_cast %18 : vector<1x8x512xf32> to vector<8x512xf32>
    %20 = vector.shape_cast %17 : vector<8x512xf32> to vector<1x8x512xf32>
    tpu.vector_store %arg20[%c0_33, %c0_34, %c0_35], %20 {strides = array<i32>} : memref<2x8x512xf32, #tpu.memory_space<vmem>>, vector<1x8x512xf32>,
    %c0_36 = arith.constant 0 : index
    %c0_37 = arith.constant 0 : index
    %c0_38 = arith.constant 0 : index
    %21 = vector.load %arg21[%c0_36, %c0_37, %c0_38] : memref<2x8x512xf32, #tpu.memory_space<vmem>>, vector<1x8x512xf32>
    %22 = vector.shape_cast %21 : vector<1x8x512xf32> to vector<8x512xf32>
    %c1_39 = arith.constant 1 : index
    %c0_40 = arith.constant 0 : index
    %c0_41 = arith.constant 0 : index
    %23 = vector.load %arg19[%c1_39, %c0_40, %c0_41] : memref<2x8x512xf32, #tpu.memory_space<vmem>>, vector<1x8x512xf32>
    %24 = vector.shape_cast %23 : vector<1x8x512xf32> to vector<8x512xf32>
    %25 = vector.shape_cast %22 : vector<8x512xf32> to vector<1x8x512xf32>
    tpu.vector_store %arg19[%c1_39, %c0_40, %c0_41], %25 {strides = array<i32>} : memref<2x8x512xf32, #tpu.memory_space<vmem>>, vector<1x8x512xf32>,
    %c0_42 = arith.constant 0 : index
    %c0_43 = arith.constant 0 : index
    %c0_44 = arith.constant 0 : index
    %26 = vector.load %arg22[%c0_42, %c0_43, %c0_44] : memref<2x8x512xf32, #tpu.memory_space<vmem>>, vector<1x8x512xf32>
    %27 = vector.shape_cast %26 : vector<1x8x512xf32> to vector<8x512xf32>
    %c1_45 = arith.constant 1 : index
    %c0_46 = arith.constant 0 : index
    %c0_47 = arith.constant 0 : index
    %28 = vector.load %arg20[%c1_45, %c0_46, %c0_47] : memref<2x8x512xf32, #tpu.memory_space<vmem>>, vector<1x8x512xf32>
    %29 = vector.shape_cast %28 : vector<1x8x512xf32> to vector<8x512xf32>
    %30 = vector.shape_cast %27 : vector<8x512xf32> to vector<1x8x512xf32>
    tpu.vector_store %arg20[%c1_45, %c0_46, %c0_47], %30 {strides = array<i32>} : memref<2x8x512xf32, #tpu.memory_space<vmem>>, vector<1x8x512xf32>,
    %c0_48 = arith.constant 0 : index
    %c3 = arith.constant 3 : index
    %c0_49 = arith.constant 0 : index
    %31 = vector.load %arg1[%c0_48, %c3, %c0_49] : memref<3x4x512xf32, #tpu.memory_space<vmem>>, vector<1x1x512xf32>
    %32 = vector.shape_cast %31 : vector<1x1x512xf32> to vector<1x512xf32>
    %c0_50 = arith.constant 0 : index
    %c0_51 = arith.constant 0 : index
    %33 = vector.load %arg23[%c0_50, %c0_51] : memref<1x512xf32, #tpu.memory_space<vmem>>, vector<1x512xf32>
    tpu.vector_store %arg23[%c0_50, %c0_51], %32 {strides = array<i32>} : memref<1x512xf32, #tpu.memory_space<vmem>>, vector<1x512xf32>,
    %c0_i32_52 = arith.constant 0 : i32
    %c2_i32 = arith.constant 2 : i32
    %34 = arith.addi %c0_i32_52, %c2_i32 : i32
    %c1_i32_53 = arith.constant 1 : i32
    scf.for %arg24 = %c0_i32_52 to %34 step %c1_i32_53  : i32 {
      %c1_i32_55 = arith.constant 1 : i32
      %35 = arith.muli %arg24, %c1_i32_55 : i32
      %c0_i32_56 = arith.constant 0 : i32
      %36 = arith.addi %c0_i32_56, %35 : i32
      %c0_57 = arith.constant 0 : index
      %c0_58 = arith.constant 0 : index
      %37 = vector.load %arg23[%c0_57, %c0_58] : memref<1x512xf32, #tpu.memory_space<vmem>>, vector<1x512xf32>
      %c0_59 = arith.constant 0 : index
      %c0_60 = arith.constant 0 : index
      %38 = vector.load %arg4[%c0_59, %c0_60] : memref<9x512xf32, #tpu.memory_space<vmem>>, vector<1x512xf32>
      %c17_i32 = arith.constant 17 : i32
      %39 = tpu.dynamic_rotate %37 by %c17_i32 dim 1 : vector<1x512xf32>, i32 -> vector<1x512xf32>
      %40 = arith.mulf %39, %38 : vector<1x512xf32>
      %41 = arith.truncf %40 : vector<1x512xf32> to vector<1x512xbf16>
      %c1_61 = arith.constant 1 : index
      %c0_62 = arith.constant 0 : index
      %42 = vector.load %arg4[%c1_61, %c0_62] : memref<9x512xf32, #tpu.memory_space<vmem>>, vector<1x512xf32>
      %c16_i32 = arith.constant 16 : i32
      %43 = tpu.dynamic_rotate %37 by %c16_i32 dim 1 : vector<1x512xf32>, i32 -> vector<1x512xf32>
      %44 = arith.mulf %43, %42 : vector<1x512xf32>
      %45 = arith.truncf %44 : vector<1x512xf32> to vector<1x512xbf16>
      %c2 = arith.constant 2 : index
      %c0_63 = arith.constant 0 : index
      %46 = vector.load %arg4[%c2, %c0_63] : memref<9x512xf32, #tpu.memory_space<vmem>>, vector<1x512xf32>
      %c15_i32 = arith.constant 15 : i32
      %47 = tpu.dynamic_rotate %37 by %c15_i32 dim 1 : vector<1x512xf32>, i32 -> vector<1x512xf32>
      %48 = arith.mulf %47, %46 : vector<1x512xf32>
      %49 = arith.truncf %48 : vector<1x512xf32> to vector<1x512xbf16>
      %c3_64 = arith.constant 3 : index
      %c0_65 = arith.constant 0 : index
      %50 = vector.load %arg4[%c3_64, %c0_65] : memref<9x512xf32, #tpu.memory_space<vmem>>, vector<1x512xf32>
      %c1_i32_66 = arith.constant 1 : i32
      %51 = tpu.dynamic_rotate %37 by %c1_i32_66 dim 1 : vector<1x512xf32>, i32 -> vector<1x512xf32>
      %52 = arith.mulf %51, %50 : vector<1x512xf32>
      %53 = arith.truncf %52 : vector<1x512xf32> to vector<1x512xbf16>
      %54 = arith.truncf %37 : vector<1x512xf32> to vector<1x512xbf16>
      %c5 = arith.constant 5 : index
      %c0_67 = arith.constant 0 : index
      %55 = vector.load %arg4[%c5, %c0_67] : memref<9x512xf32, #tpu.memory_space<vmem>>, vector<1x512xf32>
      %c511_i32 = arith.constant 511 : i32
      %56 = tpu.dynamic_rotate %37 by %c511_i32 dim 1 : vector<1x512xf32>, i32 -> vector<1x512xf32>
      %57 = arith.mulf %56, %55 : vector<1x512xf32>
      %58 = arith.truncf %57 : vector<1x512xf32> to vector<1x512xbf16>
      %c6 = arith.constant 6 : index
      %c0_68 = arith.constant 0 : index
      %59 = vector.load %arg4[%c6, %c0_68] : memref<9x512xf32, #tpu.memory_space<vmem>>, vector<1x512xf32>
      %c497_i32 = arith.constant 497 : i32
      %60 = tpu.dynamic_rotate %37 by %c497_i32 dim 1 : vector<1x512xf32>, i32 -> vector<1x512xf32>
      %61 = arith.mulf %60, %59 : vector<1x512xf32>
      %62 = arith.truncf %61 : vector<1x512xf32> to vector<1x512xbf16>
      %c7 = arith.constant 7 : index
      %c0_69 = arith.constant 0 : index
      %63 = vector.load %arg4[%c7, %c0_69] : memref<9x512xf32, #tpu.memory_space<vmem>>, vector<1x512xf32>
      %c496_i32 = arith.constant 496 : i32
      %64 = tpu.dynamic_rotate %37 by %c496_i32 dim 1 : vector<1x512xf32>, i32 -> vector<1x512xf32>
      %65 = arith.mulf %64, %63 : vector<1x512xf32>
      %66 = arith.truncf %65 : vector<1x512xf32> to vector<1x512xbf16>
      %c8 = arith.constant 8 : index
      %c0_70 = arith.constant 0 : index
      %67 = vector.load %arg4[%c8, %c0_70] : memref<9x512xf32, #tpu.memory_space<vmem>>, vector<1x512xf32>
      %c495_i32 = arith.constant 495 : i32
      %68 = tpu.dynamic_rotate %37 by %c495_i32 dim 1 : vector<1x512xf32>, i32 -> vector<1x512xf32>
      %69 = arith.mulf %68, %67 : vector<1x512xf32>
      %70 = arith.truncf %69 : vector<1x512xf32> to vector<1x512xbf16>
      %c0_71 = arith.constant 0 : index
      %c0_72 = arith.constant 0 : index
      %c0_73 = arith.constant 0 : index
      %71 = vector.load %arg19[%c0_71, %c0_72, %c0_73] : memref<2x8x512xf32, #tpu.memory_space<vmem>>, vector<1x8x512xf32>
      %72 = vector.shape_cast %71 : vector<1x8x512xf32> to vector<8x512xf32>
      %c0_74 = arith.constant 0 : index
      %c0_75 = arith.constant 0 : index
      %73 = vector.load %arg4[%c0_74, %c0_75] : memref<9x512xf32, #tpu.memory_space<vmem>>, vector<1x512xf32>
      %c17_i32_76 = arith.constant 17 : i32
      %74 = tpu.dynamic_rotate %72 by %c17_i32_76 dim 1 : vector<8x512xf32>, i32 -> vector<8x512xf32>
      %75 = vector.broadcast %73 : vector<1x512xf32> to vector<8x512xf32>
      %76 = arith.mulf %74, %75 : vector<8x512xf32>
      %77 = arith.truncf %76 : vector<8x512xf32> to vector<8x512xbf16>
      %c1_77 = arith.constant 1 : index
      %c0_78 = arith.constant 0 : index
      %78 = vector.load %arg4[%c1_77, %c0_78] : memref<9x512xf32, #tpu.memory_space<vmem>>, vector<1x512xf32>
      %c16_i32_79 = arith.constant 16 : i32
      %79 = tpu.dynamic_rotate %72 by %c16_i32_79 dim 1 : vector<8x512xf32>, i32 -> vector<8x512xf32>
      %80 = vector.broadcast %78 : vector<1x512xf32> to vector<8x512xf32>
      %81 = arith.mulf %79, %80 : vector<8x512xf32>
      %82 = arith.truncf %81 : vector<8x512xf32> to vector<8x512xbf16>
      %c2_80 = arith.constant 2 : index
      %c0_81 = arith.constant 0 : index
      %83 = vector.load %arg4[%c2_80, %c0_81] : memref<9x512xf32, #tpu.memory_space<vmem>>, vector<1x512xf32>
      %c15_i32_82 = arith.constant 15 : i32
      %84 = tpu.dynamic_rotate %72 by %c15_i32_82 dim 1 : vector<8x512xf32>, i32 -> vector<8x512xf32>
      %85 = vector.broadcast %83 : vector<1x512xf32> to vector<8x512xf32>
      %86 = arith.mulf %84, %85 : vector<8x512xf32>
      %87 = arith.truncf %86 : vector<8x512xf32> to vector<8x512xbf16>
      %c3_83 = arith.constant 3 : index
      %c0_84 = arith.constant 0 : index
      %88 = vector.load %arg4[%c3_83, %c0_84] : memref<9x512xf32, #tpu.memory_space<vmem>>, vector<1x512xf32>
      %c1_i32_85 = arith.constant 1 : i32
      %89 = tpu.dynamic_rotate %72 by %c1_i32_85 dim 1 : vector<8x512xf32>, i32 -> vector<8x512xf32>
      %90 = vector.broadcast %88 : vector<1x512xf32> to vector<8x512xf32>
      %91 = arith.mulf %89, %90 : vector<8x512xf32>
      %92 = arith.truncf %91 : vector<8x512xf32> to vector<8x512xbf16>
      %93 = arith.truncf %72 : vector<8x512xf32> to vector<8x512xbf16>
      %c5_86 = arith.constant 5 : index
      %c0_87 = arith.constant 0 : index
      %94 = vector.load %arg4[%c5_86, %c0_87] : memref<9x512xf32, #tpu.memory_space<vmem>>, vector<1x512xf32>
      %c511_i32_88 = arith.constant 511 : i32
      %95 = tpu.dynamic_rotate %72 by %c511_i32_88 dim 1 : vector<8x512xf32>, i32 -> vector<8x512xf32>
      %96 = vector.broadcast %94 : vector<1x512xf32> to vector<8x512xf32>
      %97 = arith.mulf %95, %96 : vector<8x512xf32>
      %98 = arith.truncf %97 : vector<8x512xf32> to vector<8x512xbf16>
      %c6_89 = arith.constant 6 : index
      %c0_90 = arith.constant 0 : index
      %99 = vector.load %arg4[%c6_89, %c0_90] : memref<9x512xf32, #tpu.memory_space<vmem>>, vector<1x512xf32>
      %c497_i32_91 = arith.constant 497 : i32
      %100 = tpu.dynamic_rotate %72 by %c497_i32_91 dim 1 : vector<8x512xf32>, i32 -> vector<8x512xf32>
      %101 = vector.broadcast %99 : vector<1x512xf32> to vector<8x512xf32>
      %102 = arith.mulf %100, %101 : vector<8x512xf32>
      %103 = arith.truncf %102 : vector<8x512xf32> to vector<8x512xbf16>
      %c7_92 = arith.constant 7 : index
      %c0_93 = arith.constant 0 : index
      %104 = vector.load %arg4[%c7_92, %c0_93] : memref<9x512xf32, #tpu.memory_space<vmem>>, vector<1x512xf32>
      %c496_i32_94 = arith.constant 496 : i32
      %105 = tpu.dynamic_rotate %72 by %c496_i32_94 dim 1 : vector<8x512xf32>, i32 -> vector<8x512xf32>
      %106 = vector.broadcast %104 : vector<1x512xf32> to vector<8x512xf32>
      %107 = arith.mulf %105, %106 : vector<8x512xf32>
      %108 = arith.truncf %107 : vector<8x512xf32> to vector<8x512xbf16>
      %c8_95 = arith.constant 8 : index
      %c0_96 = arith.constant 0 : index
      %109 = vector.load %arg4[%c8_95, %c0_96] : memref<9x512xf32, #tpu.memory_space<vmem>>, vector<1x512xf32>
      %c495_i32_97 = arith.constant 495 : i32
      %110 = tpu.dynamic_rotate %72 by %c495_i32_97 dim 1 : vector<8x512xf32>, i32 -> vector<8x512xf32>
      %111 = vector.broadcast %109 : vector<1x512xf32> to vector<8x512xf32>
      %112 = arith.mulf %110, %111 : vector<8x512xf32>
      %113 = arith.truncf %112 : vector<8x512xf32> to vector<8x512xbf16>
      %114 = tpu.concatenate %41, %45, %49, %53, %54, %58, %62, %66, %70, %77, %82, %87, %92, %93, %98, %103 in 0 : vector<1x512xbf16>, vector<1x512xbf16>, vector<1x512xbf16>, vector<1x512xbf16>, vector<1x512xbf16>, vector<1x512xbf16>, vector<1x512xbf16>, vector<1x512xbf16>, vector<1x512xbf16>, vector<8x512xbf16>, vector<8x512xbf16>, vector<8x512xbf16>, vector<8x512xbf16>, vector<8x512xbf16>, vector<8x512xbf16>, vector<8x512xbf16> -> vector<65x512xbf16>
      %115 = tpu.concatenate %108, %113 in 0 : vector<8x512xbf16>, vector<8x512xbf16> -> vector<16x512xbf16>
      %116 = tpu.concatenate %114, %115 in 0 : vector<65x512xbf16>, vector<16x512xbf16> -> vector<81x512xbf16>
      %c0_98 = arith.constant 0 : index
      %c0_99 = arith.constant 0 : index
      %117 = vector.load %arg11[%c0_98, %c0_99] : memref<32x81xbf16, #tpu.memory_space<vmem>>, vector<32x81xbf16>
      %cst_100 = arith.constant dense<0.000000e+00> : vector<32x512xf32>
      %118 = tpu.matmul %117, %116, %cst_100 {dimension_numbers = #tpu.dot_dimension_numbers<[1], [0], [0], [1], [0, 0, 1, 1], [], []>} : vector<32x81xbf16>, vector<81x512xbf16>, vector<32x512xf32> -> vector<32x512xf32>
      %c0_101 = arith.constant 0 : index
      %c0_102 = arith.constant 0 : index
      %119 = vector.load %arg12[%c0_101, %c0_102] : memref<32x1xf32, #tpu.memory_space<vmem>>, vector<32x1xf32>
      %120 = vector.broadcast %119 : vector<32x1xf32> to vector<32x512xf32>
      %121 = arith.addf %118, %120 : vector<32x512xf32>
      %c0_103 = arith.constant 0 : index
      %c0_104 = arith.constant 0 : index
      %c0_105 = arith.constant 0 : index
      %122 = vector.load %arg20[%c0_103, %c0_104, %c0_105] : memref<2x8x512xf32, #tpu.memory_space<vmem>>, vector<1x8x512xf32>
      %123 = vector.shape_cast %122 : vector<1x8x512xf32> to vector<8x512xf32>
      %124 = vector.extract_strided_slice %121 {offsets = [0, 0], sizes = [8, 512], strides = [1, 1]} : vector<32x512xf32> to vector<8x512xf32>
      %125 = arith.negf %124 : vector<8x512xf32>
      %126 = math.exp %125 : vector<8x512xf32>
      %cst_106 = arith.constant 1.000000e+00 : f32
      %127 = vector.broadcast %cst_106 : f32 to vector<8x512xf32>
      %128 = arith.addf %127, %126 : vector<8x512xf32>
      %129 = arith.divf %127, %128 : vector<8x512xf32>
      %130 = vector.extract_strided_slice %121 {offsets = [8, 0], sizes = [8, 512], strides = [1, 1]} : vector<32x512xf32> to vector<8x512xf32>
      %131 = arith.negf %130 : vector<8x512xf32>
      %132 = math.exp %131 : vector<8x512xf32>
      %cst_107 = arith.constant 1.000000e+00 : f32
      %133 = vector.broadcast %cst_107 : f32 to vector<8x512xf32>
      %134 = arith.addf %133, %132 : vector<8x512xf32>
      %135 = arith.divf %133, %134 : vector<8x512xf32>
      %136 = vector.extract_strided_slice %121 {offsets = [16, 0], sizes = [8, 512], strides = [1, 1]} : vector<32x512xf32> to vector<8x512xf32>
      %137 = arith.negf %136 : vector<8x512xf32>
      %138 = math.exp %137 : vector<8x512xf32>
      %cst_108 = arith.constant 1.000000e+00 : f32
      %139 = vector.broadcast %cst_108 : f32 to vector<8x512xf32>
      %140 = arith.addf %139, %138 : vector<8x512xf32>
      %141 = arith.divf %139, %140 : vector<8x512xf32>
      %142 = vector.extract_strided_slice %121 {offsets = [24, 0], sizes = [8, 512], strides = [1, 1]} : vector<32x512xf32> to vector<8x512xf32>
      %143 = math.tanh %142 : vector<8x512xf32>
      %144 = arith.mulf %135, %123 : vector<8x512xf32>
      %145 = arith.mulf %129, %143 : vector<8x512xf32>
      %146 = arith.addf %144, %145 : vector<8x512xf32>
      %147 = math.tanh %146 : vector<8x512xf32>
      %148 = arith.mulf %141, %147 : vector<8x512xf32>
      %c0_109 = arith.constant 0 : index
      %c0_110 = arith.constant 0 : index
      %c0_111 = arith.constant 0 : index
      %149 = vector.load %arg19[%c0_109, %c0_110, %c0_111] : memref<2x8x512xf32, #tpu.memory_space<vmem>>, vector<1x8x512xf32>
      %150 = vector.shape_cast %149 : vector<1x8x512xf32> to vector<8x512xf32>
      %151 = vector.shape_cast %148 : vector<8x512xf32> to vector<1x8x512xf32>
      tpu.vector_store %arg19[%c0_109, %c0_110, %c0_111], %151 {strides = array<i32>} : memref<2x8x512xf32, #tpu.memory_space<vmem>>, vector<1x8x512xf32>,
      %c0_112 = arith.constant 0 : index
      %c0_113 = arith.constant 0 : index
      %c0_114 = arith.constant 0 : index
      %152 = vector.load %arg20[%c0_112, %c0_113, %c0_114] : memref<2x8x512xf32, #tpu.memory_space<vmem>>, vector<1x8x512xf32>
      %153 = vector.shape_cast %152 : vector<1x8x512xf32> to vector<8x512xf32>
      %154 = vector.shape_cast %146 : vector<8x512xf32> to vector<1x8x512xf32>
      tpu.vector_store %arg20[%c0_112, %c0_113, %c0_114], %154 {strides = array<i32>} : memref<2x8x512xf32, #tpu.memory_space<vmem>>, vector<1x8x512xf32>,
      %c0_115 = arith.constant 0 : index
      %c0_116 = arith.constant 0 : index
      %155 = vector.load %arg4[%c0_115, %c0_116] : memref<9x512xf32, #tpu.memory_space<vmem>>, vector<1x512xf32>
      %c17_i32_117 = arith.constant 17 : i32
      %156 = tpu.dynamic_rotate %148 by %c17_i32_117 dim 1 : vector<8x512xf32>, i32 -> vector<8x512xf32>
      %157 = vector.broadcast %155 : vector<1x512xf32> to vector<8x512xf32>
      %158 = arith.mulf %156, %157 : vector<8x512xf32>
      %159 = arith.truncf %158 : vector<8x512xf32> to vector<8x512xbf16>
      %c1_118 = arith.constant 1 : index
      %c0_119 = arith.constant 0 : index
      %160 = vector.load %arg4[%c1_118, %c0_119] : memref<9x512xf32, #tpu.memory_space<vmem>>, vector<1x512xf32>
      %c16_i32_120 = arith.constant 16 : i32
      %161 = tpu.dynamic_rotate %148 by %c16_i32_120 dim 1 : vector<8x512xf32>, i32 -> vector<8x512xf32>
      %162 = vector.broadcast %160 : vector<1x512xf32> to vector<8x512xf32>
      %163 = arith.mulf %161, %162 : vector<8x512xf32>
      %164 = arith.truncf %163 : vector<8x512xf32> to vector<8x512xbf16>
      %c2_121 = arith.constant 2 : index
      %c0_122 = arith.constant 0 : index
      %165 = vector.load %arg4[%c2_121, %c0_122] : memref<9x512xf32, #tpu.memory_space<vmem>>, vector<1x512xf32>
      %c15_i32_123 = arith.constant 15 : i32
      %166 = tpu.dynamic_rotate %148 by %c15_i32_123 dim 1 : vector<8x512xf32>, i32 -> vector<8x512xf32>
      %167 = vector.broadcast %165 : vector<1x512xf32> to vector<8x512xf32>
      %168 = arith.mulf %166, %167 : vector<8x512xf32>
      %169 = arith.truncf %168 : vector<8x512xf32> to vector<8x512xbf16>
      %c3_124 = arith.constant 3 : index
      %c0_125 = arith.constant 0 : index
      %170 = vector.load %arg4[%c3_124, %c0_125] : memref<9x512xf32, #tpu.memory_space<vmem>>, vector<1x512xf32>
      %c1_i32_126 = arith.constant 1 : i32
      %171 = tpu.dynamic_rotate %148 by %c1_i32_126 dim 1 : vector<8x512xf32>, i32 -> vector<8x512xf32>
      %172 = vector.broadcast %170 : vector<1x512xf32> to vector<8x512xf32>
      %173 = arith.mulf %171, %172 : vector<8x512xf32>
      %174 = arith.truncf %173 : vector<8x512xf32> to vector<8x512xbf16>
      %175 = arith.truncf %148 : vector<8x512xf32> to vector<8x512xbf16>
      %c5_127 = arith.constant 5 : index
      %c0_128 = arith.constant 0 : index
      %176 = vector.load %arg4[%c5_127, %c0_128] : memref<9x512xf32, #tpu.memory_space<vmem>>, vector<1x512xf32>
      %c511_i32_129 = arith.constant 511 : i32
      %177 = tpu.dynamic_rotate %148 by %c511_i32_129 dim 1 : vector<8x512xf32>, i32 -> vector<8x512xf32>
      %178 = vector.broadcast %176 : vector<1x512xf32> to vector<8x512xf32>
      %179 = arith.mulf %177, %178 : vector<8x512xf32>
      %180 = arith.truncf %179 : vector<8x512xf32> to vector<8x512xbf16>
      %c6_130 = arith.constant 6 : index
      %c0_131 = arith.constant 0 : index
      %181 = vector.load %arg4[%c6_130, %c0_131] : memref<9x512xf32, #tpu.memory_space<vmem>>, vector<1x512xf32>
      %c497_i32_132 = arith.constant 497 : i32
      %182 = tpu.dynamic_rotate %148 by %c497_i32_132 dim 1 : vector<8x512xf32>, i32 -> vector<8x512xf32>
      %183 = vector.broadcast %181 : vector<1x512xf32> to vector<8x512xf32>
      %184 = arith.mulf %182, %183 : vector<8x512xf32>
      %185 = arith.truncf %184 : vector<8x512xf32> to vector<8x512xbf16>
      %c7_133 = arith.constant 7 : index
      %c0_134 = arith.constant 0 : index
      %186 = vector.load %arg4[%c7_133, %c0_134] : memref<9x512xf32, #tpu.memory_space<vmem>>, vector<1x512xf32>
      %c496_i32_135 = arith.constant 496 : i32
      %187 = tpu.dynamic_rotate %148 by %c496_i32_135 dim 1 : vector<8x512xf32>, i32 -> vector<8x512xf32>
      %188 = vector.broadcast %186 : vector<1x512xf32> to vector<8x512xf32>
      %189 = arith.mulf %187, %188 : vector<8x512xf32>
      %190 = arith.truncf %189 : vector<8x512xf32> to vector<8x512xbf16>
      %c8_136 = arith.constant 8 : index
      %c0_137 = arith.constant 0 : index
      %191 = vector.load %arg4[%c8_136, %c0_137] : memref<9x512xf32, #tpu.memory_space<vmem>>, vector<1x512xf32>
      %c495_i32_138 = arith.constant 495 : i32
      %192 = tpu.dynamic_rotate %148 by %c495_i32_138 dim 1 : vector<8x512xf32>, i32 -> vector<8x512xf32>
      %193 = vector.broadcast %191 : vector<1x512xf32> to vector<8x512xf32>
      %194 = arith.mulf %192, %193 : vector<8x512xf32>
      %195 = arith.truncf %194 : vector<8x512xf32> to vector<8x512xbf16>
      %c1_139 = arith.constant 1 : index
      %c0_140 = arith.constant 0 : index
      %c0_141 = arith.constant 0 : index
      %196 = vector.load %arg19[%c1_139, %c0_140, %c0_141] : memref<2x8x512xf32, #tpu.memory_space<vmem>>, vector<1x8x512xf32>
      %197 = vector.shape_cast %196 : vector<1x8x512xf32> to vector<8x512xf32>
      %c0_142 = arith.constant 0 : index
      %c0_143 = arith.constant 0 : index
      %198 = vector.load %arg4[%c0_142, %c0_143] : memref<9x512xf32, #tpu.memory_space<vmem>>, vector<1x512xf32>
      %c17_i32_144 = arith.constant 17 : i32
      %199 = tpu.dynamic_rotate %197 by %c17_i32_144 dim 1 : vector<8x512xf32>, i32 -> vector<8x512xf32>
      %200 = vector.broadcast %198 : vector<1x512xf32> to vector<8x512xf32>
      %201 = arith.mulf %199, %200 : vector<8x512xf32>
      %202 = arith.truncf %201 : vector<8x512xf32> to vector<8x512xbf16>
      %c1_145 = arith.constant 1 : index
      %c0_146 = arith.constant 0 : index
      %203 = vector.load %arg4[%c1_145, %c0_146] : memref<9x512xf32, #tpu.memory_space<vmem>>, vector<1x512xf32>
      %c16_i32_147 = arith.constant 16 : i32
      %204 = tpu.dynamic_rotate %197 by %c16_i32_147 dim 1 : vector<8x512xf32>, i32 -> vector<8x512xf32>
      %205 = vector.broadcast %203 : vector<1x512xf32> to vector<8x512xf32>
      %206 = arith.mulf %204, %205 : vector<8x512xf32>
      %207 = arith.truncf %206 : vector<8x512xf32> to vector<8x512xbf16>
      %c2_148 = arith.constant 2 : index
      %c0_149 = arith.constant 0 : index
      %208 = vector.load %arg4[%c2_148, %c0_149] : memref<9x512xf32, #tpu.memory_space<vmem>>, vector<1x512xf32>
      %c15_i32_150 = arith.constant 15 : i32
      %209 = tpu.dynamic_rotate %197 by %c15_i32_150 dim 1 : vector<8x512xf32>, i32 -> vector<8x512xf32>
      %210 = vector.broadcast %208 : vector<1x512xf32> to vector<8x512xf32>
      %211 = arith.mulf %209, %210 : vector<8x512xf32>
      %212 = arith.truncf %211 : vector<8x512xf32> to vector<8x512xbf16>
      %c3_151 = arith.constant 3 : index
      %c0_152 = arith.constant 0 : index
      %213 = vector.load %arg4[%c3_151, %c0_152] : memref<9x512xf32, #tpu.memory_space<vmem>>, vector<1x512xf32>
      %c1_i32_153 = arith.constant 1 : i32
      %214 = tpu.dynamic_rotate %197 by %c1_i32_153 dim 1 : vector<8x512xf32>, i32 -> vector<8x512xf32>
      %215 = vector.broadcast %213 : vector<1x512xf32> to vector<8x512xf32>
      %216 = arith.mulf %214, %215 : vector<8x512xf32>
      %217 = arith.truncf %216 : vector<8x512xf32> to vector<8x512xbf16>
      %218 = arith.truncf %197 : vector<8x512xf32> to vector<8x512xbf16>
      %c5_154 = arith.constant 5 : index
      %c0_155 = arith.constant 0 : index
      %219 = vector.load %arg4[%c5_154, %c0_155] : memref<9x512xf32, #tpu.memory_space<vmem>>, vector<1x512xf32>
      %c511_i32_156 = arith.constant 511 : i32
      %220 = tpu.dynamic_rotate %197 by %c511_i32_156 dim 1 : vector<8x512xf32>, i32 -> vector<8x512xf32>
      %221 = vector.broadcast %219 : vector<1x512xf32> to vector<8x512xf32>
      %222 = arith.mulf %220, %221 : vector<8x512xf32>
      %223 = arith.truncf %222 : vector<8x512xf32> to vector<8x512xbf16>
      %c6_157 = arith.constant 6 : index
      %c0_158 = arith.constant 0 : index
      %224 = vector.load %arg4[%c6_157, %c0_158] : memref<9x512xf32, #tpu.memory_space<vmem>>, vector<1x512xf32>
      %c497_i32_159 = arith.constant 497 : i32
      %225 = tpu.dynamic_rotate %197 by %c497_i32_159 dim 1 : vector<8x512xf32>, i32 -> vector<8x512xf32>
      %226 = vector.broadcast %224 : vector<1x512xf32> to vector<8x512xf32>
      %227 = arith.mulf %225, %226 : vector<8x512xf32>
      %228 = arith.truncf %227 : vector<8x512xf32> to vector<8x512xbf16>
      %c7_160 = arith.constant 7 : index
      %c0_161 = arith.constant 0 : index
      %229 = vector.load %arg4[%c7_160, %c0_161] : memref<9x512xf32, #tpu.memory_space<vmem>>, vector<1x512xf32>
      %c496_i32_162 = arith.constant 496 : i32
      %230 = tpu.dynamic_rotate %197 by %c496_i32_162 dim 1 : vector<8x512xf32>, i32 -> vector<8x512xf32>
      %231 = vector.broadcast %229 : vector<1x512xf32> to vector<8x512xf32>
      %232 = arith.mulf %230, %231 : vector<8x512xf32>
      %233 = arith.truncf %232 : vector<8x512xf32> to vector<8x512xbf16>
      %c8_163 = arith.constant 8 : index
      %c0_164 = arith.constant 0 : index
      %234 = vector.load %arg4[%c8_163, %c0_164] : memref<9x512xf32, #tpu.memory_space<vmem>>, vector<1x512xf32>
      %c495_i32_165 = arith.constant 495 : i32
      %235 = tpu.dynamic_rotate %197 by %c495_i32_165 dim 1 : vector<8x512xf32>, i32 -> vector<8x512xf32>
      %236 = vector.broadcast %234 : vector<1x512xf32> to vector<8x512xf32>
      %237 = arith.mulf %235, %236 : vector<8x512xf32>
      %238 = arith.truncf %237 : vector<8x512xf32> to vector<8x512xbf16>
      %239 = tpu.concatenate %159, %164, %169, %174, %175, %180, %185, %190, %195, %202, %207, %212, %217, %218, %223, %228 in 0 : vector<8x512xbf16>, vector<8x512xbf16>, vector<8x512xbf16>, vector<8x512xbf16>, vector<8x512xbf16>, vector<8x512xbf16>, vector<8x512xbf16>, vector<8x512xbf16>, vector<8x512xbf16>, vector<8x512xbf16>, vector<8x512xbf16>, vector<8x512xbf16>, vector<8x512xbf16>, vector<8x512xbf16>, vector<8x512xbf16>, vector<8x512xbf16> -> vector<128x512xbf16>
      %240 = tpu.concatenate %233, %238 in 0 : vector<8x512xbf16>, vector<8x512xbf16> -> vector<16x512xbf16>
      %241 = tpu.concatenate %239, %240 in 0 : vector<128x512xbf16>, vector<16x512xbf16> -> vector<144x512xbf16>
      %c0_166 = arith.constant 0 : index
      %c0_167 = arith.constant 0 : index
      %242 = vector.load %arg13[%c0_166, %c0_167] : memref<32x144xbf16, #tpu.memory_space<vmem>>, vector<32x144xbf16>
      %cst_168 = arith.constant dense<0.000000e+00> : vector<32x512xf32>
      %243 = tpu.matmul %242, %241, %cst_168 {dimension_numbers = #tpu.dot_dimension_numbers<[1], [0], [0], [1], [0, 0, 1, 1], [], []>} : vector<32x144xbf16>, vector<144x512xbf16>, vector<32x512xf32> -> vector<32x512xf32>
      %c0_169 = arith.constant 0 : index
      %c0_170 = arith.constant 0 : index
      %244 = vector.load %arg14[%c0_169, %c0_170] : memref<32x1xf32, #tpu.memory_space<vmem>>, vector<32x1xf32>
      %245 = vector.broadcast %244 : vector<32x1xf32> to vector<32x512xf32>
      %246 = arith.addf %243, %245 : vector<32x512xf32>
      %c1_171 = arith.constant 1 : index
      %c0_172 = arith.constant 0 : index
      %c0_173 = arith.constant 0 : index
      %247 = vector.load %arg20[%c1_171, %c0_172, %c0_173] : memref<2x8x512xf32, #tpu.memory_space<vmem>>, vector<1x8x512xf32>
      %248 = vector.shape_cast %247 : vector<1x8x512xf32> to vector<8x512xf32>
      %249 = vector.extract_strided_slice %246 {offsets = [0, 0], sizes = [8, 512], strides = [1, 1]} : vector<32x512xf32> to vector<8x512xf32>
      %250 = arith.negf %249 : vector<8x512xf32>
      %251 = math.exp %250 : vector<8x512xf32>
      %cst_174 = arith.constant 1.000000e+00 : f32
      %252 = vector.broadcast %cst_174 : f32 to vector<8x512xf32>
      %253 = arith.addf %252, %251 : vector<8x512xf32>
      %254 = arith.divf %252, %253 : vector<8x512xf32>
      %255 = vector.extract_strided_slice %246 {offsets = [8, 0], sizes = [8, 512], strides = [1, 1]} : vector<32x512xf32> to vector<8x512xf32>
      %256 = arith.negf %255 : vector<8x512xf32>
      %257 = math.exp %256 : vector<8x512xf32>
      %cst_175 = arith.constant 1.000000e+00 : f32
      %258 = vector.broadcast %cst_175 : f32 to vector<8x512xf32>
      %259 = arith.addf %258, %257 : vector<8x512xf32>
      %260 = arith.divf %258, %259 : vector<8x512xf32>
      %261 = vector.extract_strided_slice %246 {offsets = [16, 0], sizes = [8, 512], strides = [1, 1]} : vector<32x512xf32> to vector<8x512xf32>
      %262 = arith.negf %261 : vector<8x512xf32>
      %263 = math.exp %262 : vector<8x512xf32>
      %cst_176 = arith.constant 1.000000e+00 : f32
      %264 = vector.broadcast %cst_176 : f32 to vector<8x512xf32>
      %265 = arith.addf %264, %263 : vector<8x512xf32>
      %266 = arith.divf %264, %265 : vector<8x512xf32>
      %267 = vector.extract_strided_slice %246 {offsets = [24, 0], sizes = [8, 512], strides = [1, 1]} : vector<32x512xf32> to vector<8x512xf32>
      %268 = math.tanh %267 : vector<8x512xf32>
      %269 = arith.mulf %260, %248 : vector<8x512xf32>
      %270 = arith.mulf %254, %268 : vector<8x512xf32>
      %271 = arith.addf %269, %270 : vector<8x512xf32>
      %272 = math.tanh %271 : vector<8x512xf32>
      %273 = arith.mulf %266, %272 : vector<8x512xf32>
      %c1_177 = arith.constant 1 : index
      %c0_178 = arith.constant 0 : index
      %c0_179 = arith.constant 0 : index
      %274 = vector.load %arg19[%c1_177, %c0_178, %c0_179] : memref<2x8x512xf32, #tpu.memory_space<vmem>>, vector<1x8x512xf32>
      %275 = vector.shape_cast %274 : vector<1x8x512xf32> to vector<8x512xf32>
      %276 = vector.shape_cast %273 : vector<8x512xf32> to vector<1x8x512xf32>
      tpu.vector_store %arg19[%c1_177, %c0_178, %c0_179], %276 {strides = array<i32>} : memref<2x8x512xf32, #tpu.memory_space<vmem>>, vector<1x8x512xf32>,
      %c1_180 = arith.constant 1 : index
      %c0_181 = arith.constant 0 : index
      %c0_182 = arith.constant 0 : index
      %277 = vector.load %arg20[%c1_180, %c0_181, %c0_182] : memref<2x8x512xf32, #tpu.memory_space<vmem>>, vector<1x8x512xf32>
      %278 = vector.shape_cast %277 : vector<1x8x512xf32> to vector<8x512xf32>
      %279 = vector.shape_cast %271 : vector<8x512xf32> to vector<1x8x512xf32>
      tpu.vector_store %arg20[%c1_180, %c0_181, %c0_182], %279 {strides = array<i32>} : memref<2x8x512xf32, #tpu.memory_space<vmem>>, vector<1x8x512xf32>,
      %c0_183 = arith.constant 0 : index
      %c0_184 = arith.constant 0 : index
      %280 = vector.load %arg15[%c0_183, %c0_184] : memref<8x72xbf16, #tpu.memory_space<vmem>>, vector<8x72xbf16>
      %c0_185 = arith.constant 0 : index
      %c0_186 = arith.constant 0 : index
      %281 = vector.load %arg4[%c0_185, %c0_186] : memref<9x512xf32, #tpu.memory_space<vmem>>, vector<1x512xf32>
      %c17_i32_187 = arith.constant 17 : i32
      %282 = tpu.dynamic_rotate %273 by %c17_i32_187 dim 1 : vector<8x512xf32>, i32 -> vector<8x512xf32>
      %283 = vector.broadcast %281 : vector<1x512xf32> to vector<8x512xf32>
      %284 = arith.mulf %282, %283 : vector<8x512xf32>
      %285 = arith.truncf %284 : vector<8x512xf32> to vector<8x512xbf16>
      %c1_188 = arith.constant 1 : index
      %c0_189 = arith.constant 0 : index
      %286 = vector.load %arg4[%c1_188, %c0_189] : memref<9x512xf32, #tpu.memory_space<vmem>>, vector<1x512xf32>
      %c16_i32_190 = arith.constant 16 : i32
      %287 = tpu.dynamic_rotate %273 by %c16_i32_190 dim 1 : vector<8x512xf32>, i32 -> vector<8x512xf32>
      %288 = vector.broadcast %286 : vector<1x512xf32> to vector<8x512xf32>
      %289 = arith.mulf %287, %288 : vector<8x512xf32>
      %290 = arith.truncf %289 : vector<8x512xf32> to vector<8x512xbf16>
      %c2_191 = arith.constant 2 : index
      %c0_192 = arith.constant 0 : index
      %291 = vector.load %arg4[%c2_191, %c0_192] : memref<9x512xf32, #tpu.memory_space<vmem>>, vector<1x512xf32>
      %c15_i32_193 = arith.constant 15 : i32
      %292 = tpu.dynamic_rotate %273 by %c15_i32_193 dim 1 : vector<8x512xf32>, i32 -> vector<8x512xf32>
      %293 = vector.broadcast %291 : vector<1x512xf32> to vector<8x512xf32>
      %294 = arith.mulf %292, %293 : vector<8x512xf32>
      %295 = arith.truncf %294 : vector<8x512xf32> to vector<8x512xbf16>
      %c3_194 = arith.constant 3 : index
      %c0_195 = arith.constant 0 : index
      %296 = vector.load %arg4[%c3_194, %c0_195] : memref<9x512xf32, #tpu.memory_space<vmem>>, vector<1x512xf32>
      %c1_i32_196 = arith.constant 1 : i32
      %297 = tpu.dynamic_rotate %273 by %c1_i32_196 dim 1 : vector<8x512xf32>, i32 -> vector<8x512xf32>
      %298 = vector.broadcast %296 : vector<1x512xf32> to vector<8x512xf32>
      %299 = arith.mulf %297, %298 : vector<8x512xf32>
      %300 = arith.truncf %299 : vector<8x512xf32> to vector<8x512xbf16>
      %301 = arith.truncf %273 : vector<8x512xf32> to vector<8x512xbf16>
      %c5_197 = arith.constant 5 : index
      %c0_198 = arith.constant 0 : index
      %302 = vector.load %arg4[%c5_197, %c0_198] : memref<9x512xf32, #tpu.memory_space<vmem>>, vector<1x512xf32>
      %c511_i32_199 = arith.constant 511 : i32
      %303 = tpu.dynamic_rotate %273 by %c511_i32_199 dim 1 : vector<8x512xf32>, i32 -> vector<8x512xf32>
      %304 = vector.broadcast %302 : vector<1x512xf32> to vector<8x512xf32>
      %305 = arith.mulf %303, %304 : vector<8x512xf32>
      %306 = arith.truncf %305 : vector<8x512xf32> to vector<8x512xbf16>
      %c6_200 = arith.constant 6 : index
      %c0_201 = arith.constant 0 : index
      %307 = vector.load %arg4[%c6_200, %c0_201] : memref<9x512xf32, #tpu.memory_space<vmem>>, vector<1x512xf32>
      %c497_i32_202 = arith.constant 497 : i32
      %308 = tpu.dynamic_rotate %273 by %c497_i32_202 dim 1 : vector<8x512xf32>, i32 -> vector<8x512xf32>
      %309 = vector.broadcast %307 : vector<1x512xf32> to vector<8x512xf32>
      %310 = arith.mulf %308, %309 : vector<8x512xf32>
      %311 = arith.truncf %310 : vector<8x512xf32> to vector<8x512xbf16>
      %c7_203 = arith.constant 7 : index
      %c0_204 = arith.constant 0 : index
      %312 = vector.load %arg4[%c7_203, %c0_204] : memref<9x512xf32, #tpu.memory_space<vmem>>, vector<1x512xf32>
      %c496_i32_205 = arith.constant 496 : i32
      %313 = tpu.dynamic_rotate %273 by %c496_i32_205 dim 1 : vector<8x512xf32>, i32 -> vector<8x512xf32>
      %314 = vector.broadcast %312 : vector<1x512xf32> to vector<8x512xf32>
      %315 = arith.mulf %313, %314 : vector<8x512xf32>
      %316 = arith.truncf %315 : vector<8x512xf32> to vector<8x512xbf16>
      %c8_206 = arith.constant 8 : index
      %c0_207 = arith.constant 0 : index
      %317 = vector.load %arg4[%c8_206, %c0_207] : memref<9x512xf32, #tpu.memory_space<vmem>>, vector<1x512xf32>
      %c495_i32_208 = arith.constant 495 : i32
      %318 = tpu.dynamic_rotate %273 by %c495_i32_208 dim 1 : vector<8x512xf32>, i32 -> vector<8x512xf32>
      %319 = vector.broadcast %317 : vector<1x512xf32> to vector<8x512xf32>
      %320 = arith.mulf %318, %319 : vector<8x512xf32>
      %321 = arith.truncf %320 : vector<8x512xf32> to vector<8x512xbf16>
      %322 = tpu.concatenate %285, %290, %295, %300, %301, %306, %311, %316, %321 in 0 : vector<8x512xbf16>, vector<8x512xbf16>, vector<8x512xbf16>, vector<8x512xbf16>, vector<8x512xbf16>, vector<8x512xbf16>, vector<8x512xbf16>, vector<8x512xbf16>, vector<8x512xbf16> -> vector<72x512xbf16>
      %cst_209 = arith.constant dense<0.000000e+00> : vector<8x512xf32>
      %323 = tpu.matmul %280, %322, %cst_209 {dimension_numbers = #tpu.dot_dimension_numbers<[1], [0], [0], [1], [0, 0, 1, 1], [], []>} : vector<8x72xbf16>, vector<72x512xbf16>, vector<8x512xf32> -> vector<8x512xf32>
      %cst_210 = arith.constant 0.000000e+00 : f32
      %324 = vector.broadcast %cst_210 : f32 to vector<8x512xf32>
      %325 = arith.cmpf ogt, %323, %324 : vector<8x512xf32>
      %cst_211 = arith.constant 0.00999999977 : f32
      %326 = vector.broadcast %cst_211 : f32 to vector<8x512xf32>
      %327 = arith.mulf %326, %323 : vector<8x512xf32>
      %328 = arith.select %325, %323, %327 : vector<8x512xi1>, vector<8x512xf32>
      %c0_212 = arith.constant 0 : index
      %c0_213 = arith.constant 0 : index
      %329 = vector.load %arg16[%c0_212, %c0_213] : memref<1x72xbf16, #tpu.memory_space<vmem>>, vector<1x72xbf16>
      %c0_214 = arith.constant 0 : index
      %c0_215 = arith.constant 0 : index
      %330 = vector.load %arg4[%c0_214, %c0_215] : memref<9x512xf32, #tpu.memory_space<vmem>>, vector<1x512xf32>
      %c17_i32_216 = arith.constant 17 : i32
      %331 = tpu.dynamic_rotate %328 by %c17_i32_216 dim 1 : vector<8x512xf32>, i32 -> vector<8x512xf32>
      %332 = vector.broadcast %330 : vector<1x512xf32> to vector<8x512xf32>
      %333 = arith.mulf %331, %332 : vector<8x512xf32>
      %334 = arith.truncf %333 : vector<8x512xf32> to vector<8x512xbf16>
      %c1_217 = arith.constant 1 : index
      %c0_218 = arith.constant 0 : index
      %335 = vector.load %arg4[%c1_217, %c0_218] : memref<9x512xf32, #tpu.memory_space<vmem>>, vector<1x512xf32>
      %c16_i32_219 = arith.constant 16 : i32
      %336 = tpu.dynamic_rotate %328 by %c16_i32_219 dim 1 : vector<8x512xf32>, i32 -> vector<8x512xf32>
      %337 = vector.broadcast %335 : vector<1x512xf32> to vector<8x512xf32>
      %338 = arith.mulf %336, %337 : vector<8x512xf32>
      %339 = arith.truncf %338 : vector<8x512xf32> to vector<8x512xbf16>
      %c2_220 = arith.constant 2 : index
      %c0_221 = arith.constant 0 : index
      %340 = vector.load %arg4[%c2_220, %c0_221] : memref<9x512xf32, #tpu.memory_space<vmem>>, vector<1x512xf32>
      %c15_i32_222 = arith.constant 15 : i32
      %341 = tpu.dynamic_rotate %328 by %c15_i32_222 dim 1 : vector<8x512xf32>, i32 -> vector<8x512xf32>
      %342 = vector.broadcast %340 : vector<1x512xf32> to vector<8x512xf32>
      %343 = arith.mulf %341, %342 : vector<8x512xf32>
      %344 = arith.truncf %343 : vector<8x512xf32> to vector<8x512xbf16>
      %c3_223 = arith.constant 3 : index
      %c0_224 = arith.constant 0 : index
      %345 = vector.load %arg4[%c3_223, %c0_224] : memref<9x512xf32, #tpu.memory_space<vmem>>, vector<1x512xf32>
      %c1_i32_225 = arith.constant 1 : i32
      %346 = tpu.dynamic_rotate %328 by %c1_i32_225 dim 1 : vector<8x512xf32>, i32 -> vector<8x512xf32>
      %347 = vector.broadcast %345 : vector<1x512xf32> to vector<8x512xf32>
      %348 = arith.mulf %346, %347 : vector<8x512xf32>
      %349 = arith.truncf %348 : vector<8x512xf32> to vector<8x512xbf16>
      %350 = arith.truncf %328 : vector<8x512xf32> to vector<8x512xbf16>
      %c5_226 = arith.constant 5 : index
      %c0_227 = arith.constant 0 : index
      %351 = vector.load %arg4[%c5_226, %c0_227] : memref<9x512xf32, #tpu.memory_space<vmem>>, vector<1x512xf32>
      %c511_i32_228 = arith.constant 511 : i32
      %352 = tpu.dynamic_rotate %328 by %c511_i32_228 dim 1 : vector<8x512xf32>, i32 -> vector<8x512xf32>
      %353 = vector.broadcast %351 : vector<1x512xf32> to vector<8x512xf32>
      %354 = arith.mulf %352, %353 : vector<8x512xf32>
      %355 = arith.truncf %354 : vector<8x512xf32> to vector<8x512xbf16>
      %c6_229 = arith.constant 6 : index
      %c0_230 = arith.constant 0 : index
      %356 = vector.load %arg4[%c6_229, %c0_230] : memref<9x512xf32, #tpu.memory_space<vmem>>, vector<1x512xf32>
      %c497_i32_231 = arith.constant 497 : i32
      %357 = tpu.dynamic_rotate %328 by %c497_i32_231 dim 1 : vector<8x512xf32>, i32 -> vector<8x512xf32>
      %358 = vector.broadcast %356 : vector<1x512xf32> to vector<8x512xf32>
      %359 = arith.mulf %357, %358 : vector<8x512xf32>
      %360 = arith.truncf %359 : vector<8x512xf32> to vector<8x512xbf16>
      %c7_232 = arith.constant 7 : index
      %c0_233 = arith.constant 0 : index
      %361 = vector.load %arg4[%c7_232, %c0_233] : memref<9x512xf32, #tpu.memory_space<vmem>>, vector<1x512xf32>
      %c496_i32_234 = arith.constant 496 : i32
      %362 = tpu.dynamic_rotate %328 by %c496_i32_234 dim 1 : vector<8x512xf32>, i32 -> vector<8x512xf32>
      %363 = vector.broadcast %361 : vector<1x512xf32> to vector<8x512xf32>
      %364 = arith.mulf %362, %363 : vector<8x512xf32>
      %365 = arith.truncf %364 : vector<8x512xf32> to vector<8x512xbf16>
      %c8_235 = arith.constant 8 : index
      %c0_236 = arith.constant 0 : index
      %366 = vector.load %arg4[%c8_235, %c0_236] : memref<9x512xf32, #tpu.memory_space<vmem>>, vector<1x512xf32>
      %c495_i32_237 = arith.constant 495 : i32
      %367 = tpu.dynamic_rotate %328 by %c495_i32_237 dim 1 : vector<8x512xf32>, i32 -> vector<8x512xf32>
      %368 = vector.broadcast %366 : vector<1x512xf32> to vector<8x512xf32>
      %369 = arith.mulf %367, %368 : vector<8x512xf32>
      %370 = arith.truncf %369 : vector<8x512xf32> to vector<8x512xbf16>
      %371 = tpu.concatenate %334, %339, %344, %349, %350, %355, %360, %365, %370 in 0 : vector<8x512xbf16>, vector<8x512xbf16>, vector<8x512xbf16>, vector<8x512xbf16>, vector<8x512xbf16>, vector<8x512xbf16>, vector<8x512xbf16>, vector<8x512xbf16>, vector<8x512xbf16> -> vector<72x512xbf16>
      %cst_238 = arith.constant dense<0.000000e+00> : vector<1x512xf32>
      %372 = tpu.matmul %329, %371, %cst_238 {dimension_numbers = #tpu.dot_dimension_numbers<[1], [0], [0], [1], [0, 0, 1, 1], [], []>} : vector<1x72xbf16>, vector<72x512xbf16>, vector<1x512xf32> -> vector<1x512xf32>
      %cst_239 = arith.constant 0.000000e+00 : f32
      %373 = vector.broadcast %cst_239 : f32 to vector<1x512xf32>
      %374 = arith.cmpf ogt, %372, %373 : vector<1x512xf32>
      %cst_240 = arith.constant 0.00999999977 : f32
      %375 = vector.broadcast %cst_240 : f32 to vector<1x512xf32>
      %376 = arith.mulf %375, %372 : vector<1x512xf32>
      %377 = arith.select %374, %372, %376 : vector<1x512xi1>, vector<1x512xf32>
      %378 = arith.index_cast %36 : i32 to index
      %c0_241 = arith.constant 0 : index
      %c0_242 = arith.constant 0 : index
      %379 = vector.load %arg17[%378, %c0_241, %c0_242] : memref<2x1x512xf32, #tpu.memory_space<vmem>>, vector<1x1x512xf32>
      %380 = vector.shape_cast %379 : vector<1x1x512xf32> to vector<1x512xf32>
      %381 = vector.shape_cast %377 : vector<1x512xf32> to vector<1x1x512xf32>
      tpu.vector_store %arg17[%378, %c0_241, %c0_242], %381 {strides = array<i32>} : memref<2x1x512xf32, #tpu.memory_space<vmem>>, vector<1x1x512xf32>,
      %c0_243 = arith.constant 0 : index
      %c0_244 = arith.constant 0 : index
      %382 = vector.load %arg23[%c0_243, %c0_244] : memref<1x512xf32, #tpu.memory_space<vmem>>, vector<1x512xf32>
      tpu.vector_store %arg23[%c0_243, %c0_244], %377 {strides = array<i32>} : memref<1x512xf32, #tpu.memory_space<vmem>>, vector<1x512xf32>,
    }
    %c2_i32_54 = arith.constant 2 : i32
    return
  }
  func.func @transform_0(%arg0: i32) -> (i32, i32, i32) {
    %c0_i32 = arith.constant 0 : i32
    %c0_i32_0 = arith.constant 0 : i32
    %c0_i32_1 = arith.constant 0 : i32
    return %c0_i32, %c0_i32_0, %arg0 : i32, i32, i32
  }
  func.func @transform_1(%arg0: i32) -> (i32, i32, i32) {
    %c0_i32 = arith.constant 0 : i32
    %c0_i32_0 = arith.constant 0 : i32
    %c0_i32_1 = arith.constant 0 : i32
    return %c0_i32, %c0_i32_0, %arg0 : i32, i32, i32
  }
  func.func @transform_2(%arg0: i32) -> (i32, i32, i32) {
    %c0_i32 = arith.constant 0 : i32
    %c0_i32_0 = arith.constant 0 : i32
    %c0_i32_1 = arith.constant 0 : i32
    return %c0_i32, %c0_i32_0, %arg0 : i32, i32, i32
  }
  func.func @transform_3(%arg0: i32) -> (i32, i32) {
    %c0_i32 = arith.constant 0 : i32
    %c0_i32_0 = arith.constant 0 : i32
    return %c0_i32, %arg0 : i32, i32
  }
  func.func @transform_4(%arg0: i32) -> (i32, i32) {
    %c0_i32 = arith.constant 0 : i32
    %c0_i32_0 = arith.constant 0 : i32
    %c0_i32_1 = arith.constant 0 : i32
    return %c0_i32, %c0_i32_0 : i32, i32
  }
  func.func @transform_5(%arg0: i32) -> (i32, i32) {
    %c0_i32 = arith.constant 0 : i32
    %c0_i32_0 = arith.constant 0 : i32
    %c0_i32_1 = arith.constant 0 : i32
    return %c0_i32, %c0_i32_0 : i32, i32
  }
  func.func @transform_6(%arg0: i32) -> (i32, i32) {
    %c0_i32 = arith.constant 0 : i32
    %c0_i32_0 = arith.constant 0 : i32
    %c0_i32_1 = arith.constant 0 : i32
    return %c0_i32, %c0_i32_0 : i32, i32
  }
  func.func @transform_7(%arg0: i32) -> (i32, i32) {
    %c0_i32 = arith.constant 0 : i32
    %c0_i32_0 = arith.constant 0 : i32
    %c0_i32_1 = arith.constant 0 : i32
    return %c0_i32, %c0_i32_0 : i32, i32
  }
  func.func @transform_8(%arg0: i32) -> (i32, i32) {
    %c0_i32 = arith.constant 0 : i32
    %c0_i32_0 = arith.constant 0 : i32
    %c0_i32_1 = arith.constant 0 : i32
    return %c0_i32, %c0_i32_0 : i32, i32
  }
  func.func @transform_9(%arg0: i32) -> (i32, i32) {
    %c0_i32 = arith.constant 0 : i32
    %c0_i32_0 = arith.constant 0 : i32
    %c0_i32_1 = arith.constant 0 : i32
    return %c0_i32, %c0_i32_0 : i32, i32
  }
  func.func @transform_10(%arg0: i32) -> (i32, i32) {
    %c0_i32 = arith.constant 0 : i32
    %c0_i32_0 = arith.constant 0 : i32
    %c0_i32_1 = arith.constant 0 : i32
    return %c0_i32, %c0_i32_0 : i32, i32
  }
  func.func @transform_11(%arg0: i32) -> (i32, i32) {
    %c0_i32 = arith.constant 0 : i32
    %c0_i32_0 = arith.constant 0 : i32
    %c0_i32_1 = arith.constant 0 : i32
    return %c0_i32, %c0_i32_0 : i32, i32
  }
  func.func @transform_12(%arg0: i32) -> (i32, i32) {
    %c0_i32 = arith.constant 0 : i32
    %c0_i32_0 = arith.constant 0 : i32
    %c0_i32_1 = arith.constant 0 : i32
    return %c0_i32, %c0_i32_0 : i32, i32
  }
  func.func @transform_13(%arg0: i32) -> (i32, i32) {
    %c0_i32 = arith.constant 0 : i32
    %c0_i32_0 = arith.constant 0 : i32
    %c0_i32_1 = arith.constant 0 : i32
    return %c0_i32, %c0_i32_0 : i32, i32
  }
  func.func @transform_14(%arg0: i32) -> (i32, i32) {
    %c0_i32 = arith.constant 0 : i32
    %c0_i32_0 = arith.constant 0 : i32
    %c0_i32_1 = arith.constant 0 : i32
    return %c0_i32, %c0_i32_0 : i32, i32
  }
  func.func @transform_15(%arg0: i32) -> (i32, i32) {
    %c0_i32 = arith.constant 0 : i32
    %c0_i32_0 = arith.constant 0 : i32
    %c0_i32_1 = arith.constant 0 : i32
    return %c0_i32, %c0_i32_0 : i32, i32
  }
  func.func @transform_16(%arg0: i32) -> (i32, i32, i32) {
    %c0_i32 = arith.constant 0 : i32
    %c0_i32_0 = arith.constant 0 : i32
    %c0_i32_1 = arith.constant 0 : i32
    return %c0_i32, %c0_i32_0, %arg0 : i32, i32, i32
  }
}

</mosaic_0001>

<llo_original>
// kernel: weather_model_forward.1
$region0: #{weather_model_forward.1}
  #allocation0 [shape = 'u32[]', space=smem, size = 0x4, offset = 0x4, fixed_abs, tag = 'smem constant byte address 0x4 - core index']
  #allocation1 [shape = 'u32[144,128]{1,0:T(1,128)}', space=vmem, size = 0x12000, scoped, tag = 'internal scratch']
  #allocation2 [shape = 'f32[3,4,512]{2,1,0:T(4,128)}', space=vmem, size = 0x6000, scoped, tag = 'scratch operand']
  #allocation3 [shape = 'f32[2,8,512]{2,1,0:T(8,128)}', space=vmem, size = 0x8000, scoped, tag = 'scratch operand']
  #allocation4 [shape = 'f32[2,8,512]{2,1,0:T(8,128)}', space=vmem, size = 0x8000, scoped, tag = 'scratch operand']
  #allocation5 [shape = 'f32[2,8,512]{2,1,0:T(8,128)}', space=vmem, size = 0x8000, scoped, tag = 'scratch operand']
  #allocation6 [shape = 'f32[2,8,512]{2,1,0:T(8,128)}', space=vmem, size = 0x8000, scoped, tag = 'scratch operand']
  #allocation7 [shape = 'f32[1,512]{1,0:T(1,128)}', space=vmem, size = 0x800, scoped, tag = 'scratch operand']
  %s0 = inlined_call_operand.vmem [shape: f32[3,4,512], index: 0, kind: input, shape index: {}]
  %s1 = inlined_call_operand.vmem [shape: f32[2,8,512], index: 1, kind: input, shape index: {}]
  %s2 = inlined_call_operand.vmem [shape: f32[2,8,512], index: 2, kind: input, shape index: {}]
  %s3 = inlined_call_operand.vmem [shape: f32[9,512], index: 3, kind: input, shape index: {}]
  %s4 = inlined_call_operand.vmem [shape: bf16[12,252], index: 4, kind: input, shape index: {}]
  %s5 = inlined_call_operand.vmem [shape: f32[12,1], index: 5, kind: input, shape index: {}]
  %s6 = inlined_call_operand.vmem [shape: bf16[32,99], index: 6, kind: input, shape index: {}]
  %s7 = inlined_call_operand.vmem [shape: f32[32,1], index: 7, kind: input, shape index: {}]
  %s8 = inlined_call_operand.vmem [shape: bf16[32,144], index: 8, kind: input, shape index: {}]
  %s9 = inlined_call_operand.vmem [shape: f32[32,1], index: 9, kind: input, shape index: {}]
  %s10 = inlined_call_operand.vmem [shape: bf16[32,81], index: 10, kind: input, shape index: {}]
  %s11 = inlined_call_operand.vmem [shape: f32[32,1], index: 11, kind: input, shape index: {}]
  %s12 = inlined_call_operand.vmem [shape: bf16[32,144], index: 12, kind: input, shape index: {}]
  %s13 = inlined_call_operand.vmem [shape: f32[32,1], index: 13, kind: input, shape index: {}]
  %s14 = inlined_call_operand.vmem [shape: bf16[8,72], index: 14, kind: input, shape index: {}]
  %s15 = inlined_call_operand.vmem [shape: bf16[1,72], index: 15, kind: input, shape index: {}]
  %s16 = inlined_call_operand.vmem [shape: f32[2,1,512], index: 16, kind: output, shape index: {}]
  %s17 = sld [smem:[#allocation0]]
  $region88: #{weather_model_forward.1} parent=0
    _
  %s19 = ssub.s32 1, %s17
  %s20 = scalar_select 0, %s19, %s17
  // Predicated region
  $region2: #{weather_model_forward.1} parent=0 // pred_check
    _
  $region3: #{weather_model_forward.1} parent=0 // pred_check_branch
    %22 = sbr.rel (0) target = $region5
  $region4: #{weather_model_forward.1} parent=0 // pred_region
    _
  $region5: #{weather_model_forward.1} parent=0 // pred_fallthru
    _
  // Predicated region
  $region6: #{weather_model_forward.1} parent=0 // pred_check
    _
  $region7: #{weather_model_forward.1} parent=0 // pred_check_branch
    %24 = sbr.rel (0) target = $region9
  $region8: #{weather_model_forward.1} parent=0 // pred_region
    _
  $region9: #{weather_model_forward.1} parent=0 // pred_fallthru
    _
  // Predicated region
  $region10: #{weather_model_forward.1} parent=0 // pred_check
    _
  $region11: #{weather_model_forward.1} parent=0 // pred_check_branch
    %26 = sbr.rel (0) target = $region13
  $region12: #{weather_model_forward.1} parent=0 // pred_region
    _
  $region13: #{weather_model_forward.1} parent=0 // pred_fallthru
    _
  // Predicated region
  $region14: #{weather_model_forward.1} parent=0 // pred_check
    _
  $region15: #{weather_model_forward.1} parent=0 // pred_check_branch
    %28 = sbr.rel (0) target = $region17
  $region16: #{weather_model_forward.1} parent=0 // pred_region
    _
  $region17: #{weather_model_forward.1} parent=0 // pred_fallthru
    _
  // Predicated region
  $region18: #{weather_model_forward.1} parent=0 // pred_check
    _
  $region19: #{weather_model_forward.1} parent=0 // pred_check_branch
    %30 = sbr.rel (0) target = $region21
  $region20: #{weather_model_forward.1} parent=0 // pred_region
    _
  $region21: #{weather_model_forward.1} parent=0 // pred_fallthru
    _
  // Predicated region
  $region22: #{weather_model_forward.1} parent=0 // pred_check
    _
  $region23: #{weather_model_forward.1} parent=0 // pred_check_branch
    %32 = sbr.rel (0) target = $region25
  $region24: #{weather_model_forward.1} parent=0 // pred_region
    _
  $region25: #{weather_model_forward.1} parent=0 // pred_fallthru
    _
  // Predicated region
  $region26: #{weather_model_forward.1} parent=0 // pred_check
    _
  $region27: #{weather_model_forward.1} parent=0 // pred_check_branch
    %34 = sbr.rel (0) target = $region29
  $region28: #{weather_model_forward.1} parent=0 // pred_region
    _
  $region29: #{weather_model_forward.1} parent=0 // pred_fallthru
    _
  // Predicated region
  $region30: #{weather_model_forward.1} parent=0 // pred_check
    _
  $region31: #{weather_model_forward.1} parent=0 // pred_check_branch
    %36 = sbr.rel (0) target = $region33
  $region32: #{weather_model_forward.1} parent=0 // pred_region
    _
  $region33: #{weather_model_forward.1} parent=0 // pred_fallthru
    _
  // Predicated region
  $region34: #{weather_model_forward.1} parent=0 // pred_check
    _
  $region35: #{weather_model_forward.1} parent=0 // pred_check_branch
    %38 = sbr.rel (0) target = $region37
  $region36: #{weather_model_forward.1} parent=0 // pred_region
    _
  $region37: #{weather_model_forward.1} parent=0 // pred_fallthru
    _
  // Predicated region
  $region38: #{weather_model_forward.1} parent=0 // pred_check
    _
  $region39: #{weather_model_forward.1} parent=0 // pred_check_branch
    %40 = sbr.rel (0) target = $region41
  $region40: #{weather_model_forward.1} parent=0 // pred_region
    _
  $region41: #{weather_model_forward.1} parent=0 // pred_fallthru
    _
  // Predicated region
  $region42: #{weather_model_forward.1} parent=0 // pred_check
    _
  $region43: #{weather_model_forward.1} parent=0 // pred_check_branch
    %42 = sbr.rel (0) target = $region45
  $region44: #{weather_model_forward.1} parent=0 // pred_region
    _
  $region45: #{weather_model_forward.1} parent=0 // pred_fallthru
    _
  // Predicated region
  $region46: #{weather_model_forward.1} parent=0 // pred_check
    _
  $region47: #{weather_model_forward.1} parent=0 // pred_check_branch
    %44 = sbr.rel (0) target = $region49
  $region48: #{weather_model_forward.1} parent=0 // pred_region
    _
  $region49: #{weather_model_forward.1} parent=0 // pred_fallthru
    _
  // Predicated region
  $region50: #{weather_model_forward.1} parent=0 // pred_check
    _
  $region51: #{weather_model_forward.1} parent=0 // pred_check_branch
    %46 = sbr.rel (0) target = $region53
  $region52: #{weather_model_forward.1} parent=0 // pred_region
    _
  $region53: #{weather_model_forward.1} parent=0 // pred_fallthru
    _
  // Predicated region
  $region54: #{weather_model_forward.1} parent=0 // pred_check
    _
  $region55: #{weather_model_forward.1} parent=0 // pred_check_branch
    %48 = sbr.rel (0) target = $region57
  $region56: #{weather_model_forward.1} parent=0 // pred_region
    _
  $region57: #{weather_model_forward.1} parent=0 // pred_fallthru
    _
  // Predicated region
  $region58: #{weather_model_forward.1} parent=0 // pred_check
    _
  $region59: #{weather_model_forward.1} parent=0 // pred_check_branch
    %50 = sbr.rel (0) target = $region61
  $region60: #{weather_model_forward.1} parent=0 // pred_region
    _
  $region61: #{weather_model_forward.1} parent=0 // pred_fallthru
    _
  // Predicated region
  $region62: #{weather_model_forward.1} parent=0 // pred_check
    _
  $region63: #{weather_model_forward.1} parent=0 // pred_check_branch
    %52 = sbr.rel (0) target = $region65
  $region64: #{weather_model_forward.1} parent=0 // pred_region
    _
  $region65: #{weather_model_forward.1} parent=0 // pred_fallthru
    _
  %v54 = vld [vmem:[%s0] sm:$0xff]
  %v55 = vld [vmem:[%s0 + $0x8] sm:$0xff]
  %v56 = vld [vmem:[%s0 + $0x10] sm:$0xff]
  %v57 = vld [vmem:[%s0 + $0x18] sm:$0xff]
  %v58 = vld [vmem:[%s0 + $0x20] sm:$0xff]
  %v59 = vld [vmem:[%s0 + $0x28] sm:$0xff]
  %60 = vst [vmem:[#allocation2] sm:$0xff] %v54
  %61 = vst [vmem:[#allocation2 + $0x8] sm:$0xff] %v55
  %62 = vst [vmem:[#allocation2 + $0x10] sm:$0xff] %v56
  %63 = vst [vmem:[#allocation2 + $0x18] sm:$0xff] %v57
  %64 = vst [vmem:[#allocation2 + $0x20] sm:$0xff] %v58
  %65 = vst [vmem:[#allocation2 + $0x28] sm:$0xff] %v59
  %v66 = vld [vmem:[%s1] sm:$0xff]
  %v67 = vld [vmem:[%s1 + $0x8] sm:$0xff]
  %v68 = vld [vmem:[%s1 + $0x10] sm:$0xff]
  %v69 = vld [vmem:[%s1 + $0x18] sm:$0xff]
  %v70 = vld [vmem:[%s1 + $0x20] sm:$0xff]
  %v71 = vld [vmem:[%s1 + $0x28] sm:$0xff]
  %v72 = vld [vmem:[%s1 + $0x30] sm:$0xff]
  %v73 = vld [vmem:[%s1 + $0x38] sm:$0xff]
  %74 = vst [vmem:[#allocation3] sm:$0xff] %v66
  %75 = vst [vmem:[#allocation3 + $0x8] sm:$0xff] %v67
  %76 = vst [vmem:[#allocation3 + $0x10] sm:$0xff] %v68
  %77 = vst [vmem:[#allocation3 + $0x18] sm:$0xff] %v69
  %78 = vst [vmem:[#allocation3 + $0x20] sm:$0xff] %v70
  %79 = vst [vmem:[#allocation3 + $0x28] sm:$0xff] %v71
  %80 = vst [vmem:[#allocation3 + $0x30] sm:$0xff] %v72
  %81 = vst [vmem:[#allocation3 + $0x38] sm:$0xff] %v73
  %v82 = vld [vmem:[%s2] sm:$0xff]
  %v83 = vld [vmem:[%s2 + $0x8] sm:$0xff]
  %v84 = vld [vmem:[%s2 + $0x10] sm:$0xff]
  %v85 = vld [vmem:[%s2 + $0x18] sm:$0xff]
  %v86 = vld [vmem:[%s2 + $0x20] sm:$0xff]
  %v87 = vld [vmem:[%s2 + $0x28] sm:$0xff]
  %v88 = vld [vmem:[%s2 + $0x30] sm:$0xff]
  %v89 = vld [vmem:[%s2 + $0x38] sm:$0xff]
  %90 = vst [vmem:[#allocation4] sm:$0xff] %v82
  %91 = vst [vmem:[#allocation4 + $0x8] sm:$0xff] %v83
  %92 = vst [vmem:[#allocation4 + $0x10] sm:$0xff] %v84
  %93 = vst [vmem:[#allocation4 + $0x18] sm:$0xff] %v85
  %94 = vst [vmem:[#allocation4 + $0x20] sm:$0xff] %v86
  %95 = vst [vmem:[#allocation4 + $0x28] sm:$0xff] %v87
  %96 = vst [vmem:[#allocation4 + $0x30] sm:$0xff] %v88
  %97 = vst [vmem:[#allocation4 + $0x38] sm:$0xff] %v89
  %98 = vst [vmem:[#allocation5] sm:$0xff] 0.0
  %99 = vst [vmem:[#allocation5 + $0x8] sm:$0xff] 0.0
  %100 = vst [vmem:[#allocation5 + $0x10] sm:$0xff] 0.0
  %101 = vst [vmem:[#allocation5 + $0x18] sm:$0xff] 0.0
  %102 = vst [vmem:[#allocation5 + $0x20] sm:$0xff] 0.0
  %103 = vst [vmem:[#allocation5 + $0x28] sm:$0xff] 0.0
  %104 = vst [vmem:[#allocation5 + $0x30] sm:$0xff] 0.0
  %105 = vst [vmem:[#allocation5 + $0x38] sm:$0xff] 0.0
  %106 = vst [vmem:[#allocation6] sm:$0xff] 0.0
  %107 = vst [vmem:[#allocation6 + $0x8] sm:$0xff] 0.0
  %108 = vst [vmem:[#allocation6 + $0x10] sm:$0xff] 0.0
  %109 = vst [vmem:[#allocation6 + $0x18] sm:$0xff] 0.0
  %110 = vst [vmem:[#allocation6 + $0x20] sm:$0xff] 0.0
  %111 = vst [vmem:[#allocation6 + $0x28] sm:$0xff] 0.0
  %112 = vst [vmem:[#allocation6 + $0x30] sm:$0xff] 0.0
  %113 = vst [vmem:[#allocation6 + $0x38] sm:$0xff] 0.0
  loop: start=0, step=1, limit=4
  $region66: #{weather_model_forward.1} parent=0 // loop_pre_header
    _
  $region67: #{weather_model_forward.1} parent=0 // loop_header
    %s115 = sphi 0, %s119
    %p116 = scmp.ge.s32.totalorder %s115, 4
  $region68: #{weather_model_forward.1} parent=0 // loop_header_branch
    %118 = sbr.rel (%p116) target = $region72
  $region69: #{weather_model_forward.1} parent=0 // loop_body
    %v120 = vld [vmem:[#allocation3] sm:$0xff]
    %v121 = vld [vmem:[#allocation3 + $0x8] sm:$0xff]
    %v122 = vld [vmem:[#allocation3 + $0x10] sm:$0xff]
    %v123 = vld [vmem:[#allocation3 + $0x18] sm:$0xff]
    %v124 = vld [vmem:[%s3] ss:$8 sm:$0xf]
    %125 = vrot.lane.b32.xlu0 %v120, 17
    %v126 = vpop.permute.xlu0 %125
    %127 = vrot.lane.b32.xlu0 %v121, 17
    %v128 = vpop.permute.xlu0 %127
    %129 = vrot.lane.b32.xlu0 %v122, 17
    %v130 = vpop.permute.xlu0 %129
    %131 = vrot.lane.b32.xlu0 %v123, 17
    %v132 = vpop.permute.xlu0 %131
    %v133 = vlaneseq
    %v134 = vand.u32 %v133, 127
    %vm135 = vcmp.lt.s32.totalorder %v134, 17
    %v136 = vsel %vm135, %v130, %v132
    %v137 = vsel %vm135, %v128, %v130
    %v138 = vsel %vm135, %v126, %v128
    %v139 = vsel %vm135, %v132, %v126
    %v141 = vlaneseq
    %v142 = vshrl.u32 %v141, 7
    %v143 = vsub.s32 0, %v142
    %v144 = vrot.slane %v124, %v143
    %v145 = vlaneseq
    %v146 = vshrl.u32 %v145, 7
    %v147 = vsub.s32 1, %v146
    %v148 = vrot.slane %v124, %v147
    %v149 = vlaneseq
    %v150 = vshrl.u32 %v149, 7
    %v151 = vsub.s32 2, %v150
    %v152 = vrot.slane %v124, %v151
    %v153 = vlaneseq
    %v154 = vshrl.u32 %v153, 7
    %v155 = vsub.s32 3, %v154
    %v156 = vrot.slane %v124, %v155
    %v161 = vmul.f32 %v139, %v144
    %v162 = vmul.f32 %v138, %v148
    %v163 = vmul.f32 %v137, %v152
    %v164 = vmul.f32 %v136, %v156
    %v165 = vpack.c.bf16 %v161, %v161
    %v166 = vpack.c.bf16 %v162, %v162
    %v167 = vpack.c.bf16 %v163, %v163
    %v168 = vpack.c.bf16 %v164, %v164
    %s169 = scalar_lea.vmem %s3, 1
    %v170 = vld [vmem:[%s169] ss:$8 sm:$0xf]
    %171 = vrot.lane.b32.xlu0 %v120, 16
    %v172 = vpop.permute.xlu0 %171
    %173 = vrot.lane.b32.xlu0 %v121, 16
    %v174 = vpop.permute.xlu0 %173
    %175 = vrot.lane.b32.xlu0 %v122, 16
    %v176 = vpop.permute.xlu0 %175
    %177 = vrot.lane.b32.xlu0 %v123, 16
    %v178 = vpop.permute.xlu0 %177
    %vm179 = vcmp.lt.s32.totalorder %v134, 16
    %v180 = vsel %vm179, %v176, %v178
    %v181 = vsel %vm179, %v174, %v176
    %v182 = vsel %vm179, %v172, %v174
    %v183 = vsel %vm179, %v178, %v172
    %v185 = vlaneseq
    %v186 = vshrl.u32 %v185, 7
    %v187 = vsub.s32 0, %v186
    %v188 = vrot.slane %v170, %v187
    %v189 = vlaneseq
    %v190 = vshrl.u32 %v189, 7
    %v191 = vsub.s32 1, %v190
    %v192 = vrot.slane %v170, %v191
    %v193 = vlaneseq
    %v194 = vshrl.u32 %v193, 7
    %v195 = vsub.s32 2, %v194
    %v196 = vrot.slane %v170, %v195
    %v197 = vlaneseq
    %v198 = vshrl.u32 %v197, 7
    %v199 = vsub.s32 3, %v198
    %v200 = vrot.slane %v170, %v199
    %v205 = vmul.f32 %v183, %v188
    %v206 = vmul.f32 %v182, %v192
    %v207 = vmul.f32 %v181, %v196
    %v208 = vmul.f32 %v180, %v200
    %v209 = vpack.c.bf16 %v205, %v205
    %v210 = vpack.c.bf16 %v206, %v206
    %v211 = vpack.c.bf16 %v207, %v207
    %v212 = vpack.c.bf16 %v208, %v208
    %s213 = scalar_lea.vmem %s3, 2
    %v214 = vld [vmem:[%s213] ss:$8 sm:$0xf]
    %215 = vrot.lane.b32.xlu0 %v120, 15
    %v216 = vpop.permute.xlu0 %215
    %217 = vrot.lane.b32.xlu0 %v121, 15
    %v218 = vpop.permute.xlu0 %217
    %219 = vrot.lane.b32.xlu0 %v122, 15
    %v220 = vpop.permute.xlu0 %219
    %221 = vrot.lane.b32.xlu0 %v123, 15
    %v222 = vpop.permute.xlu0 %221
    %vm223 = vcmp.lt.s32.totalorder %v134, 15
    %v224 = vsel %vm223, %v220, %v222
    %v225 = vsel %vm223, %v218, %v220
    %v226 = vsel %vm223, %v216, %v218
    %v227 = vsel %vm223, %v222, %v216
    %v229 = vlaneseq
    %v230 = vshrl.u32 %v229, 7
    %v231 = vsub.s32 0, %v230
    %v232 = vrot.slane %v214, %v231
    %v233 = vlaneseq
    %v234 = vshrl.u32 %v233, 7
    %v235 = vsub.s32 1, %v234
    %v236 = vrot.slane %v214, %v235
    %v237 = vlaneseq
    %v238 = vshrl.u32 %v237, 7
    %v239 = vsub.s32 2, %v238
    %v240 = vrot.slane %v214, %v239
    %v241 = vlaneseq
    %v242 = vshrl.u32 %v241, 7
    %v243 = vsub.s32 3, %v242
    %v244 = vrot.slane %v214, %v243
    %v249 = vmul.f32 %v227, %v232
    %v250 = vmul.f32 %v226, %v236
    %v251 = vmul.f32 %v225, %v240
    %v252 = vmul.f32 %v224, %v244
    %v253 = vpack.c.bf16 %v249, %v249
    %v254 = vpack.c.bf16 %v250, %v250
    %v255 = vpack.c.bf16 %v251, %v251
    %v256 = vpack.c.bf16 %v252, %v252
    %s257 = scalar_lea.vmem %s3, 3
    %v258 = vld [vmem:[%s257] ss:$8 sm:$0xf]
    %259 = vrot.lane.b32.xlu0 %v120, 1
    %v260 = vpop.permute.xlu0 %259
    %261 = vrot.lane.b32.xlu0 %v121, 1
    %v262 = vpop.permute.xlu0 %261
    %263 = vrot.lane.b32.xlu0 %v122, 1
    %v264 = vpop.permute.xlu0 %263
    %265 = vrot.lane.b32.xlu0 %v123, 1
    %v266 = vpop.permute.xlu0 %265
    %vm267 = vcmp.lt.s32.totalorder %v134, 1
    %v268 = vsel %vm267, %v264, %v266
    %v269 = vsel %vm267, %v262, %v264
    %v270 = vsel %vm267, %v260, %v262
    %v271 = vsel %vm267, %v266, %v260
    %v273 = vlaneseq
    %v274 = vshrl.u32 %v273, 7
    %v275 = vsub.s32 0, %v274
    %v276 = vrot.slane %v258, %v275
    %v277 = vlaneseq
    %v278 = vshrl.u32 %v277, 7
    %v279 = vsub.s32 1, %v278
    %v280 = vrot.slane %v258, %v279
    %v281 = vlaneseq
    %v282 = vshrl.u32 %v281, 7
    %v283 = vsub.s32 2, %v282
    %v284 = vrot.slane %v258, %v283
    %v285 = vlaneseq
    %v286 = vshrl.u32 %v285, 7
    %v287 = vsub.s32 3, %v286
    %v288 = vrot.slane %v258, %v287
    %v293 = vmul.f32 %v271, %v276
    %v294 = vmul.f32 %v270, %v280
    %v295 = vmul.f32 %v269, %v284
    %v296 = vmul.f32 %v268, %v288
    %v297 = vpack.c.bf16 %v293, %v293
    %v298 = vpack.c.bf16 %v294, %v294
    %v299 = vpack.c.bf16 %v295, %v295
    %v300 = vpack.c.bf16 %v296, %v296
    %v301 = vpack.c.bf16 %v120, %v120
    %v302 = vpack.c.bf16 %v121, %v121
    %v303 = vpack.c.bf16 %v122, %v122
    %v304 = vpack.c.bf16 %v123, %v123
    %s305 = scalar_lea.vmem %s3, 5
    %v306 = vld [vmem:[%s305] ss:$8 sm:$0xf]
    %307 = vrot.lane.b32.xlu0 %v120, 127
    %v308 = vpop.permute.xlu0 %307
    %309 = vrot.lane.b32.xlu0 %v121, 127
    %v310 = vpop.permute.xlu0 %309
    %311 = vrot.lane.b32.xlu0 %v122, 127
    %v312 = vpop.permute.xlu0 %311
    %313 = vrot.lane.b32.xlu0 %v123, 127
    %v314 = vpop.permute.xlu0 %313
    %vm315 = vcmp.lt.s32.totalorder %v134, 127
    %v316 = vsel %vm315, %v312, %v314
    %v317 = vsel %vm315, %v310, %v312
    %v318 = vsel %vm315, %v308, %v310
    %v319 = vsel %vm315, %v314, %v308
    %v321 = vlaneseq
    %v322 = vshrl.u32 %v321, 7
    %v323 = vsub.s32 0, %v322
    %v324 = vrot.slane %v306, %v323
    %v325 = vlaneseq
    %v326 = vshrl.u32 %v325, 7
    %v327 = vsub.s32 1, %v326
    %v328 = vrot.slane %v306, %v327
    %v329 = vlaneseq
    %v330 = vshrl.u32 %v329, 7
    %v331 = vsub.s32 2, %v330
    %v332 = vrot.slane %v306, %v331
    %v333 = vlaneseq
    %v334 = vshrl.u32 %v333, 7
    %v335 = vsub.s32 3, %v334
    %v336 = vrot.slane %v306, %v335
    %v341 = vmul.f32 %v318, %v324
    %v342 = vmul.f32 %v317, %v328
    %v343 = vmul.f32 %v316, %v332
    %v344 = vmul.f32 %v319, %v336
    %v345 = vpack.c.bf16 %v341, %v341
    %v346 = vpack.c.bf16 %v342, %v342
    %v347 = vpack.c.bf16 %v343, %v343
    %v348 = vpack.c.bf16 %v344, %v344
    %s349 = scalar_lea.vmem %s3, 6
    %v350 = vld [vmem:[%s349] ss:$8 sm:$0xf]
    %351 = vrot.lane.b32.xlu0 %v120, 113
    %v352 = vpop.permute.xlu0 %351
    %353 = vrot.lane.b32.xlu0 %v121, 113
    %v354 = vpop.permute.xlu0 %353
    %355 = vrot.lane.b32.xlu0 %v122, 113
    %v356 = vpop.permute.xlu0 %355
    %357 = vrot.lane.b32.xlu0 %v123, 113
    %v358 = vpop.permute.xlu0 %357
    %vm359 = vcmp.lt.s32.totalorder %v134, 113
    %v360 = vsel %vm359, %v356, %v358
    %v361 = vsel %vm359, %v354, %v356
    %v362 = vsel %vm359, %v352, %v354
    %v363 = vsel %vm359, %v358, %v352
    %v365 = vlaneseq
    %v366 = vshrl.u32 %v365, 7
    %v367 = vsub.s32 0, %v366
    %v368 = vrot.slane %v350, %v367
    %v369 = vlaneseq
    %v370 = vshrl.u32 %v369, 7
    %v371 = vsub.s32 1, %v370
    %v372 = vrot.slane %v350, %v371
    %v373 = vlaneseq
    %v374 = vshrl.u32 %v373, 7
    %v375 = vsub.s32 2, %v374
    %v376 = vrot.slane %v350, %v375
    %v377 = vlaneseq
    %v378 = vshrl.u32 %v377, 7
    %v379 = vsub.s32 3, %v378
    %v380 = vrot.slane %v350, %v379
    %v385 = vmul.f32 %v362, %v368
    %v386 = vmul.f32 %v361, %v372
    %v387 = vmul.f32 %v360, %v376
    %v388 = vmul.f32 %v363, %v380
    %v389 = vpack.c.bf16 %v385, %v385
    %v390 = vpack.c.bf16 %v386, %v386
    %v391 = vpack.c.bf16 %v387, %v387
    %v392 = vpack.c.bf16 %v388, %v388
    %s393 = scalar_lea.vmem %s3, 7
    %v394 = vld [vmem:[%s393] ss:$8 sm:$0xf]
    %395 = vrot.lane.b32.xlu0 %v120, 112
    %v396 = vpop.permute.xlu0 %395
    %397 = vrot.lane.b32.xlu0 %v121, 112
    %v398 = vpop.permute.xlu0 %397
    %399 = vrot.lane.b32.xlu0 %v122, 112
    %v400 = vpop.permute.xlu0 %399
    %401 = vrot.lane.b32.xlu0 %v123, 112
    %v402 = vpop.permute.xlu0 %401
    %vm403 = vcmp.lt.s32.totalorder %v134, 112
    %v404 = vsel %vm403, %v400, %v402
    %v405 = vsel %vm403, %v398, %v400
    %v406 = vsel %vm403, %v396, %v398
    %v407 = vsel %vm403, %v402, %v396
    %v409 = vlaneseq
    %v410 = vshrl.u32 %v409, 7
    %v411 = vsub.s32 0, %v410
    %v412 = vrot.slane %v394, %v411
    %v413 = vlaneseq
    %v414 = vshrl.u32 %v413, 7
    %v415 = vsub.s32 1, %v414
    %v416 = vrot.slane %v394, %v415
    %v417 = vlaneseq
    %v418 = vshrl.u32 %v417, 7
    %v419 = vsub.s32 2, %v418
    %v420 = vrot.slane %v394, %v419
    %v421 = vlaneseq
    %v422 = vshrl.u32 %v421, 7
    %v423 = vsub.s32 3, %v422
    %v424 = vrot.slane %v394, %v423
    %v429 = vmul.f32 %v406, %v412
    %v430 = vmul.f32 %v405, %v416
    %v431 = vmul.f32 %v404, %v420
    %v432 = vmul.f32 %v407, %v424
    %v433 = vpack.c.bf16 %v429, %v429
    %v434 = vpack.c.bf16 %v430, %v430
    %v435 = vpack.c.bf16 %v431, %v431
    %v436 = vpack.c.bf16 %v432, %v432
    %s437 = scalar_lea.vmem %s3, 32
    %v438 = vld [vmem:[%s437] ss:$8 sm:$0xf]
    %439 = vrot.lane.b32.xlu0 %v120, 111
    %v440 = vpop.permute.xlu0 %439
    %441 = vrot.lane.b32.xlu0 %v121, 111
    %v442 = vpop.permute.xlu0 %441
    %443 = vrot.lane.b32.xlu0 %v122, 111
    %v444 = vpop.permute.xlu0 %443
    %445 = vrot.lane.b32.xlu0 %v123, 111
    %v446 = vpop.permute.xlu0 %445
    %vm447 = vcmp.lt.s32.totalorder %v134, 111
    %v448 = vsel %vm447, %v444, %v446
    %v449 = vsel %vm447, %v442, %v444
    %v450 = vsel %vm447, %v440, %v442
    %v451 = vsel %vm447, %v446, %v440
    %v453 = vlaneseq
    %v454 = vshrl.u32 %v453, 7
    %v455 = vsub.s32 0, %v454
    %v456 = vrot.slane %v438, %v455
    %v457 = vlaneseq
    %v458 = vshrl.u32 %v457, 7
    %v459 = vsub.s32 1, %v458
    %v460 = vrot.slane %v438, %v459
    %v461 = vlaneseq
    %v462 = vshrl.u32 %v461, 7
    %v463 = vsub.s32 2, %v462
    %v464 = vrot.slane %v438, %v463
    %v465 = vlaneseq
    %v466 = vshrl.u32 %v465, 7
    %v467 = vsub.s32 3, %v466
    %v468 = vrot.slane %v438, %v467
    %v473 = vmul.f32 %v450, %v456
    %v474 = vmul.f32 %v449, %v460
    %v475 = vmul.f32 %v448, %v464
    %v476 = vmul.f32 %v451, %v468
    %v477 = vpack.c.bf16 %v473, %v473
    %v478 = vpack.c.bf16 %v474, %v474
    %v479 = vpack.c.bf16 %v475, %v475
    %v480 = vpack.c.bf16 %v476, %v476
    %v481 = vld [vmem:[#allocation4] sm:$0xff]
    %v482 = vld [vmem:[#allocation4 + $0x8] sm:$0xff]
    %v483 = vld [vmem:[#allocation4 + $0x10] sm:$0xff]
    %v484 = vld [vmem:[#allocation4 + $0x18] sm:$0xff]
    %485 = vrot.lane.b32.xlu0 %v481, 17
    %v486 = vpop.permute.xlu0 %485
    %487 = vrot.lane.b32.xlu0 %v482, 17
    %v488 = vpop.permute.xlu0 %487
    %489 = vrot.lane.b32.xlu0 %v483, 17
    %v490 = vpop.permute.xlu0 %489
    %491 = vrot.lane.b32.xlu0 %v484, 17
    %v492 = vpop.permute.xlu0 %491
    %v493 = vsel %vm135, %v490, %v492
    %v494 = vsel %vm135, %v488, %v490
    %v495 = vsel %vm135, %v486, %v488
    %v496 = vsel %vm135, %v492, %v486
    %v497 = vmul.f32 %v496, %v144
    %v498 = vmul.f32 %v495, %v148
    %v499 = vmul.f32 %v494, %v152
    %v500 = vmul.f32 %v493, %v156
    %v501 = vpack.c.bf16 %v497, %v497
    %v502 = vpack.c.bf16 %v498, %v498
    %v503 = vpack.c.bf16 %v499, %v499
    %v504 = vpack.c.bf16 %v500, %v500
    %505 = vrot.lane.b32.xlu0 %v481, 16
    %v506 = vpop.permute.xlu0 %505
    %507 = vrot.lane.b32.xlu0 %v482, 16
    %v508 = vpop.permute.xlu0 %507
    %509 = vrot.lane.b32.xlu0 %v483, 16
    %v510 = vpop.permute.xlu0 %509
    %511 = vrot.lane.b32.xlu0 %v484, 16
    %v512 = vpop.permute.xlu0 %511
    %v513 = vsel %vm179, %v510, %v512
    %v514 = vsel %vm179, %v508, %v510
    %v515 = vsel %vm179, %v506, %v508
    %v516 = vsel %vm179, %v512, %v506
    %v517 = vmul.f32 %v516, %v188
    %v518 = vmul.f32 %v515, %v192
    %v519 = vmul.f32 %v514, %v196
    %v520 = vmul.f32 %v513, %v200
    %v521 = vpack.c.bf16 %v517, %v517
    %v522 = vpack.c.bf16 %v518, %v518
    %v523 = vpack.c.bf16 %v519, %v519
    %v524 = vpack.c.bf16 %v520, %v520
    %525 = vrot.lane.b32.xlu0 %v481, 15
    %v526 = vpop.permute.xlu0 %525
    %527 = vrot.lane.b32.xlu0 %v482, 15
    %v528 = vpop.permute.xlu0 %527
    %529 = vrot.lane.b32.xlu0 %v483, 15
    %v530 = vpop.permute.xlu0 %529
    %531 = vrot.lane.b32.xlu0 %v484, 15
    %v532 = vpop.permute.xlu0 %531
    %v533 = vsel %vm223, %v530, %v532
    %v534 = vsel %vm223, %v528, %v530
    %v535 = vsel %vm223, %v526, %v528
    %v536 = vsel %vm223, %v532, %v526
    %v537 = vmul.f32 %v536, %v232
    %v538 = vmul.f32 %v535, %v236
    %v539 = vmul.f32 %v534, %v240
    %v540 = vmul.f32 %v533, %v244
    %v541 = vpack.c.bf16 %v537, %v537
    %v542 = vpack.c.bf16 %v538, %v538
    %v543 = vpack.c.bf16 %v539, %v539
    %v544 = vpack.c.bf16 %v540, %v540
    %545 = vrot.lane.b32.xlu0 %v481, 1
    %v546 = vpop.permute.xlu0 %545
    %547 = vrot.lane.b32.xlu0 %v482, 1
    %v548 = vpop.permute.xlu0 %547
    %549 = vrot.lane.b32.xlu0 %v483, 1
    %v550 = vpop.permute.xlu0 %549
    %551 = vrot.lane.b32.xlu0 %v484, 1
    %v552 = vpop.permute.xlu0 %551
    %v553 = vsel %vm267, %v550, %v552
    %v554 = vsel %vm267, %v548, %v550
    %v555 = vsel %vm267, %v546, %v548
    %v556 = vsel %vm267, %v552, %v546
    %v557 = vmul.f32 %v556, %v276
    %v558 = vmul.f32 %v555, %v280
    %v559 = vmul.f32 %v554, %v284
    %v560 = vmul.f32 %v553, %v288
    %v561 = vpack.c.bf16 %v557, %v557
    %v562 = vpack.c.bf16 %v558, %v558
    %v563 = vpack.c.bf16 %v559, %v559
    %v564 = vpack.c.bf16 %v560, %v560
    %v565 = vpack.c.bf16 %v481, %v481
    %v566 = vpack.c.bf16 %v482, %v482
    %v567 = vpack.c.bf16 %v483, %v483
    %v568 = vpack.c.bf16 %v484, %v484
    %569 = vrot.lane.b32.xlu0 %v481, 127
    %v570 = vpop.permute.xlu0 %569
    %571 = vrot.lane.b32.xlu0 %v482, 127
    %v572 = vpop.permute.xlu0 %571
    %573 = vrot.lane.b32.xlu0 %v483, 127
    %v574 = vpop.permute.xlu0 %573
    %575 = vrot.lane.b32.xlu0 %v484, 127
    %v576 = vpop.permute.xlu0 %575
    %v577 = vsel %vm315, %v574, %v576
    %v578 = vsel %vm315, %v572, %v574
    %v579 = vsel %vm315, %v570, %v572
    %v580 = vsel %vm315, %v576, %v570
    %v581 = vmul.f32 %v579, %v324
    %v582 = vmul.f32 %v578, %v328
    %v583 = vmul.f32 %v577, %v332
    %v584 = vmul.f32 %v580, %v336
    %v585 = vpack.c.bf16 %v581, %v581
    %v586 = vpack.c.bf16 %v582, %v582
    %v587 = vpack.c.bf16 %v583, %v583
    %v588 = vpack.c.bf16 %v584, %v584
    %589 = vrot.lane.b32.xlu0 %v481, 113
    %v590 = vpop.permute.xlu0 %589
    %591 = vrot.lane.b32.xlu0 %v482, 113
    %v592 = vpop.permute.xlu0 %591
    %593 = vrot.lane.b32.xlu0 %v483, 113
    %v594 = vpop.permute.xlu0 %593
    %595 = vrot.lane.b32.xlu0 %v484, 113
    %v596 = vpop.permute.xlu0 %595
    %v597 = vsel %vm359, %v594, %v596
    %v598 = vsel %vm359, %v592, %v594
    %v599 = vsel %vm359, %v590, %v592
    %v600 = vsel %vm359, %v596, %v590
    %v601 = vmul.f32 %v599, %v368
    %v602 = vmul.f32 %v598, %v372
    %v603 = vmul.f32 %v597, %v376
    %v604 = vmul.f32 %v600, %v380
    %v605 = vpack.c.bf16 %v601, %v601
    %v606 = vpack.c.bf16 %v602, %v602
    %v607 = vpack.c.bf16 %v603, %v603
    %v608 = vpack.c.bf16 %v604, %v604
    %609 = vrot.lane.b32.xlu0 %v481, 112
    %v610 = vpop.permute.xlu0 %609
    %611 = vrot.lane.b32.xlu0 %v482, 112
    %v612 = vpop.permute.xlu0 %611
    %613 = vrot.lane.b32.xlu0 %v483, 112
    %v614 = vpop.permute.xlu0 %613
    %615 = vrot.lane.b32.xlu0 %v484, 112
    %v616 = vpop.permute.xlu0 %615
    %v617 = vsel %vm403, %v614, %v616
    %v618 = vsel %vm403, %v612, %v614
    %v619 = vsel %vm403, %v610, %v612
    %v620 = vsel %vm403, %v616, %v610
    %v621 = vmul.f32 %v619, %v412
    %v622 = vmul.f32 %v618, %v416
    %v623 = vmul.f32 %v617, %v420
    %v624 = vmul.f32 %v620, %v424
    %v625 = vpack.c.bf16 %v621, %v621
    %v626 = vpack.c.bf16 %v622, %v622
    %v627 = vpack.c.bf16 %v623, %v623
    %v628 = vpack.c.bf16 %v624, %v624
    %629 = vrot.lane.b32.xlu0 %v481, 111
    %v630 = vpop.permute.xlu0 %629
    %631 = vrot.lane.b32.xlu0 %v482, 111
    %v632 = vpop.permute.xlu0 %631
    %633 = vrot.lane.b32.xlu0 %v483, 111
    %v634 = vpop.permute.xlu0 %633
    %635 = vrot.lane.b32.xlu0 %v484, 111
    %v636 = vpop.permute.xlu0 %635
    %v637 = vsel %vm447, %v634, %v636
    %v638 = vsel %vm447, %v632, %v634
    %v639 = vsel %vm447, %v630, %v632
    %v640 = vsel %vm447, %v636, %v630
    %v641 = vmul.f32 %v639, %v456
    %v642 = vmul.f32 %v638, %v460
    %v643 = vmul.f32 %v637, %v464
    %v644 = vmul.f32 %v640, %v468
    %v645 = vpack.c.bf16 %v641, %v641
    %v646 = vpack.c.bf16 %v642, %v642
    %v647 = vpack.c.bf16 %v643, %v643
    %v648 = vpack.c.bf16 %v644, %v644
    %v649 = vld [vmem:[#allocation2] sm:$0xff]
    %v650 = vld [vmem:[#allocation2 + $0x8] sm:$0xff]
    %v653 = vcombine.high %v649, %v649
    %v654 = vcombine.high %v650, %v650
    %657 = vrot.lane.b32.xlu0 %v649, 17
    %v658 = vpop.permute.xlu0 %657
    %659 = vrot.lane.b32.xlu0 %v653, 17
    %v660 = vpop.permute.xlu0 %659
    %661 = vrot.lane.b32.xlu0 %v650, 17
    %v662 = vpop.permute.xlu0 %661
    %663 = vrot.lane.b32.xlu0 %v654, 17
    %v664 = vpop.permute.xlu0 %663
    %v665 = vsel %vm135, %v662, %v664
    %v666 = vsel %vm135, %v660, %v662
    %v667 = vsel %vm135, %v658, %v660
    %v668 = vsel %vm135, %v664, %v658
    %v669 = vmul.f32 %v668, %v144
    %v670 = vmul.f32 %v667, %v148
    %v671 = vmul.f32 %v666, %v152
    %v672 = vmul.f32 %v665, %v156
    %v673 = vpack.c.bf16 %v669, %v669
    %v674 = vpack.c.bf16 %v670, %v670
    %v675 = vpack.c.bf16 %v671, %v671
    %v676 = vpack.c.bf16 %v672, %v672
    %677 = vrot.lane.b32.xlu0 %v649, 16
    %v678 = vpop.permute.xlu0 %677
    %679 = vrot.lane.b32.xlu0 %v653, 16
    %v680 = vpop.permute.xlu0 %679
    %681 = vrot.lane.b32.xlu0 %v650, 16
    %v682 = vpop.permute.xlu0 %681
    %683 = vrot.lane.b32.xlu0 %v654, 16
    %v684 = vpop.permute.xlu0 %683
    %v685 = vsel %vm179, %v682, %v684
    %v686 = vsel %vm179, %v680, %v682
    %v687 = vsel %vm179, %v678, %v680
    %v688 = vsel %vm179, %v684, %v678
    %v689 = vmul.f32 %v688, %v188
    %v690 = vmul.f32 %v687, %v192
    %v691 = vmul.f32 %v686, %v196
    %v692 = vmul.f32 %v685, %v200
    %v693 = vpack.c.bf16 %v689, %v689
    %v694 = vpack.c.bf16 %v690, %v690
    %v695 = vpack.c.bf16 %v691, %v691
    %v696 = vpack.c.bf16 %v692, %v692
    %697 = vrot.lane.b32.xlu0 %v649, 15
    %v698 = vpop.permute.xlu0 %697
    %699 = vrot.lane.b32.xlu0 %v653, 15
    %v700 = vpop.permute.xlu0 %699
    %701 = vrot.lane.b32.xlu0 %v650, 15
    %v702 = vpop.permute.xlu0 %701
    %703 = vrot.lane.b32.xlu0 %v654, 15
    %v704 = vpop.permute.xlu0 %703
    %v705 = vsel %vm223, %v702, %v704
    %v706 = vsel %vm223, %v700, %v702
    %v707 = vsel %vm223, %v698, %v700
    %v708 = vsel %vm223, %v704, %v698
    %v709 = vmul.f32 %v708, %v232
    %v710 = vmul.f32 %v707, %v236
    %v711 = vmul.f32 %v706, %v240
    %v712 = vmul.f32 %v705, %v244
    %v713 = vpack.c.bf16 %v709, %v709
    %v714 = vpack.c.bf16 %v710, %v710
    %v715 = vpack.c.bf16 %v711, %v711
    %v716 = vpack.c.bf16 %v712, %v712
    %717 = vrot.lane.b32.xlu0 %v649, 1
    %v718 = vpop.permute.xlu0 %717
    %719 = vrot.lane.b32.xlu0 %v653, 1
    %v720 = vpop.permute.xlu0 %719
    %721 = vrot.lane.b32.xlu0 %v650, 1
    %v722 = vpop.permute.xlu0 %721
    %723 = vrot.lane.b32.xlu0 %v654, 1
    %v724 = vpop.permute.xlu0 %723
    %v725 = vsel %vm267, %v722, %v724
    %v726 = vsel %vm267, %v720, %v722
    %v727 = vsel %vm267, %v718, %v720
    %v728 = vsel %vm267, %v724, %v718
    %v729 = vmul.f32 %v728, %v276
    %v730 = vmul.f32 %v727, %v280
    %v731 = vmul.f32 %v726, %v284
    %v732 = vmul.f32 %v725, %v288
    %v733 = vpack.c.bf16 %v729, %v729
    %v734 = vpack.c.bf16 %v730, %v730
    %v735 = vpack.c.bf16 %v731, %v731
    %v736 = vpack.c.bf16 %v732, %v732
    %v737 = vpack.c.bf16 %v649, %v649
    %v738 = vpack.c.bf16 %v653, %v653
    %v739 = vpack.c.bf16 %v650, %v650
    %v740 = vpack.c.bf16 %v654, %v654
    %741 = vrot.lane.b32.xlu0 %v649, 127
    %v742 = vpop.permute.xlu0 %741
    %743 = vrot.lane.b32.xlu0 %v653, 127
    %v744 = vpop.permute.xlu0 %743
    %745 = vrot.lane.b32.xlu0 %v650, 127
    %v746 = vpop.permute.xlu0 %745
    %747 = vrot.lane.b32.xlu0 %v654, 127
    %v748 = vpop.permute.xlu0 %747
    %v749 = vsel %vm315, %v746, %v748
    %v750 = vsel %vm315, %v744, %v746
    %v751 = vsel %vm315, %v742, %v744
    %v752 = vsel %vm315, %v748, %v742
    %v753 = vmul.f32 %v751, %v324
    %v754 = vmul.f32 %v750, %v328
    %v755 = vmul.f32 %v749, %v332
    %v756 = vmul.f32 %v752, %v336
    %v757 = vpack.c.bf16 %v753, %v753
    %v758 = vpack.c.bf16 %v754, %v754
    %v759 = vpack.c.bf16 %v755, %v755
    %v760 = vpack.c.bf16 %v756, %v756
    %761 = vrot.lane.b32.xlu0 %v649, 113
    %v762 = vpop.permute.xlu0 %761
    %763 = vrot.lane.b32.xlu0 %v653, 113
    %v764 = vpop.permute.xlu0 %763
    %765 = vrot.lane.b32.xlu0 %v650, 113
    %v766 = vpop.permute.xlu0 %765
    %767 = vrot.lane.b32.xlu0 %v654, 113
    %v768 = vpop.permute.xlu0 %767
    %v769 = vsel %vm359, %v766, %v768
    %v770 = vsel %vm359, %v764, %v766
    %v771 = vsel %vm359, %v762, %v764
    %v772 = vsel %vm359, %v768, %v762
    %v773 = vmul.f32 %v771, %v368
    %v774 = vmul.f32 %v770, %v372
    %v775 = vmul.f32 %v769, %v376
    %v776 = vmul.f32 %v772, %v380
    %v777 = vpack.c.bf16 %v773, %v773
    %v778 = vpack.c.bf16 %v774, %v774
    %v779 = vpack.c.bf16 %v775, %v775
    %v780 = vpack.c.bf16 %v776, %v776
    %781 = vrot.lane.b32.xlu0 %v649, 112
    %v782 = vpop.permute.xlu0 %781
    %783 = vrot.lane.b32.xlu0 %v653, 112
    %v784 = vpop.permute.xlu0 %783
    %785 = vrot.lane.b32.xlu0 %v650, 112
    %v786 = vpop.permute.xlu0 %785
    %787 = vrot.lane.b32.xlu0 %v654, 112
    %v788 = vpop.permute.xlu0 %787
    %v789 = vsel %vm403, %v786, %v788
    %v790 = vsel %vm403, %v784, %v786
    %v791 = vsel %vm403, %v782, %v784
    %v792 = vsel %vm403, %v788, %v782
    %v793 = vmul.f32 %v791, %v412
    %v794 = vmul.f32 %v790, %v416
    %v795 = vmul.f32 %v789, %v420
    %v796 = vmul.f32 %v792, %v424
    %v797 = vpack.c.bf16 %v793, %v793
    %v798 = vpack.c.bf16 %v794, %v794
    %v799 = vpack.c.bf16 %v795, %v795
    %v800 = vpack.c.bf16 %v796, %v796
    %801 = vrot.lane.b32.xlu0 %v649, 111
    %v802 = vpop.permute.xlu0 %801
    %803 = vrot.lane.b32.xlu0 %v653, 111
    %v804 = vpop.permute.xlu0 %803
    %805 = vrot.lane.b32.xlu0 %v650, 111
    %v806 = vpop.permute.xlu0 %805
    %807 = vrot.lane.b32.xlu0 %v654, 111
    %v808 = vpop.permute.xlu0 %807
    %v809 = vsel %vm447, %v806, %v808
    %v810 = vsel %vm447, %v804, %v806
    %v811 = vsel %vm447, %v802, %v804
    %v812 = vsel %vm447, %v808, %v802
    %v813 = vmul.f32 %v811, %v456
    %v814 = vmul.f32 %v810, %v460
    %v815 = vmul.f32 %v809, %v464
    %v816 = vmul.f32 %v812, %v468
    %v817 = vpack.c.bf16 %v813, %v813
    %v818 = vpack.c.bf16 %v814, %v814
    %v819 = vpack.c.bf16 %v815, %v815
    %v820 = vpack.c.bf16 %v816, %v816
    %s821 = scalar_lea.vmem [#allocation2], 16
    %v822 = vld [vmem:[%s821] sm:$0xff]
    %v823 = vld [vmem:[%s821 + $0x8] sm:$0xff]
    %v826 = vcombine.high %v822, %v822
    %v827 = vcombine.high %v823, %v823
    %830 = vrot.lane.b32.xlu0 %v822, 17
    %v831 = vpop.permute.xlu0 %830
    %832 = vrot.lane.b32.xlu0 %v826, 17
    %v833 = vpop.permute.xlu0 %832
    %834 = vrot.lane.b32.xlu0 %v823, 17
    %v835 = vpop.permute.xlu0 %834
    %836 = vrot.lane.b32.xlu0 %v827, 17
    %v837 = vpop.permute.xlu0 %836
    %v838 = vsel %vm135, %v835, %v837
    %v839 = vsel %vm135, %v833, %v835
    %v840 = vsel %vm135, %v831, %v833
    %v841 = vsel %vm135, %v837, %v831
    %v842 = vmul.f32 %v841, %v144
    %v843 = vmul.f32 %v840, %v148
    %v844 = vmul.f32 %v839, %v152
    %v845 = vmul.f32 %v838, %v156
    %v846 = vpack.c.bf16 %v842, %v842
    %v847 = vpack.c.bf16 %v843, %v843
    %v848 = vpack.c.bf16 %v844, %v844
    %v849 = vpack.c.bf16 %v845, %v845
    %850 = vrot.lane.b32.xlu0 %v822, 16
    %v851 = vpop.permute.xlu0 %850
    %852 = vrot.lane.b32.xlu0 %v826, 16
    %v853 = vpop.permute.xlu0 %852
    %854 = vrot.lane.b32.xlu0 %v823, 16
    %v855 = vpop.permute.xlu0 %854
    %856 = vrot.lane.b32.xlu0 %v827, 16
    %v857 = vpop.permute.xlu0 %856
    %v858 = vsel %vm179, %v855, %v857
    %v859 = vsel %vm179, %v853, %v855
    %v860 = vsel %vm179, %v851, %v853
    %v861 = vsel %vm179, %v857, %v851
    %v862 = vmul.f32 %v861, %v188
    %v863 = vmul.f32 %v860, %v192
    %v864 = vmul.f32 %v859, %v196
    %v865 = vmul.f32 %v858, %v200
    %v866 = vpack.c.bf16 %v862, %v862
    %v867 = vpack.c.bf16 %v863, %v863
    %v868 = vpack.c.bf16 %v864, %v864
    %v869 = vpack.c.bf16 %v865, %v865
    %870 = vrot.lane.b32.xlu0 %v822, 15
    %v871 = vpop.permute.xlu0 %870
    %872 = vrot.lane.b32.xlu0 %v826, 15
    %v873 = vpop.permute.xlu0 %872
    %874 = vrot.lane.b32.xlu0 %v823, 15
    %v875 = vpop.permute.xlu0 %874
    %876 = vrot.lane.b32.xlu0 %v827, 15
    %v877 = vpop.permute.xlu0 %876
    %v878 = vsel %vm223, %v875, %v877
    %v879 = vsel %vm223, %v873, %v875
    %v880 = vsel %vm223, %v871, %v873
    %v881 = vsel %vm223, %v877, %v871
    %v882 = vmul.f32 %v881, %v232
    %v883 = vmul.f32 %v880, %v236
    %v884 = vmul.f32 %v879, %v240
    %v885 = vmul.f32 %v878, %v244
    %v886 = vpack.c.bf16 %v882, %v882
    %v887 = vpack.c.bf16 %v883, %v883
    %v888 = vpack.c.bf16 %v884, %v884
    %v889 = vpack.c.bf16 %v885, %v885
    %890 = vrot.lane.b32.xlu0 %v822, 1
    %v891 = vpop.permute.xlu0 %890
    %892 = vrot.lane.b32.xlu0 %v826, 1
    %v893 = vpop.permute.xlu0 %892
    %894 = vrot.lane.b32.xlu0 %v823, 1
    %v895 = vpop.permute.xlu0 %894
    %896 = vrot.lane.b32.xlu0 %v827, 1
    %v897 = vpop.permute.xlu0 %896
    %v898 = vsel %vm267, %v895, %v897
    %v899 = vsel %vm267, %v893, %v895
    %v900 = vsel %vm267, %v891, %v893
    %v901 = vsel %vm267, %v897, %v891
    %v902 = vmul.f32 %v901, %v276
    %v903 = vmul.f32 %v900, %v280
    %v904 = vmul.f32 %v899, %v284
    %v905 = vmul.f32 %v898, %v288
    %v906 = vpack.c.bf16 %v902, %v902
    %v907 = vpack.c.bf16 %v903, %v903
    %v908 = vpack.c.bf16 %v904, %v904
    %v909 = vpack.c.bf16 %v905, %v905
    %v910 = vpack.c.bf16 %v822, %v822
    %v911 = vpack.c.bf16 %v826, %v826
    %v912 = vpack.c.bf16 %v823, %v823
    %v913 = vpack.c.bf16 %v827, %v827
    %914 = vrot.lane.b32.xlu0 %v822, 127
    %v915 = vpop.permute.xlu0 %914
    %916 = vrot.lane.b32.xlu0 %v826, 127
    %v917 = vpop.permute.xlu0 %916
    %918 = vrot.lane.b32.xlu0 %v823, 127
    %v919 = vpop.permute.xlu0 %918
    %920 = vrot.lane.b32.xlu0 %v827, 127
    %v921 = vpop.permute.xlu0 %920
    %v922 = vsel %vm315, %v919, %v921
    %v923 = vsel %vm315, %v917, %v919
    %v924 = vsel %vm315, %v915, %v917
    %v925 = vsel %vm315, %v921, %v915
    %v926 = vmul.f32 %v924, %v324
    %v927 = vmul.f32 %v923, %v328
    %v928 = vmul.f32 %v922, %v332
    %v929 = vmul.f32 %v925, %v336
    %v930 = vpack.c.bf16 %v926, %v926
    %v931 = vpack.c.bf16 %v927, %v927
    %v932 = vpack.c.bf16 %v928, %v928
    %v933 = vpack.c.bf16 %v929, %v929
    %934 = vrot.lane.b32.xlu0 %v822, 113
    %v935 = vpop.permute.xlu0 %934
    %936 = vrot.lane.b32.xlu0 %v826, 113
    %v937 = vpop.permute.xlu0 %936
    %938 = vrot.lane.b32.xlu0 %v823, 113
    %v939 = vpop.permute.xlu0 %938
    %940 = vrot.lane.b32.xlu0 %v827, 113
    %v941 = vpop.permute.xlu0 %940
    %v942 = vsel %vm359, %v939, %v941
    %v943 = vsel %vm359, %v937, %v939
    %v944 = vsel %vm359, %v935, %v937
    %v945 = vsel %vm359, %v941, %v935
    %v946 = vmul.f32 %v944, %v368
    %v947 = vmul.f32 %v943, %v372
    %v948 = vmul.f32 %v942, %v376
    %v949 = vmul.f32 %v945, %v380
    %v950 = vpack.c.bf16 %v946, %v946
    %v951 = vpack.c.bf16 %v947, %v947
    %v952 = vpack.c.bf16 %v948, %v948
    %v953 = vpack.c.bf16 %v949, %v949
    %954 = vrot.lane.b32.xlu0 %v822, 112
    %v955 = vpop.permute.xlu0 %954
    %956 = vrot.lane.b32.xlu0 %v826, 112
    %v957 = vpop.permute.xlu0 %956
    %958 = vrot.lane.b32.xlu0 %v823, 112
    %v959 = vpop.permute.xlu0 %958
    %960 = vrot.lane.b32.xlu0 %v827, 112
    %v961 = vpop.permute.xlu0 %960
    %v962 = vsel %vm403, %v959, %v961
    %v963 = vsel %vm403, %v957, %v959
    %v964 = vsel %vm403, %v955, %v957
    %v965 = vsel %vm403, %v961, %v955
    %v966 = vmul.f32 %v964, %v412
    %v967 = vmul.f32 %v963, %v416
    %v968 = vmul.f32 %v962, %v420
    %v969 = vmul.f32 %v965, %v424
    %v970 = vpack.c.bf16 %v966, %v966
    %v971 = vpack.c.bf16 %v967, %v967
    %v972 = vpack.c.bf16 %v968, %v968
    %v973 = vpack.c.bf16 %v969, %v969
    %974 = vrot.lane.b32.xlu0 %v822, 111
    %v975 = vpop.permute.xlu0 %974
    %976 = vrot.lane.b32.xlu0 %v826, 111
    %v977 = vpop.permute.xlu0 %976
    %978 = vrot.lane.b32.xlu0 %v823, 111
    %v979 = vpop.permute.xlu0 %978
    %980 = vrot.lane.b32.xlu0 %v827, 111
    %v981 = vpop.permute.xlu0 %980
    %v982 = vsel %vm447, %v979, %v981
    %v983 = vsel %vm447, %v977, %v979
    %v984 = vsel %vm447, %v975, %v977
    %v985 = vsel %vm447, %v981, %v975
    %v986 = vmul.f32 %v984, %v456
    %v987 = vmul.f32 %v983, %v460
    %v988 = vmul.f32 %v982, %v464
    %v989 = vmul.f32 %v985, %v468
    %v990 = vpack.c.bf16 %v986, %v986
    %v991 = vpack.c.bf16 %v987, %v987
    %v992 = vpack.c.bf16 %v988, %v988
    %v993 = vpack.c.bf16 %v989, %v989
    %s994 = scalar_lea.vmem [#allocation2], 32
    %v995 = vld [vmem:[%s994] sm:$0xff]
    %v996 = vld [vmem:[%s994 + $0x8] sm:$0xff]
    %v999 = vcombine.high %v995, %v995
    %v1000 = vcombine.high %v996, %v996
    %1003 = vrot.lane.b32.xlu0 %v995, 17
    %v1004 = vpop.permute.xlu0 %1003
    %1005 = vrot.lane.b32.xlu0 %v999, 17
    %v1006 = vpop.permute.xlu0 %1005
    %1007 = vrot.lane.b32.xlu0 %v996, 17
    %v1008 = vpop.permute.xlu0 %1007
    %1009 = vrot.lane.b32.xlu0 %v1000, 17
    %v1010 = vpop.permute.xlu0 %1009
    %v1011 = vsel %vm135, %v1008, %v1010
    %v1012 = vsel %vm135, %v1006, %v1008
    %v1013 = vsel %vm135, %v1004, %v1006
    %v1014 = vsel %vm135, %v1010, %v1004
    %v1015 = vmul.f32 %v1014, %v144
    %v1016 = vmul.f32 %v1013, %v148
    %v1017 = vmul.f32 %v1012, %v152
    %v1018 = vmul.f32 %v1011, %v156
    %v1019 = vpack.c.bf16 %v1015, %v1015
    %v1020 = vpack.c.bf16 %v1016, %v1016
    %v1021 = vpack.c.bf16 %v1017, %v1017
    %v1022 = vpack.c.bf16 %v1018, %v1018
    %1023 = vrot.lane.b32.xlu0 %v995, 16
    %v1024 = vpop.permute.xlu0 %1023
    %1025 = vrot.lane.b32.xlu0 %v999, 16
    %v1026 = vpop.permute.xlu0 %1025
    %1027 = vrot.lane.b32.xlu0 %v996, 16
    %v1028 = vpop.permute.xlu0 %1027
    %1029 = vrot.lane.b32.xlu0 %v1000, 16
    %v1030 = vpop.permute.xlu0 %1029
    %v1031 = vsel %vm179, %v1028, %v1030
    %v1032 = vsel %vm179, %v1026, %v1028
    %v1033 = vsel %vm179, %v1024, %v1026
    %v1034 = vsel %vm179, %v1030, %v1024
    %v1035 = vmul.f32 %v1034, %v188
    %v1036 = vmul.f32 %v1033, %v192
    %v1037 = vmul.f32 %v1032, %v196
    %v1038 = vmul.f32 %v1031, %v200
    %v1039 = vpack.c.bf16 %v1035, %v1035
    %v1040 = vpack.c.bf16 %v1036, %v1036
    %v1041 = vpack.c.bf16 %v1037, %v1037
    %v1042 = vpack.c.bf16 %v1038, %v1038
    %1043 = vrot.lane.b32.xlu0 %v995, 15
    %v1044 = vpop.permute.xlu0 %1043
    %1045 = vrot.lane.b32.xlu0 %v999, 15
    %v1046 = vpop.permute.xlu0 %1045
    %1047 = vrot.lane.b32.xlu0 %v996, 15
    %v1048 = vpop.permute.xlu0 %1047
    %1049 = vrot.lane.b32.xlu0 %v1000, 15
    %v1050 = vpop.permute.xlu0 %1049
    %v1051 = vsel %vm223, %v1048, %v1050
    %v1052 = vsel %vm223, %v1046, %v1048
    %v1053 = vsel %vm223, %v1044, %v1046
    %v1054 = vsel %vm223, %v1050, %v1044
    %v1055 = vmul.f32 %v1054, %v232
    %v1056 = vmul.f32 %v1053, %v236
    %v1057 = vmul.f32 %v1052, %v240
    %v1058 = vmul.f32 %v1051, %v244
    %v1059 = vpack.c.bf16 %v1055, %v1055
    %v1060 = vpack.c.bf16 %v1056, %v1056
    %v1061 = vpack.c.bf16 %v1057, %v1057
    %v1062 = vpack.c.bf16 %v1058, %v1058
    %1063 = vrot.lane.b32.xlu0 %v995, 1
    %v1064 = vpop.permute.xlu0 %1063
    %1065 = vrot.lane.b32.xlu0 %v999, 1
    %v1066 = vpop.permute.xlu0 %1065
    %1067 = vrot.lane.b32.xlu0 %v996, 1
    %v1068 = vpop.permute.xlu0 %1067
    %1069 = vrot.lane.b32.xlu0 %v1000, 1
    %v1070 = vpop.permute.xlu0 %1069
    %v1071 = vsel %vm267, %v1068, %v1070
    %v1072 = vsel %vm267, %v1066, %v1068
    %v1073 = vsel %vm267, %v1064, %v1066
    %v1074 = vsel %vm267, %v1070, %v1064
    %v1075 = vmul.f32 %v1074, %v276
    %v1076 = vmul.f32 %v1073, %v280
    %v1077 = vmul.f32 %v1072, %v284
    %v1078 = vmul.f32 %v1071, %v288
    %v1079 = vpack.c.bf16 %v1075, %v1075
    %v1080 = vpack.c.bf16 %v1076, %v1076
    %v1081 = vpack.c.bf16 %v1077, %v1077
    %v1082 = vpack.c.bf16 %v1078, %v1078
    %v1083 = vpack.c.bf16 %v995, %v995
    %v1084 = vpack.c.bf16 %v999, %v999
    %v1085 = vpack.c.bf16 %v996, %v996
    %v1086 = vpack.c.bf16 %v1000, %v1000
    %1087 = vrot.lane.b32.xlu0 %v995, 127
    %v1088 = vpop.permute.xlu0 %1087
    %1089 = vrot.lane.b32.xlu0 %v999, 127
    %v1090 = vpop.permute.xlu0 %1089
    %1091 = vrot.lane.b32.xlu0 %v996, 127
    %v1092 = vpop.permute.xlu0 %1091
    %1093 = vrot.lane.b32.xlu0 %v1000, 127
    %v1094 = vpop.permute.xlu0 %1093
    %v1095 = vsel %vm315, %v1092, %v1094
    %v1096 = vsel %vm315, %v1090, %v1092
    %v1097 = vsel %vm315, %v1088, %v1090
    %v1098 = vsel %vm315, %v1094, %v1088
    %v1099 = vmul.f32 %v1097, %v324
    %v1100 = vmul.f32 %v1096, %v328
    %v1101 = vmul.f32 %v1095, %v332
    %v1102 = vmul.f32 %v1098, %v336
    %v1103 = vpack.c.bf16 %v1099, %v1099
    %v1104 = vpack.c.bf16 %v1100, %v1100
    %v1105 = vpack.c.bf16 %v1101, %v1101
    %v1106 = vpack.c.bf16 %v1102, %v1102
    %1107 = vrot.lane.b32.xlu0 %v995, 113
    %v1108 = vpop.permute.xlu0 %1107
    %1109 = vrot.lane.b32.xlu0 %v999, 113
    %v1110 = vpop.permute.xlu0 %1109
    %1111 = vrot.lane.b32.xlu0 %v996, 113
    %v1112 = vpop.permute.xlu0 %1111
    %1113 = vrot.lane.b32.xlu0 %v1000, 113
    %v1114 = vpop.permute.xlu0 %1113
    %v1115 = vsel %vm359, %v1112, %v1114
    %v1116 = vsel %vm359, %v1110, %v1112
    %v1117 = vsel %vm359, %v1108, %v1110
    %v1118 = vsel %vm359, %v1114, %v1108
    %v1119 = vmul.f32 %v1117, %v368
    %v1120 = vmul.f32 %v1116, %v372
    %v1121 = vmul.f32 %v1115, %v376
    %v1122 = vmul.f32 %v1118, %v380
    %v1123 = vpack.c.bf16 %v1119, %v1119
    %v1124 = vpack.c.bf16 %v1120, %v1120
    %v1125 = vpack.c.bf16 %v1121, %v1121
    %v1126 = vpack.c.bf16 %v1122, %v1122
    %1127 = vrot.lane.b32.xlu0 %v995, 112
    %v1128 = vpop.permute.xlu0 %1127
    %1129 = vrot.lane.b32.xlu0 %v999, 112
    %v1130 = vpop.permute.xlu0 %1129
    %1131 = vrot.lane.b32.xlu0 %v996, 112
    %v1132 = vpop.permute.xlu0 %1131
    %1133 = vrot.lane.b32.xlu0 %v1000, 112
    %v1134 = vpop.permute.xlu0 %1133
    %v1135 = vsel %vm403, %v1132, %v1134
    %v1136 = vsel %vm403, %v1130, %v1132
    %v1137 = vsel %vm403, %v1128, %v1130
    %v1138 = vsel %vm403, %v1134, %v1128
    %v1139 = vmul.f32 %v1137, %v412
    %v1140 = vmul.f32 %v1136, %v416
    %v1141 = vmul.f32 %v1135, %v420
    %v1142 = vmul.f32 %v1138, %v424
    %v1143 = vpack.c.bf16 %v1139, %v1139
    %v1144 = vpack.c.bf16 %v1140, %v1140
    %v1145 = vpack.c.bf16 %v1141, %v1141
    %v1146 = vpack.c.bf16 %v1142, %v1142
    %1147 = vrot.lane.b32.xlu0 %v995, 111
    %v1148 = vpop.permute.xlu0 %1147
    %1149 = vrot.lane.b32.xlu0 %v999, 111
    %v1150 = vpop.permute.xlu0 %1149
    %1151 = vrot.lane.b32.xlu0 %v996, 111
    %v1152 = vpop.permute.xlu0 %1151
    %1153 = vrot.lane.b32.xlu0 %v1000, 111
    %v1154 = vpop.permute.xlu0 %1153
    %v1155 = vsel %vm447, %v1152, %v1154
    %v1156 = vsel %vm447, %v1150, %v1152
    %v1157 = vsel %vm447, %v1148, %v1150
    %v1158 = vsel %vm447, %v1154, %v1148
    %v1159 = vmul.f32 %v1157, %v456
    %v1160 = vmul.f32 %v1156, %v460
    %v1161 = vmul.f32 %v1155, %v464
    %v1162 = vmul.f32 %v1158, %v468
    %v1163 = vpack.c.bf16 %v1159, %v1159
    %v1164 = vpack.c.bf16 %v1160, %v1160
    %v1165 = vpack.c.bf16 %v1161, %v1161
    %v1166 = vpack.c.bf16 %v1162, %v1162
    %v1171 = vrot.slane %v693, 6
    %v1172 = vrot.slane %v694, 6
    %v1173 = vrot.slane %v695, 6
    %v1174 = vrot.slane %v696, 6
    %v1179 = vrot.slane %v713, 4
    %v1180 = vrot.slane %v714, 4
    %v1181 = vrot.slane %v715, 4
    %v1182 = vrot.slane %v716, 4
    %v1187 = vrot.slane %v733, 2
    %v1188 = vrot.slane %v734, 2
    %v1189 = vrot.slane %v735, 2
    %v1190 = vrot.slane %v736, 2
    %v1195 = vrot.slane %v757, 6
    %v1196 = vrot.slane %v758, 6
    %v1197 = vrot.slane %v759, 6
    %v1198 = vrot.slane %v760, 6
    %v1203 = vrot.slane %v777, 4
    %v1204 = vrot.slane %v778, 4
    %v1205 = vrot.slane %v779, 4
    %v1206 = vrot.slane %v780, 4
    %v1211 = vrot.slane %v797, 2
    %v1212 = vrot.slane %v798, 2
    %v1213 = vrot.slane %v799, 2
    %v1214 = vrot.slane %v800, 2
    %v1219 = vrot.slane %v846, 6
    %v1220 = vrot.slane %v847, 6
    %v1221 = vrot.slane %v848, 6
    %v1222 = vrot.slane %v849, 6
    %v1227 = vrot.slane %v866, 4
    %v1228 = vrot.slane %v867, 4
    %v1229 = vrot.slane %v868, 4
    %v1230 = vrot.slane %v869, 4
    %v1235 = vrot.slane %v886, 2
    %v1236 = vrot.slane %v887, 2
    %v1237 = vrot.slane %v888, 2
    %v1238 = vrot.slane %v889, 2
    %v1243 = vrot.slane %v910, 6
    %v1244 = vrot.slane %v911, 6
    %v1245 = vrot.slane %v912, 6
    %v1246 = vrot.slane %v913, 6
    %v1251 = vrot.slane %v930, 4
    %v1252 = vrot.slane %v931, 4
    %v1253 = vrot.slane %v932, 4
    %v1254 = vrot.slane %v933, 4
    %v1259 = vrot.slane %v950, 2
    %v1260 = vrot.slane %v951, 2
    %v1261 = vrot.slane %v952, 2
    %v1262 = vrot.slane %v953, 2
    %vm1263 = vcmask 1041408
    %v1266 = vsel %vm1263, %v673, %v1171
    %v1269 = vsel %vm1263, %v674, %v1172
    %v1272 = vsel %vm1263, %v675, %v1173
    %v1275 = vsel %vm1263, %v676, %v1174
    %vm1276 = vcmask 1043456
    %v1278 = vsel %vm1276, %v1266, %v1179
    %v1280 = vsel %vm1276, %v1269, %v1180
    %v1282 = vsel %vm1276, %v1272, %v1181
    %v1284 = vsel %vm1276, %v1275, %v1182
    %vm1285 = vcmask 1045504
    %v1287 = vsel %vm1285, %v1278, %v1187
    %v1290 = vsel %vm1285, %v1280, %v1188
    %v1293 = vsel %vm1285, %v1282, %v1189
    %v1296 = vsel %vm1285, %v1284, %v1190
    %v1300 = vsel %vm1263, %v737, %v1195
    %v1303 = vsel %vm1263, %v738, %v1196
    %v1306 = vsel %vm1263, %v739, %v1197
    %v1309 = vsel %vm1263, %v740, %v1198
    %v1311 = vsel %vm1276, %v1300, %v1203
    %v1313 = vsel %vm1276, %v1303, %v1204
    %v1315 = vsel %vm1276, %v1306, %v1205
    %v1317 = vsel %vm1276, %v1309, %v1206
    %v1319 = vsel %vm1285, %v1311, %v1211
    %v1322 = vsel %vm1285, %v1313, %v1212
    %v1325 = vsel %vm1285, %v1315, %v1213
    %v1328 = vsel %vm1285, %v1317, %v1214
    %v1332 = vsel %vm1263, %v817, %v1219
    %v1335 = vsel %vm1263, %v818, %v1220
    %v1338 = vsel %vm1263, %v819, %v1221
    %v1341 = vsel %vm1263, %v820, %v1222
    %v1343 = vsel %vm1276, %v1332, %v1227
    %v1345 = vsel %vm1276, %v1335, %v1228
    %v1347 = vsel %vm1276, %v1338, %v1229
    %v1349 = vsel %vm1276, %v1341, %v1230
    %v1351 = vsel %vm1285, %v1343, %v1235
    %v1354 = vsel %vm1285, %v1345, %v1236
    %v1357 = vsel %vm1285, %v1347, %v1237
    %v1360 = vsel %vm1285, %v1349, %v1238
    %v1364 = vsel %vm1263, %v906, %v1243
    %v1367 = vsel %vm1263, %v907, %v1244
    %v1370 = vsel %vm1263, %v908, %v1245
    %v1373 = vsel %vm1263, %v909, %v1246
    %v1375 = vsel %vm1276, %v1364, %v1251
    %v1377 = vsel %vm1276, %v1367, %v1252
    %v1379 = vsel %vm1276, %v1370, %v1253
    %v1381 = vsel %vm1276, %v1373, %v1254
    %v1383 = vsel %vm1285, %v1375, %v1259
    %v1386 = vsel %vm1285, %v1377, %v1260
    %v1389 = vsel %vm1285, %v1379, %v1261
    %v1392 = vsel %vm1285, %v1381, %v1262
    %v1398 = vrot.slane %v990, 6
    %v1399 = vrot.slane %v991, 6
    %v1400 = vrot.slane %v992, 6
    %v1401 = vrot.slane %v993, 6
    %v1406 = vrot.slane %v1019, 4
    %v1407 = vrot.slane %v1020, 4
    %v1408 = vrot.slane %v1021, 4
    %v1409 = vrot.slane %v1022, 4
    %v1414 = vrot.slane %v1039, 2
    %v1415 = vrot.slane %v1040, 2
    %v1416 = vrot.slane %v1041, 2
    %v1417 = vrot.slane %v1042, 2
    %v1422 = vrot.slane %v1079, 6
    %v1423 = vrot.slane %v1080, 6
    %v1424 = vrot.slane %v1081, 6
    %v1425 = vrot.slane %v1082, 6
    %v1430 = vrot.slane %v1083, 4
    %v1431 = vrot.slane %v1084, 4
    %v1432 = vrot.slane %v1085, 4
    %v1433 = vrot.slane %v1086, 4
    %v1438 = vrot.slane %v1103, 2
    %v1439 = vrot.slane %v1104, 2
    %v1440 = vrot.slane %v1105, 2
    %v1441 = vrot.slane %v1106, 2
    %v1446 = vrot.slane %v1143, 6
    %v1447 = vrot.slane %v1144, 6
    %v1448 = vrot.slane %v1145, 6
    %v1449 = vrot.slane %v1146, 6
    %v1454 = vrot.slane %v1163, 4
    %v1455 = vrot.slane %v1164, 4
    %v1456 = vrot.slane %v1165, 4
    %v1457 = vrot.slane %v1166, 4
    %v1462 = vrot.slane %v165, 2
    %v1463 = vrot.slane %v166, 2
    %v1464 = vrot.slane %v167, 2
    %v1465 = vrot.slane %v168, 2
    %v1470 = vrot.slane %v209, 6
    %v1471 = vrot.slane %v210, 6
    %v1472 = vrot.slane %v211, 6
    %v1473 = vrot.slane %v212, 6
    %v1478 = vrot.slane %v253, 2
    %v1479 = vrot.slane %v254, 2
    %v1480 = vrot.slane %v255, 2
    %v1481 = vrot.slane %v256, 2
    %v1486 = vrot.slane %v297, 6
    %v1487 = vrot.slane %v298, 6
    %v1488 = vrot.slane %v299, 6
    %v1489 = vrot.slane %v300, 6
    %v1494 = vrot.slane %v301, 2
    %v1495 = vrot.slane %v302, 2
    %v1496 = vrot.slane %v303, 2
    %v1497 = vrot.slane %v304, 2
    %v1500 = vsel %vm1263, %v970, %v1398
    %v1503 = vsel %vm1263, %v971, %v1399
    %v1506 = vsel %vm1263, %v972, %v1400
    %v1509 = vsel %vm1263, %v973, %v1401
    %v1511 = vsel %vm1276, %v1500, %v1406
    %v1513 = vsel %vm1276, %v1503, %v1407
    %v1515 = vsel %vm1276, %v1506, %v1408
    %v1517 = vsel %vm1276, %v1509, %v1409
    %v1519 = vsel %vm1285, %v1511, %v1414
    %v1522 = vsel %vm1285, %v1513, %v1415
    %v1525 = vsel %vm1285, %v1515, %v1416
    %v1528 = vsel %vm1285, %v1517, %v1417
    %v1532 = vsel %vm1263, %v1059, %v1422
    %v1535 = vsel %vm1263, %v1060, %v1423
    %v1538 = vsel %vm1263, %v1061, %v1424
    %v1541 = vsel %vm1263, %v1062, %v1425
    %v1543 = vsel %vm1276, %v1532, %v1430
    %v1545 = vsel %vm1276, %v1535, %v1431
    %v1547 = vsel %vm1276, %v1538, %v1432
    %v1549 = vsel %vm1276, %v1541, %v1433
    %v1551 = vsel %vm1285, %v1543, %v1438
    %v1554 = vsel %vm1285, %v1545, %v1439
    %v1557 = vsel %vm1285, %v1547, %v1440
    %v1560 = vsel %vm1285, %v1549, %v1441
    %v1564 = vsel %vm1263, %v1123, %v1446
    %v1567 = vsel %vm1263, %v1124, %v1447
    %v1570 = vsel %vm1263, %v1125, %v1448
    %v1573 = vsel %vm1263, %v1126, %v1449
    %v1575 = vsel %vm1276, %v1564, %v1454
    %v1577 = vsel %vm1276, %v1567, %v1455
    %v1579 = vsel %vm1276, %v1570, %v1456
    %v1581 = vsel %vm1276, %v1573, %v1457
    %v1583 = vsel %vm1285, %v1575, %v1462
    %v1586 = vsel %vm1285, %v1577, %v1463
    %v1589 = vsel %vm1285, %v1579, %v1464
    %v1592 = vsel %vm1285, %v1581, %v1465
    %v1595 = vsel %vm1263, %v1462, %v1470
    %v1597 = vsel %vm1263, %v1463, %v1471
    %v1599 = vsel %vm1263, %v1464, %v1472
    %v1601 = vsel %vm1263, %v1465, %v1473
    %v1603 = vsel %vm1285, %v1595, %v1478
    %v1606 = vsel %vm1285, %v1597, %v1479
    %v1609 = vsel %vm1285, %v1599, %v1480
    %v1612 = vsel %vm1285, %v1601, %v1481
    %v1615 = vsel %vm1263, %v1478, %v1486
    %v1617 = vsel %vm1263, %v1479, %v1487
    %v1619 = vsel %vm1263, %v1480, %v1488
    %v1621 = vsel %vm1263, %v1481, %v1489
    %v1623 = vsel %vm1285, %v1615, %v1494
    %v1626 = vsel %vm1285, %v1617, %v1495
    %v1629 = vsel %vm1285, %v1619, %v1496
    %v1632 = vsel %vm1285, %v1621, %v1497
    %v1638 = vrot.slane %v389, 4
    %v1639 = vrot.slane %v390, 4
    %v1640 = vrot.slane %v391, 4
    %v1641 = vrot.slane %v392, 4
    %v1646 = vrot.slane %v477, 4
    %v1647 = vrot.slane %v478, 4
    %v1648 = vrot.slane %v479, 4
    %v1649 = vrot.slane %v480, 4
    %v1654 = vrot.slane %v521, 4
    %v1655 = vrot.slane %v522, 4
    %v1656 = vrot.slane %v523, 4
    %v1657 = vrot.slane %v524, 4
    %v1662 = vrot.slane %v561, 4
    %v1663 = vrot.slane %v562, 4
    %v1664 = vrot.slane %v563, 4
    %v1665 = vrot.slane %v564, 4
    %v1670 = vrot.slane %v585, 4
    %v1671 = vrot.slane %v586, 4
    %v1672 = vrot.slane %v587, 4
    %v1673 = vrot.slane %v588, 4
    %v1678 = vrot.slane %v625, 4
    %v1679 = vrot.slane %v626, 4
    %v1680 = vrot.slane %v627, 4
    %v1681 = vrot.slane %v628, 4
    %v1684 = vsel %vm1276, %v345, %v1638
    %v1687 = vsel %vm1276, %v346, %v1639
    %v1690 = vsel %vm1276, %v347, %v1640
    %v1693 = vsel %vm1276, %v348, %v1641
    %v1696 = vsel %vm1276, %v433, %v1646
    %v1699 = vsel %vm1276, %v434, %v1647
    %v1702 = vsel %vm1276, %v435, %v1648
    %v1705 = vsel %vm1276, %v436, %v1649
    %v1708 = vsel %vm1276, %v501, %v1654
    %v1711 = vsel %vm1276, %v502, %v1655
    %v1714 = vsel %vm1276, %v503, %v1656
    %v1717 = vsel %vm1276, %v504, %v1657
    %v1720 = vsel %vm1276, %v541, %v1662
    %v1723 = vsel %vm1276, %v542, %v1663
    %v1726 = vsel %vm1276, %v543, %v1664
    %v1729 = vsel %vm1276, %v544, %v1665
    %v1732 = vsel %vm1276, %v565, %v1670
    %v1735 = vsel %vm1276, %v566, %v1671
    %v1738 = vsel %vm1276, %v567, %v1672
    %v1741 = vsel %vm1276, %v568, %v1673
    %v1744 = vsel %vm1276, %v605, %v1678
    %v1747 = vsel %vm1276, %v606, %v1679
    %v1750 = vsel %vm1276, %v607, %v1680
    %v1753 = vsel %vm1276, %v608, %v1681
    %vm1782 = vcmask 1041408
    %v1783 = vrot.slane %v1684, 6
    %v1784 = vrot.slane %v1687, 6
    %v1785 = vrot.slane %v1690, 6
    %v1786 = vrot.slane %v1693, 6
    %v1787 = vrot.slane %v1696, 6
    %v1788 = vsel %vm1782, %v1783, %v1787
    %v1789 = vrot.slane %v1699, 6
    %v1790 = vsel %vm1782, %v1784, %v1789
    %v1791 = vrot.slane %v1702, 6
    %v1792 = vsel %vm1782, %v1785, %v1791
    %v1793 = vrot.slane %v1705, 6
    %v1794 = vsel %vm1782, %v1786, %v1793
    %v1795 = vrot.slane %v1708, 6
    %v1796 = vsel %vm1782, %v1787, %v1795
    %v1797 = vrot.slane %v1711, 6
    %v1798 = vsel %vm1782, %v1789, %v1797
    %v1799 = vrot.slane %v1714, 6
    %v1800 = vsel %vm1782, %v1791, %v1799
    %v1801 = vrot.slane %v1717, 6
    %v1802 = vsel %vm1782, %v1793, %v1801
    %v1803 = vrot.slane %v1720, 6
    %v1804 = vsel %vm1782, %v1795, %v1803
    %v1805 = vrot.slane %v1723, 6
    %v1806 = vsel %vm1782, %v1797, %v1805
    %v1807 = vrot.slane %v1726, 6
    %v1808 = vsel %vm1782, %v1799, %v1807
    %v1809 = vrot.slane %v1729, 6
    %v1810 = vsel %vm1782, %v1801, %v1809
    %v1811 = vrot.slane %v1732, 6
    %v1812 = vsel %vm1782, %v1803, %v1811
    %v1813 = vrot.slane %v1735, 6
    %v1814 = vsel %vm1782, %v1805, %v1813
    %v1815 = vrot.slane %v1738, 6
    %v1816 = vsel %vm1782, %v1807, %v1815
    %v1817 = vrot.slane %v1741, 6
    %v1818 = vsel %vm1782, %v1809, %v1817
    %v1819 = vrot.slane %v1744, 6
    %v1820 = vsel %vm1782, %v1811, %v1819
    %v1821 = vrot.slane %v1747, 6
    %v1822 = vsel %vm1782, %v1813, %v1821
    %v1823 = vrot.slane %v1750, 6
    %v1824 = vsel %vm1782, %v1815, %v1823
    %v1825 = vrot.slane %v1753, 6
    %v1826 = vsel %vm1782, %v1817, %v1825
    %v1827 = vrot.slane %v645, 6
    %v1828 = vsel %vm1782, %v1819, %v1827
    %v1829 = vrot.slane %v646, 6
    %v1830 = vsel %vm1782, %v1821, %v1829
    %v1831 = vrot.slane %v647, 6
    %v1832 = vsel %vm1782, %v1823, %v1831
    %v1833 = vrot.slane %v648, 6
    %v1834 = vsel %vm1782, %v1825, %v1833
    %v1856 = vsel %vm1263, %v1494, %v1783
    %v1859 = vsel %vm1263, %v1495, %v1784
    %v1862 = vsel %vm1263, %v1496, %v1785
    %v1865 = vsel %vm1263, %v1497, %v1786
    %v1867 = vld [vmem:[%s4] sm:$0xff]
    %v1868 = vld [vmem:[%s4 + $0x8] sm:$0x33]
    %v1869 = vld [vmem:[%s5] sm:$0xff]
    %v1870 = vld [vmem:[%s5 + $0x8] sm:$0xf]
    %1872 = vset.pattern.permute.xlu0 0
    %1873 = vperm.xlu0 %1872, %v1869
    %v1874 = vpop.permute.xlu0 %1873
    %1877 = vset.pattern.permute.xlu0 0
    %1878 = vperm.xlu0 %1877, %v1870
    %v1879 = vpop.permute.xlu0 %1878
    %v1883 = vunpack.c.l.b16 %v1867
    %v1884 = vunpack.c.h.b16 %v1867
    %v1885 = vunpack.c.l.b16 %v1868
    %v1886 = vunpack.c.h.b16 %v1868
    %v1887 = vpack.c.b16 %v1885, %v1883
    %v1888 = vpack.c.b16 %v1886, %v1884
    %vm1890 = vcmask 1014784
    %v1892 = vsel %vm1890, %v1888, 0
    %v1895 = vsel %vm1285, %v1828, 0
    %v1898 = vsel %vm1285, %v1830, 0
    %v1901 = vsel %vm1285, %v1832, 0
    %v1904 = vsel %vm1285, %v1834, 0
    %1906 = vmatprep.subr.bf16.mxu0 %v1606
    %1907 = vmatpush1.bf16.msra.mxu0 %v1603
    %1908 = vmatprep.subr.bf16.mxu0 %v1586
    %1909 = vmatpush1.bf16.msra.mxu0 %v1583
    %1910 = vmatprep.subr.bf16.mxu0 %v1554
    %1911 = vmatpush1.bf16.msra.mxu0 %v1551
    %1912 = vmatprep.subr.bf16.mxu0 %v1522
    %1913 = vmatpush1.bf16.msra.mxu0 %v1519
    %1914 = vmatprep.subr.bf16.mxu0 %v1386
    %1915 = vmatpush1.bf16.msra.mxu0 %v1383
    %1916 = vmatprep.subr.bf16.mxu0 %v1354
    %1917 = vmatpush1.bf16.msra.mxu0 %v1351
    %1918 = vmatprep.subr.bf16.mxu0 %v1322
    %1919 = vmatpush1.bf16.msra.mxu0 %v1319
    %1920 = vmatprep.subr.bf16.mxu0 %v1290
    %1921 = vmatpush1.bf16.msra.mxu0 %v1287
    %1922 = vmatprep.subr.bf16.mxu0 %v1898
    %1923 = vmatpush2.bf16.msra.mxu0 %v1895
    %1924 = vmatprep.subr.bf16.mxu0 %v1822
    %1925 = vmatpush2.bf16.msra.mxu0 %v1820
    %1926 = vmatprep.subr.bf16.mxu0 %v1814
    %1927 = vmatpush2.bf16.msra.mxu0 %v1812
    %1928 = vmatprep.subr.bf16.mxu0 %v1806
    %1929 = vmatpush2.bf16.msra.mxu0 %v1804
    %1930 = vmatprep.subr.bf16.mxu0 %v1798
    %1931 = vmatpush2.bf16.msra.mxu0 %v1796
    %1932 = vmatprep.subr.bf16.mxu0 %v1790
    %1933 = vmatpush2.bf16.msra.mxu0 %v1788
    %1934 = vmatprep.subr.bf16.mxu0 %v1859
    %1935 = vmatpush2.bf16.msra.mxu0 %v1856
    %1936 = vmatprep.subr.bf16.mxu0 %v1626
    %1937 = vmatpush2.bf16.msra.mxu0 %v1623
    %1938 = vmatprep.mubr.bf16.mxu0 %v1892
    %1939 = vmatmul.mubr.bf16.gmra.mxu0 %v1887
    %v1940 = vpop.f32.mrf.mxu0
    %v1941 = vadd.f32 %v1874, %v1940
    %v1942 = vpop.f32.mrf.mxu0
    %v1943 = vadd.f32 %v1874, %v1942
    %v1944 = vpop.f32.mrf.mxu0
    %v1945 = vadd.f32 %v1879, %v1944
    %v1946 = vpop.f32.mrf.mxu0
    %v1947 = vadd.f32 %v1879, %v1946
    %1948 = vdwg.mxu0
    %1949 = vmatprep.subr.bf16.mxu0 %v1612
    %1950 = vmatpush1.bf16.msra.mxu0 %v1609
    %1951 = vmatprep.subr.bf16.mxu0 %v1592
    %1952 = vmatpush1.bf16.msra.mxu0 %v1589
    %1953 = vmatprep.subr.bf16.mxu0 %v1560
    %1954 = vmatpush1.bf16.msra.mxu0 %v1557
    %1955 = vmatprep.subr.bf16.mxu0 %v1528
    %1956 = vmatpush1.bf16.msra.mxu0 %v1525
    %1957 = vmatprep.subr.bf16.mxu0 %v1392
    %1958 = vmatpush1.bf16.msra.mxu0 %v1389
    %1959 = vmatprep.subr.bf16.mxu0 %v1360
    %1960 = vmatpush1.bf16.msra.mxu0 %v1357
    %1961 = vmatprep.subr.bf16.mxu0 %v1328
    %1962 = vmatpush1.bf16.msra.mxu0 %v1325
    %1963 = vmatprep.subr.bf16.mxu0 %v1296
    %1964 = vmatpush1.bf16.msra.mxu0 %v1293
    %1965 = vmatprep.subr.bf16.mxu0 %v1904
    %1966 = vmatpush2.bf16.msra.mxu0 %v1901
    %1967 = vmatprep.subr.bf16.mxu0 %v1826
    %1968 = vmatpush2.bf16.msra.mxu0 %v1824
    %1969 = vmatprep.subr.bf16.mxu0 %v1818
    %1970 = vmatpush2.bf16.msra.mxu0 %v1816
    %1971 = vmatprep.subr.bf16.mxu0 %v1810
    %1972 = vmatpush2.bf16.msra.mxu0 %v1808
    %1973 = vmatprep.subr.bf16.mxu0 %v1802
    %1974 = vmatpush2.bf16.msra.mxu0 %v1800
    %1975 = vmatprep.subr.bf16.mxu0 %v1794
    %1976 = vmatpush2.bf16.msra.mxu0 %v1792
    %1977 = vmatprep.subr.bf16.mxu0 %v1865
    %1978 = vmatpush2.bf16.msra.mxu0 %v1862
    %1979 = vmatprep.subr.bf16.mxu0 %v1632
    %1980 = vmatpush2.bf16.msra.mxu0 %v1629
    %1981 = vmatprep.mubr.bf16.mxu0 %v1892
    %1982 = vmatmul.mubr.bf16.gmra.mxu0 %v1887
    %v1983 = vpop.f32.mrf.mxu0
    %v1984 = vadd.f32 %v1874, %v1983
    %v1985 = vpop.f32.mrf.mxu0
    %v1986 = vadd.f32 %v1874, %v1985
    %v1987 = vpop.f32.mrf.mxu0
    %v1988 = vadd.f32 %v1879, %v1987
    %v1989 = vpop.f32.mrf.mxu0
    %v1990 = vadd.f32 %v1879, %v1989
    %1991 = vdwg.mxu0
    %v1992 = vtanh.pop %v1941
    %v1993 = vtanh.pop %v1943
    %v1994 = vtanh.pop %v1984
    %v1995 = vtanh.pop %v1986
    %v1996 = vtanh.pop %v1945
    %v1997 = vtanh.pop %v1947
    %v1998 = vtanh.pop %v1988
    %v1999 = vtanh.pop %v1990
    %v2000 = vsel %vm1276, %v1992, 0.0
    %v2001 = vrot.slane %v2000, 4
    %v2002 = vadd.f32 %v2000, %v2001
    %v2003 = vrot.slane %v2002, 2
    %v2004 = vadd.f32 %v2002, %v2003
    %v2005 = vrot.slane %v2004, 1
    %v2006 = vadd.f32 %v2004, %v2005
    %v2007 = vsel %vm1276, %v1993, 0.0
    %v2008 = vrot.slane %v2007, 4
    %v2009 = vadd.f32 %v2007, %v2008
    %v2010 = vrot.slane %v2009, 2
    %v2011 = vadd.f32 %v2009, %v2010
    %v2012 = vrot.slane %v2011, 1
    %v2013 = vadd.f32 %v2011, %v2012
    %v2014 = vsel %vm1276, %v1994, 0.0
    %v2015 = vrot.slane %v2014, 4
    %v2016 = vadd.f32 %v2014, %v2015
    %v2017 = vrot.slane %v2016, 2
    %v2018 = vadd.f32 %v2016, %v2017
    %v2019 = vrot.slane %v2018, 1
    %v2020 = vadd.f32 %v2018, %v2019
    %v2021 = vsel %vm1276, %v1995, 0.0
    %v2022 = vrot.slane %v2021, 4
    %v2023 = vadd.f32 %v2021, %v2022
    %v2024 = vrot.slane %v2023, 2
    %v2025 = vadd.f32 %v2023, %v2024
    %v2026 = vrot.slane %v2025, 1
    %v2027 = vadd.f32 %v2025, %v2026
    %v2032 = vrot.slane %v1992, 4
    %v2033 = vrot.slane %v1993, 4
    %v2034 = vrot.slane %v1994, 4
    %v2035 = vrot.slane %v1995, 4
    %v2040 = vsel %vm1276, %v2032, 0.0
    %v2041 = vrot.slane %v2040, 4
    %v2042 = vadd.f32 %v2040, %v2041
    %v2043 = vrot.slane %v2042, 2
    %v2044 = vadd.f32 %v2042, %v2043
    %v2045 = vrot.slane %v2044, 1
    %v2046 = vadd.f32 %v2044, %v2045
    %v2047 = vsel %vm1276, %v2033, 0.0
    %v2048 = vrot.slane %v2047, 4
    %v2049 = vadd.f32 %v2047, %v2048
    %v2050 = vrot.slane %v2049, 2
    %v2051 = vadd.f32 %v2049, %v2050
    %v2052 = vrot.slane %v2051, 1
    %v2053 = vadd.f32 %v2051, %v2052
    %v2054 = vsel %vm1276, %v2034, 0.0
    %v2055 = vrot.slane %v2054, 4
    %v2056 = vadd.f32 %v2054, %v2055
    %v2057 = vrot.slane %v2056, 2
    %v2058 = vadd.f32 %v2056, %v2057
    %v2059 = vrot.slane %v2058, 1
    %v2060 = vadd.f32 %v2058, %v2059
    %v2061 = vsel %vm1276, %v2035, 0.0
    %v2062 = vrot.slane %v2061, 4
    %v2063 = vadd.f32 %v2061, %v2062
    %v2064 = vrot.slane %v2063, 2
    %v2065 = vadd.f32 %v2063, %v2064
    %v2066 = vrot.slane %v2065, 1
    %v2067 = vadd.f32 %v2065, %v2066
    %v2068 = vsel %vm1276, %v1996, 0.0
    %v2069 = vrot.slane %v2068, 4
    %v2070 = vadd.f32 %v2068, %v2069
    %v2071 = vrot.slane %v2070, 2
    %v2072 = vadd.f32 %v2070, %v2071
    %v2073 = vrot.slane %v2072, 1
    %v2074 = vadd.f32 %v2072, %v2073
    %v2075 = vsel %vm1276, %v1997, 0.0
    %v2076 = vrot.slane %v2075, 4
    %v2077 = vadd.f32 %v2075, %v2076
    %v2078 = vrot.slane %v2077, 2
    %v2079 = vadd.f32 %v2077, %v2078
    %v2080 = vrot.slane %v2079, 1
    %v2081 = vadd.f32 %v2079, %v2080
    %v2082 = vsel %vm1276, %v1998, 0.0
    %v2083 = vrot.slane %v2082, 4
    %v2084 = vadd.f32 %v2082, %v2083
    %v2085 = vrot.slane %v2084, 2
    %v2086 = vadd.f32 %v2084, %v2085
    %v2087 = vrot.slane %v2086, 1
    %v2088 = vadd.f32 %v2086, %v2087
    %v2089 = vsel %vm1276, %v1999, 0.0
    %v2090 = vrot.slane %v2089, 4
    %v2091 = vadd.f32 %v2089, %v2090
    %v2092 = vrot.slane %v2091, 2
    %v2093 = vadd.f32 %v2091, %v2092
    %v2094 = vrot.slane %v2093, 1
    %v2095 = vadd.f32 %v2093, %v2094
    %vm2096 = vcmask 1040384
    %v2097 = vsel %vm2096, %v2006, %v2046
    %v2098 = vsel %vm2096, %v2013, %v2053
    %v2099 = vsel %vm2096, %v2020, %v2060
    %v2100 = vsel %vm2096, %v2027, %v2067
    %v2101 = vsel %vm1263, %v2097, %v2074
    %v2102 = vsel %vm1263, %v2098, %v2081
    %v2103 = vsel %vm1263, %v2099, %v2088
    %v2104 = vsel %vm1263, %v2100, %v2095
    %s2105 = sshra.s32 %s115, 2
    %s2106 = sand.u32 %s115, 3
    %s2107 = sshra.s32 %s115, 2
    %s2108 = sand.u32 %s115, 3
    %s2109 = smul.u32 %s2105, 4
    %s2110 = smul.u32 %s2109, 4
    %s2111 = sadd.s32 %s2110, %s2108
    %s2112 = scalar_lea.vmem [#allocation2], %s2111
    %v2113 = vld [vmem:[%s2112] ss:$4 sm:$0xf]
    %s2114 = sadd.s32 16, %s2111
    %s2115 = scalar_lea.vmem [#allocation2], %s2114
    %v2116 = vld [vmem:[%s2115] ss:$4 sm:$0xf]
    %s2117 = sadd.s32 32, %s2111
    %s2118 = scalar_lea.vmem [#allocation2], %s2117
    %v2119 = vld [vmem:[%s2118] ss:$4 sm:$0xf]
    %v2121 = vlaneseq
    %v2122 = vshrl.u32 %v2121, 7
    %v2123 = vsub.s32 0, %v2122
    %v2124 = vrot.slane %v2113, %v2123
    %v2125 = vlaneseq
    %v2126 = vshrl.u32 %v2125, 7
    %v2127 = vsub.s32 1, %v2126
    %v2128 = vrot.slane %v2113, %v2127
    %v2129 = vlaneseq
    %v2130 = vshrl.u32 %v2129, 7
    %v2131 = vsub.s32 2, %v2130
    %v2132 = vrot.slane %v2113, %v2131
    %v2133 = vlaneseq
    %v2134 = vshrl.u32 %v2133, 7
    %v2135 = vsub.s32 3, %v2134
    %v2136 = vrot.slane %v2113, %v2135
    %v2142 = vlaneseq
    %v2143 = vshrl.u32 %v2142, 7
    %v2144 = vsub.s32 0, %v2143
    %v2145 = vrot.slane %v2116, %v2144
    %v2146 = vlaneseq
    %v2147 = vshrl.u32 %v2146, 7
    %v2148 = vsub.s32 1, %v2147
    %v2149 = vrot.slane %v2116, %v2148
    %v2150 = vlaneseq
    %v2151 = vshrl.u32 %v2150, 7
    %v2152 = vsub.s32 2, %v2151
    %v2153 = vrot.slane %v2116, %v2152
    %v2154 = vlaneseq
    %v2155 = vshrl.u32 %v2154, 7
    %v2156 = vsub.s32 3, %v2155
    %v2157 = vrot.slane %v2116, %v2156
    %v2163 = vlaneseq
    %v2164 = vshrl.u32 %v2163, 7
    %v2165 = vsub.s32 0, %v2164
    %v2166 = vrot.slane %v2119, %v2165
    %v2167 = vlaneseq
    %v2168 = vshrl.u32 %v2167, 7
    %v2169 = vsub.s32 1, %v2168
    %v2170 = vrot.slane %v2119, %v2169
    %v2171 = vlaneseq
    %v2172 = vshrl.u32 %v2171, 7
    %v2173 = vsub.s32 2, %v2172
    %v2174 = vrot.slane %v2119, %v2173
    %v2175 = vlaneseq
    %v2176 = vshrl.u32 %v2175, 7
    %v2177 = vsub.s32 3, %v2176
    %v2178 = vrot.slane %v2119, %v2177
    %v2183 = vsel %vm2096, %v2124, %v2145
    %v2184 = vsel %vm2096, %v2128, %v2149
    %v2185 = vsel %vm2096, %v2132, %v2153
    %v2186 = vsel %vm2096, %v2136, %v2157
    %v2187 = vsel %vm1263, %v2183, %v2166
    %v2188 = vsel %vm1263, %v2184, %v2170
    %v2189 = vsel %vm1263, %v2185, %v2174
    %v2190 = vsel %vm1263, %v2186, %v2178
    %v2191 = vadd.s32 %v134, 128
    %v2192 = vadd.s32 %v134, 256
    %v2193 = vadd.s32 %v134, 384
    %vm2194 = vcmask 1042432
    %v2195 = vsel %vm2194, %v2101, 0.0
    %v2196 = vsel %vm2194, %v2102, 0.0
    %v2197 = vadd.f32 %v2195, %v2196
    %2198 = vadd.xlane.f32.xlu0 %v2197
    %v2199 = vpop.xlane.xlu0 %2198
    %v2200 = vmul.f32 %v2199, 0.0009765625
    %v2201 = vsel %vm2194, %v2200, -inf
    %v2202 = vrot.slane %v2201, 4
    %v2203 = vmax.f32 %v2201, %v2202
    %v2204 = vrot.slane %v2203, 2
    %v2205 = vmax.f32 %v2203, %v2204
    %v2206 = vrot.slane %v2205, 1
    %v2207 = vmax.f32 %v2205, %v2206
    %v2208 = vsub.f32 %v2200, %v2207
    %v2209 = vmul.f32 %v2208, 1.442695
    %v2210 = vpow.pop %v2209
    %v2211 = vsel %vm2194, %v2210, 0.0
    %v2212 = vrot.slane %v2211, 4
    %v2213 = vadd.f32 %v2211, %v2212
    %v2214 = vrot.slane %v2213, 2
    %v2215 = vadd.f32 %v2213, %v2214
    %v2216 = vrot.slane %v2215, 1
    %v2217 = vadd.f32 %v2215, %v2216
    %v2218 = vrcp.pop %v2217
    %v2219 = vmul.f32 %v2210, %v2218
    %vm2220 = vcmp.ge.s32.totalorder %v134, 0
    %vm2221 = vcmp.ge.s32.totalorder %v2191, 0
    %vm2222 = vcmp.ge.s32.totalorder %v2192, 0
    %vm2223 = vcmp.ge.s32.totalorder %v2193, 0
    %vm2224 = vcmp.lt.s32.totalorder %v134, 256
    %vm2225 = vcmp.lt.s32.totalorder %v2191, 256
    %vm2226 = vcmp.lt.s32.totalorder %v2192, 256
    %vm2227 = vcmp.lt.s32.totalorder %v2193, 256
    %vm2228 = vmand %vm2220, %vm2224
    %vm2229 = vmand %vm2221, %vm2225
    %vm2230 = vmand %vm2222, %vm2226
    %vm2231 = vmand %vm2223, %vm2227
    %v2232 = vsel %vm2228, 1, 0
    %v2233 = vsel %vm2229, 1, 0
    %v2234 = vsel %vm2230, 1, 0
    %v2235 = vsel %vm2231, 1, 0
    %v2236 = vcvt.s32.f32 %v2232
    %v2237 = vcvt.s32.f32 %v2233
    %v2238 = vcvt.s32.f32 %v2234
    %v2239 = vcvt.s32.f32 %v2235
    %v2240 = vmul.f32 %v2219, %v2236
    %v2241 = vmul.f32 %v2219, %v2237
    %v2242 = vmul.f32 %v2219, %v2238
    %v2243 = vmul.f32 %v2219, %v2239
    %v2244 = vadd.f32 %v2240, 0.0
    %v2245 = vadd.f32 %v2241, 0.0
    %v2246 = vadd.f32 %v2242, 0.0
    %v2247 = vadd.f32 %v2243, 0.0
    %v2248 = vsel %vm2194, %v2103, 0.0
    %v2249 = vsel %vm2194, %v2104, 0.0
    %v2250 = vadd.f32 %v2248, %v2249
    %2251 = vadd.xlane.f32.xlu0 %v2250
    %v2252 = vpop.xlane.xlu0 %2251
    %v2253 = vmul.f32 %v2252, 0.0009765625
    %v2254 = vsel %vm2194, %v2253, -inf
    %v2255 = vrot.slane %v2254, 4
    %v2256 = vmax.f32 %v2254, %v2255
    %v2257 = vrot.slane %v2256, 2
    %v2258 = vmax.f32 %v2256, %v2257
    %v2259 = vrot.slane %v2258, 1
    %v2260 = vmax.f32 %v2258, %v2259
    %v2261 = vsub.f32 %v2253, %v2260
    %v2262 = vmul.f32 %v2261, 1.442695
    %v2263 = vpow.pop %v2262
    %v2264 = vsel %vm2194, %v2263, 0.0
    %v2265 = vrot.slane %v2264, 4
    %v2266 = vadd.f32 %v2264, %v2265
    %v2267 = vrot.slane %v2266, 2
    %v2268 = vadd.f32 %v2266, %v2267
    %v2269 = vrot.slane %v2268, 1
    %v2270 = vadd.f32 %v2268, %v2269
    %v2271 = vrcp.pop %v2270
    %v2272 = vmul.f32 %v2263, %v2271
    %vm2273 = vcmp.ge.s32.totalorder %v134, 256
    %vm2274 = vcmp.ge.s32.totalorder %v2191, 256
    %vm2275 = vcmp.ge.s32.totalorder %v2192, 256
    %vm2276 = vcmp.ge.s32.totalorder %v2193, 256
    %vm2277 = vcmp.lt.s32.totalorder %v134, 512
    %vm2278 = vcmp.lt.s32.totalorder %v2191, 512
    %vm2279 = vcmp.lt.s32.totalorder %v2192, 512
    %vm2280 = vcmp.lt.s32.totalorder %v2193, 512
    %vm2281 = vmand %vm2273, %vm2277
    %vm2282 = vmand %vm2274, %vm2278
    %vm2283 = vmand %vm2275, %vm2279
    %vm2284 = vmand %vm2276, %vm2280
    %v2285 = vsel %vm2281, 1, 0
    %v2286 = vsel %vm2282, 1, 0
    %v2287 = vsel %vm2283, 1, 0
    %v2288 = vsel %vm2284, 1, 0
    %v2289 = vcvt.s32.f32 %v2285
    %v2290 = vcvt.s32.f32 %v2286
    %v2291 = vcvt.s32.f32 %v2287
    %v2292 = vcvt.s32.f32 %v2288
    %v2293 = vmul.f32 %v2272, %v2289
    %v2294 = vmul.f32 %v2272, %v2290
    %v2295 = vmul.f32 %v2272, %v2291
    %v2296 = vmul.f32 %v2272, %v2292
    %v2297 = vadd.f32 %v2244, %v2293
    %v2298 = vadd.f32 %v2245, %v2294
    %v2299 = vadd.f32 %v2246, %v2295
    %v2300 = vadd.f32 %v2247, %v2296
    %v2301 = vmul.f32 %v2187, %v2297
    %v2302 = vmul.f32 %v2188, %v2298
    %v2303 = vmul.f32 %v2189, %v2299
    %v2304 = vmul.f32 %v2190, %v2300
    %v2309 = vcombine.low %v2301, %v2302
    %v2310 = vcombine.low %v2303, %v2304
    %v2312 = vunpack.c.l.s4 1966171168
    %v2313 = vunpack.c.0.s8 %v2312
    %v2314 = vlaneseq
    %v2315 = vshrl.u32 %v2314, 7
    %v2316 = vsub.s32 %v2313, %v2315
    %v2317 = vrot.slane %v2309, %v2316
    %v2319 = vunpack.c.l.s4 1966171168
    %v2320 = vunpack.c.0.s8 %v2319
    %v2321 = vlaneseq
    %v2322 = vshrl.u32 %v2321, 7
    %v2323 = vsub.s32 %v2320, %v2322
    %v2324 = vrot.slane %v2310, %v2323
    %v2325 = vcombine.low %v2317, %v2324
    %v2327 = vunpack.c.l.s4 1966171168
    %v2328 = vunpack.c.0.s8 %v2327
    %v2329 = vlaneseq
    %v2330 = vshrl.u32 %v2329, 7
    %v2331 = vsub.s32 %v2328, %v2330
    %v2332 = vrot.slane %v2325, %v2331
    %v2334 = vlaneseq
    %vm2335 = vcmp.ge.s32.totalorder %v2334, 0
    %vm2336 = vcmp.lt.s32.totalorder %v2334, 512
    %vm2337 = vmand %vm2335, %vm2336
    %2338 = vst.msk [vmem:[%s2112] ss:$4 sm:$0xf] %vm2337, %v2332
    %v2339 = vcombine.high %v2317, %v2324
    %v2341 = vunpack.c.l.s4 1966171168
    %v2342 = vunpack.c.0.s8 %v2341
    %v2343 = vlaneseq
    %v2344 = vshrl.u32 %v2343, 7
    %v2345 = vsub.s32 %v2342, %v2344
    %v2346 = vrot.slane %v2339, %v2345
    %2348 = vst.msk [vmem:[%s2115] ss:$4 sm:$0xf] %vm2337, %v2346
    %v2349 = vcombine.high %v2332, %v2332
    %2351 = vst.msk [vmem:[%s2118] ss:$4 sm:$0xf] %vm2337, %v2349
    %v2352 = vld [vmem:[%s3] ss:$8 sm:$0xf]
    %2353 = vrot.lane.b32.xlu0 %v2301, 17
    %v2354 = vpop.permute.xlu0 %2353
    %2355 = vrot.lane.b32.xlu0 %v2302, 17
    %v2356 = vpop.permute.xlu0 %2355
    %2357 = vrot.lane.b32.xlu0 %v2303, 17
    %v2358 = vpop.permute.xlu0 %2357
    %2359 = vrot.lane.b32.xlu0 %v2304, 17
    %v2360 = vpop.permute.xlu0 %2359
    %v2361 = vsel %vm135, %v2358, %v2360
    %v2362 = vsel %vm135, %v2356, %v2358
    %v2363 = vsel %vm135, %v2354, %v2356
    %v2364 = vsel %vm135, %v2360, %v2354
    %v2366 = vlaneseq
    %v2367 = vshrl.u32 %v2366, 7
    %v2368 = vsub.s32 0, %v2367
    %v2369 = vrot.slane %v2352, %v2368
    %v2370 = vlaneseq
    %v2371 = vshrl.u32 %v2370, 7
    %v2372 = vsub.s32 1, %v2371
    %v2373 = vrot.slane %v2352, %v2372
    %v2374 = vlaneseq
    %v2375 = vshrl.u32 %v2374, 7
    %v2376 = vsub.s32 2, %v2375
    %v2377 = vrot.slane %v2352, %v2376
    %v2378 = vlaneseq
    %v2379 = vshrl.u32 %v2378, 7
    %v2380 = vsub.s32 3, %v2379
    %v2381 = vrot.slane %v2352, %v2380
    %v2386 = vmul.f32 %v2364, %v2369
    %v2387 = vmul.f32 %v2363, %v2373
    %v2388 = vmul.f32 %v2362, %v2377
    %v2389 = vmul.f32 %v2361, %v2381
    %v2390 = vpack.c.bf16 %v2386, %v2386
    %v2391 = vpack.c.bf16 %v2387, %v2387
    %v2392 = vpack.c.bf16 %v2388, %v2388
    %v2393 = vpack.c.bf16 %v2389, %v2389
    %v2394 = vld [vmem:[%s169] ss:$8 sm:$0xf]
    %2395 = vrot.lane.b32.xlu0 %v2301, 16
    %v2396 = vpop.permute.xlu0 %2395
    %2397 = vrot.lane.b32.xlu0 %v2302, 16
    %v2398 = vpop.permute.xlu0 %2397
    %2399 = vrot.lane.b32.xlu0 %v2303, 16
    %v2400 = vpop.permute.xlu0 %2399
    %2401 = vrot.lane.b32.xlu0 %v2304, 16
    %v2402 = vpop.permute.xlu0 %2401
    %v2403 = vsel %vm179, %v2400, %v2402
    %v2404 = vsel %vm179, %v2398, %v2400
    %v2405 = vsel %vm179, %v2396, %v2398
    %v2406 = vsel %vm179, %v2402, %v2396
    %v2408 = vlaneseq
    %v2409 = vshrl.u32 %v2408, 7
    %v2410 = vsub.s32 0, %v2409
    %v2411 = vrot.slane %v2394, %v2410
    %v2412 = vlaneseq
    %v2413 = vshrl.u32 %v2412, 7
    %v2414 = vsub.s32 1, %v2413
    %v2415 = vrot.slane %v2394, %v2414
    %v2416 = vlaneseq
    %v2417 = vshrl.u32 %v2416, 7
    %v2418 = vsub.s32 2, %v2417
    %v2419 = vrot.slane %v2394, %v2418
    %v2420 = vlaneseq
    %v2421 = vshrl.u32 %v2420, 7
    %v2422 = vsub.s32 3, %v2421
    %v2423 = vrot.slane %v2394, %v2422
    %v2428 = vmul.f32 %v2406, %v2411
    %v2429 = vmul.f32 %v2405, %v2415
    %v2430 = vmul.f32 %v2404, %v2419
    %v2431 = vmul.f32 %v2403, %v2423
    %v2432 = vpack.c.bf16 %v2428, %v2428
    %v2433 = vpack.c.bf16 %v2429, %v2429
    %v2434 = vpack.c.bf16 %v2430, %v2430
    %v2435 = vpack.c.bf16 %v2431, %v2431
    %v2436 = vld [vmem:[%s213] ss:$8 sm:$0xf]
    %2437 = vrot.lane.b32.xlu0 %v2301, 15
    %v2438 = vpop.permute.xlu0 %2437
    %2439 = vrot.lane.b32.xlu0 %v2302, 15
    %v2440 = vpop.permute.xlu0 %2439
    %2441 = vrot.lane.b32.xlu0 %v2303, 15
    %v2442 = vpop.permute.xlu0 %2441
    %2443 = vrot.lane.b32.xlu0 %v2304, 15
    %v2444 = vpop.permute.xlu0 %2443
    %v2445 = vsel %vm223, %v2442, %v2444
    %v2446 = vsel %vm223, %v2440, %v2442
    %v2447 = vsel %vm223, %v2438, %v2440
    %v2448 = vsel %vm223, %v2444, %v2438
    %v2450 = vlaneseq
    %v2451 = vshrl.u32 %v2450, 7
    %v2452 = vsub.s32 0, %v2451
    %v2453 = vrot.slane %v2436, %v2452
    %v2454 = vlaneseq
    %v2455 = vshrl.u32 %v2454, 7
    %v2456 = vsub.s32 1, %v2455
    %v2457 = vrot.slane %v2436, %v2456
    %v2458 = vlaneseq
    %v2459 = vshrl.u32 %v2458, 7
    %v2460 = vsub.s32 2, %v2459
    %v2461 = vrot.slane %v2436, %v2460
    %v2462 = vlaneseq
    %v2463 = vshrl.u32 %v2462, 7
    %v2464 = vsub.s32 3, %v2463
    %v2465 = vrot.slane %v2436, %v2464
    %v2470 = vmul.f32 %v2448, %v2453
    %v2471 = vmul.f32 %v2447, %v2457
    %v2472 = vmul.f32 %v2446, %v2461
    %v2473 = vmul.f32 %v2445, %v2465
    %v2474 = vpack.c.bf16 %v2470, %v2470
    %v2475 = vpack.c.bf16 %v2471, %v2471
    %v2476 = vpack.c.bf16 %v2472, %v2472
    %v2477 = vpack.c.bf16 %v2473, %v2473
    %v2478 = vld [vmem:[%s257] ss:$8 sm:$0xf]
    %2479 = vrot.lane.b32.xlu0 %v2301, 1
    %v2480 = vpop.permute.xlu0 %2479
    %2481 = vrot.lane.b32.xlu0 %v2302, 1
    %v2482 = vpop.permute.xlu0 %2481
    %2483 = vrot.lane.b32.xlu0 %v2303, 1
    %v2484 = vpop.permute.xlu0 %2483
    %2485 = vrot.lane.b32.xlu0 %v2304, 1
    %v2486 = vpop.permute.xlu0 %2485
    %v2487 = vsel %vm267, %v2484, %v2486
    %v2488 = vsel %vm267, %v2482, %v2484
    %v2489 = vsel %vm267, %v2480, %v2482
    %v2490 = vsel %vm267, %v2486, %v2480
    %v2492 = vlaneseq
    %v2493 = vshrl.u32 %v2492, 7
    %v2494 = vsub.s32 0, %v2493
    %v2495 = vrot.slane %v2478, %v2494
    %v2496 = vlaneseq
    %v2497 = vshrl.u32 %v2496, 7
    %v2498 = vsub.s32 1, %v2497
    %v2499 = vrot.slane %v2478, %v2498
    %v2500 = vlaneseq
    %v2501 = vshrl.u32 %v2500, 7
    %v2502 = vsub.s32 2, %v2501
    %v2503 = vrot.slane %v2478, %v2502
    %v2504 = vlaneseq
    %v2505 = vshrl.u32 %v2504, 7
    %v2506 = vsub.s32 3, %v2505
    %v2507 = vrot.slane %v2478, %v2506
    %v2512 = vmul.f32 %v2490, %v2495
    %v2513 = vmul.f32 %v2489, %v2499
    %v2514 = vmul.f32 %v2488, %v2503
    %v2515 = vmul.f32 %v2487, %v2507
    %v2516 = vpack.c.bf16 %v2512, %v2512
    %v2517 = vpack.c.bf16 %v2513, %v2513
    %v2518 = vpack.c.bf16 %v2514, %v2514
    %v2519 = vpack.c.bf16 %v2515, %v2515
    %v2520 = vpack.c.bf16 %v2301, %v2301
    %v2521 = vpack.c.bf16 %v2302, %v2302
    %v2522 = vpack.c.bf16 %v2303, %v2303
    %v2523 = vpack.c.bf16 %v2304, %v2304
    %v2524 = vld [vmem:[%s305] ss:$8 sm:$0xf]
    %2525 = vrot.lane.b32.xlu0 %v2301, 127
    %v2526 = vpop.permute.xlu0 %2525
    %2527 = vrot.lane.b32.xlu0 %v2302, 127
    %v2528 = vpop.permute.xlu0 %2527
    %2529 = vrot.lane.b32.xlu0 %v2303, 127
    %v2530 = vpop.permute.xlu0 %2529
    %2531 = vrot.lane.b32.xlu0 %v2304, 127
    %v2532 = vpop.permute.xlu0 %2531
    %v2533 = vsel %vm315, %v2530, %v2532
    %v2534 = vsel %vm315, %v2528, %v2530
    %v2535 = vsel %vm315, %v2526, %v2528
    %v2536 = vsel %vm315, %v2532, %v2526
    %v2538 = vlaneseq
    %v2539 = vshrl.u32 %v2538, 7
    %v2540 = vsub.s32 0, %v2539
    %v2541 = vrot.slane %v2524, %v2540
    %v2542 = vlaneseq
    %v2543 = vshrl.u32 %v2542, 7
    %v2544 = vsub.s32 1, %v2543
    %v2545 = vrot.slane %v2524, %v2544
    %v2546 = vlaneseq
    %v2547 = vshrl.u32 %v2546, 7
    %v2548 = vsub.s32 2, %v2547
    %v2549 = vrot.slane %v2524, %v2548
    %v2550 = vlaneseq
    %v2551 = vshrl.u32 %v2550, 7
    %v2552 = vsub.s32 3, %v2551
    %v2553 = vrot.slane %v2524, %v2552
    %v2558 = vmul.f32 %v2535, %v2541
    %v2559 = vmul.f32 %v2534, %v2545
    %v2560 = vmul.f32 %v2533, %v2549
    %v2561 = vmul.f32 %v2536, %v2553
    %v2562 = vpack.c.bf16 %v2558, %v2558
    %v2563 = vpack.c.bf16 %v2559, %v2559
    %v2564 = vpack.c.bf16 %v2560, %v2560
    %v2565 = vpack.c.bf16 %v2561, %v2561
    %v2566 = vld [vmem:[%s349] ss:$8 sm:$0xf]
    %2567 = vrot.lane.b32.xlu0 %v2301, 113
    %v2568 = vpop.permute.xlu0 %2567
    %2569 = vrot.lane.b32.xlu0 %v2302, 113
    %v2570 = vpop.permute.xlu0 %2569
    %2571 = vrot.lane.b32.xlu0 %v2303, 113
    %v2572 = vpop.permute.xlu0 %2571
    %2573 = vrot.lane.b32.xlu0 %v2304, 113
    %v2574 = vpop.permute.xlu0 %2573
    %v2575 = vsel %vm359, %v2572, %v2574
    %v2576 = vsel %vm359, %v2570, %v2572
    %v2577 = vsel %vm359, %v2568, %v2570
    %v2578 = vsel %vm359, %v2574, %v2568
    %v2580 = vlaneseq
    %v2581 = vshrl.u32 %v2580, 7
    %v2582 = vsub.s32 0, %v2581
    %v2583 = vrot.slane %v2566, %v2582
    %v2584 = vlaneseq
    %v2585 = vshrl.u32 %v2584, 7
    %v2586 = vsub.s32 1, %v2585
    %v2587 = vrot.slane %v2566, %v2586
    %v2588 = vlaneseq
    %v2589 = vshrl.u32 %v2588, 7
    %v2590 = vsub.s32 2, %v2589
    %v2591 = vrot.slane %v2566, %v2590
    %v2592 = vlaneseq
    %v2593 = vshrl.u32 %v2592, 7
    %v2594 = vsub.s32 3, %v2593
    %v2595 = vrot.slane %v2566, %v2594
    %v2600 = vmul.f32 %v2577, %v2583
    %v2601 = vmul.f32 %v2576, %v2587
    %v2602 = vmul.f32 %v2575, %v2591
    %v2603 = vmul.f32 %v2578, %v2595
    %v2604 = vpack.c.bf16 %v2600, %v2600
    %v2605 = vpack.c.bf16 %v2601, %v2601
    %v2606 = vpack.c.bf16 %v2602, %v2602
    %v2607 = vpack.c.bf16 %v2603, %v2603
    %v2608 = vld [vmem:[%s393] ss:$8 sm:$0xf]
    %2609 = vrot.lane.b32.xlu0 %v2301, 112
    %v2610 = vpop.permute.xlu0 %2609
    %2611 = vrot.lane.b32.xlu0 %v2302, 112
    %v2612 = vpop.permute.xlu0 %2611
    %2613 = vrot.lane.b32.xlu0 %v2303, 112
    %v2614 = vpop.permute.xlu0 %2613
    %2615 = vrot.lane.b32.xlu0 %v2304, 112
    %v2616 = vpop.permute.xlu0 %2615
    %v2617 = vsel %vm403, %v2614, %v2616
    %v2618 = vsel %vm403, %v2612, %v2614
    %v2619 = vsel %vm403, %v2610, %v2612
    %v2620 = vsel %vm403, %v2616, %v2610
    %v2622 = vlaneseq
    %v2623 = vshrl.u32 %v2622, 7
    %v2624 = vsub.s32 0, %v2623
    %v2625 = vrot.slane %v2608, %v2624
    %v2626 = vlaneseq
    %v2627 = vshrl.u32 %v2626, 7
    %v2628 = vsub.s32 1, %v2627
    %v2629 = vrot.slane %v2608, %v2628
    %v2630 = vlaneseq
    %v2631 = vshrl.u32 %v2630, 7
    %v2632 = vsub.s32 2, %v2631
    %v2633 = vrot.slane %v2608, %v2632
    %v2634 = vlaneseq
    %v2635 = vshrl.u32 %v2634, 7
    %v2636 = vsub.s32 3, %v2635
    %v2637 = vrot.slane %v2608, %v2636
    %v2642 = vmul.f32 %v2619, %v2625
    %v2643 = vmul.f32 %v2618, %v2629
    %v2644 = vmul.f32 %v2617, %v2633
    %v2645 = vmul.f32 %v2620, %v2637
    %v2646 = vpack.c.bf16 %v2642, %v2642
    %v2647 = vpack.c.bf16 %v2643, %v2643
    %v2648 = vpack.c.bf16 %v2644, %v2644
    %v2649 = vpack.c.bf16 %v2645, %v2645
    %v2650 = vld [vmem:[%s437] ss:$8 sm:$0xf]
    %2651 = vrot.lane.b32.xlu0 %v2301, 111
    %v2652 = vpop.permute.xlu0 %2651
    %2653 = vrot.lane.b32.xlu0 %v2302, 111
    %v2654 = vpop.permute.xlu0 %2653
    %2655 = vrot.lane.b32.xlu0 %v2303, 111
    %v2656 = vpop.permute.xlu0 %2655
    %2657 = vrot.lane.b32.xlu0 %v2304, 111
    %v2658 = vpop.permute.xlu0 %2657
    %v2659 = vsel %vm447, %v2656, %v2658
    %v2660 = vsel %vm447, %v2654, %v2656
    %v2661 = vsel %vm447, %v2652, %v2654
    %v2662 = vsel %vm447, %v2658, %v2652
    %v2664 = vlaneseq
    %v2665 = vshrl.u32 %v2664, 7
    %v2666 = vsub.s32 0, %v2665
    %v2667 = vrot.slane %v2650, %v2666
    %v2668 = vlaneseq
    %v2669 = vshrl.u32 %v2668, 7
    %v2670 = vsub.s32 1, %v2669
    %v2671 = vrot.slane %v2650, %v2670
    %v2672 = vlaneseq
    %v2673 = vshrl.u32 %v2672, 7
    %v2674 = vsub.s32 2, %v2673
    %v2675 = vrot.slane %v2650, %v2674
    %v2676 = vlaneseq
    %v2677 = vshrl.u32 %v2676, 7
    %v2678 = vsub.s32 3, %v2677
    %v2679 = vrot.slane %v2650, %v2678
    %v2684 = vmul.f32 %v2661, %v2667
    %v2685 = vmul.f32 %v2660, %v2671
    %v2686 = vmul.f32 %v2659, %v2675
    %v2687 = vmul.f32 %v2662, %v2679
    %v2688 = vpack.c.bf16 %v2684, %v2684
    %v2689 = vpack.c.bf16 %v2685, %v2685
    %v2690 = vpack.c.bf16 %v2686, %v2686
    %v2691 = vpack.c.bf16 %v2687, %v2687
    %v2693 = vshrl.u32 %v2432, 16
    %v2695 = vrot.slane %v2693, 6
    %v2696 = vshll.u32 %v2432, 16
    %v2698 = vrot.slane %v2696, 7
    %v2699 = vor.u32 %v2695, %v2698
    %v2701 = vshrl.u32 %v2433, 16
    %v2703 = vrot.slane %v2701, 6
    %v2704 = vshll.u32 %v2433, 16
    %v2706 = vrot.slane %v2704, 7
    %v2707 = vor.u32 %v2703, %v2706
    %v2709 = vshrl.u32 %v2434, 16
    %v2711 = vrot.slane %v2709, 6
    %v2712 = vshll.u32 %v2434, 16
    %v2714 = vrot.slane %v2712, 7
    %v2715 = vor.u32 %v2711, %v2714
    %v2717 = vshrl.u32 %v2435, 16
    %v2719 = vrot.slane %v2717, 6
    %v2720 = vshll.u32 %v2435, 16
    %v2722 = vrot.slane %v2720, 7
    %v2723 = vor.u32 %v2719, %v2722
    %v2732 = vrot.slane %v2474, 5
    %v2733 = vrot.slane %v2475, 5
    %v2734 = vrot.slane %v2476, 5
    %v2735 = vrot.slane %v2477, 5
    %v2737 = vshrl.u32 %v2516, 16
    %v2739 = vrot.slane %v2737, 3
    %v2740 = vshll.u32 %v2516, 16
    %v2742 = vrot.slane %v2740, 4
    %v2743 = vor.u32 %v2739, %v2742
    %v2745 = vshrl.u32 %v2517, 16
    %v2747 = vrot.slane %v2745, 3
    %v2748 = vshll.u32 %v2517, 16
    %v2750 = vrot.slane %v2748, 4
    %v2751 = vor.u32 %v2747, %v2750
    %v2753 = vshrl.u32 %v2518, 16
    %v2755 = vrot.slane %v2753, 3
    %v2756 = vshll.u32 %v2518, 16
    %v2758 = vrot.slane %v2756, 4
    %v2759 = vor.u32 %v2755, %v2758
    %v2761 = vshrl.u32 %v2519, 16
    %v2763 = vrot.slane %v2761, 3
    %v2764 = vshll.u32 %v2519, 16
    %v2766 = vrot.slane %v2764, 4
    %v2767 = vor.u32 %v2763, %v2766
    %v2776 = vrot.slane %v2520, 2
    %v2777 = vrot.slane %v2521, 2
    %v2778 = vrot.slane %v2522, 2
    %v2779 = vrot.slane %v2523, 2
    %v2781 = vshll.u32 %v2562, 16
    %v2783 = vrot.slane %v2781, 1
    %v2785 = vshll.u32 %v2563, 16
    %v2787 = vrot.slane %v2785, 1
    %v2789 = vshll.u32 %v2564, 16
    %v2791 = vrot.slane %v2789, 1
    %v2793 = vshll.u32 %v2565, 16
    %v2795 = vrot.slane %v2793, 1
    %v2796 = vshrl.u32 %v2562, 16
    %v2798 = vor.u32 %v2796, %v2783
    %v2799 = vshrl.u32 %v2563, 16
    %v2801 = vor.u32 %v2799, %v2787
    %v2802 = vshrl.u32 %v2564, 16
    %v2804 = vor.u32 %v2802, %v2791
    %v2805 = vshrl.u32 %v2565, 16
    %v2807 = vor.u32 %v2805, %v2795
    %v2816 = vrot.slane %v2604, 7
    %v2817 = vrot.slane %v2605, 7
    %v2818 = vrot.slane %v2606, 7
    %v2819 = vrot.slane %v2607, 7
    %v2821 = vshrl.u32 %v2646, 16
    %v2823 = vrot.slane %v2821, 5
    %v2824 = vshll.u32 %v2646, 16
    %v2826 = vrot.slane %v2824, 6
    %v2827 = vor.u32 %v2823, %v2826
    %v2829 = vshrl.u32 %v2647, 16
    %v2831 = vrot.slane %v2829, 5
    %v2832 = vshll.u32 %v2647, 16
    %v2834 = vrot.slane %v2832, 6
    %v2835 = vor.u32 %v2831, %v2834
    %v2837 = vshrl.u32 %v2648, 16
    %v2839 = vrot.slane %v2837, 5
    %v2840 = vshll.u32 %v2648, 16
    %v2842 = vrot.slane %v2840, 6
    %v2843 = vor.u32 %v2839, %v2842
    %v2845 = vshrl.u32 %v2649, 16
    %v2847 = vrot.slane %v2845, 5
    %v2848 = vshll.u32 %v2649, 16
    %v2850 = vrot.slane %v2848, 6
    %v2851 = vor.u32 %v2847, %v2850
    %v2860 = vrot.slane %v2688, 4
    %v2861 = vrot.slane %v2689, 4
    %v2862 = vrot.slane %v2690, 4
    %v2863 = vrot.slane %v2691, 4
    %v2865 = vshrl.u32 %v165, 16
    %v2867 = vrot.slane %v2865, 2
    %v2868 = vshll.u32 %v165, 16
    %v2870 = vrot.slane %v2868, 3
    %v2871 = vor.u32 %v2867, %v2870
    %v2873 = vshrl.u32 %v166, 16
    %v2875 = vrot.slane %v2873, 2
    %v2876 = vshll.u32 %v166, 16
    %v2878 = vrot.slane %v2876, 3
    %v2879 = vor.u32 %v2875, %v2878
    %v2881 = vshrl.u32 %v167, 16
    %v2883 = vrot.slane %v2881, 2
    %v2884 = vshll.u32 %v167, 16
    %v2886 = vrot.slane %v2884, 3
    %v2887 = vor.u32 %v2883, %v2886
    %v2889 = vshrl.u32 %v168, 16
    %v2891 = vrot.slane %v2889, 2
    %v2892 = vshll.u32 %v168, 16
    %v2894 = vrot.slane %v2892, 3
    %v2895 = vor.u32 %v2891, %v2894
    %v2901 = vshrl.u32 %v209, 16
    %v2903 = vrot.slane %v2901, 6
    %v2904 = vshll.u32 %v209, 16
    %v2906 = vrot.slane %v2904, 7
    %v2907 = vor.u32 %v2903, %v2906
    %v2909 = vshrl.u32 %v210, 16
    %v2911 = vrot.slane %v2909, 6
    %v2912 = vshll.u32 %v210, 16
    %v2914 = vrot.slane %v2912, 7
    %v2915 = vor.u32 %v2911, %v2914
    %v2917 = vshrl.u32 %v211, 16
    %v2919 = vrot.slane %v2917, 6
    %v2920 = vshll.u32 %v211, 16
    %v2922 = vrot.slane %v2920, 7
    %v2923 = vor.u32 %v2919, %v2922
    %v2925 = vshrl.u32 %v212, 16
    %v2927 = vrot.slane %v2925, 6
    %v2928 = vshll.u32 %v212, 16
    %v2930 = vrot.slane %v2928, 7
    %v2931 = vor.u32 %v2927, %v2930
    %v2937 = vshrl.u32 %v253, 16
    %v2939 = vrot.slane %v2937, 2
    %v2940 = vshll.u32 %v253, 16
    %v2942 = vrot.slane %v2940, 3
    %v2943 = vor.u32 %v2939, %v2942
    %v2945 = vshrl.u32 %v254, 16
    %v2947 = vrot.slane %v2945, 2
    %v2948 = vshll.u32 %v254, 16
    %v2950 = vrot.slane %v2948, 3
    %v2951 = vor.u32 %v2947, %v2950
    %v2953 = vshrl.u32 %v255, 16
    %v2955 = vrot.slane %v2953, 2
    %v2956 = vshll.u32 %v255, 16
    %v2958 = vrot.slane %v2956, 3
    %v2959 = vor.u32 %v2955, %v2958
    %v2961 = vshrl.u32 %v256, 16
    %v2963 = vrot.slane %v2961, 2
    %v2964 = vshll.u32 %v256, 16
    %v2966 = vrot.slane %v2964, 3
    %v2967 = vor.u32 %v2963, %v2966
    %v2973 = vshrl.u32 %v297, 16
    %v2975 = vrot.slane %v2973, 6
    %v2976 = vshll.u32 %v297, 16
    %v2978 = vrot.slane %v2976, 7
    %v2979 = vor.u32 %v2975, %v2978
    %v2981 = vshrl.u32 %v298, 16
    %v2983 = vrot.slane %v2981, 6
    %v2984 = vshll.u32 %v298, 16
    %v2986 = vrot.slane %v2984, 7
    %v2987 = vor.u32 %v2983, %v2986
    %v2989 = vshrl.u32 %v299, 16
    %v2991 = vrot.slane %v2989, 6
    %v2992 = vshll.u32 %v299, 16
    %v2994 = vrot.slane %v2992, 7
    %v2995 = vor.u32 %v2991, %v2994
    %v2997 = vshrl.u32 %v300, 16
    %v2999 = vrot.slane %v2997, 6
    %v3000 = vshll.u32 %v300, 16
    %v3002 = vrot.slane %v3000, 7
    %v3003 = vor.u32 %v2999, %v3002
    %v3009 = vshrl.u32 %v301, 16
    %v3011 = vrot.slane %v3009, 2
    %v3012 = vshll.u32 %v301, 16
    %v3014 = vrot.slane %v3012, 3
    %v3015 = vor.u32 %v3011, %v3014
    %v3017 = vshrl.u32 %v302, 16
    %v3019 = vrot.slane %v3017, 2
    %v3020 = vshll.u32 %v302, 16
    %v3022 = vrot.slane %v3020, 3
    %v3023 = vor.u32 %v3019, %v3022
    %v3025 = vshrl.u32 %v303, 16
    %v3027 = vrot.slane %v3025, 2
    %v3028 = vshll.u32 %v303, 16
    %v3030 = vrot.slane %v3028, 3
    %v3031 = vor.u32 %v3027, %v3030
    %v3033 = vshrl.u32 %v304, 16
    %v3035 = vrot.slane %v3033, 2
    %v3036 = vshll.u32 %v304, 16
    %v3038 = vrot.slane %v3036, 3
    %v3039 = vor.u32 %v3035, %v3038
    %v3044 = vshrl.u32 %v345, 16
    %v3046 = vrot.slane %v3044, 6
    %v3047 = vshll.u32 %v345, 16
    %v3049 = vrot.slane %v3047, 7
    %v3050 = vor.u32 %v3046, %v3049
    %v3051 = vshrl.u32 %v346, 16
    %v3053 = vrot.slane %v3051, 6
    %v3054 = vshll.u32 %v346, 16
    %v3056 = vrot.slane %v3054, 7
    %v3057 = vor.u32 %v3053, %v3056
    %v3058 = vshrl.u32 %v347, 16
    %v3060 = vrot.slane %v3058, 6
    %v3061 = vshll.u32 %v347, 16
    %v3063 = vrot.slane %v3061, 7
    %v3064 = vor.u32 %v3060, %v3063
    %v3065 = vshrl.u32 %v348, 16
    %v3067 = vrot.slane %v3065, 6
    %v3068 = vshll.u32 %v348, 16
    %v3070 = vrot.slane %v3068, 7
    %v3071 = vor.u32 %v3067, %v3070
    %v3077 = vshrl.u32 %v389, 16
    %v3079 = vrot.slane %v3077, 2
    %v3080 = vshll.u32 %v389, 16
    %v3082 = vrot.slane %v3080, 3
    %v3083 = vor.u32 %v3079, %v3082
    %v3085 = vshrl.u32 %v390, 16
    %v3087 = vrot.slane %v3085, 2
    %v3088 = vshll.u32 %v390, 16
    %v3090 = vrot.slane %v3088, 3
    %v3091 = vor.u32 %v3087, %v3090
    %v3093 = vshrl.u32 %v391, 16
    %v3095 = vrot.slane %v3093, 2
    %v3096 = vshll.u32 %v391, 16
    %v3098 = vrot.slane %v3096, 3
    %v3099 = vor.u32 %v3095, %v3098
    %v3101 = vshrl.u32 %v392, 16
    %v3103 = vrot.slane %v3101, 2
    %v3104 = vshll.u32 %v392, 16
    %v3106 = vrot.slane %v3104, 3
    %v3107 = vor.u32 %v3103, %v3106
    %vm3112 = vsmask.f32 1280
    %vm3113 = vmand %vm1782, %vm3112
    %v3114 = vsel %vm3113, %v2390, %v2699
    %v3115 = vsel %vm3113, %v2391, %v2707
    %v3116 = vsel %vm3113, %v2392, %v2715
    %v3117 = vsel %vm3113, %v2393, %v2723
    %v3120 = vsel %vm2194, %v3114, %v2732
    %v3124 = vsel %vm2194, %v3115, %v2733
    %v3128 = vsel %vm2194, %v3116, %v2734
    %v3132 = vsel %vm2194, %v3117, %v2735
    %vm3134 = vcmask 1044480
    %vm3135 = vsmask.f32 4352
    %vm3136 = vmand %vm3134, %vm3135
    %v3137 = vsel %vm3136, %v3120, %v2743
    %v3138 = vsel %vm3136, %v3124, %v2751
    %v3139 = vsel %vm3136, %v3128, %v2759
    %v3140 = vsel %vm3136, %v3132, %v2767
    %v3143 = vsel %vm1285, %v3137, %v2776
    %v3147 = vsel %vm1285, %v3138, %v2777
    %v3151 = vsel %vm1285, %v3139, %v2778
    %v3155 = vsel %vm1285, %v3140, %v2779
    %vm3157 = vcmask 1047552
    %vm3158 = vsmask.f32 7424
    %vm3159 = vmand %vm3157, %vm3158
    %v3160 = vsel %vm3159, %v3143, %v2783
    %v3161 = vsel %vm3159, %v3147, %v2787
    %v3162 = vsel %vm3159, %v3151, %v2791
    %v3163 = vsel %vm3159, %v3155, %v2795
    %v3166 = vsel %vm2096, %v2798, %v2816
    %v3170 = vsel %vm2096, %v2801, %v2817
    %v3174 = vsel %vm2096, %v2804, %v2818
    %v3178 = vsel %vm2096, %v2807, %v2819
    %vm3180 = vcmask 1042432
    %vm3181 = vsmask.f32 2304
    %vm3182 = vmand %vm3180, %vm3181
    %v3183 = vsel %vm3182, %v3166, %v2827
    %v3184 = vsel %vm3182, %v3170, %v2835
    %v3185 = vsel %vm3182, %v3174, %v2843
    %v3186 = vsel %vm3182, %v3178, %v2851
    %v3189 = vsel %vm1276, %v3183, %v2860
    %v3193 = vsel %vm1276, %v3184, %v2861
    %v3197 = vsel %vm1276, %v3185, %v2862
    %v3201 = vsel %vm1276, %v3186, %v2863
    %vm3203 = vcmask 1045504
    %vm3204 = vsmask.f32 5376
    %vm3205 = vmand %vm3203, %vm3204
    %v3206 = vsel %vm3205, %v3189, %v2871
    %v3207 = vsel %vm3205, %v3193, %v2879
    %v3208 = vsel %vm3205, %v3197, %v2887
    %v3209 = vsel %vm3205, %v3201, %v2895
    %v3210 = vsel %vm3113, %v2871, %v2907
    %v3211 = vsel %vm3113, %v2879, %v2915
    %v3212 = vsel %vm3113, %v2887, %v2923
    %v3213 = vsel %vm3113, %v2895, %v2931
    %v3214 = vsel %vm3205, %v3210, %v2943
    %v3215 = vsel %vm3205, %v3211, %v2951
    %v3216 = vsel %vm3205, %v3212, %v2959
    %v3217 = vsel %vm3205, %v3213, %v2967
    %v3218 = vsel %vm3113, %v2943, %v2979
    %v3219 = vsel %vm3113, %v2951, %v2987
    %v3220 = vsel %vm3113, %v2959, %v2995
    %v3221 = vsel %vm3113, %v2967, %v3003
    %v3222 = vsel %vm3205, %v3218, %v3015
    %v3223 = vsel %vm3205, %v3219, %v3023
    %v3224 = vsel %vm3205, %v3220, %v3031
    %v3225 = vsel %vm3205, %v3221, %v3039
    %v3226 = vsel %vm3113, %v3015, %v3050
    %v3227 = vsel %vm3113, %v3023, %v3057
    %v3228 = vsel %vm3113, %v3031, %v3064
    %v3229 = vsel %vm3113, %v3039, %v3071
    %v3230 = vsel %vm3205, %v3226, %v3083
    %v3231 = vsel %vm3205, %v3227, %v3091
    %v3232 = vsel %vm3205, %v3228, %v3099
    %v3233 = vsel %vm3205, %v3229, %v3107
    %v3234 = vshrl.u32 %v1696, 16
    %v3236 = vrot.slane %v3234, 6
    %v3237 = vshll.u32 %v1696, 16
    %v3239 = vrot.slane %v3237, 7
    %v3240 = vor.u32 %v3236, %v3239
    %v3241 = vshrl.u32 %v1699, 16
    %v3243 = vrot.slane %v3241, 6
    %v3244 = vshll.u32 %v1699, 16
    %v3246 = vrot.slane %v3244, 7
    %v3247 = vor.u32 %v3243, %v3246
    %v3248 = vshrl.u32 %v1702, 16
    %v3250 = vrot.slane %v3248, 6
    %v3251 = vshll.u32 %v1702, 16
    %v3253 = vrot.slane %v3251, 7
    %v3254 = vor.u32 %v3250, %v3253
    %v3255 = vshrl.u32 %v1705, 16
    %v3257 = vrot.slane %v3255, 6
    %v3258 = vshll.u32 %v1705, 16
    %v3260 = vrot.slane %v3258, 7
    %v3261 = vor.u32 %v3257, %v3260
    %v3266 = vsel %vm3113, %v3083, %v3240
    %v3267 = vsel %vm3113, %v3091, %v3247
    %v3268 = vsel %vm3113, %v3099, %v3254
    %v3269 = vsel %vm3113, %v3107, %v3261
    %v3270 = vld [vmem:[%s6] sm:$0xf]
    %v3271 = vld [vmem:[%s6 + $0x4] sm:$0xf]
    %v3272 = vld [vmem:[%s6 + $0x8] sm:$0xf]
    %v3273 = vld [vmem:[%s6 + $0xc] sm:$0xf]
    %v3274 = vld [vmem:[%s7] sm:$0xff]
    %v3275 = vld [vmem:[%s7 + $0x8] sm:$0xff]
    %v3276 = vld [vmem:[%s7 + $0x10] sm:$0xff]
    %v3277 = vld [vmem:[%s7 + $0x18] sm:$0xff]
    %3279 = vset.pattern.permute.xlu0 0
    %3280 = vperm.xlu0 %3279, %v3274
    %v3281 = vpop.permute.xlu0 %3280
    %3284 = vset.pattern.permute.xlu0 0
    %3285 = vperm.xlu0 %3284, %v3275
    %v3286 = vpop.permute.xlu0 %3285
    %3289 = vset.pattern.permute.xlu0 0
    %3290 = vperm.xlu0 %3289, %v3276
    %v3291 = vpop.permute.xlu0 %3290
    %3294 = vset.pattern.permute.xlu0 0
    %3295 = vperm.xlu0 %3294, %v3277
    %v3296 = vpop.permute.xlu0 %3295
    %v3302 = vunpack.c.l.b16 %v3270
    %v3303 = vunpack.c.l.b16 %v3271
    %v3304 = vunpack.c.l.b16 %v3272
    %v3305 = vunpack.c.l.b16 %v3273
    %v3306 = vpack.c.b16 %v3303, %v3302
    %v3307 = vpack.c.b16 %v3305, %v3304
    %vm3308 = vcmask 809984
    %v3310 = vsel %vm3308, %v3306, 0
    %v3313 = vsel %vm3308, %v3307, 0
    %v3315 = vsel %vm2096, 4294967295, 65535
    %v3316 = vsel %vm1263, %v3315, 0
    %v3318 = vand.u32 %v3240, %v3316
    %v3321 = vand.u32 %v3247, %v3316
    %v3324 = vand.u32 %v3254, %v3316
    %v3327 = vand.u32 %v3261, %v3316
    %3329 = vmatprep.subr.bf16.mxu0 0
    %3330 = vmatpush1.bf16.msra.mxu0 0
    %3331 = vmatprep.subr.bf16.mxu0 %v3321
    %3332 = vmatpush1.bf16.msra.mxu0 %v3318
    %3333 = vmatprep.subr.bf16.mxu0 %v3267
    %3334 = vmatpush1.bf16.msra.mxu0 %v3266
    %3335 = vmatprep.subr.bf16.mxu0 %v3231
    %3336 = vmatpush1.bf16.msra.mxu0 %v3230
    %3337 = vmatprep.subr.bf16.mxu0 %v3223
    %3338 = vmatpush1.bf16.msra.mxu0 %v3222
    %3339 = vmatprep.subr.bf16.mxu0 %v3215
    %3340 = vmatpush1.bf16.msra.mxu0 %v3214
    %3341 = vmatprep.subr.bf16.mxu0 %v3207
    %3342 = vmatpush1.bf16.msra.mxu0 %v3206
    %3343 = vmatprep.subr.bf16.mxu0 %v3161
    %3344 = vmatpush1.bf16.msra.mxu0 %v3160
    %3345 = vmatprep.subr.bf16.mxu0 0
    %3346 = vmatpush2.bf16.msra.mxu0 0
    %3347 = vmatprep.subr.bf16.mxu0 0
    %3348 = vmatpush2.bf16.msra.mxu0 0
    %3349 = vmatprep.subr.bf16.mxu0 0
    %3350 = vmatpush2.bf16.msra.mxu0 0
    %3351 = vmatprep.subr.bf16.mxu0 0
    %3352 = vmatpush2.bf16.msra.mxu0 0
    %3353 = vmatprep.subr.bf16.mxu0 0
    %3354 = vmatpush2.bf16.msra.mxu0 0
    %3355 = vmatprep.subr.bf16.mxu0 0
    %3356 = vmatpush2.bf16.msra.mxu0 0
    %3357 = vmatprep.subr.bf16.mxu0 0
    %3358 = vmatpush2.bf16.msra.mxu0 0
    %3359 = vmatprep.subr.bf16.mxu0 0
    %3360 = vmatpush2.bf16.msra.mxu0 0
    %3361 = vmatprep.mubr.bf16.mxu0 0
    %3362 = vmatmul.mubr.bf16.gmra.mxu0 %v3310
    %v3363 = vpop.f32.mrf.mxu0
    %v3364 = vadd.f32 %v3281, %v3363
    %v3365 = vpop.f32.mrf.mxu0
    %v3366 = vadd.f32 %v3281, %v3365
    %v3367 = vpop.f32.mrf.mxu0
    %v3368 = vadd.f32 %v3286, %v3367
    %v3369 = vpop.f32.mrf.mxu0
    %v3370 = vadd.f32 %v3286, %v3369
    %3371 = vmatprep.mubr.bf16.mxu0 0
    %3372 = vmatmul.mubr.bf16.gmra.mxu0 %v3313
    %v3373 = vpop.f32.mrf.mxu0
    %v3374 = vadd.f32 %v3291, %v3373
    %v3375 = vpop.f32.mrf.mxu0
    %v3376 = vadd.f32 %v3291, %v3375
    %v3377 = vpop.f32.mrf.mxu0
    %v3378 = vadd.f32 %v3296, %v3377
    %v3379 = vpop.f32.mrf.mxu0
    %v3380 = vadd.f32 %v3296, %v3379
    %3381 = vdwg.mxu0
    %3382 = vmatprep.subr.bf16.mxu0 0
    %3383 = vmatpush1.bf16.msra.mxu0 0
    %3384 = vmatprep.subr.bf16.mxu0 %v3327
    %3385 = vmatpush1.bf16.msra.mxu0 %v3324
    %3386 = vmatprep.subr.bf16.mxu0 %v3269
    %3387 = vmatpush1.bf16.msra.mxu0 %v3268
    %3388 = vmatprep.subr.bf16.mxu0 %v3233
    %3389 = vmatpush1.bf16.msra.mxu0 %v3232
    %3390 = vmatprep.subr.bf16.mxu0 %v3225
    %3391 = vmatpush1.bf16.msra.mxu0 %v3224
    %3392 = vmatprep.subr.bf16.mxu0 %v3217
    %3393 = vmatpush1.bf16.msra.mxu0 %v3216
    %3394 = vmatprep.subr.bf16.mxu0 %v3209
    %3395 = vmatpush1.bf16.msra.mxu0 %v3208
    %3396 = vmatprep.subr.bf16.mxu0 %v3163
    %3397 = vmatpush1.bf16.msra.mxu0 %v3162
    %3398 = vmatprep.subr.bf16.mxu0 0
    %3399 = vmatpush2.bf16.msra.mxu0 0
    %3400 = vmatprep.subr.bf16.mxu0 0
    %3401 = vmatpush2.bf16.msra.mxu0 0
    %3402 = vmatprep.subr.bf16.mxu0 0
    %3403 = vmatpush2.bf16.msra.mxu0 0
    %3404 = vmatprep.subr.bf16.mxu0 0
    %3405 = vmatpush2.bf16.msra.mxu0 0
    %3406 = vmatprep.subr.bf16.mxu0 0
    %3407 = vmatpush2.bf16.msra.mxu0 0
    %3408 = vmatprep.subr.bf16.mxu0 0
    %3409 = vmatpush2.bf16.msra.mxu0 0
    %3410 = vmatprep.subr.bf16.mxu0 0
    %3411 = vmatpush2.bf16.msra.mxu0 0
    %3412 = vmatprep.subr.bf16.mxu0 0
    %3413 = vmatpush2.bf16.msra.mxu0 0
    %3414 = vmatprep.mubr.bf16.mxu0 0
    %3415 = vmatmul.mubr.bf16.gmra.mxu0 %v3310
    %v3416 = vpop.f32.mrf.mxu0
    %v3417 = vadd.f32 %v3281, %v3416
    %v3418 = vpop.f32.mrf.mxu0
    %v3419 = vadd.f32 %v3281, %v3418
    %v3420 = vpop.f32.mrf.mxu0
    %v3421 = vadd.f32 %v3286, %v3420
    %v3422 = vpop.f32.mrf.mxu0
    %v3423 = vadd.f32 %v3286, %v3422
    %3424 = vmatprep.mubr.bf16.mxu0 0
    %3425 = vmatmul.mubr.bf16.gmra.mxu0 %v3313
    %v3426 = vpop.f32.mrf.mxu0
    %v3427 = vadd.f32 %v3291, %v3426
    %v3428 = vpop.f32.mrf.mxu0
    %v3429 = vadd.f32 %v3291, %v3428
    %v3430 = vpop.f32.mrf.mxu0
    %v3431 = vadd.f32 %v3296, %v3430
    %v3432 = vpop.f32.mrf.mxu0
    %v3433 = vadd.f32 %v3296, %v3432
    %3434 = vdwg.mxu0
    %v3435 = vld [vmem:[#allocation4] sm:$0xff]
    %v3436 = vld [vmem:[#allocation4 + $0x8] sm:$0xff]
    %v3437 = vld [vmem:[#allocation4 + $0x10] sm:$0xff]
    %v3438 = vld [vmem:[#allocation4 + $0x18] sm:$0xff]
    %v3439 = vxor.u32 %v3364, 2147483648
    %v3440 = vxor.u32 %v3366, 2147483648
    %v3441 = vxor.u32 %v3417, 2147483648
    %v3442 = vxor.u32 %v3419, 2147483648
    %v3443 = vmul.f32 %v3439, 1.442695
    %v3444 = vpow.pop %v3443
    %v3445 = vmul.f32 %v3440, 1.442695
    %v3446 = vpow.pop %v3445
    %v3447 = vmul.f32 %v3441, 1.442695
    %v3448 = vpow.pop %v3447
    %v3449 = vmul.f32 %v3442, 1.442695
    %v3450 = vpow.pop %v3449
    %v3451 = vadd.f32 %v3444, 1.0
    %v3452 = vadd.f32 %v3446, 1.0
    %v3453 = vadd.f32 %v3448, 1.0
    %v3454 = vadd.f32 %v3450, 1.0
    %v3455 = vrcp.pop %v3451
    %v3456 = vmul.f32 1.0, %v3455
    %v3457 = vrcp.pop %v3452
    %v3458 = vmul.f32 1.0, %v3457
    %v3459 = vrcp.pop %v3453
    %v3460 = vmul.f32 1.0, %v3459
    %v3461 = vrcp.pop %v3454
    %v3462 = vmul.f32 1.0, %v3461
    %v3463 = vxor.u32 %v3368, 2147483648
    %v3464 = vxor.u32 %v3370, 2147483648
    %v3465 = vxor.u32 %v3421, 2147483648
    %v3466 = vxor.u32 %v3423, 2147483648
    %v3467 = vmul.f32 %v3463, 1.442695
    %v3468 = vpow.pop %v3467
    %v3469 = vmul.f32 %v3464, 1.442695
    %v3470 = vpow.pop %v3469
    %v3471 = vmul.f32 %v3465, 1.442695
    %v3472 = vpow.pop %v3471
    %v3473 = vmul.f32 %v3466, 1.442695
    %v3474 = vpow.pop %v3473
    %v3475 = vadd.f32 %v3468, 1.0
    %v3476 = vadd.f32 %v3470, 1.0
    %v3477 = vadd.f32 %v3472, 1.0
    %v3478 = vadd.f32 %v3474, 1.0
    %v3479 = vrcp.pop %v3475
    %v3480 = vmul.f32 1.0, %v3479
    %v3481 = vrcp.pop %v3476
    %v3482 = vmul.f32 1.0, %v3481
    %v3483 = vrcp.pop %v3477
    %v3484 = vmul.f32 1.0, %v3483
    %v3485 = vrcp.pop %v3478
    %v3486 = vmul.f32 1.0, %v3485
    %v3487 = vxor.u32 %v3374, 2147483648
    %v3488 = vxor.u32 %v3376, 2147483648
    %v3489 = vxor.u32 %v3427, 2147483648
    %v3490 = vxor.u32 %v3429, 2147483648
    %v3491 = vmul.f32 %v3487, 1.442695
    %v3492 = vpow.pop %v3491
    %v3493 = vmul.f32 %v3488, 1.442695
    %v3494 = vpow.pop %v3493
    %v3495 = vmul.f32 %v3489, 1.442695
    %v3496 = vpow.pop %v3495
    %v3497 = vmul.f32 %v3490, 1.442695
    %v3498 = vpow.pop %v3497
    %v3499 = vadd.f32 %v3492, 1.0
    %v3500 = vadd.f32 %v3494, 1.0
    %v3501 = vadd.f32 %v3496, 1.0
    %v3502 = vadd.f32 %v3498, 1.0
    %v3503 = vrcp.pop %v3499
    %v3504 = vmul.f32 1.0, %v3503
    %v3505 = vrcp.pop %v3500
    %v3506 = vmul.f32 1.0, %v3505
    %v3507 = vrcp.pop %v3501
    %v3508 = vmul.f32 1.0, %v3507
    %v3509 = vrcp.pop %v3502
    %v3510 = vmul.f32 1.0, %v3509
    %v3511 = vtanh.pop %v3378
    %v3512 = vtanh.pop %v3380
    %v3513 = vtanh.pop %v3431
    %v3514 = vtanh.pop %v3433
    %v3515 = vmul.f32 %v3480, %v3435
    %v3516 = vmul.f32 %v3482, %v3436
    %v3517 = vmul.f32 %v3484, %v3437
    %v3518 = vmul.f32 %v3486, %v3438
    %v3519 = vmul.f32 %v3456, %v3511
    %v3520 = vmul.f32 %v3458, %v3512
    %v3521 = vmul.f32 %v3460, %v3513
    %v3522 = vmul.f32 %v3462, %v3514
    %v3523 = vadd.f32 %v3515, %v3519
    %v3524 = vadd.f32 %v3516, %v3520
    %v3525 = vadd.f32 %v3517, %v3521
    %v3526 = vadd.f32 %v3518, %v3522
    %v3527 = vtanh.pop %v3523
    %v3528 = vtanh.pop %v3524
    %v3529 = vtanh.pop %v3525
    %v3530 = vtanh.pop %v3526
    %v3531 = vmul.f32 %v3504, %v3527
    %v3532 = vmul.f32 %v3506, %v3528
    %v3533 = vmul.f32 %v3508, %v3529
    %v3534 = vmul.f32 %v3510, %v3530
    %3535 = vst [vmem:[#allocation3] sm:$0xff] %v3531
    %3536 = vst [vmem:[#allocation3 + $0x8] sm:$0xff] %v3532
    %3537 = vst [vmem:[#allocation3 + $0x10] sm:$0xff] %v3533
    %3538 = vst [vmem:[#allocation3 + $0x18] sm:$0xff] %v3534
    %3539 = vst [vmem:[#allocation4] sm:$0xff] %v3523
    %3540 = vst [vmem:[#allocation4 + $0x8] sm:$0xff] %v3524
    %3541 = vst [vmem:[#allocation4 + $0x10] sm:$0xff] %v3525
    %3542 = vst [vmem:[#allocation4 + $0x18] sm:$0xff] %v3526
    %v3543 = vld [vmem:[#allocation5] sm:$0xff]
    %v3544 = vld [vmem:[#allocation5 + $0x8] sm:$0xff]
    %v3545 = vld [vmem:[#allocation5 + $0x10] sm:$0xff]
    %v3546 = vld [vmem:[#allocation5 + $0x18] sm:$0xff]
    %v3547 = vadd.f32 %v3543, %v3531
    %v3548 = vadd.f32 %v3544, %v3532
    %v3549 = vadd.f32 %v3545, %v3533
    %v3550 = vadd.f32 %v3546, %v3534
    %3551 = vst [vmem:[#allocation5] sm:$0xff] %v3547
    %3552 = vst [vmem:[#allocation5 + $0x8] sm:$0xff] %v3548
    %3553 = vst [vmem:[#allocation5 + $0x10] sm:$0xff] %v3549
    %3554 = vst [vmem:[#allocation5 + $0x18] sm:$0xff] %v3550
    %v3555 = vld [vmem:[#allocation6] sm:$0xff]
    %v3556 = vld [vmem:[#allocation6 + $0x8] sm:$0xff]
    %v3557 = vld [vmem:[#allocation6 + $0x10] sm:$0xff]
    %v3558 = vld [vmem:[#allocation6 + $0x18] sm:$0xff]
    %v3559 = vadd.f32 %v3555, %v3523
    %v3560 = vadd.f32 %v3556, %v3524
    %v3561 = vadd.f32 %v3557, %v3525
    %v3562 = vadd.f32 %v3558, %v3526
    %3563 = vst [vmem:[#allocation6] sm:$0xff] %v3559
    %3564 = vst [vmem:[#allocation6 + $0x8] sm:$0xff] %v3560
    %3565 = vst [vmem:[#allocation6 + $0x10] sm:$0xff] %v3561
    %3566 = vst [vmem:[#allocation6 + $0x18] sm:$0xff] %v3562
    %v3567 = vld [vmem:[%s3] ss:$8 sm:$0xf]
    %3568 = vrot.lane.b32.xlu0 %v3531, 17
    %v3569 = vpop.permute.xlu0 %3568
    %3570 = vrot.lane.b32.xlu0 %v3532, 17
    %v3571 = vpop.permute.xlu0 %3570
    %3572 = vrot.lane.b32.xlu0 %v3533, 17
    %v3573 = vpop.permute.xlu0 %3572
    %3574 = vrot.lane.b32.xlu0 %v3534, 17
    %v3575 = vpop.permute.xlu0 %3574
    %v3576 = vsel %vm135, %v3573, %v3575
    %v3577 = vsel %vm135, %v3571, %v3573
    %v3578 = vsel %vm135, %v3569, %v3571
    %v3579 = vsel %vm135, %v3575, %v3569
    %v3581 = vlaneseq
    %v3582 = vshrl.u32 %v3581, 7
    %v3583 = vsub.s32 0, %v3582
    %v3584 = vrot.slane %v3567, %v3583
    %v3585 = vlaneseq
    %v3586 = vshrl.u32 %v3585, 7
    %v3587 = vsub.s32 1, %v3586
    %v3588 = vrot.slane %v3567, %v3587
    %v3589 = vlaneseq
    %v3590 = vshrl.u32 %v3589, 7
    %v3591 = vsub.s32 2, %v3590
    %v3592 = vrot.slane %v3567, %v3591
    %v3593 = vlaneseq
    %v3594 = vshrl.u32 %v3593, 7
    %v3595 = vsub.s32 3, %v3594
    %v3596 = vrot.slane %v3567, %v3595
    %v3601 = vmul.f32 %v3579, %v3584
    %v3602 = vmul.f32 %v3578, %v3588
    %v3603 = vmul.f32 %v3577, %v3592
    %v3604 = vmul.f32 %v3576, %v3596
    %v3605 = vpack.c.bf16 %v3601, %v3601
    %v3606 = vpack.c.bf16 %v3602, %v3602
    %v3607 = vpack.c.bf16 %v3603, %v3603
    %v3608 = vpack.c.bf16 %v3604, %v3604
    %v3609 = vld [vmem:[%s169] ss:$8 sm:$0xf]
    %3610 = vrot.lane.b32.xlu0 %v3531, 16
    %v3611 = vpop.permute.xlu0 %3610
    %3612 = vrot.lane.b32.xlu0 %v3532, 16
    %v3613 = vpop.permute.xlu0 %3612
    %3614 = vrot.lane.b32.xlu0 %v3533, 16
    %v3615 = vpop.permute.xlu0 %3614
    %3616 = vrot.lane.b32.xlu0 %v3534, 16
    %v3617 = vpop.permute.xlu0 %3616
    %v3618 = vsel %vm179, %v3615, %v3617
    %v3619 = vsel %vm179, %v3613, %v3615
    %v3620 = vsel %vm179, %v3611, %v3613
    %v3621 = vsel %vm179, %v3617, %v3611
    %v3623 = vlaneseq
    %v3624 = vshrl.u32 %v3623, 7
    %v3625 = vsub.s32 0, %v3624
    %v3626 = vrot.slane %v3609, %v3625
    %v3627 = vlaneseq
    %v3628 = vshrl.u32 %v3627, 7
    %v3629 = vsub.s32 1, %v3628
    %v3630 = vrot.slane %v3609, %v3629
    %v3631 = vlaneseq
    %v3632 = vshrl.u32 %v3631, 7
    %v3633 = vsub.s32 2, %v3632
    %v3634 = vrot.slane %v3609, %v3633
    %v3635 = vlaneseq
    %v3636 = vshrl.u32 %v3635, 7
    %v3637 = vsub.s32 3, %v3636
    %v3638 = vrot.slane %v3609, %v3637
    %v3643 = vmul.f32 %v3621, %v3626
    %v3644 = vmul.f32 %v3620, %v3630
    %v3645 = vmul.f32 %v3619, %v3634
    %v3646 = vmul.f32 %v3618, %v3638
    %v3647 = vpack.c.bf16 %v3643, %v3643
    %v3648 = vpack.c.bf16 %v3644, %v3644
    %v3649 = vpack.c.bf16 %v3645, %v3645
    %v3650 = vpack.c.bf16 %v3646, %v3646
    %v3651 = vld [vmem:[%s213] ss:$8 sm:$0xf]
    %3652 = vrot.lane.b32.xlu0 %v3531, 15
    %v3653 = vpop.permute.xlu0 %3652
    %3654 = vrot.lane.b32.xlu0 %v3532, 15
    %v3655 = vpop.permute.xlu0 %3654
    %3656 = vrot.lane.b32.xlu0 %v3533, 15
    %v3657 = vpop.permute.xlu0 %3656
    %3658 = vrot.lane.b32.xlu0 %v3534, 15
    %v3659 = vpop.permute.xlu0 %3658
    %v3660 = vsel %vm223, %v3657, %v3659
    %v3661 = vsel %vm223, %v3655, %v3657
    %v3662 = vsel %vm223, %v3653, %v3655
    %v3663 = vsel %vm223, %v3659, %v3653
    %v3665 = vlaneseq
    %v3666 = vshrl.u32 %v3665, 7
    %v3667 = vsub.s32 0, %v3666
    %v3668 = vrot.slane %v3651, %v3667
    %v3669 = vlaneseq
    %v3670 = vshrl.u32 %v3669, 7
    %v3671 = vsub.s32 1, %v3670
    %v3672 = vrot.slane %v3651, %v3671
    %v3673 = vlaneseq
    %v3674 = vshrl.u32 %v3673, 7
    %v3675 = vsub.s32 2, %v3674
    %v3676 = vrot.slane %v3651, %v3675
    %v3677 = vlaneseq
    %v3678 = vshrl.u32 %v3677, 7
    %v3679 = vsub.s32 3, %v3678
    %v3680 = vrot.slane %v3651, %v3679
    %v3685 = vmul.f32 %v3663, %v3668
    %v3686 = vmul.f32 %v3662, %v3672
    %v3687 = vmul.f32 %v3661, %v3676
    %v3688 = vmul.f32 %v3660, %v3680
    %v3689 = vpack.c.bf16 %v3685, %v3685
    %v3690 = vpack.c.bf16 %v3686, %v3686
    %v3691 = vpack.c.bf16 %v3687, %v3687
    %v3692 = vpack.c.bf16 %v3688, %v3688
    %v3693 = vld [vmem:[%s257] ss:$8 sm:$0xf]
    %3694 = vrot.lane.b32.xlu0 %v3531, 1
    %v3695 = vpop.permute.xlu0 %3694
    %3696 = vrot.lane.b32.xlu0 %v3532, 1
    %v3697 = vpop.permute.xlu0 %3696
    %3698 = vrot.lane.b32.xlu0 %v3533, 1
    %v3699 = vpop.permute.xlu0 %3698
    %3700 = vrot.lane.b32.xlu0 %v3534, 1
    %v3701 = vpop.permute.xlu0 %3700
    %v3702 = vsel %vm267, %v3699, %v3701
    %v3703 = vsel %vm267, %v3697, %v3699
    %v3704 = vsel %vm267, %v3695, %v3697
    %v3705 = vsel %vm267, %v3701, %v3695
    %v3707 = vlaneseq
    %v3708 = vshrl.u32 %v3707, 7
    %v3709 = vsub.s32 0, %v3708
    %v3710 = vrot.slane %v3693, %v3709
    %v3711 = vlaneseq
    %v3712 = vshrl.u32 %v3711, 7
    %v3713 = vsub.s32 1, %v3712
    %v3714 = vrot.slane %v3693, %v3713
    %v3715 = vlaneseq
    %v3716 = vshrl.u32 %v3715, 7
    %v3717 = vsub.s32 2, %v3716
    %v3718 = vrot.slane %v3693, %v3717
    %v3719 = vlaneseq
    %v3720 = vshrl.u32 %v3719, 7
    %v3721 = vsub.s32 3, %v3720
    %v3722 = vrot.slane %v3693, %v3721
    %v3727 = vmul.f32 %v3705, %v3710
    %v3728 = vmul.f32 %v3704, %v3714
    %v3729 = vmul.f32 %v3703, %v3718
    %v3730 = vmul.f32 %v3702, %v3722
    %v3731 = vpack.c.bf16 %v3727, %v3727
    %v3732 = vpack.c.bf16 %v3728, %v3728
    %v3733 = vpack.c.bf16 %v3729, %v3729
    %v3734 = vpack.c.bf16 %v3730, %v3730
    %v3735 = vpack.c.bf16 %v3531, %v3531
    %v3736 = vpack.c.bf16 %v3532, %v3532
    %v3737 = vpack.c.bf16 %v3533, %v3533
    %v3738 = vpack.c.bf16 %v3534, %v3534
    %v3739 = vld [vmem:[%s305] ss:$8 sm:$0xf]
    %3740 = vrot.lane.b32.xlu0 %v3531, 127
    %v3741 = vpop.permute.xlu0 %3740
    %3742 = vrot.lane.b32.xlu0 %v3532, 127
    %v3743 = vpop.permute.xlu0 %3742
    %3744 = vrot.lane.b32.xlu0 %v3533, 127
    %v3745 = vpop.permute.xlu0 %3744
    %3746 = vrot.lane.b32.xlu0 %v3534, 127
    %v3747 = vpop.permute.xlu0 %3746
    %v3748 = vsel %vm315, %v3745, %v3747
    %v3749 = vsel %vm315, %v3743, %v3745
    %v3750 = vsel %vm315, %v3741, %v3743
    %v3751 = vsel %vm315, %v3747, %v3741
    %v3753 = vlaneseq
    %v3754 = vshrl.u32 %v3753, 7
    %v3755 = vsub.s32 0, %v3754
    %v3756 = vrot.slane %v3739, %v3755
    %v3757 = vlaneseq
    %v3758 = vshrl.u32 %v3757, 7
    %v3759 = vsub.s32 1, %v3758
    %v3760 = vrot.slane %v3739, %v3759
    %v3761 = vlaneseq
    %v3762 = vshrl.u32 %v3761, 7
    %v3763 = vsub.s32 2, %v3762
    %v3764 = vrot.slane %v3739, %v3763
    %v3765 = vlaneseq
    %v3766 = vshrl.u32 %v3765, 7
    %v3767 = vsub.s32 3, %v3766
    %v3768 = vrot.slane %v3739, %v3767
    %v3773 = vmul.f32 %v3750, %v3756
    %v3774 = vmul.f32 %v3749, %v3760
    %v3775 = vmul.f32 %v3748, %v3764
    %v3776 = vmul.f32 %v3751, %v3768
    %v3777 = vpack.c.bf16 %v3773, %v3773
    %v3778 = vpack.c.bf16 %v3774, %v3774
    %v3779 = vpack.c.bf16 %v3775, %v3775
    %v3780 = vpack.c.bf16 %v3776, %v3776
    %v3781 = vld [vmem:[%s349] ss:$8 sm:$0xf]
    %3782 = vrot.lane.b32.xlu0 %v3531, 113
    %v3783 = vpop.permute.xlu0 %3782
    %3784 = vrot.lane.b32.xlu0 %v3532, 113
    %v3785 = vpop.permute.xlu0 %3784
    %3786 = vrot.lane.b32.xlu0 %v3533, 113
    %v3787 = vpop.permute.xlu0 %3786
    %3788 = vrot.lane.b32.xlu0 %v3534, 113
    %v3789 = vpop.permute.xlu0 %3788
    %v3790 = vsel %vm359, %v3787, %v3789
    %v3791 = vsel %vm359, %v3785, %v3787
    %v3792 = vsel %vm359, %v3783, %v3785
    %v3793 = vsel %vm359, %v3789, %v3783
    %v3795 = vlaneseq
    %v3796 = vshrl.u32 %v3795, 7
    %v3797 = vsub.s32 0, %v3796
    %v3798 = vrot.slane %v3781, %v3797
    %v3799 = vlaneseq
    %v3800 = vshrl.u32 %v3799, 7
    %v3801 = vsub.s32 1, %v3800
    %v3802 = vrot.slane %v3781, %v3801
    %v3803 = vlaneseq
    %v3804 = vshrl.u32 %v3803, 7
    %v3805 = vsub.s32 2, %v3804
    %v3806 = vrot.slane %v3781, %v3805
    %v3807 = vlaneseq
    %v3808 = vshrl.u32 %v3807, 7
    %v3809 = vsub.s32 3, %v3808
    %v3810 = vrot.slane %v3781, %v3809
    %v3815 = vmul.f32 %v3792, %v3798
    %v3816 = vmul.f32 %v3791, %v3802
    %v3817 = vmul.f32 %v3790, %v3806
    %v3818 = vmul.f32 %v3793, %v3810
    %v3819 = vpack.c.bf16 %v3815, %v3815
    %v3820 = vpack.c.bf16 %v3816, %v3816
    %v3821 = vpack.c.bf16 %v3817, %v3817
    %v3822 = vpack.c.bf16 %v3818, %v3818
    %v3823 = vld [vmem:[%s393] ss:$8 sm:$0xf]
    %3824 = vrot.lane.b32.xlu0 %v3531, 112
    %v3825 = vpop.permute.xlu0 %3824
    %3826 = vrot.lane.b32.xlu0 %v3532, 112
    %v3827 = vpop.permute.xlu0 %3826
    %3828 = vrot.lane.b32.xlu0 %v3533, 112
    %v3829 = vpop.permute.xlu0 %3828
    %3830 = vrot.lane.b32.xlu0 %v3534, 112
    %v3831 = vpop.permute.xlu0 %3830
    %v3832 = vsel %vm403, %v3829, %v3831
    %v3833 = vsel %vm403, %v3827, %v3829
    %v3834 = vsel %vm403, %v3825, %v3827
    %v3835 = vsel %vm403, %v3831, %v3825
    %v3837 = vlaneseq
    %v3838 = vshrl.u32 %v3837, 7
    %v3839 = vsub.s32 0, %v3838
    %v3840 = vrot.slane %v3823, %v3839
    %v3841 = vlaneseq
    %v3842 = vshrl.u32 %v3841, 7
    %v3843 = vsub.s32 1, %v3842
    %v3844 = vrot.slane %v3823, %v3843
    %v3845 = vlaneseq
    %v3846 = vshrl.u32 %v3845, 7
    %v3847 = vsub.s32 2, %v3846
    %v3848 = vrot.slane %v3823, %v3847
    %v3849 = vlaneseq
    %v3850 = vshrl.u32 %v3849, 7
    %v3851 = vsub.s32 3, %v3850
    %v3852 = vrot.slane %v3823, %v3851
    %v3857 = vmul.f32 %v3834, %v3840
    %v3858 = vmul.f32 %v3833, %v3844
    %v3859 = vmul.f32 %v3832, %v3848
    %v3860 = vmul.f32 %v3835, %v3852
    %v3861 = vpack.c.bf16 %v3857, %v3857
    %v3862 = vpack.c.bf16 %v3858, %v3858
    %v3863 = vpack.c.bf16 %v3859, %v3859
    %v3864 = vpack.c.bf16 %v3860, %v3860
    %v3865 = vld [vmem:[%s437] ss:$8 sm:$0xf]
    %3866 = vrot.lane.b32.xlu0 %v3531, 111
    %v3867 = vpop.permute.xlu0 %3866
    %3868 = vrot.lane.b32.xlu0 %v3532, 111
    %v3869 = vpop.permute.xlu0 %3868
    %3870 = vrot.lane.b32.xlu0 %v3533, 111
    %v3871 = vpop.permute.xlu0 %3870
    %3872 = vrot.lane.b32.xlu0 %v3534, 111
    %v3873 = vpop.permute.xlu0 %3872
    %v3874 = vsel %vm447, %v3871, %v3873
    %v3875 = vsel %vm447, %v3869, %v3871
    %v3876 = vsel %vm447, %v3867, %v3869
    %v3877 = vsel %vm447, %v3873, %v3867
    %v3879 = vlaneseq
    %v3880 = vshrl.u32 %v3879, 7
    %v3881 = vsub.s32 0, %v3880
    %v3882 = vrot.slane %v3865, %v3881
    %v3883 = vlaneseq
    %v3884 = vshrl.u32 %v3883, 7
    %v3885 = vsub.s32 1, %v3884
    %v3886 = vrot.slane %v3865, %v3885
    %v3887 = vlaneseq
    %v3888 = vshrl.u32 %v3887, 7
    %v3889 = vsub.s32 2, %v3888
    %v3890 = vrot.slane %v3865, %v3889
    %v3891 = vlaneseq
    %v3892 = vshrl.u32 %v3891, 7
    %v3893 = vsub.s32 3, %v3892
    %v3894 = vrot.slane %v3865, %v3893
    %v3899 = vmul.f32 %v3876, %v3882
    %v3900 = vmul.f32 %v3875, %v3886
    %v3901 = vmul.f32 %v3874, %v3890
    %v3902 = vmul.f32 %v3877, %v3894
    %v3903 = vpack.c.bf16 %v3899, %v3899
    %v3904 = vpack.c.bf16 %v3900, %v3900
    %v3905 = vpack.c.bf16 %v3901, %v3901
    %v3906 = vpack.c.bf16 %v3902, %v3902
    %s3907 = scalar_lea.vmem [#allocation3], 32
    %v3908 = vld [vmem:[%s3907] sm:$0xff]
    %v3909 = vld [vmem:[%s3907 + $0x8] sm:$0xff]
    %v3910 = vld [vmem:[%s3907 + $0x10] sm:$0xff]
    %v3911 = vld [vmem:[%s3907 + $0x18] sm:$0xff]
    %3912 = vrot.lane.b32.xlu0 %v3908, 17
    %v3913 = vpop.permute.xlu0 %3912
    %3914 = vrot.lane.b32.xlu0 %v3909, 17
    %v3915 = vpop.permute.xlu0 %3914
    %3916 = vrot.lane.b32.xlu0 %v3910, 17
    %v3917 = vpop.permute.xlu0 %3916
    %3918 = vrot.lane.b32.xlu0 %v3911, 17
    %v3919 = vpop.permute.xlu0 %3918
    %v3920 = vsel %vm135, %v3917, %v3919
    %v3921 = vsel %vm135, %v3915, %v3917
    %v3922 = vsel %vm135, %v3913, %v3915
    %v3923 = vsel %vm135, %v3919, %v3913
    %v3924 = vmul.f32 %v3923, %v3584
    %v3925 = vmul.f32 %v3922, %v3588
    %v3926 = vmul.f32 %v3921, %v3592
    %v3927 = vmul.f32 %v3920, %v3596
    %v3928 = vpack.c.bf16 %v3924, %v3924
    %v3929 = vpack.c.bf16 %v3925, %v3925
    %v3930 = vpack.c.bf16 %v3926, %v3926
    %v3931 = vpack.c.bf16 %v3927, %v3927
    %3932 = vrot.lane.b32.xlu0 %v3908, 16
    %v3933 = vpop.permute.xlu0 %3932
    %3934 = vrot.lane.b32.xlu0 %v3909, 16
    %v3935 = vpop.permute.xlu0 %3934
    %3936 = vrot.lane.b32.xlu0 %v3910, 16
    %v3937 = vpop.permute.xlu0 %3936
    %3938 = vrot.lane.b32.xlu0 %v3911, 16
    %v3939 = vpop.permute.xlu0 %3938
    %v3940 = vsel %vm179, %v3937, %v3939
    %v3941 = vsel %vm179, %v3935, %v3937
    %v3942 = vsel %vm179, %v3933, %v3935
    %v3943 = vsel %vm179, %v3939, %v3933
    %v3944 = vmul.f32 %v3943, %v3626
    %v3945 = vmul.f32 %v3942, %v3630
    %v3946 = vmul.f32 %v3941, %v3634
    %v3947 = vmul.f32 %v3940, %v3638
    %v3948 = vpack.c.bf16 %v3944, %v3944
    %v3949 = vpack.c.bf16 %v3945, %v3945
    %v3950 = vpack.c.bf16 %v3946, %v3946
    %v3951 = vpack.c.bf16 %v3947, %v3947
    %3952 = vrot.lane.b32.xlu0 %v3908, 15
    %v3953 = vpop.permute.xlu0 %3952
    %3954 = vrot.lane.b32.xlu0 %v3909, 15
    %v3955 = vpop.permute.xlu0 %3954
    %3956 = vrot.lane.b32.xlu0 %v3910, 15
    %v3957 = vpop.permute.xlu0 %3956
    %3958 = vrot.lane.b32.xlu0 %v3911, 15
    %v3959 = vpop.permute.xlu0 %3958
    %v3960 = vsel %vm223, %v3957, %v3959
    %v3961 = vsel %vm223, %v3955, %v3957
    %v3962 = vsel %vm223, %v3953, %v3955
    %v3963 = vsel %vm223, %v3959, %v3953
    %v3964 = vmul.f32 %v3963, %v3668
    %v3965 = vmul.f32 %v3962, %v3672
    %v3966 = vmul.f32 %v3961, %v3676
    %v3967 = vmul.f32 %v3960, %v3680
    %v3968 = vpack.c.bf16 %v3964, %v3964
    %v3969 = vpack.c.bf16 %v3965, %v3965
    %v3970 = vpack.c.bf16 %v3966, %v3966
    %v3971 = vpack.c.bf16 %v3967, %v3967
    %3972 = vrot.lane.b32.xlu0 %v3908, 1
    %v3973 = vpop.permute.xlu0 %3972
    %3974 = vrot.lane.b32.xlu0 %v3909, 1
    %v3975 = vpop.permute.xlu0 %3974
    %3976 = vrot.lane.b32.xlu0 %v3910, 1
    %v3977 = vpop.permute.xlu0 %3976
    %3978 = vrot.lane.b32.xlu0 %v3911, 1
    %v3979 = vpop.permute.xlu0 %3978
    %v3980 = vsel %vm267, %v3977, %v3979
    %v3981 = vsel %vm267, %v3975, %v3977
    %v3982 = vsel %vm267, %v3973, %v3975
    %v3983 = vsel %vm267, %v3979, %v3973
    %v3984 = vmul.f32 %v3983, %v3710
    %v3985 = vmul.f32 %v3982, %v3714
    %v3986 = vmul.f32 %v3981, %v3718
    %v3987 = vmul.f32 %v3980, %v3722
    %v3988 = vpack.c.bf16 %v3984, %v3984
    %v3989 = vpack.c.bf16 %v3985, %v3985
    %v3990 = vpack.c.bf16 %v3986, %v3986
    %v3991 = vpack.c.bf16 %v3987, %v3987
    %v3992 = vpack.c.bf16 %v3908, %v3908
    %v3993 = vpack.c.bf16 %v3909, %v3909
    %v3994 = vpack.c.bf16 %v3910, %v3910
    %v3995 = vpack.c.bf16 %v3911, %v3911
    %3996 = vrot.lane.b32.xlu0 %v3908, 127
    %v3997 = vpop.permute.xlu0 %3996
    %3998 = vrot.lane.b32.xlu0 %v3909, 127
    %v3999 = vpop.permute.xlu0 %3998
    %4000 = vrot.lane.b32.xlu0 %v3910, 127
    %v4001 = vpop.permute.xlu0 %4000
    %4002 = vrot.lane.b32.xlu0 %v3911, 127
    %v4003 = vpop.permute.xlu0 %4002
    %v4004 = vsel %vm315, %v4001, %v4003
    %v4005 = vsel %vm315, %v3999, %v4001
    %v4006 = vsel %vm315, %v3997, %v3999
    %v4007 = vsel %vm315, %v4003, %v3997
    %v4008 = vmul.f32 %v4006, %v3756
    %v4009 = vmul.f32 %v4005, %v3760
    %v4010 = vmul.f32 %v4004, %v3764
    %v4011 = vmul.f32 %v4007, %v3768
    %v4012 = vpack.c.bf16 %v4008, %v4008
    %v4013 = vpack.c.bf16 %v4009, %v4009
    %v4014 = vpack.c.bf16 %v4010, %v4010
    %v4015 = vpack.c.bf16 %v4011, %v4011
    %4016 = vrot.lane.b32.xlu0 %v3908, 113
    %v4017 = vpop.permute.xlu0 %4016
    %4018 = vrot.lane.b32.xlu0 %v3909, 113
    %v4019 = vpop.permute.xlu0 %4018
    %4020 = vrot.lane.b32.xlu0 %v3910, 113
    %v4021 = vpop.permute.xlu0 %4020
    %4022 = vrot.lane.b32.xlu0 %v3911, 113
    %v4023 = vpop.permute.xlu0 %4022
    %v4024 = vsel %vm359, %v4021, %v4023
    %v4025 = vsel %vm359, %v4019, %v4021
    %v4026 = vsel %vm359, %v4017, %v4019
    %v4027 = vsel %vm359, %v4023, %v4017
    %v4028 = vmul.f32 %v4026, %v3798
    %v4029 = vmul.f32 %v4025, %v3802
    %v4030 = vmul.f32 %v4024, %v3806
    %v4031 = vmul.f32 %v4027, %v3810
    %v4032 = vpack.c.bf16 %v4028, %v4028
    %v4033 = vpack.c.bf16 %v4029, %v4029
    %v4034 = vpack.c.bf16 %v4030, %v4030
    %v4035 = vpack.c.bf16 %v4031, %v4031
    %4036 = vrot.lane.b32.xlu0 %v3908, 112
    %v4037 = vpop.permute.xlu0 %4036
    %4038 = vrot.lane.b32.xlu0 %v3909, 112
    %v4039 = vpop.permute.xlu0 %4038
    %4040 = vrot.lane.b32.xlu0 %v3910, 112
    %v4041 = vpop.permute.xlu0 %4040
    %4042 = vrot.lane.b32.xlu0 %v3911, 112
    %v4043 = vpop.permute.xlu0 %4042
    %v4044 = vsel %vm403, %v4041, %v4043
    %v4045 = vsel %vm403, %v4039, %v4041
    %v4046 = vsel %vm403, %v4037, %v4039
    %v4047 = vsel %vm403, %v4043, %v4037
    %v4048 = vmul.f32 %v4046, %v3840
    %v4049 = vmul.f32 %v4045, %v3844
    %v4050 = vmul.f32 %v4044, %v3848
    %v4051 = vmul.f32 %v4047, %v3852
    %v4052 = vpack.c.bf16 %v4048, %v4048
    %v4053 = vpack.c.bf16 %v4049, %v4049
    %v4054 = vpack.c.bf16 %v4050, %v4050
    %v4055 = vpack.c.bf16 %v4051, %v4051
    %4056 = vrot.lane.b32.xlu0 %v3908, 111
    %v4057 = vpop.permute.xlu0 %4056
    %4058 = vrot.lane.b32.xlu0 %v3909, 111
    %v4059 = vpop.permute.xlu0 %4058
    %4060 = vrot.lane.b32.xlu0 %v3910, 111
    %v4061 = vpop.permute.xlu0 %4060
    %4062 = vrot.lane.b32.xlu0 %v3911, 111
    %v4063 = vpop.permute.xlu0 %4062
    %v4064 = vsel %vm447, %v4061, %v4063
    %v4065 = vsel %vm447, %v4059, %v4061
    %v4066 = vsel %vm447, %v4057, %v4059
    %v4067 = vsel %vm447, %v4063, %v4057
    %v4068 = vmul.f32 %v4066, %v3882
    %v4069 = vmul.f32 %v4065, %v3886
    %v4070 = vmul.f32 %v4064, %v3890
    %v4071 = vmul.f32 %v4067, %v3894
    %v4072 = vpack.c.bf16 %v4068, %v4068
    %v4073 = vpack.c.bf16 %v4069, %v4069
    %v4074 = vpack.c.bf16 %v4070, %v4070
    %v4075 = vpack.c.bf16 %v4071, %v4071
    %v4080 = vrot.slane %v3647, 4
    %v4081 = vrot.slane %v3648, 4
    %v4082 = vrot.slane %v3649, 4
    %v4083 = vrot.slane %v3650, 4
    %v4088 = vrot.slane %v3731, 4
    %v4089 = vrot.slane %v3732, 4
    %v4090 = vrot.slane %v3733, 4
    %v4091 = vrot.slane %v3734, 4
    %v4096 = vrot.slane %v3777, 4
    %v4097 = vrot.slane %v3778, 4
    %v4098 = vrot.slane %v3779, 4
    %v4099 = vrot.slane %v3780, 4
    %v4104 = vrot.slane %v3861, 4
    %v4105 = vrot.slane %v3862, 4
    %v4106 = vrot.slane %v3863, 4
    %v4107 = vrot.slane %v3864, 4
    %v4112 = vrot.slane %v3928, 4
    %v4113 = vrot.slane %v3929, 4
    %v4114 = vrot.slane %v3930, 4
    %v4115 = vrot.slane %v3931, 4
    %v4120 = vrot.slane %v3968, 4
    %v4121 = vrot.slane %v3969, 4
    %v4122 = vrot.slane %v3970, 4
    %v4123 = vrot.slane %v3971, 4
    %v4128 = vrot.slane %v3992, 4
    %v4129 = vrot.slane %v3993, 4
    %v4130 = vrot.slane %v3994, 4
    %v4131 = vrot.slane %v3995, 4
    %v4136 = vrot.slane %v4032, 4
    %v4137 = vrot.slane %v4033, 4
    %v4138 = vrot.slane %v4034, 4
    %v4139 = vrot.slane %v4035, 4
    %v4142 = vsel %vm1276, %v3605, %v4080
    %v4146 = vsel %vm1276, %v3606, %v4081
    %v4150 = vsel %vm1276, %v3607, %v4082
    %v4154 = vsel %vm1276, %v3608, %v4083
    %v4158 = vsel %vm1276, %v3689, %v4088
    %v4162 = vsel %vm1276, %v3690, %v4089
    %v4166 = vsel %vm1276, %v3691, %v4090
    %v4170 = vsel %vm1276, %v3692, %v4091
    %v4174 = vsel %vm1276, %v3735, %v4096
    %v4178 = vsel %vm1276, %v3736, %v4097
    %v4182 = vsel %vm1276, %v3737, %v4098
    %v4186 = vsel %vm1276, %v3738, %v4099
    %v4190 = vsel %vm1276, %v3819, %v4104
    %v4194 = vsel %vm1276, %v3820, %v4105
    %v4198 = vsel %vm1276, %v3821, %v4106
    %v4202 = vsel %vm1276, %v3822, %v4107
    %v4206 = vsel %vm1276, %v3903, %v4112
    %v4210 = vsel %vm1276, %v3904, %v4113
    %v4214 = vsel %vm1276, %v3905, %v4114
    %v4218 = vsel %vm1276, %v3906, %v4115
    %v4222 = vsel %vm1276, %v3948, %v4120
    %v4226 = vsel %vm1276, %v3949, %v4121
    %v4230 = vsel %vm1276, %v3950, %v4122
    %v4234 = vsel %vm1276, %v3951, %v4123
    %v4238 = vsel %vm1276, %v3988, %v4128
    %v4242 = vsel %vm1276, %v3989, %v4129
    %v4246 = vsel %vm1276, %v3990, %v4130
    %v4250 = vsel %vm1276, %v3991, %v4131
    %v4254 = vsel %vm1276, %v4012, %v4136
    %v4258 = vsel %vm1276, %v4013, %v4137
    %v4262 = vsel %vm1276, %v4014, %v4138
    %v4266 = vsel %vm1276, %v4015, %v4139
    %v4272 = vrot.slane %v4072, 4
    %v4273 = vrot.slane %v4073, 4
    %v4274 = vrot.slane %v4074, 4
    %v4275 = vrot.slane %v4075, 4
    %v4278 = vsel %vm1276, %v4052, %v4272
    %v4282 = vsel %vm1276, %v4053, %v4273
    %v4286 = vsel %vm1276, %v4054, %v4274
    %v4290 = vsel %vm1276, %v4055, %v4275
    %v4292 = vld [vmem:[%s8] sm:$0xff]
    %v4293 = vld [vmem:[%s8 + $0x8] sm:$0xff]
    %v4294 = vld [vmem:[%s8 + $0x10] sm:$0xff]
    %v4295 = vld [vmem:[%s8 + $0x18] sm:$0xff]
    %v4296 = vld [vmem:[%s9] sm:$0xff]
    %v4297 = vld [vmem:[%s9 + $0x8] sm:$0xff]
    %v4298 = vld [vmem:[%s9 + $0x10] sm:$0xff]
    %v4299 = vld [vmem:[%s9 + $0x18] sm:$0xff]
    %4301 = vset.pattern.permute.xlu0 0
    %4302 = vperm.xlu0 %4301, %v4296
    %v4303 = vpop.permute.xlu0 %4302
    %4306 = vset.pattern.permute.xlu0 0
    %4307 = vperm.xlu0 %4306, %v4297
    %v4308 = vpop.permute.xlu0 %4307
    %4311 = vset.pattern.permute.xlu0 0
    %4312 = vperm.xlu0 %4311, %v4298
    %v4313 = vpop.permute.xlu0 %4312
    %4316 = vset.pattern.permute.xlu0 0
    %4317 = vperm.xlu0 %4316, %v4299
    %v4318 = vpop.permute.xlu0 %4317
    %v4324 = vunpack.c.l.b16 %v4292
    %v4325 = vunpack.c.h.b16 %v4292
    %v4326 = vunpack.c.l.b16 %v4293
    %v4327 = vunpack.c.h.b16 %v4293
    %v4328 = vunpack.c.l.b16 %v4294
    %v4329 = vunpack.c.h.b16 %v4294
    %v4330 = vunpack.c.l.b16 %v4295
    %v4331 = vunpack.c.h.b16 %v4295
    %v4332 = vpack.c.b16 %v4326, %v4324
    %v4333 = vpack.c.b16 %v4327, %v4325
    %v4334 = vpack.c.b16 %v4330, %v4328
    %v4335 = vpack.c.b16 %v4331, %v4329
    %vm4338 = vcmask 130048
    %v4340 = vsel %vm4338, %v4333, 0
    %v4343 = vsel %vm4338, %v4335, 0
    %4345 = vmatprep.subr.bf16.mxu0 %v4258
    %4346 = vmatpush1.bf16.msra.mxu0 %v4254
    %4347 = vmatprep.subr.bf16.mxu0 %v4242
    %4348 = vmatpush1.bf16.msra.mxu0 %v4238
    %4349 = vmatprep.subr.bf16.mxu0 %v4226
    %4350 = vmatpush1.bf16.msra.mxu0 %v4222
    %4351 = vmatprep.subr.bf16.mxu0 %v4210
    %4352 = vmatpush1.bf16.msra.mxu0 %v4206
    %4353 = vmatprep.subr.bf16.mxu0 %v4194
    %4354 = vmatpush1.bf16.msra.mxu0 %v4190
    %4355 = vmatprep.subr.bf16.mxu0 %v4178
    %4356 = vmatpush1.bf16.msra.mxu0 %v4174
    %4357 = vmatprep.subr.bf16.mxu0 %v4162
    %4358 = vmatpush1.bf16.msra.mxu0 %v4158
    %4359 = vmatprep.subr.bf16.mxu0 %v4146
    %4360 = vmatpush1.bf16.msra.mxu0 %v4142
    %4361 = vmatprep.subr.bf16.mxu0 0
    %4362 = vmatpush2.bf16.msra.mxu0 0
    %4363 = vmatprep.subr.bf16.mxu0 0
    %4364 = vmatpush2.bf16.msra.mxu0 0
    %4365 = vmatprep.subr.bf16.mxu0 0
    %4366 = vmatpush2.bf16.msra.mxu0 0
    %4367 = vmatprep.subr.bf16.mxu0 0
    %4368 = vmatpush2.bf16.msra.mxu0 0
    %4369 = vmatprep.subr.bf16.mxu0 0
    %4370 = vmatpush2.bf16.msra.mxu0 0
    %4371 = vmatprep.subr.bf16.mxu0 0
    %4372 = vmatpush2.bf16.msra.mxu0 0
    %4373 = vmatprep.subr.bf16.mxu0 0
    %4374 = vmatpush2.bf16.msra.mxu0 0
    %4375 = vmatprep.subr.bf16.mxu0 %v4282
    %4376 = vmatpush2.bf16.msra.mxu0 %v4278
    %4377 = vmatprep.mubr.bf16.mxu0 %v4340
    %4378 = vmatmul.mubr.bf16.gmra.mxu0 %v4332
    %v4379 = vpop.f32.mrf.mxu0
    %v4380 = vadd.f32 %v4303, %v4379
    %v4381 = vpop.f32.mrf.mxu0
    %v4382 = vadd.f32 %v4303, %v4381
    %v4383 = vpop.f32.mrf.mxu0
    %v4384 = vadd.f32 %v4308, %v4383
    %v4385 = vpop.f32.mrf.mxu0
    %v4386 = vadd.f32 %v4308, %v4385
    %4387 = vmatprep.mubr.bf16.mxu0 %v4343
    %4388 = vmatmul.mubr.bf16.gmra.mxu0 %v4334
    %v4389 = vpop.f32.mrf.mxu0
    %v4390 = vadd.f32 %v4313, %v4389
    %v4391 = vpop.f32.mrf.mxu0
    %v4392 = vadd.f32 %v4313, %v4391
    %v4393 = vpop.f32.mrf.mxu0
    %v4394 = vadd.f32 %v4318, %v4393
    %v4395 = vpop.f32.mrf.mxu0
    %v4396 = vadd.f32 %v4318, %v4395
    %4397 = vdwg.mxu0
    %4398 = vmatprep.subr.bf16.mxu0 %v4266
    %4399 = vmatpush1.bf16.msra.mxu0 %v4262
    %4400 = vmatprep.subr.bf16.mxu0 %v4250
    %4401 = vmatpush1.bf16.msra.mxu0 %v4246
    %4402 = vmatprep.subr.bf16.mxu0 %v4234
    %4403 = vmatpush1.bf16.msra.mxu0 %v4230
    %4404 = vmatprep.subr.bf16.mxu0 %v4218
    %4405 = vmatpush1.bf16.msra.mxu0 %v4214
    %4406 = vmatprep.subr.bf16.mxu0 %v4202
    %4407 = vmatpush1.bf16.msra.mxu0 %v4198
    %4408 = vmatprep.subr.bf16.mxu0 %v4186
    %4409 = vmatpush1.bf16.msra.mxu0 %v4182
    %4410 = vmatprep.subr.bf16.mxu0 %v4170
    %4411 = vmatpush1.bf16.msra.mxu0 %v4166
    %4412 = vmatprep.subr.bf16.mxu0 %v4154
    %4413 = vmatpush1.bf16.msra.mxu0 %v4150
    %4414 = vmatprep.subr.bf16.mxu0 0
    %4415 = vmatpush2.bf16.msra.mxu0 0
    %4416 = vmatprep.subr.bf16.mxu0 0
    %4417 = vmatpush2.bf16.msra.mxu0 0
    %4418 = vmatprep.subr.bf16.mxu0 0
    %4419 = vmatpush2.bf16.msra.mxu0 0
    %4420 = vmatprep.subr.bf16.mxu0 0
    %4421 = vmatpush2.bf16.msra.mxu0 0
    %4422 = vmatprep.subr.bf16.mxu0 0
    %4423 = vmatpush2.bf16.msra.mxu0 0
    %4424 = vmatprep.subr.bf16.mxu0 0
    %4425 = vmatpush2.bf16.msra.mxu0 0
    %4426 = vmatprep.subr.bf16.mxu0 0
    %4427 = vmatpush2.bf16.msra.mxu0 0
    %4428 = vmatprep.subr.bf16.mxu0 %v4290
    %4429 = vmatpush2.bf16.msra.mxu0 %v4286
    %4430 = vmatprep.mubr.bf16.mxu0 %v4340
    %4431 = vmatmul.mubr.bf16.gmra.mxu0 %v4332
    %v4432 = vpop.f32.mrf.mxu0
    %v4433 = vadd.f32 %v4303, %v4432
    %v4434 = vpop.f32.mrf.mxu0
    %v4435 = vadd.f32 %v4303, %v4434
    %v4436 = vpop.f32.mrf.mxu0
    %v4437 = vadd.f32 %v4308, %v4436
    %v4438 = vpop.f32.mrf.mxu0
    %v4439 = vadd.f32 %v4308, %v4438
    %4440 = vmatprep.mubr.bf16.mxu0 %v4343
    %4441 = vmatmul.mubr.bf16.gmra.mxu0 %v4334
    %v4442 = vpop.f32.mrf.mxu0
    %v4443 = vadd.f32 %v4313, %v4442
    %v4444 = vpop.f32.mrf.mxu0
    %v4445 = vadd.f32 %v4313, %v4444
    %v4446 = vpop.f32.mrf.mxu0
    %v4447 = vadd.f32 %v4318, %v4446
    %v4448 = vpop.f32.mrf.mxu0
    %v4449 = vadd.f32 %v4318, %v4448
    %4450 = vdwg.mxu0
    %s4451 = scalar_lea.vmem [#allocation4], 32
    %v4452 = vld [vmem:[%s4451] sm:$0xff]
    %v4453 = vld [vmem:[%s4451 + $0x8] sm:$0xff]
    %v4454 = vld [vmem:[%s4451 + $0x10] sm:$0xff]
    %v4455 = vld [vmem:[%s4451 + $0x18] sm:$0xff]
    %v4456 = vxor.u32 %v4380, 2147483648
    %v4457 = vxor.u32 %v4382, 2147483648
    %v4458 = vxor.u32 %v4433, 2147483648
    %v4459 = vxor.u32 %v4435, 2147483648
    %v4460 = vmul.f32 %v4456, 1.442695
    %v4461 = vpow.pop %v4460
    %v4462 = vmul.f32 %v4457, 1.442695
    %v4463 = vpow.pop %v4462
    %v4464 = vmul.f32 %v4458, 1.442695
    %v4465 = vpow.pop %v4464
    %v4466 = vmul.f32 %v4459, 1.442695
    %v4467 = vpow.pop %v4466
    %v4468 = vadd.f32 %v4461, 1.0
    %v4469 = vadd.f32 %v4463, 1.0
    %v4470 = vadd.f32 %v4465, 1.0
    %v4471 = vadd.f32 %v4467, 1.0
    %v4472 = vrcp.pop %v4468
    %v4473 = vmul.f32 1.0, %v4472
    %v4474 = vrcp.pop %v4469
    %v4475 = vmul.f32 1.0, %v4474
    %v4476 = vrcp.pop %v4470
    %v4477 = vmul.f32 1.0, %v4476
    %v4478 = vrcp.pop %v4471
    %v4479 = vmul.f32 1.0, %v4478
    %v4480 = vxor.u32 %v4384, 2147483648
    %v4481 = vxor.u32 %v4386, 2147483648
    %v4482 = vxor.u32 %v4437, 2147483648
    %v4483 = vxor.u32 %v4439, 2147483648
    %v4484 = vmul.f32 %v4480, 1.442695
    %v4485 = vpow.pop %v4484
    %v4486 = vmul.f32 %v4481, 1.442695
    %v4487 = vpow.pop %v4486
    %v4488 = vmul.f32 %v4482, 1.442695
    %v4489 = vpow.pop %v4488
    %v4490 = vmul.f32 %v4483, 1.442695
    %v4491 = vpow.pop %v4490
    %v4492 = vadd.f32 %v4485, 1.0
    %v4493 = vadd.f32 %v4487, 1.0
    %v4494 = vadd.f32 %v4489, 1.0
    %v4495 = vadd.f32 %v4491, 1.0
    %v4496 = vrcp.pop %v4492
    %v4497 = vmul.f32 1.0, %v4496
    %v4498 = vrcp.pop %v4493
    %v4499 = vmul.f32 1.0, %v4498
    %v4500 = vrcp.pop %v4494
    %v4501 = vmul.f32 1.0, %v4500
    %v4502 = vrcp.pop %v4495
    %v4503 = vmul.f32 1.0, %v4502
    %v4504 = vxor.u32 %v4390, 2147483648
    %v4505 = vxor.u32 %v4392, 2147483648
    %v4506 = vxor.u32 %v4443, 2147483648
    %v4507 = vxor.u32 %v4445, 2147483648
    %v4508 = vmul.f32 %v4504, 1.442695
    %v4509 = vpow.pop %v4508
    %v4510 = vmul.f32 %v4505, 1.442695
    %v4511 = vpow.pop %v4510
    %v4512 = vmul.f32 %v4506, 1.442695
    %v4513 = vpow.pop %v4512
    %v4514 = vmul.f32 %v4507, 1.442695
    %v4515 = vpow.pop %v4514
    %v4516 = vadd.f32 %v4509, 1.0
    %v4517 = vadd.f32 %v4511, 1.0
    %v4518 = vadd.f32 %v4513, 1.0
    %v4519 = vadd.f32 %v4515, 1.0
    %v4520 = vrcp.pop %v4516
    %v4521 = vmul.f32 1.0, %v4520
    %v4522 = vrcp.pop %v4517
    %v4523 = vmul.f32 1.0, %v4522
    %v4524 = vrcp.pop %v4518
    %v4525 = vmul.f32 1.0, %v4524
    %v4526 = vrcp.pop %v4519
    %v4527 = vmul.f32 1.0, %v4526
    %v4528 = vtanh.pop %v4394
    %v4529 = vtanh.pop %v4396
    %v4530 = vtanh.pop %v4447
    %v4531 = vtanh.pop %v4449
    %v4532 = vmul.f32 %v4497, %v4452
    %v4533 = vmul.f32 %v4499, %v4453
    %v4534 = vmul.f32 %v4501, %v4454
    %v4535 = vmul.f32 %v4503, %v4455
    %v4536 = vmul.f32 %v4473, %v4528
    %v4537 = vmul.f32 %v4475, %v4529
    %v4538 = vmul.f32 %v4477, %v4530
    %v4539 = vmul.f32 %v4479, %v4531
    %v4540 = vadd.f32 %v4532, %v4536
    %v4541 = vadd.f32 %v4533, %v4537
    %v4542 = vadd.f32 %v4534, %v4538
    %v4543 = vadd.f32 %v4535, %v4539
    %v4544 = vtanh.pop %v4540
    %v4545 = vtanh.pop %v4541
    %v4546 = vtanh.pop %v4542
    %v4547 = vtanh.pop %v4543
    %v4548 = vmul.f32 %v4521, %v4544
    %v4549 = vmul.f32 %v4523, %v4545
    %v4550 = vmul.f32 %v4525, %v4546
    %v4551 = vmul.f32 %v4527, %v4547
    %4552 = vst [vmem:[%s3907] sm:$0xff] %v4548
    %4553 = vst [vmem:[%s3907 + $0x8] sm:$0xff] %v4549
    %4554 = vst [vmem:[%s3907 + $0x10] sm:$0xff] %v4550
    %4555 = vst [vmem:[%s3907 + $0x18] sm:$0xff] %v4551
    %4556 = vst [vmem:[%s4451] sm:$0xff] %v4540
    %4557 = vst [vmem:[%s4451 + $0x8] sm:$0xff] %v4541
    %4558 = vst [vmem:[%s4451 + $0x10] sm:$0xff] %v4542
    %4559 = vst [vmem:[%s4451 + $0x18] sm:$0xff] %v4543
    %s4560 = scalar_lea.vmem [#allocation5], 32
    %v4561 = vld [vmem:[%s4560] sm:$0xff]
    %v4562 = vld [vmem:[%s4560 + $0x8] sm:$0xff]
    %v4563 = vld [vmem:[%s4560 + $0x10] sm:$0xff]
    %v4564 = vld [vmem:[%s4560 + $0x18] sm:$0xff]
    %v4565 = vadd.f32 %v4561, %v4548
    %v4566 = vadd.f32 %v4562, %v4549
    %v4567 = vadd.f32 %v4563, %v4550
    %v4568 = vadd.f32 %v4564, %v4551
    %4569 = vst [vmem:[%s4560] sm:$0xff] %v4565
    %4570 = vst [vmem:[%s4560 + $0x8] sm:$0xff] %v4566
    %4571 = vst [vmem:[%s4560 + $0x10] sm:$0xff] %v4567
    %4572 = vst [vmem:[%s4560 + $0x18] sm:$0xff] %v4568
    %s4573 = scalar_lea.vmem [#allocation6], 32
    %v4574 = vld [vmem:[%s4573] sm:$0xff]
    %v4575 = vld [vmem:[%s4573 + $0x8] sm:$0xff]
    %v4576 = vld [vmem:[%s4573 + $0x10] sm:$0xff]
    %v4577 = vld [vmem:[%s4573 + $0x18] sm:$0xff]
    %v4578 = vadd.f32 %v4574, %v4540
    %v4579 = vadd.f32 %v4575, %v4541
    %v4580 = vadd.f32 %v4576, %v4542
    %v4581 = vadd.f32 %v4577, %v4543
    %4582 = vst [vmem:[%s4573] sm:$0xff] %v4578
    %4583 = vst [vmem:[%s4573 + $0x8] sm:$0xff] %v4579
    %4584 = vst [vmem:[%s4573 + $0x10] sm:$0xff] %v4580
    %4585 = vst [vmem:[%s4573 + $0x18] sm:$0xff] %v4581
  $region70: #{weather_model_forward.1} parent=0 // loop_footer
    %s119 = sadd.s32 1, %s115
  $region71: #{weather_model_forward.1} parent=0 // loop_footer_branch
    %114 = sbr.rel target = $region67
  $region72: #{weather_model_forward.1} parent=0 // loop_exit
    _
  %s4586 = scalar_lea.vmem [#allocation5], 32
  %v4587 = vld [vmem:[%s4586] sm:$0xff]
  %v4588 = vld [vmem:[%s4586 + $0x8] sm:$0xff]
  %v4589 = vld [vmem:[%s4586 + $0x10] sm:$0xff]
  %v4590 = vld [vmem:[%s4586 + $0x18] sm:$0xff]
  %4591 = vst [vmem:[#allocation3] sm:$0xff] %v4587
  %4592 = vst [vmem:[#allocation3 + $0x8] sm:$0xff] %v4588
  %4593 = vst [vmem:[#allocation3 + $0x10] sm:$0xff] %v4589
  %4594 = vst [vmem:[#allocation3 + $0x18] sm:$0xff] %v4590
  %s4595 = scalar_lea.vmem [#allocation6], 32
  %v4596 = vld [vmem:[%s4595] sm:$0xff]
  %v4597 = vld [vmem:[%s4595 + $0x8] sm:$0xff]
  %v4598 = vld [vmem:[%s4595 + $0x10] sm:$0xff]
  %v4599 = vld [vmem:[%s4595 + $0x18] sm:$0xff]
  %4600 = vst [vmem:[#allocation4] sm:$0xff] %v4596
  %4601 = vst [vmem:[#allocation4 + $0x8] sm:$0xff] %v4597
  %4602 = vst [vmem:[#allocation4 + $0x10] sm:$0xff] %v4598
  %4603 = vst [vmem:[#allocation4 + $0x18] sm:$0xff] %v4599
  %v4604 = vld [vmem:[#allocation5] sm:$0xff]
  %v4605 = vld [vmem:[#allocation5 + $0x8] sm:$0xff]
  %v4606 = vld [vmem:[#allocation5 + $0x10] sm:$0xff]
  %v4607 = vld [vmem:[#allocation5 + $0x18] sm:$0xff]
  %s4608 = scalar_lea.vmem [#allocation3], 32
  %4609 = vst [vmem:[%s4608] sm:$0xff] %v4604
  %4610 = vst [vmem:[%s4608 + $0x8] sm:$0xff] %v4605
  %4611 = vst [vmem:[%s4608 + $0x10] sm:$0xff] %v4606
  %4612 = vst [vmem:[%s4608 + $0x18] sm:$0xff] %v4607
  %v4613 = vld [vmem:[#allocation6] sm:$0xff]
  %v4614 = vld [vmem:[#allocation6 + $0x8] sm:$0xff]
  %v4615 = vld [vmem:[#allocation6 + $0x10] sm:$0xff]
  %v4616 = vld [vmem:[#allocation6 + $0x18] sm:$0xff]
  %s4617 = scalar_lea.vmem [#allocation4], 32
  %4618 = vst [vmem:[%s4617] sm:$0xff] %v4613
  %4619 = vst [vmem:[%s4617 + $0x8] sm:$0xff] %v4614
  %4620 = vst [vmem:[%s4617 + $0x10] sm:$0xff] %v4615
  %4621 = vst [vmem:[%s4617 + $0x18] sm:$0xff] %v4616
  %s4622 = scalar_lea.vmem %s0, 3
  %v4623 = vld [vmem:[%s4622] ss:$4 sm:$0xf]
  %v4624 = vlaneseq
  %vm4625 = vcmp.ge.s32.totalorder %v4624, 0
  %vm4626 = vcmp.lt.s32.totalorder %v4624, 512
  %vm4627 = vmand %vm4625, %vm4626
  %4628 = vst.msk [vmem:[#allocation7] sm:$0xf] %vm4627, %v4623
  loop: start=0, step=1, limit=2
  $region73: #{weather_model_forward.1} parent=0 // loop_pre_header
    _
  $region74: #{weather_model_forward.1} parent=0 // loop_header
    %s4630 = sphi 0, %s4634
    %p4631 = scmp.ge.s32.totalorder %s4630, 2
  $region75: #{weather_model_forward.1} parent=0 // loop_header_branch
    %4633 = sbr.rel (%p4631) target = $region79
  $region76: #{weather_model_forward.1} parent=0 // loop_body
    %v4635 = vld [vmem:[#allocation7] sm:$0xf]
    %v4636 = vld [vmem:[%s3] ss:$8 sm:$0xf]
    %v4638 = vlaneseq
    %v4639 = vshrl.u32 %v4638, 7
    %v4640 = vsub.s32 0, %v4639
    %v4641 = vrot.slane %v4635, %v4640
    %v4642 = vlaneseq
    %v4643 = vshrl.u32 %v4642, 7
    %v4644 = vsub.s32 1, %v4643
    %v4645 = vrot.slane %v4635, %v4644
    %v4646 = vlaneseq
    %v4647 = vshrl.u32 %v4646, 7
    %v4648 = vsub.s32 2, %v4647
    %v4649 = vrot.slane %v4635, %v4648
    %v4650 = vlaneseq
    %v4651 = vshrl.u32 %v4650, 7
    %v4652 = vsub.s32 3, %v4651
    %v4653 = vrot.slane %v4635, %v4652
    %4658 = vrot.lane.b32.xlu0 %v4641, 17
    %v4659 = vpop.permute.xlu0 %4658
    %4660 = vrot.lane.b32.xlu0 %v4645, 17
    %v4661 = vpop.permute.xlu0 %4660
    %4662 = vrot.lane.b32.xlu0 %v4649, 17
    %v4663 = vpop.permute.xlu0 %4662
    %4664 = vrot.lane.b32.xlu0 %v4653, 17
    %v4665 = vpop.permute.xlu0 %4664
    %v4666 = vlaneseq
    %v4667 = vand.u32 %v4666, 127
    %vm4668 = vcmp.lt.s32.totalorder %v4667, 17
    %v4669 = vsel %vm4668, %v4663, %v4665
    %v4670 = vsel %vm4668, %v4661, %v4663
    %v4671 = vsel %vm4668, %v4659, %v4661
    %v4672 = vsel %vm4668, %v4665, %v4659
    %v4674 = vlaneseq
    %v4675 = vshrl.u32 %v4674, 7
    %v4676 = vsub.s32 0, %v4675
    %v4677 = vrot.slane %v4636, %v4676
    %v4678 = vlaneseq
    %v4679 = vshrl.u32 %v4678, 7
    %v4680 = vsub.s32 1, %v4679
    %v4681 = vrot.slane %v4636, %v4680
    %v4682 = vlaneseq
    %v4683 = vshrl.u32 %v4682, 7
    %v4684 = vsub.s32 2, %v4683
    %v4685 = vrot.slane %v4636, %v4684
    %v4686 = vlaneseq
    %v4687 = vshrl.u32 %v4686, 7
    %v4688 = vsub.s32 3, %v4687
    %v4689 = vrot.slane %v4636, %v4688
    %v4694 = vmul.f32 %v4672, %v4677
    %v4695 = vmul.f32 %v4671, %v4681
    %v4696 = vmul.f32 %v4670, %v4685
    %v4697 = vmul.f32 %v4669, %v4689
    %v4698 = vpack.c.bf16 %v4694, %v4694
    %v4699 = vpack.c.bf16 %v4695, %v4695
    %v4700 = vpack.c.bf16 %v4696, %v4696
    %v4701 = vpack.c.bf16 %v4697, %v4697
    %s4702 = scalar_lea.vmem %s3, 1
    %v4703 = vld [vmem:[%s4702] ss:$8 sm:$0xf]
    %4704 = vrot.lane.b32.xlu0 %v4641, 16
    %v4705 = vpop.permute.xlu0 %4704
    %4706 = vrot.lane.b32.xlu0 %v4645, 16
    %v4707 = vpop.permute.xlu0 %4706
    %4708 = vrot.lane.b32.xlu0 %v4649, 16
    %v4709 = vpop.permute.xlu0 %4708
    %4710 = vrot.lane.b32.xlu0 %v4653, 16
    %v4711 = vpop.permute.xlu0 %4710
    %vm4712 = vcmp.lt.s32.totalorder %v4667, 16
    %v4713 = vsel %vm4712, %v4709, %v4711
    %v4714 = vsel %vm4712, %v4707, %v4709
    %v4715 = vsel %vm4712, %v4705, %v4707
    %v4716 = vsel %vm4712, %v4711, %v4705
    %v4718 = vlaneseq
    %v4719 = vshrl.u32 %v4718, 7
    %v4720 = vsub.s32 0, %v4719
    %v4721 = vrot.slane %v4703, %v4720
    %v4722 = vlaneseq
    %v4723 = vshrl.u32 %v4722, 7
    %v4724 = vsub.s32 1, %v4723
    %v4725 = vrot.slane %v4703, %v4724
    %v4726 = vlaneseq
    %v4727 = vshrl.u32 %v4726, 7
    %v4728 = vsub.s32 2, %v4727
    %v4729 = vrot.slane %v4703, %v4728
    %v4730 = vlaneseq
    %v4731 = vshrl.u32 %v4730, 7
    %v4732 = vsub.s32 3, %v4731
    %v4733 = vrot.slane %v4703, %v4732
    %v4738 = vmul.f32 %v4716, %v4721
    %v4739 = vmul.f32 %v4715, %v4725
    %v4740 = vmul.f32 %v4714, %v4729
    %v4741 = vmul.f32 %v4713, %v4733
    %v4742 = vpack.c.bf16 %v4738, %v4738
    %v4743 = vpack.c.bf16 %v4739, %v4739
    %v4744 = vpack.c.bf16 %v4740, %v4740
    %v4745 = vpack.c.bf16 %v4741, %v4741
    %s4746 = scalar_lea.vmem %s3, 2
    %v4747 = vld [vmem:[%s4746] ss:$8 sm:$0xf]
    %4748 = vrot.lane.b32.xlu0 %v4641, 15
    %v4749 = vpop.permute.xlu0 %4748
    %4750 = vrot.lane.b32.xlu0 %v4645, 15
    %v4751 = vpop.permute.xlu0 %4750
    %4752 = vrot.lane.b32.xlu0 %v4649, 15
    %v4753 = vpop.permute.xlu0 %4752
    %4754 = vrot.lane.b32.xlu0 %v4653, 15
    %v4755 = vpop.permute.xlu0 %4754
    %vm4756 = vcmp.lt.s32.totalorder %v4667, 15
    %v4757 = vsel %vm4756, %v4753, %v4755
    %v4758 = vsel %vm4756, %v4751, %v4753
    %v4759 = vsel %vm4756, %v4749, %v4751
    %v4760 = vsel %vm4756, %v4755, %v4749
    %v4762 = vlaneseq
    %v4763 = vshrl.u32 %v4762, 7
    %v4764 = vsub.s32 0, %v4763
    %v4765 = vrot.slane %v4747, %v4764
    %v4766 = vlaneseq
    %v4767 = vshrl.u32 %v4766, 7
    %v4768 = vsub.s32 1, %v4767
    %v4769 = vrot.slane %v4747, %v4768
    %v4770 = vlaneseq
    %v4771 = vshrl.u32 %v4770, 7
    %v4772 = vsub.s32 2, %v4771
    %v4773 = vrot.slane %v4747, %v4772
    %v4774 = vlaneseq
    %v4775 = vshrl.u32 %v4774, 7
    %v4776 = vsub.s32 3, %v4775
    %v4777 = vrot.slane %v4747, %v4776
    %v4782 = vmul.f32 %v4760, %v4765
    %v4783 = vmul.f32 %v4759, %v4769
    %v4784 = vmul.f32 %v4758, %v4773
    %v4785 = vmul.f32 %v4757, %v4777
    %v4786 = vpack.c.bf16 %v4782, %v4782
    %v4787 = vpack.c.bf16 %v4783, %v4783
    %v4788 = vpack.c.bf16 %v4784, %v4784
    %v4789 = vpack.c.bf16 %v4785, %v4785
    %s4790 = scalar_lea.vmem %s3, 3
    %v4791 = vld [vmem:[%s4790] ss:$8 sm:$0xf]
    %4792 = vrot.lane.b32.xlu0 %v4641, 1
    %v4793 = vpop.permute.xlu0 %4792
    %4794 = vrot.lane.b32.xlu0 %v4645, 1
    %v4795 = vpop.permute.xlu0 %4794
    %4796 = vrot.lane.b32.xlu0 %v4649, 1
    %v4797 = vpop.permute.xlu0 %4796
    %4798 = vrot.lane.b32.xlu0 %v4653, 1
    %v4799 = vpop.permute.xlu0 %4798
    %vm4800 = vcmp.lt.s32.totalorder %v4667, 1
    %v4801 = vsel %vm4800, %v4797, %v4799
    %v4802 = vsel %vm4800, %v4795, %v4797
    %v4803 = vsel %vm4800, %v4793, %v4795
    %v4804 = vsel %vm4800, %v4799, %v4793
    %v4806 = vlaneseq
    %v4807 = vshrl.u32 %v4806, 7
    %v4808 = vsub.s32 0, %v4807
    %v4809 = vrot.slane %v4791, %v4808
    %v4810 = vlaneseq
    %v4811 = vshrl.u32 %v4810, 7
    %v4812 = vsub.s32 1, %v4811
    %v4813 = vrot.slane %v4791, %v4812
    %v4814 = vlaneseq
    %v4815 = vshrl.u32 %v4814, 7
    %v4816 = vsub.s32 2, %v4815
    %v4817 = vrot.slane %v4791, %v4816
    %v4818 = vlaneseq
    %v4819 = vshrl.u32 %v4818, 7
    %v4820 = vsub.s32 3, %v4819
    %v4821 = vrot.slane %v4791, %v4820
    %v4826 = vmul.f32 %v4804, %v4809
    %v4827 = vmul.f32 %v4803, %v4813
    %v4828 = vmul.f32 %v4802, %v4817
    %v4829 = vmul.f32 %v4801, %v4821
    %v4830 = vpack.c.bf16 %v4826, %v4826
    %v4831 = vpack.c.bf16 %v4827, %v4827
    %v4832 = vpack.c.bf16 %v4828, %v4828
    %v4833 = vpack.c.bf16 %v4829, %v4829
    %v4834 = vpack.c.bf16 %v4641, %v4641
    %v4835 = vpack.c.bf16 %v4645, %v4645
    %v4836 = vpack.c.bf16 %v4649, %v4649
    %v4837 = vpack.c.bf16 %v4653, %v4653
    %s4838 = scalar_lea.vmem %s3, 5
    %v4839 = vld [vmem:[%s4838] ss:$8 sm:$0xf]
    %4840 = vrot.lane.b32.xlu0 %v4641, 127
    %v4841 = vpop.permute.xlu0 %4840
    %4842 = vrot.lane.b32.xlu0 %v4645, 127
    %v4843 = vpop.permute.xlu0 %4842
    %4844 = vrot.lane.b32.xlu0 %v4649, 127
    %v4845 = vpop.permute.xlu0 %4844
    %4846 = vrot.lane.b32.xlu0 %v4653, 127
    %v4847 = vpop.permute.xlu0 %4846
    %vm4848 = vcmp.lt.s32.totalorder %v4667, 127
    %v4849 = vsel %vm4848, %v4845, %v4847
    %v4850 = vsel %vm4848, %v4843, %v4845
    %v4851 = vsel %vm4848, %v4841, %v4843
    %v4852 = vsel %vm4848, %v4847, %v4841
    %v4854 = vlaneseq
    %v4855 = vshrl.u32 %v4854, 7
    %v4856 = vsub.s32 0, %v4855
    %v4857 = vrot.slane %v4839, %v4856
    %v4858 = vlaneseq
    %v4859 = vshrl.u32 %v4858, 7
    %v4860 = vsub.s32 1, %v4859
    %v4861 = vrot.slane %v4839, %v4860
    %v4862 = vlaneseq
    %v4863 = vshrl.u32 %v4862, 7
    %v4864 = vsub.s32 2, %v4863
    %v4865 = vrot.slane %v4839, %v4864
    %v4866 = vlaneseq
    %v4867 = vshrl.u32 %v4866, 7
    %v4868 = vsub.s32 3, %v4867
    %v4869 = vrot.slane %v4839, %v4868
    %v4874 = vmul.f32 %v4851, %v4857
    %v4875 = vmul.f32 %v4850, %v4861
    %v4876 = vmul.f32 %v4849, %v4865
    %v4877 = vmul.f32 %v4852, %v4869
    %v4878 = vpack.c.bf16 %v4874, %v4874
    %v4879 = vpack.c.bf16 %v4875, %v4875
    %v4880 = vpack.c.bf16 %v4876, %v4876
    %v4881 = vpack.c.bf16 %v4877, %v4877
    %s4882 = scalar_lea.vmem %s3, 6
    %v4883 = vld [vmem:[%s4882] ss:$8 sm:$0xf]
    %4884 = vrot.lane.b32.xlu0 %v4641, 113
    %v4885 = vpop.permute.xlu0 %4884
    %4886 = vrot.lane.b32.xlu0 %v4645, 113
    %v4887 = vpop.permute.xlu0 %4886
    %4888 = vrot.lane.b32.xlu0 %v4649, 113
    %v4889 = vpop.permute.xlu0 %4888
    %4890 = vrot.lane.b32.xlu0 %v4653, 113
    %v4891 = vpop.permute.xlu0 %4890
    %vm4892 = vcmp.lt.s32.totalorder %v4667, 113
    %v4893 = vsel %vm4892, %v4889, %v4891
    %v4894 = vsel %vm4892, %v4887, %v4889
    %v4895 = vsel %vm4892, %v4885, %v4887
    %v4896 = vsel %vm4892, %v4891, %v4885
    %v4898 = vlaneseq
    %v4899 = vshrl.u32 %v4898, 7
    %v4900 = vsub.s32 0, %v4899
    %v4901 = vrot.slane %v4883, %v4900
    %v4902 = vlaneseq
    %v4903 = vshrl.u32 %v4902, 7
    %v4904 = vsub.s32 1, %v4903
    %v4905 = vrot.slane %v4883, %v4904
    %v4906 = vlaneseq
    %v4907 = vshrl.u32 %v4906, 7
    %v4908 = vsub.s32 2, %v4907
    %v4909 = vrot.slane %v4883, %v4908
    %v4910 = vlaneseq
    %v4911 = vshrl.u32 %v4910, 7
    %v4912 = vsub.s32 3, %v4911
    %v4913 = vrot.slane %v4883, %v4912
    %v4918 = vmul.f32 %v4895, %v4901
    %v4919 = vmul.f32 %v4894, %v4905
    %v4920 = vmul.f32 %v4893, %v4909
    %v4921 = vmul.f32 %v4896, %v4913
    %v4922 = vpack.c.bf16 %v4918, %v4918
    %v4923 = vpack.c.bf16 %v4919, %v4919
    %v4924 = vpack.c.bf16 %v4920, %v4920
    %v4925 = vpack.c.bf16 %v4921, %v4921
    %s4926 = scalar_lea.vmem %s3, 7
    %v4927 = vld [vmem:[%s4926] ss:$8 sm:$0xf]
    %4928 = vrot.lane.b32.xlu0 %v4641, 112
    %v4929 = vpop.permute.xlu0 %4928
    %4930 = vrot.lane.b32.xlu0 %v4645, 112
    %v4931 = vpop.permute.xlu0 %4930
    %4932 = vrot.lane.b32.xlu0 %v4649, 112
    %v4933 = vpop.permute.xlu0 %4932
    %4934 = vrot.lane.b32.xlu0 %v4653, 112
    %v4935 = vpop.permute.xlu0 %4934
    %vm4936 = vcmp.lt.s32.totalorder %v4667, 112
    %v4937 = vsel %vm4936, %v4933, %v4935
    %v4938 = vsel %vm4936, %v4931, %v4933
    %v4939 = vsel %vm4936, %v4929, %v4931
    %v4940 = vsel %vm4936, %v4935, %v4929
    %v4942 = vlaneseq
    %v4943 = vshrl.u32 %v4942, 7
    %v4944 = vsub.s32 0, %v4943
    %v4945 = vrot.slane %v4927, %v4944
    %v4946 = vlaneseq
    %v4947 = vshrl.u32 %v4946, 7
    %v4948 = vsub.s32 1, %v4947
    %v4949 = vrot.slane %v4927, %v4948
    %v4950 = vlaneseq
    %v4951 = vshrl.u32 %v4950, 7
    %v4952 = vsub.s32 2, %v4951
    %v4953 = vrot.slane %v4927, %v4952
    %v4954 = vlaneseq
    %v4955 = vshrl.u32 %v4954, 7
    %v4956 = vsub.s32 3, %v4955
    %v4957 = vrot.slane %v4927, %v4956
    %v4962 = vmul.f32 %v4939, %v4945
    %v4963 = vmul.f32 %v4938, %v4949
    %v4964 = vmul.f32 %v4937, %v4953
    %v4965 = vmul.f32 %v4940, %v4957
    %v4966 = vpack.c.bf16 %v4962, %v4962
    %v4967 = vpack.c.bf16 %v4963, %v4963
    %v4968 = vpack.c.bf16 %v4964, %v4964
    %v4969 = vpack.c.bf16 %v4965, %v4965
    %s4970 = scalar_lea.vmem %s3, 32
    %v4971 = vld [vmem:[%s4970] ss:$8 sm:$0xf]
    %4972 = vrot.lane.b32.xlu0 %v4641, 111
    %v4973 = vpop.permute.xlu0 %4972
    %4974 = vrot.lane.b32.xlu0 %v4645, 111
    %v4975 = vpop.permute.xlu0 %4974
    %4976 = vrot.lane.b32.xlu0 %v4649, 111
    %v4977 = vpop.permute.xlu0 %4976
    %4978 = vrot.lane.b32.xlu0 %v4653, 111
    %v4979 = vpop.permute.xlu0 %4978
    %vm4980 = vcmp.lt.s32.totalorder %v4667, 111
    %v4981 = vsel %vm4980, %v4977, %v4979
    %v4982 = vsel %vm4980, %v4975, %v4977
    %v4983 = vsel %vm4980, %v4973, %v4975
    %v4984 = vsel %vm4980, %v4979, %v4973
    %v4986 = vlaneseq
    %v4987 = vshrl.u32 %v4986, 7
    %v4988 = vsub.s32 0, %v4987
    %v4989 = vrot.slane %v4971, %v4988
    %v4990 = vlaneseq
    %v4991 = vshrl.u32 %v4990, 7
    %v4992 = vsub.s32 1, %v4991
    %v4993 = vrot.slane %v4971, %v4992
    %v4994 = vlaneseq
    %v4995 = vshrl.u32 %v4994, 7
    %v4996 = vsub.s32 2, %v4995
    %v4997 = vrot.slane %v4971, %v4996
    %v4998 = vlaneseq
    %v4999 = vshrl.u32 %v4998, 7
    %v5000 = vsub.s32 3, %v4999
    %v5001 = vrot.slane %v4971, %v5000
    %v5006 = vmul.f32 %v4983, %v4989
    %v5007 = vmul.f32 %v4982, %v4993
    %v5008 = vmul.f32 %v4981, %v4997
    %v5009 = vmul.f32 %v4984, %v5001
    %v5010 = vpack.c.bf16 %v5006, %v5006
    %v5011 = vpack.c.bf16 %v5007, %v5007
    %v5012 = vpack.c.bf16 %v5008, %v5008
    %v5013 = vpack.c.bf16 %v5009, %v5009
    %v5014 = vld [vmem:[#allocation3] sm:$0xff]
    %v5015 = vld [vmem:[#allocation3 + $0x8] sm:$0xff]
    %v5016 = vld [vmem:[#allocation3 + $0x10] sm:$0xff]
    %v5017 = vld [vmem:[#allocation3 + $0x18] sm:$0xff]
    %5018 = vrot.lane.b32.xlu0 %v5014, 17
    %v5019 = vpop.permute.xlu0 %5018
    %5020 = vrot.lane.b32.xlu0 %v5015, 17
    %v5021 = vpop.permute.xlu0 %5020
    %5022 = vrot.lane.b32.xlu0 %v5016, 17
    %v5023 = vpop.permute.xlu0 %5022
    %5024 = vrot.lane.b32.xlu0 %v5017, 17
    %v5025 = vpop.permute.xlu0 %5024
    %v5026 = vsel %vm4668, %v5023, %v5025
    %v5027 = vsel %vm4668, %v5021, %v5023
    %v5028 = vsel %vm4668, %v5019, %v5021
    %v5029 = vsel %vm4668, %v5025, %v5019
    %v5030 = vmul.f32 %v5029, %v4677
    %v5031 = vmul.f32 %v5028, %v4681
    %v5032 = vmul.f32 %v5027, %v4685
    %v5033 = vmul.f32 %v5026, %v4689
    %v5034 = vpack.c.bf16 %v5030, %v5030
    %v5035 = vpack.c.bf16 %v5031, %v5031
    %v5036 = vpack.c.bf16 %v5032, %v5032
    %v5037 = vpack.c.bf16 %v5033, %v5033
    %5038 = vrot.lane.b32.xlu0 %v5014, 16
    %v5039 = vpop.permute.xlu0 %5038
    %5040 = vrot.lane.b32.xlu0 %v5015, 16
    %v5041 = vpop.permute.xlu0 %5040
    %5042 = vrot.lane.b32.xlu0 %v5016, 16
    %v5043 = vpop.permute.xlu0 %5042
    %5044 = vrot.lane.b32.xlu0 %v5017, 16
    %v5045 = vpop.permute.xlu0 %5044
    %v5046 = vsel %vm4712, %v5043, %v5045
    %v5047 = vsel %vm4712, %v5041, %v5043
    %v5048 = vsel %vm4712, %v5039, %v5041
    %v5049 = vsel %vm4712, %v5045, %v5039
    %v5050 = vmul.f32 %v5049, %v4721
    %v5051 = vmul.f32 %v5048, %v4725
    %v5052 = vmul.f32 %v5047, %v4729
    %v5053 = vmul.f32 %v5046, %v4733
    %v5054 = vpack.c.bf16 %v5050, %v5050
    %v5055 = vpack.c.bf16 %v5051, %v5051
    %v5056 = vpack.c.bf16 %v5052, %v5052
    %v5057 = vpack.c.bf16 %v5053, %v5053
    %5058 = vrot.lane.b32.xlu0 %v5014, 15
    %v5059 = vpop.permute.xlu0 %5058
    %5060 = vrot.lane.b32.xlu0 %v5015, 15
    %v5061 = vpop.permute.xlu0 %5060
    %5062 = vrot.lane.b32.xlu0 %v5016, 15
    %v5063 = vpop.permute.xlu0 %5062
    %5064 = vrot.lane.b32.xlu0 %v5017, 15
    %v5065 = vpop.permute.xlu0 %5064
    %v5066 = vsel %vm4756, %v5063, %v5065
    %v5067 = vsel %vm4756, %v5061, %v5063
    %v5068 = vsel %vm4756, %v5059, %v5061
    %v5069 = vsel %vm4756, %v5065, %v5059
    %v5070 = vmul.f32 %v5069, %v4765
    %v5071 = vmul.f32 %v5068, %v4769
    %v5072 = vmul.f32 %v5067, %v4773
    %v5073 = vmul.f32 %v5066, %v4777
    %v5074 = vpack.c.bf16 %v5070, %v5070
    %v5075 = vpack.c.bf16 %v5071, %v5071
    %v5076 = vpack.c.bf16 %v5072, %v5072
    %v5077 = vpack.c.bf16 %v5073, %v5073
    %5078 = vrot.lane.b32.xlu0 %v5014, 1
    %v5079 = vpop.permute.xlu0 %5078
    %5080 = vrot.lane.b32.xlu0 %v5015, 1
    %v5081 = vpop.permute.xlu0 %5080
    %5082 = vrot.lane.b32.xlu0 %v5016, 1
    %v5083 = vpop.permute.xlu0 %5082
    %5084 = vrot.lane.b32.xlu0 %v5017, 1
    %v5085 = vpop.permute.xlu0 %5084
    %v5086 = vsel %vm4800, %v5083, %v5085
    %v5087 = vsel %vm4800, %v5081, %v5083
    %v5088 = vsel %vm4800, %v5079, %v5081
    %v5089 = vsel %vm4800, %v5085, %v5079
    %v5090 = vmul.f32 %v5089, %v4809
    %v5091 = vmul.f32 %v5088, %v4813
    %v5092 = vmul.f32 %v5087, %v4817
    %v5093 = vmul.f32 %v5086, %v4821
    %v5094 = vpack.c.bf16 %v5090, %v5090
    %v5095 = vpack.c.bf16 %v5091, %v5091
    %v5096 = vpack.c.bf16 %v5092, %v5092
    %v5097 = vpack.c.bf16 %v5093, %v5093
    %v5098 = vpack.c.bf16 %v5014, %v5014
    %v5099 = vpack.c.bf16 %v5015, %v5015
    %v5100 = vpack.c.bf16 %v5016, %v5016
    %v5101 = vpack.c.bf16 %v5017, %v5017
    %5102 = vrot.lane.b32.xlu0 %v5014, 127
    %v5103 = vpop.permute.xlu0 %5102
    %5104 = vrot.lane.b32.xlu0 %v5015, 127
    %v5105 = vpop.permute.xlu0 %5104
    %5106 = vrot.lane.b32.xlu0 %v5016, 127
    %v5107 = vpop.permute.xlu0 %5106
    %5108 = vrot.lane.b32.xlu0 %v5017, 127
    %v5109 = vpop.permute.xlu0 %5108
    %v5110 = vsel %vm4848, %v5107, %v5109
    %v5111 = vsel %vm4848, %v5105, %v5107
    %v5112 = vsel %vm4848, %v5103, %v5105
    %v5113 = vsel %vm4848, %v5109, %v5103
    %v5114 = vmul.f32 %v5112, %v4857
    %v5115 = vmul.f32 %v5111, %v4861
    %v5116 = vmul.f32 %v5110, %v4865
    %v5117 = vmul.f32 %v5113, %v4869
    %v5118 = vpack.c.bf16 %v5114, %v5114
    %v5119 = vpack.c.bf16 %v5115, %v5115
    %v5120 = vpack.c.bf16 %v5116, %v5116
    %v5121 = vpack.c.bf16 %v5117, %v5117
    %5122 = vrot.lane.b32.xlu0 %v5014, 113
    %v5123 = vpop.permute.xlu0 %5122
    %5124 = vrot.lane.b32.xlu0 %v5015, 113
    %v5125 = vpop.permute.xlu0 %5124
    %5126 = vrot.lane.b32.xlu0 %v5016, 113
    %v5127 = vpop.permute.xlu0 %5126
    %5128 = vrot.lane.b32.xlu0 %v5017, 113
    %v5129 = vpop.permute.xlu0 %5128
    %v5130 = vsel %vm4892, %v5127, %v5129
    %v5131 = vsel %vm4892, %v5125, %v5127
    %v5132 = vsel %vm4892, %v5123, %v5125
    %v5133 = vsel %vm4892, %v5129, %v5123
    %v5134 = vmul.f32 %v5132, %v4901
    %v5135 = vmul.f32 %v5131, %v4905
    %v5136 = vmul.f32 %v5130, %v4909
    %v5137 = vmul.f32 %v5133, %v4913
    %v5138 = vpack.c.bf16 %v5134, %v5134
    %v5139 = vpack.c.bf16 %v5135, %v5135
    %v5140 = vpack.c.bf16 %v5136, %v5136
    %v5141 = vpack.c.bf16 %v5137, %v5137
    %5142 = vrot.lane.b32.xlu0 %v5014, 112
    %v5143 = vpop.permute.xlu0 %5142
    %5144 = vrot.lane.b32.xlu0 %v5015, 112
    %v5145 = vpop.permute.xlu0 %5144
    %5146 = vrot.lane.b32.xlu0 %v5016, 112
    %v5147 = vpop.permute.xlu0 %5146
    %5148 = vrot.lane.b32.xlu0 %v5017, 112
    %v5149 = vpop.permute.xlu0 %5148
    %v5150 = vsel %vm4936, %v5147, %v5149
    %v5151 = vsel %vm4936, %v5145, %v5147
    %v5152 = vsel %vm4936, %v5143, %v5145
    %v5153 = vsel %vm4936, %v5149, %v5143
    %v5154 = vmul.f32 %v5152, %v4945
    %v5155 = vmul.f32 %v5151, %v4949
    %v5156 = vmul.f32 %v5150, %v4953
    %v5157 = vmul.f32 %v5153, %v4957
    %v5158 = vpack.c.bf16 %v5154, %v5154
    %v5159 = vpack.c.bf16 %v5155, %v5155
    %v5160 = vpack.c.bf16 %v5156, %v5156
    %v5161 = vpack.c.bf16 %v5157, %v5157
    %5162 = vrot.lane.b32.xlu0 %v5014, 111
    %v5163 = vpop.permute.xlu0 %5162
    %5164 = vrot.lane.b32.xlu0 %v5015, 111
    %v5165 = vpop.permute.xlu0 %5164
    %5166 = vrot.lane.b32.xlu0 %v5016, 111
    %v5167 = vpop.permute.xlu0 %5166
    %5168 = vrot.lane.b32.xlu0 %v5017, 111
    %v5169 = vpop.permute.xlu0 %5168
    %v5170 = vsel %vm4980, %v5167, %v5169
    %v5171 = vsel %vm4980, %v5165, %v5167
    %v5172 = vsel %vm4980, %v5163, %v5165
    %v5173 = vsel %vm4980, %v5169, %v5163
    %v5174 = vmul.f32 %v5172, %v4989
    %v5175 = vmul.f32 %v5171, %v4993
    %v5176 = vmul.f32 %v5170, %v4997
    %v5177 = vmul.f32 %v5173, %v5001
    %v5178 = vpack.c.bf16 %v5174, %v5174
    %v5179 = vpack.c.bf16 %v5175, %v5175
    %v5180 = vpack.c.bf16 %v5176, %v5176
    %v5181 = vpack.c.bf16 %v5177, %v5177
    %v5183 = vshll.u32 %v4742, 16
    %v5186 = vshll.u32 %v4743, 16
    %v5189 = vshll.u32 %v4744, 16
    %v5192 = vshll.u32 %v4745, 16
    %v5202 = vrot.slane %v4786, 7
    %v5203 = vrot.slane %v4787, 7
    %v5204 = vrot.slane %v4788, 7
    %v5205 = vrot.slane %v4789, 7
    %v5207 = vshll.u32 %v4830, 16
    %v5209 = vrot.slane %v5207, 7
    %v5211 = vshll.u32 %v4831, 16
    %v5213 = vrot.slane %v5211, 7
    %v5215 = vshll.u32 %v4832, 16
    %v5217 = vrot.slane %v5215, 7
    %v5219 = vshll.u32 %v4833, 16
    %v5221 = vrot.slane %v5219, 7
    %v5230 = vrot.slane %v4834, 6
    %v5231 = vrot.slane %v4835, 6
    %v5232 = vrot.slane %v4836, 6
    %v5233 = vrot.slane %v4837, 6
    %v5235 = vshll.u32 %v4878, 16
    %v5237 = vrot.slane %v5235, 6
    %v5239 = vshll.u32 %v4879, 16
    %v5241 = vrot.slane %v5239, 6
    %v5243 = vshll.u32 %v4880, 16
    %v5245 = vrot.slane %v5243, 6
    %v5247 = vshll.u32 %v4881, 16
    %v5249 = vrot.slane %v5247, 6
    %v5258 = vrot.slane %v4922, 5
    %v5259 = vrot.slane %v4923, 5
    %v5260 = vrot.slane %v4924, 5
    %v5261 = vrot.slane %v4925, 5
    %v5263 = vshll.u32 %v4966, 16
    %v5265 = vrot.slane %v5263, 5
    %v5267 = vshll.u32 %v4967, 16
    %v5269 = vrot.slane %v5267, 5
    %v5271 = vshll.u32 %v4968, 16
    %v5273 = vrot.slane %v5271, 5
    %v5275 = vshll.u32 %v4969, 16
    %v5277 = vrot.slane %v5275, 5
    %v5286 = vrot.slane %v5010, 4
    %v5287 = vrot.slane %v5011, 4
    %v5288 = vrot.slane %v5012, 4
    %v5289 = vrot.slane %v5013, 4
    %v5291 = vshrl.u32 %v5034, 16
    %v5293 = vrot.slane %v5291, 3
    %v5294 = vshll.u32 %v5034, 16
    %v5296 = vrot.slane %v5294, 4
    %v5297 = vor.u32 %v5293, %v5296
    %v5299 = vshrl.u32 %v5035, 16
    %v5301 = vrot.slane %v5299, 3
    %v5302 = vshll.u32 %v5035, 16
    %v5304 = vrot.slane %v5302, 4
    %v5305 = vor.u32 %v5301, %v5304
    %v5307 = vshrl.u32 %v5036, 16
    %v5309 = vrot.slane %v5307, 3
    %v5310 = vshll.u32 %v5036, 16
    %v5312 = vrot.slane %v5310, 4
    %v5313 = vor.u32 %v5309, %v5312
    %v5315 = vshrl.u32 %v5037, 16
    %v5317 = vrot.slane %v5315, 3
    %v5318 = vshll.u32 %v5037, 16
    %v5320 = vrot.slane %v5318, 4
    %v5321 = vor.u32 %v5317, %v5320
    %v5331 = vshrl.u32 %v5054, 16
    %v5333 = vrot.slane %v5331, 7
    %v5334 = vshll.u32 %v5054, 16
    %v5336 = vor.u32 %v5333, %v5334
    %v5338 = vshrl.u32 %v5055, 16
    %v5340 = vrot.slane %v5338, 7
    %v5341 = vshll.u32 %v5055, 16
    %v5343 = vor.u32 %v5340, %v5341
    %v5345 = vshrl.u32 %v5056, 16
    %v5347 = vrot.slane %v5345, 7
    %v5348 = vshll.u32 %v5056, 16
    %v5350 = vor.u32 %v5347, %v5348
    %v5352 = vshrl.u32 %v5057, 16
    %v5354 = vrot.slane %v5352, 7
    %v5355 = vshll.u32 %v5057, 16
    %v5357 = vor.u32 %v5354, %v5355
    %v5363 = vshrl.u32 %v5074, 16
    %v5365 = vrot.slane %v5363, 3
    %v5366 = vshll.u32 %v5074, 16
    %v5368 = vrot.slane %v5366, 4
    %v5369 = vor.u32 %v5365, %v5368
    %v5371 = vshrl.u32 %v5075, 16
    %v5373 = vrot.slane %v5371, 3
    %v5374 = vshll.u32 %v5075, 16
    %v5376 = vrot.slane %v5374, 4
    %v5377 = vor.u32 %v5373, %v5376
    %v5379 = vshrl.u32 %v5076, 16
    %v5381 = vrot.slane %v5379, 3
    %v5382 = vshll.u32 %v5076, 16
    %v5384 = vrot.slane %v5382, 4
    %v5385 = vor.u32 %v5381, %v5384
    %v5387 = vshrl.u32 %v5077, 16
    %v5389 = vrot.slane %v5387, 3
    %v5390 = vshll.u32 %v5077, 16
    %v5392 = vrot.slane %v5390, 4
    %v5393 = vor.u32 %v5389, %v5392
    %v5403 = vshrl.u32 %v5094, 16
    %v5405 = vrot.slane %v5403, 7
    %v5406 = vshll.u32 %v5094, 16
    %v5408 = vor.u32 %v5405, %v5406
    %v5410 = vshrl.u32 %v5095, 16
    %v5412 = vrot.slane %v5410, 7
    %v5413 = vshll.u32 %v5095, 16
    %v5415 = vor.u32 %v5412, %v5413
    %v5417 = vshrl.u32 %v5096, 16
    %v5419 = vrot.slane %v5417, 7
    %v5420 = vshll.u32 %v5096, 16
    %v5422 = vor.u32 %v5419, %v5420
    %v5424 = vshrl.u32 %v5097, 16
    %v5426 = vrot.slane %v5424, 7
    %v5427 = vshll.u32 %v5097, 16
    %v5429 = vor.u32 %v5426, %v5427
    %v5435 = vshrl.u32 %v5098, 16
    %v5437 = vrot.slane %v5435, 3
    %v5438 = vshll.u32 %v5098, 16
    %v5440 = vrot.slane %v5438, 4
    %v5441 = vor.u32 %v5437, %v5440
    %v5443 = vshrl.u32 %v5099, 16
    %v5445 = vrot.slane %v5443, 3
    %v5446 = vshll.u32 %v5099, 16
    %v5448 = vrot.slane %v5446, 4
    %v5449 = vor.u32 %v5445, %v5448
    %v5451 = vshrl.u32 %v5100, 16
    %v5453 = vrot.slane %v5451, 3
    %v5454 = vshll.u32 %v5100, 16
    %v5456 = vrot.slane %v5454, 4
    %v5457 = vor.u32 %v5453, %v5456
    %v5459 = vshrl.u32 %v5101, 16
    %v5461 = vrot.slane %v5459, 3
    %v5462 = vshll.u32 %v5101, 16
    %v5464 = vrot.slane %v5462, 4
    %v5465 = vor.u32 %v5461, %v5464
    %v5475 = vshrl.u32 %v5118, 16
    %v5477 = vrot.slane %v5475, 7
    %v5478 = vshll.u32 %v5118, 16
    %v5480 = vor.u32 %v5477, %v5478
    %v5482 = vshrl.u32 %v5119, 16
    %v5484 = vrot.slane %v5482, 7
    %v5485 = vshll.u32 %v5119, 16
    %v5487 = vor.u32 %v5484, %v5485
    %v5489 = vshrl.u32 %v5120, 16
    %v5491 = vrot.slane %v5489, 7
    %v5492 = vshll.u32 %v5120, 16
    %v5494 = vor.u32 %v5491, %v5492
    %v5496 = vshrl.u32 %v5121, 16
    %v5498 = vrot.slane %v5496, 7
    %v5499 = vshll.u32 %v5121, 16
    %v5501 = vor.u32 %v5498, %v5499
    %v5507 = vshrl.u32 %v5138, 16
    %v5509 = vrot.slane %v5507, 3
    %v5510 = vshll.u32 %v5138, 16
    %v5512 = vrot.slane %v5510, 4
    %v5513 = vor.u32 %v5509, %v5512
    %v5515 = vshrl.u32 %v5139, 16
    %v5517 = vrot.slane %v5515, 3
    %v5518 = vshll.u32 %v5139, 16
    %v5520 = vrot.slane %v5518, 4
    %v5521 = vor.u32 %v5517, %v5520
    %v5523 = vshrl.u32 %v5140, 16
    %v5525 = vrot.slane %v5523, 3
    %v5526 = vshll.u32 %v5140, 16
    %v5528 = vrot.slane %v5526, 4
    %v5529 = vor.u32 %v5525, %v5528
    %v5531 = vshrl.u32 %v5141, 16
    %v5533 = vrot.slane %v5531, 3
    %v5534 = vshll.u32 %v5141, 16
    %v5536 = vrot.slane %v5534, 4
    %v5537 = vor.u32 %v5533, %v5536
    %vm5546 = vcmask 1040384
    %vm5547 = vsmask.f32 256
    %vm5548 = vmand %vm5546, %vm5547
    %v5549 = vsel %vm5548, %v4698, %v5183
    %v5550 = vsel %vm5548, %v4699, %v5186
    %v5551 = vsel %vm5548, %v4700, %v5189
    %v5552 = vsel %vm5548, %v4701, %v5192
    %vm5553 = vcmask 1040384
    %v5556 = vsel %vm5553, %v5549, %v5202
    %v5560 = vsel %vm5553, %v5550, %v5203
    %v5564 = vsel %vm5553, %v5551, %v5204
    %v5568 = vsel %vm5553, %v5552, %v5205
    %vm5570 = vcmask 1041408
    %vm5571 = vsmask.f32 1280
    %vm5572 = vmand %vm5570, %vm5571
    %v5573 = vsel %vm5572, %v5556, %v5209
    %v5574 = vsel %vm5572, %v5560, %v5213
    %v5575 = vsel %vm5572, %v5564, %v5217
    %v5576 = vsel %vm5572, %v5568, %v5221
    %vm5577 = vcmask 1041408
    %v5580 = vsel %vm5577, %v5573, %v5230
    %v5584 = vsel %vm5577, %v5574, %v5231
    %v5588 = vsel %vm5577, %v5575, %v5232
    %v5592 = vsel %vm5577, %v5576, %v5233
    %vm5594 = vcmask 1042432
    %vm5595 = vsmask.f32 2304
    %vm5596 = vmand %vm5594, %vm5595
    %v5597 = vsel %vm5596, %v5580, %v5237
    %v5598 = vsel %vm5596, %v5584, %v5241
    %v5599 = vsel %vm5596, %v5588, %v5245
    %v5600 = vsel %vm5596, %v5592, %v5249
    %vm5601 = vcmask 1042432
    %v5604 = vsel %vm5601, %v5597, %v5258
    %v5608 = vsel %vm5601, %v5598, %v5259
    %v5612 = vsel %vm5601, %v5599, %v5260
    %v5616 = vsel %vm5601, %v5600, %v5261
    %vm5618 = vcmask 1043456
    %vm5619 = vsmask.f32 3328
    %vm5620 = vmand %vm5618, %vm5619
    %v5621 = vsel %vm5620, %v5604, %v5265
    %v5622 = vsel %vm5620, %v5608, %v5269
    %v5623 = vsel %vm5620, %v5612, %v5273
    %v5624 = vsel %vm5620, %v5616, %v5277
    %vm5625 = vcmask 1043456
    %v5628 = vsel %vm5625, %v5621, %v5286
    %v5632 = vsel %vm5625, %v5622, %v5287
    %v5636 = vsel %vm5625, %v5623, %v5288
    %v5640 = vsel %vm5625, %v5624, %v5289
    %vm5642 = vcmask 1044480
    %vm5643 = vsmask.f32 4352
    %vm5644 = vmand %vm5642, %vm5643
    %v5645 = vsel %vm5644, %v5628, %v5297
    %v5646 = vsel %vm5644, %v5632, %v5305
    %v5647 = vsel %vm5644, %v5636, %v5313
    %v5648 = vsel %vm5644, %v5640, %v5321
    %v5649 = vsel %vm5548, %v5293, %v5336
    %v5650 = vsel %vm5548, %v5301, %v5343
    %v5651 = vsel %vm5548, %v5309, %v5350
    %v5652 = vsel %vm5548, %v5317, %v5357
    %v5653 = vsel %vm5644, %v5649, %v5369
    %v5654 = vsel %vm5644, %v5650, %v5377
    %v5655 = vsel %vm5644, %v5651, %v5385
    %v5656 = vsel %vm5644, %v5652, %v5393
    %v5657 = vsel %vm5548, %v5365, %v5408
    %v5658 = vsel %vm5548, %v5373, %v5415
    %v5659 = vsel %vm5548, %v5381, %v5422
    %v5660 = vsel %vm5548, %v5389, %v5429
    %v5661 = vsel %vm5644, %v5657, %v5441
    %v5662 = vsel %vm5644, %v5658, %v5449
    %v5663 = vsel %vm5644, %v5659, %v5457
    %v5664 = vsel %vm5644, %v5660, %v5465
    %v5665 = vsel %vm5548, %v5437, %v5480
    %v5666 = vsel %vm5548, %v5445, %v5487
    %v5667 = vsel %vm5548, %v5453, %v5494
    %v5668 = vsel %vm5548, %v5461, %v5501
    %v5669 = vsel %vm5644, %v5665, %v5513
    %v5670 = vsel %vm5644, %v5666, %v5521
    %v5671 = vsel %vm5644, %v5667, %v5529
    %v5672 = vsel %vm5644, %v5668, %v5537
    %v5677 = vrot.slane %v5178, 4
    %v5678 = vrot.slane %v5179, 4
    %v5679 = vrot.slane %v5180, 4
    %v5680 = vrot.slane %v5181, 4
    %v5683 = vsel %vm5625, %v5158, %v5677
    %v5686 = vsel %vm5625, %v5159, %v5678
    %v5689 = vsel %vm5625, %v5160, %v5679
    %v5692 = vsel %vm5625, %v5161, %v5680
    %v5693 = vshrl.u32 %v5683, 16
    %v5695 = vrot.slane %v5693, 7
    %v5696 = vshll.u32 %v5683, 16
    %v5698 = vor.u32 %v5695, %v5696
    %v5699 = vshrl.u32 %v5686, 16
    %v5701 = vrot.slane %v5699, 7
    %v5702 = vshll.u32 %v5686, 16
    %v5704 = vor.u32 %v5701, %v5702
    %v5705 = vshrl.u32 %v5689, 16
    %v5707 = vrot.slane %v5705, 7
    %v5708 = vshll.u32 %v5689, 16
    %v5710 = vor.u32 %v5707, %v5708
    %v5711 = vshrl.u32 %v5692, 16
    %v5713 = vrot.slane %v5711, 7
    %v5714 = vshll.u32 %v5692, 16
    %v5716 = vor.u32 %v5713, %v5714
    %v5721 = vsel %vm5548, %v5509, %v5698
    %v5722 = vsel %vm5548, %v5517, %v5704
    %v5723 = vsel %vm5548, %v5525, %v5710
    %v5724 = vsel %vm5548, %v5533, %v5716
    %v5725 = vld [vmem:[%s10] sm:$0xf]
    %v5726 = vld [vmem:[%s10 + $0x4] sm:$0xf]
    %v5727 = vld [vmem:[%s10 + $0x8] sm:$0xf]
    %v5728 = vld [vmem:[%s10 + $0xc] sm:$0xf]
    %v5729 = vld [vmem:[%s11] sm:$0xff]
    %v5730 = vld [vmem:[%s11 + $0x8] sm:$0xff]
    %v5731 = vld [vmem:[%s11 + $0x10] sm:$0xff]
    %v5732 = vld [vmem:[%s11 + $0x18] sm:$0xff]
    %5734 = vset.pattern.permute.xlu0 0
    %5735 = vperm.xlu0 %5734, %v5729
    %v5736 = vpop.permute.xlu0 %5735
    %5739 = vset.pattern.permute.xlu0 0
    %5740 = vperm.xlu0 %5739, %v5730
    %v5741 = vpop.permute.xlu0 %5740
    %5744 = vset.pattern.permute.xlu0 0
    %5745 = vperm.xlu0 %5744, %v5731
    %v5746 = vpop.permute.xlu0 %5745
    %5749 = vset.pattern.permute.xlu0 0
    %5750 = vperm.xlu0 %5749, %v5732
    %v5751 = vpop.permute.xlu0 %5750
    %v5757 = vunpack.c.l.b16 %v5725
    %v5758 = vunpack.c.l.b16 %v5726
    %v5759 = vunpack.c.l.b16 %v5727
    %v5760 = vunpack.c.l.b16 %v5728
    %v5761 = vpack.c.b16 %v5758, %v5757
    %v5762 = vpack.c.b16 %v5760, %v5759
    %vm5763 = vcmask 662528
    %v5765 = vsel %vm5763, %v5761, 0
    %v5768 = vsel %vm5763, %v5762, 0
    %v5770 = vsel 0, 4294967295, 65535
    %v5771 = vsel %vm5553, %v5770, 0
    %v5773 = vand.u32 %v5695, %v5771
    %v5776 = vand.u32 %v5701, %v5771
    %v5779 = vand.u32 %v5707, %v5771
    %v5782 = vand.u32 %v5713, %v5771
    %5784 = vmatprep.subr.bf16.mxu0 0
    %5785 = vmatpush1.bf16.msra.mxu0 0
    %5786 = vmatprep.subr.bf16.mxu0 0
    %5787 = vmatpush1.bf16.msra.mxu0 0
    %5788 = vmatprep.subr.bf16.mxu0 %v5776
    %5789 = vmatpush1.bf16.msra.mxu0 %v5773
    %5790 = vmatprep.subr.bf16.mxu0 %v5722
    %5791 = vmatpush1.bf16.msra.mxu0 %v5721
    %5792 = vmatprep.subr.bf16.mxu0 %v5670
    %5793 = vmatpush1.bf16.msra.mxu0 %v5669
    %5794 = vmatprep.subr.bf16.mxu0 %v5662
    %5795 = vmatpush1.bf16.msra.mxu0 %v5661
    %5796 = vmatprep.subr.bf16.mxu0 %v5654
    %5797 = vmatpush1.bf16.msra.mxu0 %v5653
    %5798 = vmatprep.subr.bf16.mxu0 %v5646
    %5799 = vmatpush1.bf16.msra.mxu0 %v5645
    %5800 = vmatprep.subr.bf16.mxu0 0
    %5801 = vmatpush2.bf16.msra.mxu0 0
    %5802 = vmatprep.subr.bf16.mxu0 0
    %5803 = vmatpush2.bf16.msra.mxu0 0
    %5804 = vmatprep.subr.bf16.mxu0 0
    %5805 = vmatpush2.bf16.msra.mxu0 0
    %5806 = vmatprep.subr.bf16.mxu0 0
    %5807 = vmatpush2.bf16.msra.mxu0 0
    %5808 = vmatprep.subr.bf16.mxu0 0
    %5809 = vmatpush2.bf16.msra.mxu0 0
    %5810 = vmatprep.subr.bf16.mxu0 0
    %5811 = vmatpush2.bf16.msra.mxu0 0
    %5812 = vmatprep.subr.bf16.mxu0 0
    %5813 = vmatpush2.bf16.msra.mxu0 0
    %5814 = vmatprep.subr.bf16.mxu0 0
    %5815 = vmatpush2.bf16.msra.mxu0 0
    %5816 = vmatprep.mubr.bf16.mxu0 0
    %5817 = vmatmul.mubr.bf16.gmra.mxu0 %v5765
    %v5818 = vpop.f32.mrf.mxu0
    %v5819 = vadd.f32 %v5736, %v5818
    %v5820 = vpop.f32.mrf.mxu0
    %v5821 = vadd.f32 %v5736, %v5820
    %v5822 = vpop.f32.mrf.mxu0
    %v5823 = vadd.f32 %v5741, %v5822
    %v5824 = vpop.f32.mrf.mxu0
    %v5825 = vadd.f32 %v5741, %v5824
    %5826 = vmatprep.mubr.bf16.mxu0 0
    %5827 = vmatmul.mubr.bf16.gmra.mxu0 %v5768
    %v5828 = vpop.f32.mrf.mxu0
    %v5829 = vadd.f32 %v5746, %v5828
    %v5830 = vpop.f32.mrf.mxu0
    %v5831 = vadd.f32 %v5746, %v5830
    %v5832 = vpop.f32.mrf.mxu0
    %v5833 = vadd.f32 %v5751, %v5832
    %v5834 = vpop.f32.mrf.mxu0
    %v5835 = vadd.f32 %v5751, %v5834
    %5836 = vdwg.mxu0
    %5837 = vmatprep.subr.bf16.mxu0 0
    %5838 = vmatpush1.bf16.msra.mxu0 0
    %5839 = vmatprep.subr.bf16.mxu0 0
    %5840 = vmatpush1.bf16.msra.mxu0 0
    %5841 = vmatprep.subr.bf16.mxu0 %v5782
    %5842 = vmatpush1.bf16.msra.mxu0 %v5779
    %5843 = vmatprep.subr.bf16.mxu0 %v5724
    %5844 = vmatpush1.bf16.msra.mxu0 %v5723
    %5845 = vmatprep.subr.bf16.mxu0 %v5672
    %5846 = vmatpush1.bf16.msra.mxu0 %v5671
    %5847 = vmatprep.subr.bf16.mxu0 %v5664
    %5848 = vmatpush1.bf16.msra.mxu0 %v5663
    %5849 = vmatprep.subr.bf16.mxu0 %v5656
    %5850 = vmatpush1.bf16.msra.mxu0 %v5655
    %5851 = vmatprep.subr.bf16.mxu0 %v5648
    %5852 = vmatpush1.bf16.msra.mxu0 %v5647
    %5853 = vmatprep.subr.bf16.mxu0 0
    %5854 = vmatpush2.bf16.msra.mxu0 0
    %5855 = vmatprep.subr.bf16.mxu0 0
    %5856 = vmatpush2.bf16.msra.mxu0 0
    %5857 = vmatprep.subr.bf16.mxu0 0
    %5858 = vmatpush2.bf16.msra.mxu0 0
    %5859 = vmatprep.subr.bf16.mxu0 0
    %5860 = vmatpush2.bf16.msra.mxu0 0
    %5861 = vmatprep.subr.bf16.mxu0 0
    %5862 = vmatpush2.bf16.msra.mxu0 0
    %5863 = vmatprep.subr.bf16.mxu0 0
    %5864 = vmatpush2.bf16.msra.mxu0 0
    %5865 = vmatprep.subr.bf16.mxu0 0
    %5866 = vmatpush2.bf16.msra.mxu0 0
    %5867 = vmatprep.subr.bf16.mxu0 0
    %5868 = vmatpush2.bf16.msra.mxu0 0
    %5869 = vmatprep.mubr.bf16.mxu0 0
    %5870 = vmatmul.mubr.bf16.gmra.mxu0 %v5765
    %v5871 = vpop.f32.mrf.mxu0
    %v5872 = vadd.f32 %v5736, %v5871
    %v5873 = vpop.f32.mrf.mxu0
    %v5874 = vadd.f32 %v5736, %v5873
    %v5875 = vpop.f32.mrf.mxu0
    %v5876 = vadd.f32 %v5741, %v5875
    %v5877 = vpop.f32.mrf.mxu0
    %v5878 = vadd.f32 %v5741, %v5877
    %5879 = vmatprep.mubr.bf16.mxu0 0
    %5880 = vmatmul.mubr.bf16.gmra.mxu0 %v5768
    %v5881 = vpop.f32.mrf.mxu0
    %v5882 = vadd.f32 %v5746, %v5881
    %v5883 = vpop.f32.mrf.mxu0
    %v5884 = vadd.f32 %v5746, %v5883
    %v5885 = vpop.f32.mrf.mxu0
    %v5886 = vadd.f32 %v5751, %v5885
    %v5887 = vpop.f32.mrf.mxu0
    %v5888 = vadd.f32 %v5751, %v5887
    %5889 = vdwg.mxu0
    %v5890 = vld [vmem:[#allocation4] sm:$0xff]
    %v5891 = vld [vmem:[#allocation4 + $0x8] sm:$0xff]
    %v5892 = vld [vmem:[#allocation4 + $0x10] sm:$0xff]
    %v5893 = vld [vmem:[#allocation4 + $0x18] sm:$0xff]
    %v5894 = vxor.u32 %v5819, 2147483648
    %v5895 = vxor.u32 %v5821, 2147483648
    %v5896 = vxor.u32 %v5872, 2147483648
    %v5897 = vxor.u32 %v5874, 2147483648
    %v5898 = vmul.f32 %v5894, 1.442695
    %v5899 = vpow.pop %v5898
    %v5900 = vmul.f32 %v5895, 1.442695
    %v5901 = vpow.pop %v5900
    %v5902 = vmul.f32 %v5896, 1.442695
    %v5903 = vpow.pop %v5902
    %v5904 = vmul.f32 %v5897, 1.442695
    %v5905 = vpow.pop %v5904
    %v5906 = vadd.f32 %v5899, 1.0
    %v5907 = vadd.f32 %v5901, 1.0
    %v5908 = vadd.f32 %v5903, 1.0
    %v5909 = vadd.f32 %v5905, 1.0
    %v5910 = vrcp.pop %v5906
    %v5911 = vmul.f32 1.0, %v5910
    %v5912 = vrcp.pop %v5907
    %v5913 = vmul.f32 1.0, %v5912
    %v5914 = vrcp.pop %v5908
    %v5915 = vmul.f32 1.0, %v5914
    %v5916 = vrcp.pop %v5909
    %v5917 = vmul.f32 1.0, %v5916
    %v5918 = vxor.u32 %v5823, 2147483648
    %v5919 = vxor.u32 %v5825, 2147483648
    %v5920 = vxor.u32 %v5876, 2147483648
    %v5921 = vxor.u32 %v5878, 2147483648
    %v5922 = vmul.f32 %v5918, 1.442695
    %v5923 = vpow.pop %v5922
    %v5924 = vmul.f32 %v5919, 1.442695
    %v5925 = vpow.pop %v5924
    %v5926 = vmul.f32 %v5920, 1.442695
    %v5927 = vpow.pop %v5926
    %v5928 = vmul.f32 %v5921, 1.442695
    %v5929 = vpow.pop %v5928
    %v5930 = vadd.f32 %v5923, 1.0
    %v5931 = vadd.f32 %v5925, 1.0
    %v5932 = vadd.f32 %v5927, 1.0
    %v5933 = vadd.f32 %v5929, 1.0
    %v5934 = vrcp.pop %v5930
    %v5935 = vmul.f32 1.0, %v5934
    %v5936 = vrcp.pop %v5931
    %v5937 = vmul.f32 1.0, %v5936
    %v5938 = vrcp.pop %v5932
    %v5939 = vmul.f32 1.0, %v5938
    %v5940 = vrcp.pop %v5933
    %v5941 = vmul.f32 1.0, %v5940
    %v5942 = vxor.u32 %v5829, 2147483648
    %v5943 = vxor.u32 %v5831, 2147483648
    %v5944 = vxor.u32 %v5882, 2147483648
    %v5945 = vxor.u32 %v5884, 2147483648
    %v5946 = vmul.f32 %v5942, 1.442695
    %v5947 = vpow.pop %v5946
    %v5948 = vmul.f32 %v5943, 1.442695
    %v5949 = vpow.pop %v5948
    %v5950 = vmul.f32 %v5944, 1.442695
    %v5951 = vpow.pop %v5950
    %v5952 = vmul.f32 %v5945, 1.442695
    %v5953 = vpow.pop %v5952
    %v5954 = vadd.f32 %v5947, 1.0
    %v5955 = vadd.f32 %v5949, 1.0
    %v5956 = vadd.f32 %v5951, 1.0
    %v5957 = vadd.f32 %v5953, 1.0
    %v5958 = vrcp.pop %v5954
    %v5959 = vmul.f32 1.0, %v5958
    %v5960 = vrcp.pop %v5955
    %v5961 = vmul.f32 1.0, %v5960
    %v5962 = vrcp.pop %v5956
    %v5963 = vmul.f32 1.0, %v5962
    %v5964 = vrcp.pop %v5957
    %v5965 = vmul.f32 1.0, %v5964
    %v5966 = vtanh.pop %v5833
    %v5967 = vtanh.pop %v5835
    %v5968 = vtanh.pop %v5886
    %v5969 = vtanh.pop %v5888
    %v5970 = vmul.f32 %v5935, %v5890
    %v5971 = vmul.f32 %v5937, %v5891
    %v5972 = vmul.f32 %v5939, %v5892
    %v5973 = vmul.f32 %v5941, %v5893
    %v5974 = vmul.f32 %v5911, %v5966
    %v5975 = vmul.f32 %v5913, %v5967
    %v5976 = vmul.f32 %v5915, %v5968
    %v5977 = vmul.f32 %v5917, %v5969
    %v5978 = vadd.f32 %v5970, %v5974
    %v5979 = vadd.f32 %v5971, %v5975
    %v5980 = vadd.f32 %v5972, %v5976
    %v5981 = vadd.f32 %v5973, %v5977
    %v5982 = vtanh.pop %v5978
    %v5983 = vtanh.pop %v5979
    %v5984 = vtanh.pop %v5980
    %v5985 = vtanh.pop %v5981
    %v5986 = vmul.f32 %v5959, %v5982
    %v5987 = vmul.f32 %v5961, %v5983
    %v5988 = vmul.f32 %v5963, %v5984
    %v5989 = vmul.f32 %v5965, %v5985
    %5990 = vst [vmem:[#allocation3] sm:$0xff] %v5986
    %5991 = vst [vmem:[#allocation3 + $0x8] sm:$0xff] %v5987
    %5992 = vst [vmem:[#allocation3 + $0x10] sm:$0xff] %v5988
    %5993 = vst [vmem:[#allocation3 + $0x18] sm:$0xff] %v5989
    %5994 = vst [vmem:[#allocation4] sm:$0xff] %v5978
    %5995 = vst [vmem:[#allocation4 + $0x8] sm:$0xff] %v5979
    %5996 = vst [vmem:[#allocation4 + $0x10] sm:$0xff] %v5980
    %5997 = vst [vmem:[#allocation4 + $0x18] sm:$0xff] %v5981
    %v5998 = vld [vmem:[%s3] ss:$8 sm:$0xf]
    %5999 = vrot.lane.b32.xlu0 %v5986, 17
    %v6000 = vpop.permute.xlu0 %5999
    %6001 = vrot.lane.b32.xlu0 %v5987, 17
    %v6002 = vpop.permute.xlu0 %6001
    %6003 = vrot.lane.b32.xlu0 %v5988, 17
    %v6004 = vpop.permute.xlu0 %6003
    %6005 = vrot.lane.b32.xlu0 %v5989, 17
    %v6006 = vpop.permute.xlu0 %6005
    %v6007 = vsel %vm4668, %v6004, %v6006
    %v6008 = vsel %vm4668, %v6002, %v6004
    %v6009 = vsel %vm4668, %v6000, %v6002
    %v6010 = vsel %vm4668, %v6006, %v6000
    %v6012 = vlaneseq
    %v6013 = vshrl.u32 %v6012, 7
    %v6014 = vsub.s32 0, %v6013
    %v6015 = vrot.slane %v5998, %v6014
    %v6016 = vlaneseq
    %v6017 = vshrl.u32 %v6016, 7
    %v6018 = vsub.s32 1, %v6017
    %v6019 = vrot.slane %v5998, %v6018
    %v6020 = vlaneseq
    %v6021 = vshrl.u32 %v6020, 7
    %v6022 = vsub.s32 2, %v6021
    %v6023 = vrot.slane %v5998, %v6022
    %v6024 = vlaneseq
    %v6025 = vshrl.u32 %v6024, 7
    %v6026 = vsub.s32 3, %v6025
    %v6027 = vrot.slane %v5998, %v6026
    %v6032 = vmul.f32 %v6010, %v6015
    %v6033 = vmul.f32 %v6009, %v6019
    %v6034 = vmul.f32 %v6008, %v6023
    %v6035 = vmul.f32 %v6007, %v6027
    %v6036 = vpack.c.bf16 %v6032, %v6032
    %v6037 = vpack.c.bf16 %v6033, %v6033
    %v6038 = vpack.c.bf16 %v6034, %v6034
    %v6039 = vpack.c.bf16 %v6035, %v6035
    %v6040 = vld [vmem:[%s4702] ss:$8 sm:$0xf]
    %6041 = vrot.lane.b32.xlu0 %v5986, 16
    %v6042 = vpop.permute.xlu0 %6041
    %6043 = vrot.lane.b32.xlu0 %v5987, 16
    %v6044 = vpop.permute.xlu0 %6043
    %6045 = vrot.lane.b32.xlu0 %v5988, 16
    %v6046 = vpop.permute.xlu0 %6045
    %6047 = vrot.lane.b32.xlu0 %v5989, 16
    %v6048 = vpop.permute.xlu0 %6047
    %v6049 = vsel %vm4712, %v6046, %v6048
    %v6050 = vsel %vm4712, %v6044, %v6046
    %v6051 = vsel %vm4712, %v6042, %v6044
    %v6052 = vsel %vm4712, %v6048, %v6042
    %v6054 = vlaneseq
    %v6055 = vshrl.u32 %v6054, 7
    %v6056 = vsub.s32 0, %v6055
    %v6057 = vrot.slane %v6040, %v6056
    %v6058 = vlaneseq
    %v6059 = vshrl.u32 %v6058, 7
    %v6060 = vsub.s32 1, %v6059
    %v6061 = vrot.slane %v6040, %v6060
    %v6062 = vlaneseq
    %v6063 = vshrl.u32 %v6062, 7
    %v6064 = vsub.s32 2, %v6063
    %v6065 = vrot.slane %v6040, %v6064
    %v6066 = vlaneseq
    %v6067 = vshrl.u32 %v6066, 7
    %v6068 = vsub.s32 3, %v6067
    %v6069 = vrot.slane %v6040, %v6068
    %v6074 = vmul.f32 %v6052, %v6057
    %v6075 = vmul.f32 %v6051, %v6061
    %v6076 = vmul.f32 %v6050, %v6065
    %v6077 = vmul.f32 %v6049, %v6069
    %v6078 = vpack.c.bf16 %v6074, %v6074
    %v6079 = vpack.c.bf16 %v6075, %v6075
    %v6080 = vpack.c.bf16 %v6076, %v6076
    %v6081 = vpack.c.bf16 %v6077, %v6077
    %v6082 = vld [vmem:[%s4746] ss:$8 sm:$0xf]
    %6083 = vrot.lane.b32.xlu0 %v5986, 15
    %v6084 = vpop.permute.xlu0 %6083
    %6085 = vrot.lane.b32.xlu0 %v5987, 15
    %v6086 = vpop.permute.xlu0 %6085
    %6087 = vrot.lane.b32.xlu0 %v5988, 15
    %v6088 = vpop.permute.xlu0 %6087
    %6089 = vrot.lane.b32.xlu0 %v5989, 15
    %v6090 = vpop.permute.xlu0 %6089
    %v6091 = vsel %vm4756, %v6088, %v6090
    %v6092 = vsel %vm4756, %v6086, %v6088
    %v6093 = vsel %vm4756, %v6084, %v6086
    %v6094 = vsel %vm4756, %v6090, %v6084
    %v6096 = vlaneseq
    %v6097 = vshrl.u32 %v6096, 7
    %v6098 = vsub.s32 0, %v6097
    %v6099 = vrot.slane %v6082, %v6098
    %v6100 = vlaneseq
    %v6101 = vshrl.u32 %v6100, 7
    %v6102 = vsub.s32 1, %v6101
    %v6103 = vrot.slane %v6082, %v6102
    %v6104 = vlaneseq
    %v6105 = vshrl.u32 %v6104, 7
    %v6106 = vsub.s32 2, %v6105
    %v6107 = vrot.slane %v6082, %v6106
    %v6108 = vlaneseq
    %v6109 = vshrl.u32 %v6108, 7
    %v6110 = vsub.s32 3, %v6109
    %v6111 = vrot.slane %v6082, %v6110
    %v6116 = vmul.f32 %v6094, %v6099
    %v6117 = vmul.f32 %v6093, %v6103
    %v6118 = vmul.f32 %v6092, %v6107
    %v6119 = vmul.f32 %v6091, %v6111
    %v6120 = vpack.c.bf16 %v6116, %v6116
    %v6121 = vpack.c.bf16 %v6117, %v6117
    %v6122 = vpack.c.bf16 %v6118, %v6118
    %v6123 = vpack.c.bf16 %v6119, %v6119
    %v6124 = vld [vmem:[%s4790] ss:$8 sm:$0xf]
    %6125 = vrot.lane.b32.xlu0 %v5986, 1
    %v6126 = vpop.permute.xlu0 %6125
    %6127 = vrot.lane.b32.xlu0 %v5987, 1
    %v6128 = vpop.permute.xlu0 %6127
    %6129 = vrot.lane.b32.xlu0 %v5988, 1
    %v6130 = vpop.permute.xlu0 %6129
    %6131 = vrot.lane.b32.xlu0 %v5989, 1
    %v6132 = vpop.permute.xlu0 %6131
    %v6133 = vsel %vm4800, %v6130, %v6132
    %v6134 = vsel %vm4800, %v6128, %v6130
    %v6135 = vsel %vm4800, %v6126, %v6128
    %v6136 = vsel %vm4800, %v6132, %v6126
    %v6138 = vlaneseq
    %v6139 = vshrl.u32 %v6138, 7
    %v6140 = vsub.s32 0, %v6139
    %v6141 = vrot.slane %v6124, %v6140
    %v6142 = vlaneseq
    %v6143 = vshrl.u32 %v6142, 7
    %v6144 = vsub.s32 1, %v6143
    %v6145 = vrot.slane %v6124, %v6144
    %v6146 = vlaneseq
    %v6147 = vshrl.u32 %v6146, 7
    %v6148 = vsub.s32 2, %v6147
    %v6149 = vrot.slane %v6124, %v6148
    %v6150 = vlaneseq
    %v6151 = vshrl.u32 %v6150, 7
    %v6152 = vsub.s32 3, %v6151
    %v6153 = vrot.slane %v6124, %v6152
    %v6158 = vmul.f32 %v6136, %v6141
    %v6159 = vmul.f32 %v6135, %v6145
    %v6160 = vmul.f32 %v6134, %v6149
    %v6161 = vmul.f32 %v6133, %v6153
    %v6162 = vpack.c.bf16 %v6158, %v6158
    %v6163 = vpack.c.bf16 %v6159, %v6159
    %v6164 = vpack.c.bf16 %v6160, %v6160
    %v6165 = vpack.c.bf16 %v6161, %v6161
    %v6166 = vpack.c.bf16 %v5986, %v5986
    %v6167 = vpack.c.bf16 %v5987, %v5987
    %v6168 = vpack.c.bf16 %v5988, %v5988
    %v6169 = vpack.c.bf16 %v5989, %v5989
    %v6170 = vld [vmem:[%s4838] ss:$8 sm:$0xf]
    %6171 = vrot.lane.b32.xlu0 %v5986, 127
    %v6172 = vpop.permute.xlu0 %6171
    %6173 = vrot.lane.b32.xlu0 %v5987, 127
    %v6174 = vpop.permute.xlu0 %6173
    %6175 = vrot.lane.b32.xlu0 %v5988, 127
    %v6176 = vpop.permute.xlu0 %6175
    %6177 = vrot.lane.b32.xlu0 %v5989, 127
    %v6178 = vpop.permute.xlu0 %6177
    %v6179 = vsel %vm4848, %v6176, %v6178
    %v6180 = vsel %vm4848, %v6174, %v6176
    %v6181 = vsel %vm4848, %v6172, %v6174
    %v6182 = vsel %vm4848, %v6178, %v6172
    %v6184 = vlaneseq
    %v6185 = vshrl.u32 %v6184, 7
    %v6186 = vsub.s32 0, %v6185
    %v6187 = vrot.slane %v6170, %v6186
    %v6188 = vlaneseq
    %v6189 = vshrl.u32 %v6188, 7
    %v6190 = vsub.s32 1, %v6189
    %v6191 = vrot.slane %v6170, %v6190
    %v6192 = vlaneseq
    %v6193 = vshrl.u32 %v6192, 7
    %v6194 = vsub.s32 2, %v6193
    %v6195 = vrot.slane %v6170, %v6194
    %v6196 = vlaneseq
    %v6197 = vshrl.u32 %v6196, 7
    %v6198 = vsub.s32 3, %v6197
    %v6199 = vrot.slane %v6170, %v6198
    %v6204 = vmul.f32 %v6181, %v6187
    %v6205 = vmul.f32 %v6180, %v6191
    %v6206 = vmul.f32 %v6179, %v6195
    %v6207 = vmul.f32 %v6182, %v6199
    %v6208 = vpack.c.bf16 %v6204, %v6204
    %v6209 = vpack.c.bf16 %v6205, %v6205
    %v6210 = vpack.c.bf16 %v6206, %v6206
    %v6211 = vpack.c.bf16 %v6207, %v6207
    %v6212 = vld [vmem:[%s4882] ss:$8 sm:$0xf]
    %6213 = vrot.lane.b32.xlu0 %v5986, 113
    %v6214 = vpop.permute.xlu0 %6213
    %6215 = vrot.lane.b32.xlu0 %v5987, 113
    %v6216 = vpop.permute.xlu0 %6215
    %6217 = vrot.lane.b32.xlu0 %v5988, 113
    %v6218 = vpop.permute.xlu0 %6217
    %6219 = vrot.lane.b32.xlu0 %v5989, 113
    %v6220 = vpop.permute.xlu0 %6219
    %v6221 = vsel %vm4892, %v6218, %v6220
    %v6222 = vsel %vm4892, %v6216, %v6218
    %v6223 = vsel %vm4892, %v6214, %v6216
    %v6224 = vsel %vm4892, %v6220, %v6214
    %v6226 = vlaneseq
    %v6227 = vshrl.u32 %v6226, 7
    %v6228 = vsub.s32 0, %v6227
    %v6229 = vrot.slane %v6212, %v6228
    %v6230 = vlaneseq
    %v6231 = vshrl.u32 %v6230, 7
    %v6232 = vsub.s32 1, %v6231
    %v6233 = vrot.slane %v6212, %v6232
    %v6234 = vlaneseq
    %v6235 = vshrl.u32 %v6234, 7
    %v6236 = vsub.s32 2, %v6235
    %v6237 = vrot.slane %v6212, %v6236
    %v6238 = vlaneseq
    %v6239 = vshrl.u32 %v6238, 7
    %v6240 = vsub.s32 3, %v6239
    %v6241 = vrot.slane %v6212, %v6240
    %v6246 = vmul.f32 %v6223, %v6229
    %v6247 = vmul.f32 %v6222, %v6233
    %v6248 = vmul.f32 %v6221, %v6237
    %v6249 = vmul.f32 %v6224, %v6241
    %v6250 = vpack.c.bf16 %v6246, %v6246
    %v6251 = vpack.c.bf16 %v6247, %v6247
    %v6252 = vpack.c.bf16 %v6248, %v6248
    %v6253 = vpack.c.bf16 %v6249, %v6249
    %v6254 = vld [vmem:[%s4926] ss:$8 sm:$0xf]
    %6255 = vrot.lane.b32.xlu0 %v5986, 112
    %v6256 = vpop.permute.xlu0 %6255
    %6257 = vrot.lane.b32.xlu0 %v5987, 112
    %v6258 = vpop.permute.xlu0 %6257
    %6259 = vrot.lane.b32.xlu0 %v5988, 112
    %v6260 = vpop.permute.xlu0 %6259
    %6261 = vrot.lane.b32.xlu0 %v5989, 112
    %v6262 = vpop.permute.xlu0 %6261
    %v6263 = vsel %vm4936, %v6260, %v6262
    %v6264 = vsel %vm4936, %v6258, %v6260
    %v6265 = vsel %vm4936, %v6256, %v6258
    %v6266 = vsel %vm4936, %v6262, %v6256
    %v6268 = vlaneseq
    %v6269 = vshrl.u32 %v6268, 7
    %v6270 = vsub.s32 0, %v6269
    %v6271 = vrot.slane %v6254, %v6270
    %v6272 = vlaneseq
    %v6273 = vshrl.u32 %v6272, 7
    %v6274 = vsub.s32 1, %v6273
    %v6275 = vrot.slane %v6254, %v6274
    %v6276 = vlaneseq
    %v6277 = vshrl.u32 %v6276, 7
    %v6278 = vsub.s32 2, %v6277
    %v6279 = vrot.slane %v6254, %v6278
    %v6280 = vlaneseq
    %v6281 = vshrl.u32 %v6280, 7
    %v6282 = vsub.s32 3, %v6281
    %v6283 = vrot.slane %v6254, %v6282
    %v6288 = vmul.f32 %v6265, %v6271
    %v6289 = vmul.f32 %v6264, %v6275
    %v6290 = vmul.f32 %v6263, %v6279
    %v6291 = vmul.f32 %v6266, %v6283
    %v6292 = vpack.c.bf16 %v6288, %v6288
    %v6293 = vpack.c.bf16 %v6289, %v6289
    %v6294 = vpack.c.bf16 %v6290, %v6290
    %v6295 = vpack.c.bf16 %v6291, %v6291
    %v6296 = vld [vmem:[%s4970] ss:$8 sm:$0xf]
    %6297 = vrot.lane.b32.xlu0 %v5986, 111
    %v6298 = vpop.permute.xlu0 %6297
    %6299 = vrot.lane.b32.xlu0 %v5987, 111
    %v6300 = vpop.permute.xlu0 %6299
    %6301 = vrot.lane.b32.xlu0 %v5988, 111
    %v6302 = vpop.permute.xlu0 %6301
    %6303 = vrot.lane.b32.xlu0 %v5989, 111
    %v6304 = vpop.permute.xlu0 %6303
    %v6305 = vsel %vm4980, %v6302, %v6304
    %v6306 = vsel %vm4980, %v6300, %v6302
    %v6307 = vsel %vm4980, %v6298, %v6300
    %v6308 = vsel %vm4980, %v6304, %v6298
    %v6310 = vlaneseq
    %v6311 = vshrl.u32 %v6310, 7
    %v6312 = vsub.s32 0, %v6311
    %v6313 = vrot.slane %v6296, %v6312
    %v6314 = vlaneseq
    %v6315 = vshrl.u32 %v6314, 7
    %v6316 = vsub.s32 1, %v6315
    %v6317 = vrot.slane %v6296, %v6316
    %v6318 = vlaneseq
    %v6319 = vshrl.u32 %v6318, 7
    %v6320 = vsub.s32 2, %v6319
    %v6321 = vrot.slane %v6296, %v6320
    %v6322 = vlaneseq
    %v6323 = vshrl.u32 %v6322, 7
    %v6324 = vsub.s32 3, %v6323
    %v6325 = vrot.slane %v6296, %v6324
    %v6330 = vmul.f32 %v6307, %v6313
    %v6331 = vmul.f32 %v6306, %v6317
    %v6332 = vmul.f32 %v6305, %v6321
    %v6333 = vmul.f32 %v6308, %v6325
    %v6334 = vpack.c.bf16 %v6330, %v6330
    %v6335 = vpack.c.bf16 %v6331, %v6331
    %v6336 = vpack.c.bf16 %v6332, %v6332
    %v6337 = vpack.c.bf16 %v6333, %v6333
    %v6338 = vld [vmem:[%s4608] sm:$0xff]
    %v6339 = vld [vmem:[%s4608 + $0x8] sm:$0xff]
    %v6340 = vld [vmem:[%s4608 + $0x10] sm:$0xff]
    %v6341 = vld [vmem:[%s4608 + $0x18] sm:$0xff]
    %6342 = vrot.lane.b32.xlu0 %v6338, 17
    %v6343 = vpop.permute.xlu0 %6342
    %6344 = vrot.lane.b32.xlu0 %v6339, 17
    %v6345 = vpop.permute.xlu0 %6344
    %6346 = vrot.lane.b32.xlu0 %v6340, 17
    %v6347 = vpop.permute.xlu0 %6346
    %6348 = vrot.lane.b32.xlu0 %v6341, 17
    %v6349 = vpop.permute.xlu0 %6348
    %v6350 = vsel %vm4668, %v6347, %v6349
    %v6351 = vsel %vm4668, %v6345, %v6347
    %v6352 = vsel %vm4668, %v6343, %v6345
    %v6353 = vsel %vm4668, %v6349, %v6343
    %v6354 = vmul.f32 %v6353, %v6015
    %v6355 = vmul.f32 %v6352, %v6019
    %v6356 = vmul.f32 %v6351, %v6023
    %v6357 = vmul.f32 %v6350, %v6027
    %v6358 = vpack.c.bf16 %v6354, %v6354
    %v6359 = vpack.c.bf16 %v6355, %v6355
    %v6360 = vpack.c.bf16 %v6356, %v6356
    %v6361 = vpack.c.bf16 %v6357, %v6357
    %6362 = vrot.lane.b32.xlu0 %v6338, 16
    %v6363 = vpop.permute.xlu0 %6362
    %6364 = vrot.lane.b32.xlu0 %v6339, 16
    %v6365 = vpop.permute.xlu0 %6364
    %6366 = vrot.lane.b32.xlu0 %v6340, 16
    %v6367 = vpop.permute.xlu0 %6366
    %6368 = vrot.lane.b32.xlu0 %v6341, 16
    %v6369 = vpop.permute.xlu0 %6368
    %v6370 = vsel %vm4712, %v6367, %v6369
    %v6371 = vsel %vm4712, %v6365, %v6367
    %v6372 = vsel %vm4712, %v6363, %v6365
    %v6373 = vsel %vm4712, %v6369, %v6363
    %v6374 = vmul.f32 %v6373, %v6057
    %v6375 = vmul.f32 %v6372, %v6061
    %v6376 = vmul.f32 %v6371, %v6065
    %v6377 = vmul.f32 %v6370, %v6069
    %v6378 = vpack.c.bf16 %v6374, %v6374
    %v6379 = vpack.c.bf16 %v6375, %v6375
    %v6380 = vpack.c.bf16 %v6376, %v6376
    %v6381 = vpack.c.bf16 %v6377, %v6377
    %6382 = vrot.lane.b32.xlu0 %v6338, 15
    %v6383 = vpop.permute.xlu0 %6382
    %6384 = vrot.lane.b32.xlu0 %v6339, 15
    %v6385 = vpop.permute.xlu0 %6384
    %6386 = vrot.lane.b32.xlu0 %v6340, 15
    %v6387 = vpop.permute.xlu0 %6386
    %6388 = vrot.lane.b32.xlu0 %v6341, 15
    %v6389 = vpop.permute.xlu0 %6388
    %v6390 = vsel %vm4756, %v6387, %v6389
    %v6391 = vsel %vm4756, %v6385, %v6387
    %v6392 = vsel %vm4756, %v6383, %v6385
    %v6393 = vsel %vm4756, %v6389, %v6383
    %v6394 = vmul.f32 %v6393, %v6099
    %v6395 = vmul.f32 %v6392, %v6103
    %v6396 = vmul.f32 %v6391, %v6107
    %v6397 = vmul.f32 %v6390, %v6111
    %v6398 = vpack.c.bf16 %v6394, %v6394
    %v6399 = vpack.c.bf16 %v6395, %v6395
    %v6400 = vpack.c.bf16 %v6396, %v6396
    %v6401 = vpack.c.bf16 %v6397, %v6397
    %6402 = vrot.lane.b32.xlu0 %v6338, 1
    %v6403 = vpop.permute.xlu0 %6402
    %6404 = vrot.lane.b32.xlu0 %v6339, 1
    %v6405 = vpop.permute.xlu0 %6404
    %6406 = vrot.lane.b32.xlu0 %v6340, 1
    %v6407 = vpop.permute.xlu0 %6406
    %6408 = vrot.lane.b32.xlu0 %v6341, 1
    %v6409 = vpop.permute.xlu0 %6408
    %v6410 = vsel %vm4800, %v6407, %v6409
    %v6411 = vsel %vm4800, %v6405, %v6407
    %v6412 = vsel %vm4800, %v6403, %v6405
    %v6413 = vsel %vm4800, %v6409, %v6403
    %v6414 = vmul.f32 %v6413, %v6141
    %v6415 = vmul.f32 %v6412, %v6145
    %v6416 = vmul.f32 %v6411, %v6149
    %v6417 = vmul.f32 %v6410, %v6153
    %v6418 = vpack.c.bf16 %v6414, %v6414
    %v6419 = vpack.c.bf16 %v6415, %v6415
    %v6420 = vpack.c.bf16 %v6416, %v6416
    %v6421 = vpack.c.bf16 %v6417, %v6417
    %v6422 = vpack.c.bf16 %v6338, %v6338
    %v6423 = vpack.c.bf16 %v6339, %v6339
    %v6424 = vpack.c.bf16 %v6340, %v6340
    %v6425 = vpack.c.bf16 %v6341, %v6341
    %6426 = vrot.lane.b32.xlu0 %v6338, 127
    %v6427 = vpop.permute.xlu0 %6426
    %6428 = vrot.lane.b32.xlu0 %v6339, 127
    %v6429 = vpop.permute.xlu0 %6428
    %6430 = vrot.lane.b32.xlu0 %v6340, 127
    %v6431 = vpop.permute.xlu0 %6430
    %6432 = vrot.lane.b32.xlu0 %v6341, 127
    %v6433 = vpop.permute.xlu0 %6432
    %v6434 = vsel %vm4848, %v6431, %v6433
    %v6435 = vsel %vm4848, %v6429, %v6431
    %v6436 = vsel %vm4848, %v6427, %v6429
    %v6437 = vsel %vm4848, %v6433, %v6427
    %v6438 = vmul.f32 %v6436, %v6187
    %v6439 = vmul.f32 %v6435, %v6191
    %v6440 = vmul.f32 %v6434, %v6195
    %v6441 = vmul.f32 %v6437, %v6199
    %v6442 = vpack.c.bf16 %v6438, %v6438
    %v6443 = vpack.c.bf16 %v6439, %v6439
    %v6444 = vpack.c.bf16 %v6440, %v6440
    %v6445 = vpack.c.bf16 %v6441, %v6441
    %6446 = vrot.lane.b32.xlu0 %v6338, 113
    %v6447 = vpop.permute.xlu0 %6446
    %6448 = vrot.lane.b32.xlu0 %v6339, 113
    %v6449 = vpop.permute.xlu0 %6448
    %6450 = vrot.lane.b32.xlu0 %v6340, 113
    %v6451 = vpop.permute.xlu0 %6450
    %6452 = vrot.lane.b32.xlu0 %v6341, 113
    %v6453 = vpop.permute.xlu0 %6452
    %v6454 = vsel %vm4892, %v6451, %v6453
    %v6455 = vsel %vm4892, %v6449, %v6451
    %v6456 = vsel %vm4892, %v6447, %v6449
    %v6457 = vsel %vm4892, %v6453, %v6447
    %v6458 = vmul.f32 %v6456, %v6229
    %v6459 = vmul.f32 %v6455, %v6233
    %v6460 = vmul.f32 %v6454, %v6237
    %v6461 = vmul.f32 %v6457, %v6241
    %v6462 = vpack.c.bf16 %v6458, %v6458
    %v6463 = vpack.c.bf16 %v6459, %v6459
    %v6464 = vpack.c.bf16 %v6460, %v6460
    %v6465 = vpack.c.bf16 %v6461, %v6461
    %6466 = vrot.lane.b32.xlu0 %v6338, 112
    %v6467 = vpop.permute.xlu0 %6466
    %6468 = vrot.lane.b32.xlu0 %v6339, 112
    %v6469 = vpop.permute.xlu0 %6468
    %6470 = vrot.lane.b32.xlu0 %v6340, 112
    %v6471 = vpop.permute.xlu0 %6470
    %6472 = vrot.lane.b32.xlu0 %v6341, 112
    %v6473 = vpop.permute.xlu0 %6472
    %v6474 = vsel %vm4936, %v6471, %v6473
    %v6475 = vsel %vm4936, %v6469, %v6471
    %v6476 = vsel %vm4936, %v6467, %v6469
    %v6477 = vsel %vm4936, %v6473, %v6467
    %v6478 = vmul.f32 %v6476, %v6271
    %v6479 = vmul.f32 %v6475, %v6275
    %v6480 = vmul.f32 %v6474, %v6279
    %v6481 = vmul.f32 %v6477, %v6283
    %v6482 = vpack.c.bf16 %v6478, %v6478
    %v6483 = vpack.c.bf16 %v6479, %v6479
    %v6484 = vpack.c.bf16 %v6480, %v6480
    %v6485 = vpack.c.bf16 %v6481, %v6481
    %6486 = vrot.lane.b32.xlu0 %v6338, 111
    %v6487 = vpop.permute.xlu0 %6486
    %6488 = vrot.lane.b32.xlu0 %v6339, 111
    %v6489 = vpop.permute.xlu0 %6488
    %6490 = vrot.lane.b32.xlu0 %v6340, 111
    %v6491 = vpop.permute.xlu0 %6490
    %6492 = vrot.lane.b32.xlu0 %v6341, 111
    %v6493 = vpop.permute.xlu0 %6492
    %v6494 = vsel %vm4980, %v6491, %v6493
    %v6495 = vsel %vm4980, %v6489, %v6491
    %v6496 = vsel %vm4980, %v6487, %v6489
    %v6497 = vsel %vm4980, %v6493, %v6487
    %v6498 = vmul.f32 %v6496, %v6313
    %v6499 = vmul.f32 %v6495, %v6317
    %v6500 = vmul.f32 %v6494, %v6321
    %v6501 = vmul.f32 %v6497, %v6325
    %v6502 = vpack.c.bf16 %v6498, %v6498
    %v6503 = vpack.c.bf16 %v6499, %v6499
    %v6504 = vpack.c.bf16 %v6500, %v6500
    %v6505 = vpack.c.bf16 %v6501, %v6501
    %v6510 = vrot.slane %v6078, 4
    %v6511 = vrot.slane %v6079, 4
    %v6512 = vrot.slane %v6080, 4
    %v6513 = vrot.slane %v6081, 4
    %v6518 = vrot.slane %v6162, 4
    %v6519 = vrot.slane %v6163, 4
    %v6520 = vrot.slane %v6164, 4
    %v6521 = vrot.slane %v6165, 4
    %v6526 = vrot.slane %v6208, 4
    %v6527 = vrot.slane %v6209, 4
    %v6528 = vrot.slane %v6210, 4
    %v6529 = vrot.slane %v6211, 4
    %v6534 = vrot.slane %v6292, 4
    %v6535 = vrot.slane %v6293, 4
    %v6536 = vrot.slane %v6294, 4
    %v6537 = vrot.slane %v6295, 4
    %v6542 = vrot.slane %v6358, 4
    %v6543 = vrot.slane %v6359, 4
    %v6544 = vrot.slane %v6360, 4
    %v6545 = vrot.slane %v6361, 4
    %v6550 = vrot.slane %v6398, 4
    %v6551 = vrot.slane %v6399, 4
    %v6552 = vrot.slane %v6400, 4
    %v6553 = vrot.slane %v6401, 4
    %v6558 = vrot.slane %v6422, 4
    %v6559 = vrot.slane %v6423, 4
    %v6560 = vrot.slane %v6424, 4
    %v6561 = vrot.slane %v6425, 4
    %v6566 = vrot.slane %v6462, 4
    %v6567 = vrot.slane %v6463, 4
    %v6568 = vrot.slane %v6464, 4
    %v6569 = vrot.slane %v6465, 4
    %v6572 = vsel %vm5625, %v6036, %v6510
    %v6576 = vsel %vm5625, %v6037, %v6511
    %v6580 = vsel %vm5625, %v6038, %v6512
    %v6584 = vsel %vm5625, %v6039, %v6513
    %v6588 = vsel %vm5625, %v6120, %v6518
    %v6592 = vsel %vm5625, %v6121, %v6519
    %v6596 = vsel %vm5625, %v6122, %v6520
    %v6600 = vsel %vm5625, %v6123, %v6521
    %v6604 = vsel %vm5625, %v6166, %v6526
    %v6608 = vsel %vm5625, %v6167, %v6527
    %v6612 = vsel %vm5625, %v6168, %v6528
    %v6616 = vsel %vm5625, %v6169, %v6529
    %v6620 = vsel %vm5625, %v6250, %v6534
    %v6624 = vsel %vm5625, %v6251, %v6535
    %v6628 = vsel %vm5625, %v6252, %v6536
    %v6632 = vsel %vm5625, %v6253, %v6537
    %v6636 = vsel %vm5625, %v6334, %v6542
    %v6640 = vsel %vm5625, %v6335, %v6543
    %v6644 = vsel %vm5625, %v6336, %v6544
    %v6648 = vsel %vm5625, %v6337, %v6545
    %v6652 = vsel %vm5625, %v6378, %v6550
    %v6656 = vsel %vm5625, %v6379, %v6551
    %v6660 = vsel %vm5625, %v6380, %v6552
    %v6664 = vsel %vm5625, %v6381, %v6553
    %v6668 = vsel %vm5625, %v6418, %v6558
    %v6672 = vsel %vm5625, %v6419, %v6559
    %v6676 = vsel %vm5625, %v6420, %v6560
    %v6680 = vsel %vm5625, %v6421, %v6561
    %v6684 = vsel %vm5625, %v6442, %v6566
    %v6688 = vsel %vm5625, %v6443, %v6567
    %v6692 = vsel %vm5625, %v6444, %v6568
    %v6696 = vsel %vm5625, %v6445, %v6569
    %v6702 = vrot.slane %v6502, 4
    %v6703 = vrot.slane %v6503, 4
    %v6704 = vrot.slane %v6504, 4
    %v6705 = vrot.slane %v6505, 4
    %v6708 = vsel %vm5625, %v6482, %v6702
    %v6712 = vsel %vm5625, %v6483, %v6703
    %v6716 = vsel %vm5625, %v6484, %v6704
    %v6720 = vsel %vm5625, %v6485, %v6705
    %v6722 = vld [vmem:[%s12] sm:$0xff]
    %v6723 = vld [vmem:[%s12 + $0x8] sm:$0xff]
    %v6724 = vld [vmem:[%s12 + $0x10] sm:$0xff]
    %v6725 = vld [vmem:[%s12 + $0x18] sm:$0xff]
    %v6726 = vld [vmem:[%s13] sm:$0xff]
    %v6727 = vld [vmem:[%s13 + $0x8] sm:$0xff]
    %v6728 = vld [vmem:[%s13 + $0x10] sm:$0xff]
    %v6729 = vld [vmem:[%s13 + $0x18] sm:$0xff]
    %6731 = vset.pattern.permute.xlu0 0
    %6732 = vperm.xlu0 %6731, %v6726
    %v6733 = vpop.permute.xlu0 %6732
    %6736 = vset.pattern.permute.xlu0 0
    %6737 = vperm.xlu0 %6736, %v6727
    %v6738 = vpop.permute.xlu0 %6737
    %6741 = vset.pattern.permute.xlu0 0
    %6742 = vperm.xlu0 %6741, %v6728
    %v6743 = vpop.permute.xlu0 %6742
    %6746 = vset.pattern.permute.xlu0 0
    %6747 = vperm.xlu0 %6746, %v6729
    %v6748 = vpop.permute.xlu0 %6747
    %v6754 = vunpack.c.l.b16 %v6722
    %v6755 = vunpack.c.h.b16 %v6722
    %v6756 = vunpack.c.l.b16 %v6723
    %v6757 = vunpack.c.h.b16 %v6723
    %v6758 = vunpack.c.l.b16 %v6724
    %v6759 = vunpack.c.h.b16 %v6724
    %v6760 = vunpack.c.l.b16 %v6725
    %v6761 = vunpack.c.h.b16 %v6725
    %v6762 = vpack.c.b16 %v6756, %v6754
    %v6763 = vpack.c.b16 %v6757, %v6755
    %v6764 = vpack.c.b16 %v6760, %v6758
    %v6765 = vpack.c.b16 %v6761, %v6759
    %vm6768 = vcmask 130048
    %v6770 = vsel %vm6768, %v6763, 0
    %v6773 = vsel %vm6768, %v6765, 0
    %6775 = vmatprep.subr.bf16.mxu0 %v6688
    %6776 = vmatpush1.bf16.msra.mxu0 %v6684
    %6777 = vmatprep.subr.bf16.mxu0 %v6672
    %6778 = vmatpush1.bf16.msra.mxu0 %v6668
    %6779 = vmatprep.subr.bf16.mxu0 %v6656
    %6780 = vmatpush1.bf16.msra.mxu0 %v6652
    %6781 = vmatprep.subr.bf16.mxu0 %v6640
    %6782 = vmatpush1.bf16.msra.mxu0 %v6636
    %6783 = vmatprep.subr.bf16.mxu0 %v6624
    %6784 = vmatpush1.bf16.msra.mxu0 %v6620
    %6785 = vmatprep.subr.bf16.mxu0 %v6608
    %6786 = vmatpush1.bf16.msra.mxu0 %v6604
    %6787 = vmatprep.subr.bf16.mxu0 %v6592
    %6788 = vmatpush1.bf16.msra.mxu0 %v6588
    %6789 = vmatprep.subr.bf16.mxu0 %v6576
    %6790 = vmatpush1.bf16.msra.mxu0 %v6572
    %6791 = vmatprep.subr.bf16.mxu0 0
    %6792 = vmatpush2.bf16.msra.mxu0 0
    %6793 = vmatprep.subr.bf16.mxu0 0
    %6794 = vmatpush2.bf16.msra.mxu0 0
    %6795 = vmatprep.subr.bf16.mxu0 0
    %6796 = vmatpush2.bf16.msra.mxu0 0
    %6797 = vmatprep.subr.bf16.mxu0 0
    %6798 = vmatpush2.bf16.msra.mxu0 0
    %6799 = vmatprep.subr.bf16.mxu0 0
    %6800 = vmatpush2.bf16.msra.mxu0 0
    %6801 = vmatprep.subr.bf16.mxu0 0
    %6802 = vmatpush2.bf16.msra.mxu0 0
    %6803 = vmatprep.subr.bf16.mxu0 0
    %6804 = vmatpush2.bf16.msra.mxu0 0
    %6805 = vmatprep.subr.bf16.mxu0 %v6712
    %6806 = vmatpush2.bf16.msra.mxu0 %v6708
    %6807 = vmatprep.mubr.bf16.mxu0 %v6770
    %6808 = vmatmul.mubr.bf16.gmra.mxu0 %v6762
    %v6809 = vpop.f32.mrf.mxu0
    %v6810 = vadd.f32 %v6733, %v6809
    %v6811 = vpop.f32.mrf.mxu0
    %v6812 = vadd.f32 %v6733, %v6811
    %v6813 = vpop.f32.mrf.mxu0
    %v6814 = vadd.f32 %v6738, %v6813
    %v6815 = vpop.f32.mrf.mxu0
    %v6816 = vadd.f32 %v6738, %v6815
    %6817 = vmatprep.mubr.bf16.mxu0 %v6773
    %6818 = vmatmul.mubr.bf16.gmra.mxu0 %v6764
    %v6819 = vpop.f32.mrf.mxu0
    %v6820 = vadd.f32 %v6743, %v6819
    %v6821 = vpop.f32.mrf.mxu0
    %v6822 = vadd.f32 %v6743, %v6821
    %v6823 = vpop.f32.mrf.mxu0
    %v6824 = vadd.f32 %v6748, %v6823
    %v6825 = vpop.f32.mrf.mxu0
    %v6826 = vadd.f32 %v6748, %v6825
    %6827 = vdwg.mxu0
    %6828 = vmatprep.subr.bf16.mxu0 %v6696
    %6829 = vmatpush1.bf16.msra.mxu0 %v6692
    %6830 = vmatprep.subr.bf16.mxu0 %v6680
    %6831 = vmatpush1.bf16.msra.mxu0 %v6676
    %6832 = vmatprep.subr.bf16.mxu0 %v6664
    %6833 = vmatpush1.bf16.msra.mxu0 %v6660
    %6834 = vmatprep.subr.bf16.mxu0 %v6648
    %6835 = vmatpush1.bf16.msra.mxu0 %v6644
    %6836 = vmatprep.subr.bf16.mxu0 %v6632
    %6837 = vmatpush1.bf16.msra.mxu0 %v6628
    %6838 = vmatprep.subr.bf16.mxu0 %v6616
    %6839 = vmatpush1.bf16.msra.mxu0 %v6612
    %6840 = vmatprep.subr.bf16.mxu0 %v6600
    %6841 = vmatpush1.bf16.msra.mxu0 %v6596
    %6842 = vmatprep.subr.bf16.mxu0 %v6584
    %6843 = vmatpush1.bf16.msra.mxu0 %v6580
    %6844 = vmatprep.subr.bf16.mxu0 0
    %6845 = vmatpush2.bf16.msra.mxu0 0
    %6846 = vmatprep.subr.bf16.mxu0 0
    %6847 = vmatpush2.bf16.msra.mxu0 0
    %6848 = vmatprep.subr.bf16.mxu0 0
    %6849 = vmatpush2.bf16.msra.mxu0 0
    %6850 = vmatprep.subr.bf16.mxu0 0
    %6851 = vmatpush2.bf16.msra.mxu0 0
    %6852 = vmatprep.subr.bf16.mxu0 0
    %6853 = vmatpush2.bf16.msra.mxu0 0
    %6854 = vmatprep.subr.bf16.mxu0 0
    %6855 = vmatpush2.bf16.msra.mxu0 0
    %6856 = vmatprep.subr.bf16.mxu0 0
    %6857 = vmatpush2.bf16.msra.mxu0 0
    %6858 = vmatprep.subr.bf16.mxu0 %v6720
    %6859 = vmatpush2.bf16.msra.mxu0 %v6716
    %6860 = vmatprep.mubr.bf16.mxu0 %v6770
    %6861 = vmatmul.mubr.bf16.gmra.mxu0 %v6762
    %v6862 = vpop.f32.mrf.mxu0
    %v6863 = vadd.f32 %v6733, %v6862
    %v6864 = vpop.f32.mrf.mxu0
    %v6865 = vadd.f32 %v6733, %v6864
    %v6866 = vpop.f32.mrf.mxu0
    %v6867 = vadd.f32 %v6738, %v6866
    %v6868 = vpop.f32.mrf.mxu0
    %v6869 = vadd.f32 %v6738, %v6868
    %6870 = vmatprep.mubr.bf16.mxu0 %v6773
    %6871 = vmatmul.mubr.bf16.gmra.mxu0 %v6764
    %v6872 = vpop.f32.mrf.mxu0
    %v6873 = vadd.f32 %v6743, %v6872
    %v6874 = vpop.f32.mrf.mxu0
    %v6875 = vadd.f32 %v6743, %v6874
    %v6876 = vpop.f32.mrf.mxu0
    %v6877 = vadd.f32 %v6748, %v6876
    %v6878 = vpop.f32.mrf.mxu0
    %v6879 = vadd.f32 %v6748, %v6878
    %6880 = vdwg.mxu0
    %v6881 = vld [vmem:[%s4617] sm:$0xff]
    %v6882 = vld [vmem:[%s4617 + $0x8] sm:$0xff]
    %v6883 = vld [vmem:[%s4617 + $0x10] sm:$0xff]
    %v6884 = vld [vmem:[%s4617 + $0x18] sm:$0xff]
    %v6885 = vxor.u32 %v6810, 2147483648
    %v6886 = vxor.u32 %v6812, 2147483648
    %v6887 = vxor.u32 %v6863, 2147483648
    %v6888 = vxor.u32 %v6865, 2147483648
    %v6889 = vmul.f32 %v6885, 1.442695
    %v6890 = vpow.pop %v6889
    %v6891 = vmul.f32 %v6886, 1.442695
    %v6892 = vpow.pop %v6891
    %v6893 = vmul.f32 %v6887, 1.442695
    %v6894 = vpow.pop %v6893
    %v6895 = vmul.f32 %v6888, 1.442695
    %v6896 = vpow.pop %v6895
    %v6897 = vadd.f32 %v6890, 1.0
    %v6898 = vadd.f32 %v6892, 1.0
    %v6899 = vadd.f32 %v6894, 1.0
    %v6900 = vadd.f32 %v6896, 1.0
    %v6901 = vrcp.pop %v6897
    %v6902 = vmul.f32 1.0, %v6901
    %v6903 = vrcp.pop %v6898
    %v6904 = vmul.f32 1.0, %v6903
    %v6905 = vrcp.pop %v6899
    %v6906 = vmul.f32 1.0, %v6905
    %v6907 = vrcp.pop %v6900
    %v6908 = vmul.f32 1.0, %v6907
    %v6909 = vxor.u32 %v6814, 2147483648
    %v6910 = vxor.u32 %v6816, 2147483648
    %v6911 = vxor.u32 %v6867, 2147483648
    %v6912 = vxor.u32 %v6869, 2147483648
    %v6913 = vmul.f32 %v6909, 1.442695
    %v6914 = vpow.pop %v6913
    %v6915 = vmul.f32 %v6910, 1.442695
    %v6916 = vpow.pop %v6915
    %v6917 = vmul.f32 %v6911, 1.442695
    %v6918 = vpow.pop %v6917
    %v6919 = vmul.f32 %v6912, 1.442695
    %v6920 = vpow.pop %v6919
    %v6921 = vadd.f32 %v6914, 1.0
    %v6922 = vadd.f32 %v6916, 1.0
    %v6923 = vadd.f32 %v6918, 1.0
    %v6924 = vadd.f32 %v6920, 1.0
    %v6925 = vrcp.pop %v6921
    %v6926 = vmul.f32 1.0, %v6925
    %v6927 = vrcp.pop %v6922
    %v6928 = vmul.f32 1.0, %v6927
    %v6929 = vrcp.pop %v6923
    %v6930 = vmul.f32 1.0, %v6929
    %v6931 = vrcp.pop %v6924
    %v6932 = vmul.f32 1.0, %v6931
    %v6933 = vxor.u32 %v6820, 2147483648
    %v6934 = vxor.u32 %v6822, 2147483648
    %v6935 = vxor.u32 %v6873, 2147483648
    %v6936 = vxor.u32 %v6875, 2147483648
    %v6937 = vmul.f32 %v6933, 1.442695
    %v6938 = vpow.pop %v6937
    %v6939 = vmul.f32 %v6934, 1.442695
    %v6940 = vpow.pop %v6939
    %v6941 = vmul.f32 %v6935, 1.442695
    %v6942 = vpow.pop %v6941
    %v6943 = vmul.f32 %v6936, 1.442695
    %v6944 = vpow.pop %v6943
    %v6945 = vadd.f32 %v6938, 1.0
    %v6946 = vadd.f32 %v6940, 1.0
    %v6947 = vadd.f32 %v6942, 1.0
    %v6948 = vadd.f32 %v6944, 1.0
    %v6949 = vrcp.pop %v6945
    %v6950 = vmul.f32 1.0, %v6949
    %v6951 = vrcp.pop %v6946
    %v6952 = vmul.f32 1.0, %v6951
    %v6953 = vrcp.pop %v6947
    %v6954 = vmul.f32 1.0, %v6953
    %v6955 = vrcp.pop %v6948
    %v6956 = vmul.f32 1.0, %v6955
    %v6957 = vtanh.pop %v6824
    %v6958 = vtanh.pop %v6826
    %v6959 = vtanh.pop %v6877
    %v6960 = vtanh.pop %v6879
    %v6961 = vmul.f32 %v6926, %v6881
    %v6962 = vmul.f32 %v6928, %v6882
    %v6963 = vmul.f32 %v6930, %v6883
    %v6964 = vmul.f32 %v6932, %v6884
    %v6965 = vmul.f32 %v6902, %v6957
    %v6966 = vmul.f32 %v6904, %v6958
    %v6967 = vmul.f32 %v6906, %v6959
    %v6968 = vmul.f32 %v6908, %v6960
    %v6969 = vadd.f32 %v6961, %v6965
    %v6970 = vadd.f32 %v6962, %v6966
    %v6971 = vadd.f32 %v6963, %v6967
    %v6972 = vadd.f32 %v6964, %v6968
    %v6973 = vtanh.pop %v6969
    %v6974 = vtanh.pop %v6970
    %v6975 = vtanh.pop %v6971
    %v6976 = vtanh.pop %v6972
    %v6977 = vmul.f32 %v6950, %v6973
    %v6978 = vmul.f32 %v6952, %v6974
    %v6979 = vmul.f32 %v6954, %v6975
    %v6980 = vmul.f32 %v6956, %v6976
    %6981 = vst [vmem:[%s4608] sm:$0xff] %v6977
    %6982 = vst [vmem:[%s4608 + $0x8] sm:$0xff] %v6978
    %6983 = vst [vmem:[%s4608 + $0x10] sm:$0xff] %v6979
    %6984 = vst [vmem:[%s4608 + $0x18] sm:$0xff] %v6980
    %6985 = vst [vmem:[%s4617] sm:$0xff] %v6969
    %6986 = vst [vmem:[%s4617 + $0x8] sm:$0xff] %v6970
    %6987 = vst [vmem:[%s4617 + $0x10] sm:$0xff] %v6971
    %6988 = vst [vmem:[%s4617 + $0x18] sm:$0xff] %v6972
    %v6989 = vld [vmem:[%s14] sm:$0xf]
    %v6990 = vld [vmem:[%s3] ss:$8 sm:$0xf]
    %6991 = vrot.lane.b32.xlu0 %v6977, 17
    %v6992 = vpop.permute.xlu0 %6991
    %6993 = vrot.lane.b32.xlu0 %v6978, 17
    %v6994 = vpop.permute.xlu0 %6993
    %6995 = vrot.lane.b32.xlu0 %v6979, 17
    %v6996 = vpop.permute.xlu0 %6995
    %6997 = vrot.lane.b32.xlu0 %v6980, 17
    %v6998 = vpop.permute.xlu0 %6997
    %v6999 = vsel %vm4668, %v6996, %v6998
    %v7000 = vsel %vm4668, %v6994, %v6996
    %v7001 = vsel %vm4668, %v6992, %v6994
    %v7002 = vsel %vm4668, %v6998, %v6992
    %v7004 = vlaneseq
    %v7005 = vshrl.u32 %v7004, 7
    %v7006 = vsub.s32 0, %v7005
    %v7007 = vrot.slane %v6990, %v7006
    %v7008 = vlaneseq
    %v7009 = vshrl.u32 %v7008, 7
    %v7010 = vsub.s32 1, %v7009
    %v7011 = vrot.slane %v6990, %v7010
    %v7012 = vlaneseq
    %v7013 = vshrl.u32 %v7012, 7
    %v7014 = vsub.s32 2, %v7013
    %v7015 = vrot.slane %v6990, %v7014
    %v7016 = vlaneseq
    %v7017 = vshrl.u32 %v7016, 7
    %v7018 = vsub.s32 3, %v7017
    %v7019 = vrot.slane %v6990, %v7018
    %v7024 = vmul.f32 %v7002, %v7007
    %v7025 = vmul.f32 %v7001, %v7011
    %v7026 = vmul.f32 %v7000, %v7015
    %v7027 = vmul.f32 %v6999, %v7019
    %v7028 = vpack.c.bf16 %v7024, %v7024
    %v7029 = vpack.c.bf16 %v7025, %v7025
    %v7030 = vpack.c.bf16 %v7026, %v7026
    %v7031 = vpack.c.bf16 %v7027, %v7027
    %v7032 = vld [vmem:[%s4702] ss:$8 sm:$0xf]
    %7033 = vrot.lane.b32.xlu0 %v6977, 16
    %v7034 = vpop.permute.xlu0 %7033
    %7035 = vrot.lane.b32.xlu0 %v6978, 16
    %v7036 = vpop.permute.xlu0 %7035
    %7037 = vrot.lane.b32.xlu0 %v6979, 16
    %v7038 = vpop.permute.xlu0 %7037
    %7039 = vrot.lane.b32.xlu0 %v6980, 16
    %v7040 = vpop.permute.xlu0 %7039
    %v7041 = vsel %vm4712, %v7038, %v7040
    %v7042 = vsel %vm4712, %v7036, %v7038
    %v7043 = vsel %vm4712, %v7034, %v7036
    %v7044 = vsel %vm4712, %v7040, %v7034
    %v7046 = vlaneseq
    %v7047 = vshrl.u32 %v7046, 7
    %v7048 = vsub.s32 0, %v7047
    %v7049 = vrot.slane %v7032, %v7048
    %v7050 = vlaneseq
    %v7051 = vshrl.u32 %v7050, 7
    %v7052 = vsub.s32 1, %v7051
    %v7053 = vrot.slane %v7032, %v7052
    %v7054 = vlaneseq
    %v7055 = vshrl.u32 %v7054, 7
    %v7056 = vsub.s32 2, %v7055
    %v7057 = vrot.slane %v7032, %v7056
    %v7058 = vlaneseq
    %v7059 = vshrl.u32 %v7058, 7
    %v7060 = vsub.s32 3, %v7059
    %v7061 = vrot.slane %v7032, %v7060
    %v7066 = vmul.f32 %v7044, %v7049
    %v7067 = vmul.f32 %v7043, %v7053
    %v7068 = vmul.f32 %v7042, %v7057
    %v7069 = vmul.f32 %v7041, %v7061
    %v7070 = vpack.c.bf16 %v7066, %v7066
    %v7071 = vpack.c.bf16 %v7067, %v7067
    %v7072 = vpack.c.bf16 %v7068, %v7068
    %v7073 = vpack.c.bf16 %v7069, %v7069
    %v7074 = vld [vmem:[%s4746] ss:$8 sm:$0xf]
    %7075 = vrot.lane.b32.xlu0 %v6977, 15
    %v7076 = vpop.permute.xlu0 %7075
    %7077 = vrot.lane.b32.xlu0 %v6978, 15
    %v7078 = vpop.permute.xlu0 %7077
    %7079 = vrot.lane.b32.xlu0 %v6979, 15
    %v7080 = vpop.permute.xlu0 %7079
    %7081 = vrot.lane.b32.xlu0 %v6980, 15
    %v7082 = vpop.permute.xlu0 %7081
    %v7083 = vsel %vm4756, %v7080, %v7082
    %v7084 = vsel %vm4756, %v7078, %v7080
    %v7085 = vsel %vm4756, %v7076, %v7078
    %v7086 = vsel %vm4756, %v7082, %v7076
    %v7088 = vlaneseq
    %v7089 = vshrl.u32 %v7088, 7
    %v7090 = vsub.s32 0, %v7089
    %v7091 = vrot.slane %v7074, %v7090
    %v7092 = vlaneseq
    %v7093 = vshrl.u32 %v7092, 7
    %v7094 = vsub.s32 1, %v7093
    %v7095 = vrot.slane %v7074, %v7094
    %v7096 = vlaneseq
    %v7097 = vshrl.u32 %v7096, 7
    %v7098 = vsub.s32 2, %v7097
    %v7099 = vrot.slane %v7074, %v7098
    %v7100 = vlaneseq
    %v7101 = vshrl.u32 %v7100, 7
    %v7102 = vsub.s32 3, %v7101
    %v7103 = vrot.slane %v7074, %v7102
    %v7108 = vmul.f32 %v7086, %v7091
    %v7109 = vmul.f32 %v7085, %v7095
    %v7110 = vmul.f32 %v7084, %v7099
    %v7111 = vmul.f32 %v7083, %v7103
    %v7112 = vpack.c.bf16 %v7108, %v7108
    %v7113 = vpack.c.bf16 %v7109, %v7109
    %v7114 = vpack.c.bf16 %v7110, %v7110
    %v7115 = vpack.c.bf16 %v7111, %v7111
    %v7116 = vld [vmem:[%s4790] ss:$8 sm:$0xf]
    %7117 = vrot.lane.b32.xlu0 %v6977, 1
    %v7118 = vpop.permute.xlu0 %7117
    %7119 = vrot.lane.b32.xlu0 %v6978, 1
    %v7120 = vpop.permute.xlu0 %7119
    %7121 = vrot.lane.b32.xlu0 %v6979, 1
    %v7122 = vpop.permute.xlu0 %7121
    %7123 = vrot.lane.b32.xlu0 %v6980, 1
    %v7124 = vpop.permute.xlu0 %7123
    %v7125 = vsel %vm4800, %v7122, %v7124
    %v7126 = vsel %vm4800, %v7120, %v7122
    %v7127 = vsel %vm4800, %v7118, %v7120
    %v7128 = vsel %vm4800, %v7124, %v7118
    %v7130 = vlaneseq
    %v7131 = vshrl.u32 %v7130, 7
    %v7132 = vsub.s32 0, %v7131
    %v7133 = vrot.slane %v7116, %v7132
    %v7134 = vlaneseq
    %v7135 = vshrl.u32 %v7134, 7
    %v7136 = vsub.s32 1, %v7135
    %v7137 = vrot.slane %v7116, %v7136
    %v7138 = vlaneseq
    %v7139 = vshrl.u32 %v7138, 7
    %v7140 = vsub.s32 2, %v7139
    %v7141 = vrot.slane %v7116, %v7140
    %v7142 = vlaneseq
    %v7143 = vshrl.u32 %v7142, 7
    %v7144 = vsub.s32 3, %v7143
    %v7145 = vrot.slane %v7116, %v7144
    %v7150 = vmul.f32 %v7128, %v7133
    %v7151 = vmul.f32 %v7127, %v7137
    %v7152 = vmul.f32 %v7126, %v7141
    %v7153 = vmul.f32 %v7125, %v7145
    %v7154 = vpack.c.bf16 %v7150, %v7150
    %v7155 = vpack.c.bf16 %v7151, %v7151
    %v7156 = vpack.c.bf16 %v7152, %v7152
    %v7157 = vpack.c.bf16 %v7153, %v7153
    %v7158 = vpack.c.bf16 %v6977, %v6977
    %v7159 = vpack.c.bf16 %v6978, %v6978
    %v7160 = vpack.c.bf16 %v6979, %v6979
    %v7161 = vpack.c.bf16 %v6980, %v6980
    %v7162 = vld [vmem:[%s4838] ss:$8 sm:$0xf]
    %7163 = vrot.lane.b32.xlu0 %v6977, 127
    %v7164 = vpop.permute.xlu0 %7163
    %7165 = vrot.lane.b32.xlu0 %v6978, 127
    %v7166 = vpop.permute.xlu0 %7165
    %7167 = vrot.lane.b32.xlu0 %v6979, 127
    %v7168 = vpop.permute.xlu0 %7167
    %7169 = vrot.lane.b32.xlu0 %v6980, 127
    %v7170 = vpop.permute.xlu0 %7169
    %v7171 = vsel %vm4848, %v7168, %v7170
    %v7172 = vsel %vm4848, %v7166, %v7168
    %v7173 = vsel %vm4848, %v7164, %v7166
    %v7174 = vsel %vm4848, %v7170, %v7164
    %v7176 = vlaneseq
    %v7177 = vshrl.u32 %v7176, 7
    %v7178 = vsub.s32 0, %v7177
    %v7179 = vrot.slane %v7162, %v7178
    %v7180 = vlaneseq
    %v7181 = vshrl.u32 %v7180, 7
    %v7182 = vsub.s32 1, %v7181
    %v7183 = vrot.slane %v7162, %v7182
    %v7184 = vlaneseq
    %v7185 = vshrl.u32 %v7184, 7
    %v7186 = vsub.s32 2, %v7185
    %v7187 = vrot.slane %v7162, %v7186
    %v7188 = vlaneseq
    %v7189 = vshrl.u32 %v7188, 7
    %v7190 = vsub.s32 3, %v7189
    %v7191 = vrot.slane %v7162, %v7190
    %v7196 = vmul.f32 %v7173, %v7179
    %v7197 = vmul.f32 %v7172, %v7183
    %v7198 = vmul.f32 %v7171, %v7187
    %v7199 = vmul.f32 %v7174, %v7191
    %v7200 = vpack.c.bf16 %v7196, %v7196
    %v7201 = vpack.c.bf16 %v7197, %v7197
    %v7202 = vpack.c.bf16 %v7198, %v7198
    %v7203 = vpack.c.bf16 %v7199, %v7199
    %v7204 = vld [vmem:[%s4882] ss:$8 sm:$0xf]
    %7205 = vrot.lane.b32.xlu0 %v6977, 113
    %v7206 = vpop.permute.xlu0 %7205
    %7207 = vrot.lane.b32.xlu0 %v6978, 113
    %v7208 = vpop.permute.xlu0 %7207
    %7209 = vrot.lane.b32.xlu0 %v6979, 113
    %v7210 = vpop.permute.xlu0 %7209
    %7211 = vrot.lane.b32.xlu0 %v6980, 113
    %v7212 = vpop.permute.xlu0 %7211
    %v7213 = vsel %vm4892, %v7210, %v7212
    %v7214 = vsel %vm4892, %v7208, %v7210
    %v7215 = vsel %vm4892, %v7206, %v7208
    %v7216 = vsel %vm4892, %v7212, %v7206
    %v7218 = vlaneseq
    %v7219 = vshrl.u32 %v7218, 7
    %v7220 = vsub.s32 0, %v7219
    %v7221 = vrot.slane %v7204, %v7220
    %v7222 = vlaneseq
    %v7223 = vshrl.u32 %v7222, 7
    %v7224 = vsub.s32 1, %v7223
    %v7225 = vrot.slane %v7204, %v7224
    %v7226 = vlaneseq
    %v7227 = vshrl.u32 %v7226, 7
    %v7228 = vsub.s32 2, %v7227
    %v7229 = vrot.slane %v7204, %v7228
    %v7230 = vlaneseq
    %v7231 = vshrl.u32 %v7230, 7
    %v7232 = vsub.s32 3, %v7231
    %v7233 = vrot.slane %v7204, %v7232
    %v7238 = vmul.f32 %v7215, %v7221
    %v7239 = vmul.f32 %v7214, %v7225
    %v7240 = vmul.f32 %v7213, %v7229
    %v7241 = vmul.f32 %v7216, %v7233
    %v7242 = vpack.c.bf16 %v7238, %v7238
    %v7243 = vpack.c.bf16 %v7239, %v7239
    %v7244 = vpack.c.bf16 %v7240, %v7240
    %v7245 = vpack.c.bf16 %v7241, %v7241
    %v7246 = vld [vmem:[%s4926] ss:$8 sm:$0xf]
    %7247 = vrot.lane.b32.xlu0 %v6977, 112
    %v7248 = vpop.permute.xlu0 %7247
    %7249 = vrot.lane.b32.xlu0 %v6978, 112
    %v7250 = vpop.permute.xlu0 %7249
    %7251 = vrot.lane.b32.xlu0 %v6979, 112
    %v7252 = vpop.permute.xlu0 %7251
    %7253 = vrot.lane.b32.xlu0 %v6980, 112
    %v7254 = vpop.permute.xlu0 %7253
    %v7255 = vsel %vm4936, %v7252, %v7254
    %v7256 = vsel %vm4936, %v7250, %v7252
    %v7257 = vsel %vm4936, %v7248, %v7250
    %v7258 = vsel %vm4936, %v7254, %v7248
    %v7260 = vlaneseq
    %v7261 = vshrl.u32 %v7260, 7
    %v7262 = vsub.s32 0, %v7261
    %v7263 = vrot.slane %v7246, %v7262
    %v7264 = vlaneseq
    %v7265 = vshrl.u32 %v7264, 7
    %v7266 = vsub.s32 1, %v7265
    %v7267 = vrot.slane %v7246, %v7266
    %v7268 = vlaneseq
    %v7269 = vshrl.u32 %v7268, 7
    %v7270 = vsub.s32 2, %v7269
    %v7271 = vrot.slane %v7246, %v7270
    %v7272 = vlaneseq
    %v7273 = vshrl.u32 %v7272, 7
    %v7274 = vsub.s32 3, %v7273
    %v7275 = vrot.slane %v7246, %v7274
    %v7280 = vmul.f32 %v7257, %v7263
    %v7281 = vmul.f32 %v7256, %v7267
    %v7282 = vmul.f32 %v7255, %v7271
    %v7283 = vmul.f32 %v7258, %v7275
    %v7284 = vpack.c.bf16 %v7280, %v7280
    %v7285 = vpack.c.bf16 %v7281, %v7281
    %v7286 = vpack.c.bf16 %v7282, %v7282
    %v7287 = vpack.c.bf16 %v7283, %v7283
    %v7288 = vld [vmem:[%s4970] ss:$8 sm:$0xf]
    %7289 = vrot.lane.b32.xlu0 %v6977, 111
    %v7290 = vpop.permute.xlu0 %7289
    %7291 = vrot.lane.b32.xlu0 %v6978, 111
    %v7292 = vpop.permute.xlu0 %7291
    %7293 = vrot.lane.b32.xlu0 %v6979, 111
    %v7294 = vpop.permute.xlu0 %7293
    %7295 = vrot.lane.b32.xlu0 %v6980, 111
    %v7296 = vpop.permute.xlu0 %7295
    %v7297 = vsel %vm4980, %v7294, %v7296
    %v7298 = vsel %vm4980, %v7292, %v7294
    %v7299 = vsel %vm4980, %v7290, %v7292
    %v7300 = vsel %vm4980, %v7296, %v7290
    %v7302 = vlaneseq
    %v7303 = vshrl.u32 %v7302, 7
    %v7304 = vsub.s32 0, %v7303
    %v7305 = vrot.slane %v7288, %v7304
    %v7306 = vlaneseq
    %v7307 = vshrl.u32 %v7306, 7
    %v7308 = vsub.s32 1, %v7307
    %v7309 = vrot.slane %v7288, %v7308
    %v7310 = vlaneseq
    %v7311 = vshrl.u32 %v7310, 7
    %v7312 = vsub.s32 2, %v7311
    %v7313 = vrot.slane %v7288, %v7312
    %v7314 = vlaneseq
    %v7315 = vshrl.u32 %v7314, 7
    %v7316 = vsub.s32 3, %v7315
    %v7317 = vrot.slane %v7288, %v7316
    %v7322 = vmul.f32 %v7299, %v7305
    %v7323 = vmul.f32 %v7298, %v7309
    %v7324 = vmul.f32 %v7297, %v7313
    %v7325 = vmul.f32 %v7300, %v7317
    %v7326 = vpack.c.bf16 %v7322, %v7322
    %v7327 = vpack.c.bf16 %v7323, %v7323
    %v7328 = vpack.c.bf16 %v7324, %v7324
    %v7329 = vpack.c.bf16 %v7325, %v7325
    %v7334 = vrot.slane %v7070, 4
    %v7335 = vrot.slane %v7071, 4
    %v7336 = vrot.slane %v7072, 4
    %v7337 = vrot.slane %v7073, 4
    %v7342 = vrot.slane %v7154, 4
    %v7343 = vrot.slane %v7155, 4
    %v7344 = vrot.slane %v7156, 4
    %v7345 = vrot.slane %v7157, 4
    %v7350 = vrot.slane %v7200, 4
    %v7351 = vrot.slane %v7201, 4
    %v7352 = vrot.slane %v7202, 4
    %v7353 = vrot.slane %v7203, 4
    %v7358 = vrot.slane %v7284, 4
    %v7359 = vrot.slane %v7285, 4
    %v7360 = vrot.slane %v7286, 4
    %v7361 = vrot.slane %v7287, 4
    %v7364 = vsel %vm5625, %v7028, %v7334
    %v7368 = vsel %vm5625, %v7029, %v7335
    %v7372 = vsel %vm5625, %v7030, %v7336
    %v7376 = vsel %vm5625, %v7031, %v7337
    %v7380 = vsel %vm5625, %v7112, %v7342
    %v7384 = vsel %vm5625, %v7113, %v7343
    %v7388 = vsel %vm5625, %v7114, %v7344
    %v7392 = vsel %vm5625, %v7115, %v7345
    %v7396 = vsel %vm5625, %v7158, %v7350
    %v7400 = vsel %vm5625, %v7159, %v7351
    %v7404 = vsel %vm5625, %v7160, %v7352
    %v7408 = vsel %vm5625, %v7161, %v7353
    %v7412 = vsel %vm5625, %v7242, %v7358
    %v7416 = vsel %vm5625, %v7243, %v7359
    %v7420 = vsel %vm5625, %v7244, %v7360
    %v7424 = vsel %vm5625, %v7245, %v7361
    %vm7426 = vcmask 588800
    %v7428 = vsel %vm7426, %v6989, 0
    %v7431 = vsel %vm5625, %v7326, 0
    %v7434 = vsel %vm5625, %v7327, 0
    %v7437 = vsel %vm5625, %v7328, 0
    %v7440 = vsel %vm5625, %v7329, 0
    %7442 = vmatprep.subr.bf16.mxu0 0
    %7443 = vmatpush1.bf16.msra.mxu0 0
    %7444 = vmatprep.subr.bf16.mxu0 0
    %7445 = vmatpush1.bf16.msra.mxu0 0
    %7446 = vmatprep.subr.bf16.mxu0 0
    %7447 = vmatpush1.bf16.msra.mxu0 0
    %7448 = vmatprep.subr.bf16.mxu0 %v7434
    %7449 = vmatpush1.bf16.msra.mxu0 %v7431
    %7450 = vmatprep.subr.bf16.mxu0 %v7416
    %7451 = vmatpush1.bf16.msra.mxu0 %v7412
    %7452 = vmatprep.subr.bf16.mxu0 %v7400
    %7453 = vmatpush1.bf16.msra.mxu0 %v7396
    %7454 = vmatprep.subr.bf16.mxu0 %v7384
    %7455 = vmatpush1.bf16.msra.mxu0 %v7380
    %7456 = vmatprep.subr.bf16.mxu0 %v7368
    %7457 = vmatpush1.bf16.msra.mxu0 %v7364
    %7458 = vmatprep.subr.bf16.mxu0 0
    %7459 = vmatpush2.bf16.msra.mxu0 0
    %7460 = vmatprep.subr.bf16.mxu0 0
    %7461 = vmatpush2.bf16.msra.mxu0 0
    %7462 = vmatprep.subr.bf16.mxu0 0
    %7463 = vmatpush2.bf16.msra.mxu0 0
    %7464 = vmatprep.subr.bf16.mxu0 0
    %7465 = vmatpush2.bf16.msra.mxu0 0
    %7466 = vmatprep.subr.bf16.mxu0 0
    %7467 = vmatpush2.bf16.msra.mxu0 0
    %7468 = vmatprep.subr.bf16.mxu0 0
    %7469 = vmatpush2.bf16.msra.mxu0 0
    %7470 = vmatprep.subr.bf16.mxu0 0
    %7471 = vmatpush2.bf16.msra.mxu0 0
    %7472 = vmatprep.subr.bf16.mxu0 0
    %7473 = vmatpush2.bf16.msra.mxu0 0
    %7474 = vmatprep.mubr.bf16.mxu0 0
    %7475 = vmatmul.mubr.bf16.gmra.mxu0 %v7428
    %v7476 = vpop.f32.mrf.mxu0
    %v7477 = vadd.f32 0.0, %v7476
    %v7478 = vpop.f32.mrf.mxu0
    %v7479 = vadd.f32 0.0, %v7478
    %v7480 = vpop.f32.mrf.mxu0
    %v7481 = vpop.f32.mrf.mxu0
    %7482 = vdwg.mxu0
    %7483 = vmatprep.subr.bf16.mxu0 0
    %7484 = vmatpush1.bf16.msra.mxu0 0
    %7485 = vmatprep.subr.bf16.mxu0 0
    %7486 = vmatpush1.bf16.msra.mxu0 0
    %7487 = vmatprep.subr.bf16.mxu0 0
    %7488 = vmatpush1.bf16.msra.mxu0 0
    %7489 = vmatprep.subr.bf16.mxu0 %v7440
    %7490 = vmatpush1.bf16.msra.mxu0 %v7437
    %7491 = vmatprep.subr.bf16.mxu0 %v7424
    %7492 = vmatpush1.bf16.msra.mxu0 %v7420
    %7493 = vmatprep.subr.bf16.mxu0 %v7408
    %7494 = vmatpush1.bf16.msra.mxu0 %v7404
    %7495 = vmatprep.subr.bf16.mxu0 %v7392
    %7496 = vmatpush1.bf16.msra.mxu0 %v7388
    %7497 = vmatprep.subr.bf16.mxu0 %v7376
    %7498 = vmatpush1.bf16.msra.mxu0 %v7372
    %7499 = vmatprep.subr.bf16.mxu0 0
    %7500 = vmatpush2.bf16.msra.mxu0 0
    %7501 = vmatprep.subr.bf16.mxu0 0
    %7502 = vmatpush2.bf16.msra.mxu0 0
    %7503 = vmatprep.subr.bf16.mxu0 0
    %7504 = vmatpush2.bf16.msra.mxu0 0
    %7505 = vmatprep.subr.bf16.mxu0 0
    %7506 = vmatpush2.bf16.msra.mxu0 0
    %7507 = vmatprep.subr.bf16.mxu0 0
    %7508 = vmatpush2.bf16.msra.mxu0 0
    %7509 = vmatprep.subr.bf16.mxu0 0
    %7510 = vmatpush2.bf16.msra.mxu0 0
    %7511 = vmatprep.subr.bf16.mxu0 0
    %7512 = vmatpush2.bf16.msra.mxu0 0
    %7513 = vmatprep.subr.bf16.mxu0 0
    %7514 = vmatpush2.bf16.msra.mxu0 0
    %7515 = vmatprep.mubr.bf16.mxu0 0
    %7516 = vmatmul.mubr.bf16.gmra.mxu0 %v7428
    %v7517 = vpop.f32.mrf.mxu0
    %v7518 = vadd.f32 0.0, %v7517
    %v7519 = vpop.f32.mrf.mxu0
    %v7520 = vadd.f32 0.0, %v7519
    %v7521 = vpop.f32.mrf.mxu0
    %v7522 = vpop.f32.mrf.mxu0
    %7523 = vdwg.mxu0
    %vm7524 = vcmp.gt.f32.partialorder %v7477, 0.0
    %vm7525 = vcmp.gt.f32.partialorder %v7479, 0.0
    %vm7526 = vcmp.gt.f32.partialorder %v7518, 0.0
    %vm7527 = vcmp.gt.f32.partialorder %v7520, 0.0
    %v7528 = vmul.f32 %v7477, 0.01
    %v7529 = vmul.f32 %v7479, 0.01
    %v7530 = vmul.f32 %v7518, 0.01
    %v7531 = vmul.f32 %v7520, 0.01
    %v7532 = vsel %vm7524, %v7477, %v7528
    %v7533 = vsel %vm7525, %v7479, %v7529
    %v7534 = vsel %vm7526, %v7518, %v7530
    %v7535 = vsel %vm7527, %v7520, %v7531
    %v7536 = vld [vmem:[%s15] sm:$0x1]
    %7537 = vrot.lane.b32.xlu0 %v7532, 17
    %v7538 = vpop.permute.xlu0 %7537
    %7539 = vrot.lane.b32.xlu0 %v7533, 17
    %v7540 = vpop.permute.xlu0 %7539
    %7541 = vrot.lane.b32.xlu0 %v7534, 17
    %v7542 = vpop.permute.xlu0 %7541
    %7543 = vrot.lane.b32.xlu0 %v7535, 17
    %v7544 = vpop.permute.xlu0 %7543
    %v7545 = vsel %vm4668, %v7542, %v7544
    %v7546 = vsel %vm4668, %v7540, %v7542
    %v7547 = vsel %vm4668, %v7538, %v7540
    %v7548 = vsel %vm4668, %v7544, %v7538
    %v7549 = vmul.f32 %v7548, %v7007
    %v7550 = vmul.f32 %v7547, %v7011
    %v7551 = vmul.f32 %v7546, %v7015
    %v7552 = vmul.f32 %v7545, %v7019
    %v7553 = vpack.c.bf16 %v7549, %v7549
    %v7554 = vpack.c.bf16 %v7550, %v7550
    %v7555 = vpack.c.bf16 %v7551, %v7551
    %v7556 = vpack.c.bf16 %v7552, %v7552
    %7557 = vrot.lane.b32.xlu0 %v7532, 16
    %v7558 = vpop.permute.xlu0 %7557
    %7559 = vrot.lane.b32.xlu0 %v7533, 16
    %v7560 = vpop.permute.xlu0 %7559
    %7561 = vrot.lane.b32.xlu0 %v7534, 16
    %v7562 = vpop.permute.xlu0 %7561
    %7563 = vrot.lane.b32.xlu0 %v7535, 16
    %v7564 = vpop.permute.xlu0 %7563
    %v7565 = vsel %vm4712, %v7562, %v7564
    %v7566 = vsel %vm4712, %v7560, %v7562
    %v7567 = vsel %vm4712, %v7558, %v7560
    %v7568 = vsel %vm4712, %v7564, %v7558
    %v7569 = vmul.f32 %v7568, %v7049
    %v7570 = vmul.f32 %v7567, %v7053
    %v7571 = vmul.f32 %v7566, %v7057
    %v7572 = vmul.f32 %v7565, %v7061
    %v7573 = vpack.c.bf16 %v7569, %v7569
    %v7574 = vpack.c.bf16 %v7570, %v7570
    %v7575 = vpack.c.bf16 %v7571, %v7571
    %v7576 = vpack.c.bf16 %v7572, %v7572
    %7577 = vrot.lane.b32.xlu0 %v7532, 15
    %v7578 = vpop.permute.xlu0 %7577
    %7579 = vrot.lane.b32.xlu0 %v7533, 15
    %v7580 = vpop.permute.xlu0 %7579
    %7581 = vrot.lane.b32.xlu0 %v7534, 15
    %v7582 = vpop.permute.xlu0 %7581
    %7583 = vrot.lane.b32.xlu0 %v7535, 15
    %v7584 = vpop.permute.xlu0 %7583
    %v7585 = vsel %vm4756, %v7582, %v7584
    %v7586 = vsel %vm4756, %v7580, %v7582
    %v7587 = vsel %vm4756, %v7578, %v7580
    %v7588 = vsel %vm4756, %v7584, %v7578
    %v7589 = vmul.f32 %v7588, %v7091
    %v7590 = vmul.f32 %v7587, %v7095
    %v7591 = vmul.f32 %v7586, %v7099
    %v7592 = vmul.f32 %v7585, %v7103
    %v7593 = vpack.c.bf16 %v7589, %v7589
    %v7594 = vpack.c.bf16 %v7590, %v7590
    %v7595 = vpack.c.bf16 %v7591, %v7591
    %v7596 = vpack.c.bf16 %v7592, %v7592
    %7597 = vrot.lane.b32.xlu0 %v7532, 1
    %v7598 = vpop.permute.xlu0 %7597
    %7599 = vrot.lane.b32.xlu0 %v7533, 1
    %v7600 = vpop.permute.xlu0 %7599
    %7601 = vrot.lane.b32.xlu0 %v7534, 1
    %v7602 = vpop.permute.xlu0 %7601
    %7603 = vrot.lane.b32.xlu0 %v7535, 1
    %v7604 = vpop.permute.xlu0 %7603
    %v7605 = vsel %vm4800, %v7602, %v7604
    %v7606 = vsel %vm4800, %v7600, %v7602
    %v7607 = vsel %vm4800, %v7598, %v7600
    %v7608 = vsel %vm4800, %v7604, %v7598
    %v7609 = vmul.f32 %v7608, %v7133
    %v7610 = vmul.f32 %v7607, %v7137
    %v7611 = vmul.f32 %v7606, %v7141
    %v7612 = vmul.f32 %v7605, %v7145
    %v7613 = vpack.c.bf16 %v7609, %v7609
    %v7614 = vpack.c.bf16 %v7610, %v7610
    %v7615 = vpack.c.bf16 %v7611, %v7611
    %v7616 = vpack.c.bf16 %v7612, %v7612
    %v7617 = vpack.c.bf16 %v7532, %v7532
    %v7618 = vpack.c.bf16 %v7533, %v7533
    %v7619 = vpack.c.bf16 %v7534, %v7534
    %v7620 = vpack.c.bf16 %v7535, %v7535
    %7621 = vrot.lane.b32.xlu0 %v7532, 127
    %v7622 = vpop.permute.xlu0 %7621
    %7623 = vrot.lane.b32.xlu0 %v7533, 127
    %v7624 = vpop.permute.xlu0 %7623
    %7625 = vrot.lane.b32.xlu0 %v7534, 127
    %v7626 = vpop.permute.xlu0 %7625
    %7627 = vrot.lane.b32.xlu0 %v7535, 127
    %v7628 = vpop.permute.xlu0 %7627
    %v7629 = vsel %vm4848, %v7626, %v7628
    %v7630 = vsel %vm4848, %v7624, %v7626
    %v7631 = vsel %vm4848, %v7622, %v7624
    %v7632 = vsel %vm4848, %v7628, %v7622
    %v7633 = vmul.f32 %v7631, %v7179
    %v7634 = vmul.f32 %v7630, %v7183
    %v7635 = vmul.f32 %v7629, %v7187
    %v7636 = vmul.f32 %v7632, %v7191
    %v7637 = vpack.c.bf16 %v7633, %v7633
    %v7638 = vpack.c.bf16 %v7634, %v7634
    %v7639 = vpack.c.bf16 %v7635, %v7635
    %v7640 = vpack.c.bf16 %v7636, %v7636
    %7641 = vrot.lane.b32.xlu0 %v7532, 113
    %v7642 = vpop.permute.xlu0 %7641
    %7643 = vrot.lane.b32.xlu0 %v7533, 113
    %v7644 = vpop.permute.xlu0 %7643
    %7645 = vrot.lane.b32.xlu0 %v7534, 113
    %v7646 = vpop.permute.xlu0 %7645
    %7647 = vrot.lane.b32.xlu0 %v7535, 113
    %v7648 = vpop.permute.xlu0 %7647
    %v7649 = vsel %vm4892, %v7646, %v7648
    %v7650 = vsel %vm4892, %v7644, %v7646
    %v7651 = vsel %vm4892, %v7642, %v7644
    %v7652 = vsel %vm4892, %v7648, %v7642
    %v7653 = vmul.f32 %v7651, %v7221
    %v7654 = vmul.f32 %v7650, %v7225
    %v7655 = vmul.f32 %v7649, %v7229
    %v7656 = vmul.f32 %v7652, %v7233
    %v7657 = vpack.c.bf16 %v7653, %v7653
    %v7658 = vpack.c.bf16 %v7654, %v7654
    %v7659 = vpack.c.bf16 %v7655, %v7655
    %v7660 = vpack.c.bf16 %v7656, %v7656
    %7661 = vrot.lane.b32.xlu0 %v7532, 112
    %v7662 = vpop.permute.xlu0 %7661
    %7663 = vrot.lane.b32.xlu0 %v7533, 112
    %v7664 = vpop.permute.xlu0 %7663
    %7665 = vrot.lane.b32.xlu0 %v7534, 112
    %v7666 = vpop.permute.xlu0 %7665
    %7667 = vrot.lane.b32.xlu0 %v7535, 112
    %v7668 = vpop.permute.xlu0 %7667
    %v7669 = vsel %vm4936, %v7666, %v7668
    %v7670 = vsel %vm4936, %v7664, %v7666
    %v7671 = vsel %vm4936, %v7662, %v7664
    %v7672 = vsel %vm4936, %v7668, %v7662
    %v7673 = vmul.f32 %v7671, %v7263
    %v7674 = vmul.f32 %v7670, %v7267
    %v7675 = vmul.f32 %v7669, %v7271
    %v7676 = vmul.f32 %v7672, %v7275
    %v7677 = vpack.c.bf16 %v7673, %v7673
    %v7678 = vpack.c.bf16 %v7674, %v7674
    %v7679 = vpack.c.bf16 %v7675, %v7675
    %v7680 = vpack.c.bf16 %v7676, %v7676
    %7681 = vrot.lane.b32.xlu0 %v7532, 111
    %v7682 = vpop.permute.xlu0 %7681
    %7683 = vrot.lane.b32.xlu0 %v7533, 111
    %v7684 = vpop.permute.xlu0 %7683
    %7685 = vrot.lane.b32.xlu0 %v7534, 111
    %v7686 = vpop.permute.xlu0 %7685
    %7687 = vrot.lane.b32.xlu0 %v7535, 111
    %v7688 = vpop.permute.xlu0 %7687
    %v7689 = vsel %vm4980, %v7686, %v7688
    %v7690 = vsel %vm4980, %v7684, %v7686
    %v7691 = vsel %vm4980, %v7682, %v7684
    %v7692 = vsel %vm4980, %v7688, %v7682
    %v7693 = vmul.f32 %v7691, %v7305
    %v7694 = vmul.f32 %v7690, %v7309
    %v7695 = vmul.f32 %v7689, %v7313
    %v7696 = vmul.f32 %v7692, %v7317
    %v7697 = vpack.c.bf16 %v7693, %v7693
    %v7698 = vpack.c.bf16 %v7694, %v7694
    %v7699 = vpack.c.bf16 %v7695, %v7695
    %v7700 = vpack.c.bf16 %v7696, %v7696
    %v7705 = vrot.slane %v7573, 4
    %v7706 = vrot.slane %v7574, 4
    %v7707 = vrot.slane %v7575, 4
    %v7708 = vrot.slane %v7576, 4
    %v7713 = vrot.slane %v7613, 4
    %v7714 = vrot.slane %v7614, 4
    %v7715 = vrot.slane %v7615, 4
    %v7716 = vrot.slane %v7616, 4
    %v7721 = vrot.slane %v7637, 4
    %v7722 = vrot.slane %v7638, 4
    %v7723 = vrot.slane %v7639, 4
    %v7724 = vrot.slane %v7640, 4
    %v7729 = vrot.slane %v7677, 4
    %v7730 = vrot.slane %v7678, 4
    %v7731 = vrot.slane %v7679, 4
    %v7732 = vrot.slane %v7680, 4
    %v7735 = vsel %vm5625, %v7553, %v7705
    %v7739 = vsel %vm5625, %v7554, %v7706
    %v7743 = vsel %vm5625, %v7555, %v7707
    %v7747 = vsel %vm5625, %v7556, %v7708
    %v7751 = vsel %vm5625, %v7593, %v7713
    %v7755 = vsel %vm5625, %v7594, %v7714
    %v7759 = vsel %vm5625, %v7595, %v7715
    %v7763 = vsel %vm5625, %v7596, %v7716
    %v7767 = vsel %vm5625, %v7617, %v7721
    %v7771 = vsel %vm5625, %v7618, %v7722
    %v7775 = vsel %vm5625, %v7619, %v7723
    %v7779 = vsel %vm5625, %v7620, %v7724
    %v7783 = vsel %vm5625, %v7657, %v7729
    %v7787 = vsel %vm5625, %v7658, %v7730
    %v7791 = vsel %vm5625, %v7659, %v7731
    %v7795 = vsel %vm5625, %v7660, %v7732
    %v7798 = vsel %vm7426, %v7536, 0
    %v7801 = vsel %vm5625, %v7697, 0
    %v7804 = vsel %vm5625, %v7698, 0
    %v7807 = vsel %vm5625, %v7699, 0
    %v7810 = vsel %vm5625, %v7700, 0
    %7812 = vmatprep.subr.bf16.mxu0 0
    %7813 = vmatpush1.bf16.msra.mxu0 0
    %7814 = vmatprep.subr.bf16.mxu0 0
    %7815 = vmatpush1.bf16.msra.mxu0 0
    %7816 = vmatprep.subr.bf16.mxu0 0
    %7817 = vmatpush1.bf16.msra.mxu0 0
    %7818 = vmatprep.subr.bf16.mxu0 %v7804
    %7819 = vmatpush1.bf16.msra.mxu0 %v7801
    %7820 = vmatprep.subr.bf16.mxu0 %v7787
    %7821 = vmatpush1.bf16.msra.mxu0 %v7783
    %7822 = vmatprep.subr.bf16.mxu0 %v7771
    %7823 = vmatpush1.bf16.msra.mxu0 %v7767
    %7824 = vmatprep.subr.bf16.mxu0 %v7755
    %7825 = vmatpush1.bf16.msra.mxu0 %v7751
    %7826 = vmatprep.subr.bf16.mxu0 %v7739
    %7827 = vmatpush1.bf16.msra.mxu0 %v7735
    %7828 = vmatprep.subr.bf16.mxu0 0
    %7829 = vmatpush2.bf16.msra.mxu0 0
    %7830 = vmatprep.subr.bf16.mxu0 0
    %7831 = vmatpush2.bf16.msra.mxu0 0
    %7832 = vmatprep.subr.bf16.mxu0 0
    %7833 = vmatpush2.bf16.msra.mxu0 0
    %7834 = vmatprep.subr.bf16.mxu0 0
    %7835 = vmatpush2.bf16.msra.mxu0 0
    %7836 = vmatprep.subr.bf16.mxu0 0
    %7837 = vmatpush2.bf16.msra.mxu0 0
    %7838 = vmatprep.subr.bf16.mxu0 0
    %7839 = vmatpush2.bf16.msra.mxu0 0
    %7840 = vmatprep.subr.bf16.mxu0 0
    %7841 = vmatpush2.bf16.msra.mxu0 0
    %7842 = vmatprep.subr.bf16.mxu0 0
    %7843 = vmatpush2.bf16.msra.mxu0 0
    %7844 = vmatprep.mubr.bf16.mxu0 0
    %7845 = vmatmul.mubr.bf16.gmra.mxu0 %v7798
    %v7846 = vpop.f32.mrf.mxu0
    %v7847 = vadd.f32 0.0, %v7846
    %v7848 = vpop.f32.mrf.mxu0
    %v7849 = vadd.f32 0.0, %v7848
    %v7850 = vpop.f32.mrf.mxu0
    %v7851 = vpop.f32.mrf.mxu0
    %7852 = vdwg.mxu0
    %7853 = vmatprep.subr.bf16.mxu0 0
    %7854 = vmatpush1.bf16.msra.mxu0 0
    %7855 = vmatprep.subr.bf16.mxu0 0
    %7856 = vmatpush1.bf16.msra.mxu0 0
    %7857 = vmatprep.subr.bf16.mxu0 0
    %7858 = vmatpush1.bf16.msra.mxu0 0
    %7859 = vmatprep.subr.bf16.mxu0 %v7810
    %7860 = vmatpush1.bf16.msra.mxu0 %v7807
    %7861 = vmatprep.subr.bf16.mxu0 %v7795
    %7862 = vmatpush1.bf16.msra.mxu0 %v7791
    %7863 = vmatprep.subr.bf16.mxu0 %v7779
    %7864 = vmatpush1.bf16.msra.mxu0 %v7775
    %7865 = vmatprep.subr.bf16.mxu0 %v7763
    %7866 = vmatpush1.bf16.msra.mxu0 %v7759
    %7867 = vmatprep.subr.bf16.mxu0 %v7747
    %7868 = vmatpush1.bf16.msra.mxu0 %v7743
    %7869 = vmatprep.subr.bf16.mxu0 0
    %7870 = vmatpush2.bf16.msra.mxu0 0
    %7871 = vmatprep.subr.bf16.mxu0 0
    %7872 = vmatpush2.bf16.msra.mxu0 0
    %7873 = vmatprep.subr.bf16.mxu0 0
    %7874 = vmatpush2.bf16.msra.mxu0 0
    %7875 = vmatprep.subr.bf16.mxu0 0
    %7876 = vmatpush2.bf16.msra.mxu0 0
    %7877 = vmatprep.subr.bf16.mxu0 0
    %7878 = vmatpush2.bf16.msra.mxu0 0
    %7879 = vmatprep.subr.bf16.mxu0 0
    %7880 = vmatpush2.bf16.msra.mxu0 0
    %7881 = vmatprep.subr.bf16.mxu0 0
    %7882 = vmatpush2.bf16.msra.mxu0 0
    %7883 = vmatprep.subr.bf16.mxu0 0
    %7884 = vmatpush2.bf16.msra.mxu0 0
    %7885 = vmatprep.mubr.bf16.mxu0 0
    %7886 = vmatmul.mubr.bf16.gmra.mxu0 %v7798
    %v7887 = vpop.f32.mrf.mxu0
    %v7888 = vadd.f32 0.0, %v7887
    %v7889 = vpop.f32.mrf.mxu0
    %v7890 = vadd.f32 0.0, %v7889
    %v7891 = vpop.f32.mrf.mxu0
    %v7892 = vpop.f32.mrf.mxu0
    %7893 = vdwg.mxu0
    %vm7894 = vcmp.gt.f32.partialorder %v7847, 0.0
    %vm7895 = vcmp.gt.f32.partialorder %v7849, 0.0
    %vm7896 = vcmp.gt.f32.partialorder %v7888, 0.0
    %vm7897 = vcmp.gt.f32.partialorder %v7890, 0.0
    %v7898 = vmul.f32 %v7847, 0.01
    %v7899 = vmul.f32 %v7849, 0.01
    %v7900 = vmul.f32 %v7888, 0.01
    %v7901 = vmul.f32 %v7890, 0.01
    %v7902 = vsel %vm7894, %v7847, %v7898
    %v7903 = vsel %vm7895, %v7849, %v7899
    %v7904 = vsel %vm7896, %v7888, %v7900
    %v7905 = vsel %vm7897, %v7890, %v7901
    %v7910 = vcombine.low %v7902, %v7903
    %v7911 = vcombine.low %v7904, %v7905
    %v7913 = vunpack.c.l.s4 1966171168
    %v7914 = vunpack.c.0.s8 %v7913
    %v7915 = vlaneseq
    %v7916 = vshrl.u32 %v7915, 7
    %v7917 = vsub.s32 %v7914, %v7916
    %v7918 = vrot.slane %v7910, %v7917
    %v7920 = vunpack.c.l.s4 1966171168
    %v7921 = vunpack.c.0.s8 %v7920
    %v7922 = vlaneseq
    %v7923 = vshrl.u32 %v7922, 7
    %v7924 = vsub.s32 %v7921, %v7923
    %v7925 = vrot.slane %v7911, %v7924
    %v7926 = vcombine.low %v7918, %v7925
    %v7928 = vunpack.c.l.s4 1966171168
    %v7929 = vunpack.c.0.s8 %v7928
    %v7930 = vlaneseq
    %v7931 = vshrl.u32 %v7930, 7
    %v7932 = vsub.s32 %v7929, %v7931
    %v7933 = vrot.slane %v7926, %v7932
    %s7935 = smul.u32 %s4630, 4
    %s7936 = scalar_lea.vmem %s16, %s7935
    %7937 = vst.msk [vmem:[%s7936] sm:$0xf] %vm4627, %v7933
    %7938 = vst.msk [vmem:[#allocation7] sm:$0xf] %vm4627, %v7933
  $region77: #{weather_model_forward.1} parent=0 // loop_footer
    %s4634 = sadd.s32 1, %s4630
  $region78: #{weather_model_forward.1} parent=0 // loop_footer_branch
    %4629 = sbr.rel target = $region74
  $region79: #{weather_model_forward.1} parent=0 // loop_exit
    _
  // Predicated region
  $region80: #{weather_model_forward.1} parent=0 // pred_check
    _
  $region81: #{weather_model_forward.1} parent=0 // pred_check_branch
    %7940 = sbr.rel (0) target = $region83
  $region82: #{weather_model_forward.1} parent=0 // pred_region
    _
  $region83: #{weather_model_forward.1} parent=0 // pred_fallthru
    _
  // Predicated region
  $region84: #{weather_model_forward.1} parent=0 // pred_check
    _
  $region85: #{weather_model_forward.1} parent=0 // pred_check_branch
    %7942 = sbr.rel (0) target = $region87
  $region86: #{weather_model_forward.1} parent=0 // pred_region
    _
  $region87: #{weather_model_forward.1} parent=0 // pred_fallthru
    _

</llo_original>
